<compile_context>
chip_gen: v6e
topology: v6e:2x2x1
jax: 0.10.0
libtpu: 0.0.40
codegen_flags: <defaults>
</compile_context>

<pallas_src>
import functools

import jax
import jax.numpy as jnp
from jax.experimental import pallas as pl
from jax.experimental.pallas import tpu as pltpu


def _round_up(x, m):
    return ((x + m - 1) // m) * m


def _convgru_kernel(gx_ref, cx_ref, wgh_ref, wch_ref,
                    y_ref, hlast_ref,
                    hbf_ref, hf32_ref,
                    *, H, W, Ch, base):
    """One (batch, timestep) grid point of the ConvGRU recurrence.

    gx_ref   : (M, 2*Ch) f32   precomputed Conv(x, W_g) + b_g (width-haloed, flat)
    cx_ref   : (M, Ch)   f32   precomputed Conv(x, W_c) + b_c (width-haloed, flat)
    wgh_ref  : (9, Ch, 2*Ch) bf16 recurrent gate weights, taps flattened ky*3+kx
    wch_ref  : (9, Ch, Ch)   bf16 recurrent candidate weights
    y_ref    : (M, Ch)   f32   per-step hidden state (flat, padded width)
    hlast_ref: (M, Ch)   f32   final hidden state (written on last step only)
    hbf_ref  : (rows, Ch) bf16 flat zero-bordered conv operand buffer.
               Interior pixel (i, j) lives at flat row base + i*(W+2) + (j+1).
    hf32_ref : (M, Ch)   f32   carried hidden state (full precision gate math).
    """
    Wp = W + 2
    M = H * Wp
    t = pl.program_id(1)

    # Reset the carried state at the start of every batch element's time loop.
    @pl.when(t == 0)
    def _():
        hbf_ref[...] = jnp.zeros_like(hbf_ref)
        hf32_ref[...] = jnp.zeros_like(hf32_ref)

    # Mask zeroing the two horizontal halo columns (preserves the zero-border
    # invariant of the flat state buffer; also makes halo values of gx/cx moot).
    col = jax.lax.broadcasted_iota(jnp.int32, (H, Wp, 1), 1)
    interior = ((col > 0) & (col < Wp - 1)).astype(jnp.float32).reshape(M, 1)

    def conv_h(acc, w_ref):
        # 3x3 SAME conv of the flat bf16 state as 9 contiguous row-slice
        # matmuls (bf16 operands, f32 accumulation on the MXU).
        for ky in range(3):
            for kx in range(3):
                off = base + (ky - 1) * Wp + (kx - 1)          # static offset
                win = hbf_ref[off:off + M, :]
                acc = acc + jnp.dot(win, w_ref[ky * 3 + kx],
                                    preferred_element_type=jnp.float32)
        return acc

    h_cur = hf32_ref[...]                                       # (M, Ch) f32

    gates = conv_h(gx_ref[...], wgh_ref)                        # (M, 2Ch) f32
    reset = jax.nn.sigmoid(gates[:, :Ch])
    update = jax.nn.sigmoid(gates[:, Ch:])

    # Reuse the bf16 state buffer to hold reset*h for the candidate conv
    # (halo columns stay zero because h_cur is zero there).
    hbf_ref[base:base + M, :] = (reset * h_cur).astype(jnp.bfloat16)
    cand = jnp.tanh(conv_h(cx_ref[...], wch_ref))               # (M, Ch) f32

    # (1-u)*h + u*cand, fused form; zero the halo columns.
    h_new = (h_cur + update * (cand - h_cur)) * interior        # (M, Ch) f32

    hf32_ref[...] = h_new                                       # carry (f32)
    hbf_ref[base:base + M, :] = h_new.astype(jnp.bfloat16)      # carry (conv op)
    y_ref[...] = h_new

    @pl.when(t == pl.num_programs(1) - 1)
    def _():
        hlast_ref[...] = h_new


def temporal_encoder_nhwc(x_nhwc, params):
    """x_nhwc: (B,T,H,W,Cin) f32 -> (y: (B,T,H,W,Ch), h_last: (B,H,W,Ch))."""
    B, T, H, W, Cin = x_nhwc.shape
    Ch = params["wch"].shape[3]
    Wp = W + 2
    M = H * Wp

    # ---- Hoisted, non-recurrent part: x convolutions + biases over all (B,T).
    # Width is padded by 2 on each side inside the conv so the output width is
    # already W+2 (kernel halo); halo-column values are masked in the kernel.
    def conv_pad(inp, w):
        return jax.lax.conv_general_dilated(
            inp, w, window_strides=(1, 1), padding=((1, 1), (2, 2)),
            dimension_numbers=("NHWC", "HWIO", "NHWC"))

    xf = x_nhwc.reshape(B * T, H, W, Cin)
    gx = (conv_pad(xf, params["wgx"]) + params["bg"]).reshape(B, T, M, 2 * Ch)
    cx = (conv_pad(xf, params["wcx"]) + params["bc"]).reshape(B, T, M, Ch)

    # Recurrent weights: flatten the 3x3 taps, cast MXU operands to bf16.
    wgh9 = params["wgh"].reshape(9, Ch, 2 * Ch).astype(jnp.bfloat16)
    wch9 = params["wch"].reshape(9, Ch, Ch).astype(jnp.bfloat16)

    # Flat state buffer geometry: top border >= Wp+1 rows, rounded up to 16 so
    # the interior block (and its per-step stores) are sublane-aligned.
    base = _round_up(Wp + 1, 16)
    rows = base + M + Wp + 1

    kernel = functools.partial(_convgru_kernel, H=H, W=W, Ch=Ch, base=base)

    y_flat, h_flat = pl.pallas_call(
        kernel,
        out_shape=(jax.ShapeDtypeStruct((B, T, M, Ch), jnp.float32),
                   jax.ShapeDtypeStruct((B, M, Ch), jnp.float32)),
        grid_spec=pltpu.PrefetchScalarGridSpec(
            num_scalar_prefetch=0,
            grid=(B, T),
            in_specs=[
                pl.BlockSpec((None, None, M, 2 * Ch),
                             lambda b, t: (b, t, 0, 0)),
                pl.BlockSpec((None, None, M, Ch),
                             lambda b, t: (b, t, 0, 0)),
                # Constant-index weights: DMA'd once, never re-fetched.
                # (At production Ch=384 consider single-buffering these to
                #  save VMEM on v7x.)
                pl.BlockSpec((9, Ch, 2 * Ch), lambda b, t: (0, 0, 0)),
                pl.BlockSpec((9, Ch, Ch), lambda b, t: (0, 0, 0)),
            ],
            out_specs=[
                pl.BlockSpec((None, None, M, Ch), lambda b, t: (b, t, 0, 0)),
                pl.BlockSpec((None, M, Ch), lambda b, t: (b, 0, 0)),
            ],
            scratch_shapes=[
                pltpu.VMEM((rows, Ch), jnp.bfloat16),   # flat padded h (conv operand)
                pltpu.VMEM((M, Ch), jnp.float32),       # carried h (f32 gate math)
            ]),
        compiler_params=pltpu.CompilerParams(
            dimension_semantics=("parallel", "arbitrary")),
    )(gx, cx, wgh9, wch9)

    # Strip the width halo outside the serial loop.
    y = y_flat.reshape(B, T, H, Wp, Ch)[:, :, :, 1:W + 1, :]
    h_last = h_flat.reshape(B, H, Wp, Ch)[:, :, 1:W + 1, :]
    return y, h_last


def temporal_encoder(x_btchw, params):
    """PyTorch-layout wrapper. x: (B,T,Cin,H,W) -> (y: (B,T,Ch,H,W), h: (B,Ch,H,W))."""
    x_nhwc = jnp.transpose(x_btchw, (0, 1, 3, 4, 2)).astype(jnp.float32)
    y, h = temporal_encoder_nhwc(x_nhwc, params)
    return jnp.transpose(y, (0, 1, 4, 2, 3)), jnp.transpose(h, (0, 3, 1, 2))


def _make_params(key, cin, ch):
    # Deterministic synthetic weights, created in PyTorch Conv2d layout (O,I,kH,kW)
    # then converted to HWIO and split into x / h input blocks.
    k1, k2, k3, k4 = jax.random.split(key, 4)
    s = 0.1
    w_gates = s * jax.random.normal(k1, (2 * ch, cin + ch, 3, 3), jnp.float32)
    b_gates = s * jax.random.normal(k2, (2 * ch,), jnp.float32)
    w_can = s * jax.random.normal(k3, (ch, cin + ch, 3, 3), jnp.float32)
    b_can = s * jax.random.normal(k4, (ch,), jnp.float32)
    to_hwio = lambda w: jnp.transpose(w, (2, 3, 1, 0))
    return {
        "wgx": to_hwio(w_gates[:, :cin]),    # (3,3,Cin,2Ch)
        "wgh": to_hwio(w_gates[:, cin:]),    # (3,3,Ch,2Ch)
        "wcx": to_hwio(w_can[:, :cin]),      # (3,3,Cin,Ch)
        "wch": to_hwio(w_can[:, cin:]),      # (3,3,Ch,Ch)
        "bg": b_gates,                       # (2Ch,)
        "bc": b_can,                         # (Ch,)
    }


def _reference_nhwc(x_nhwc, p):
    """Pure-JAX f32 reference ConvGRU (same math) for correctness checking."""
    B, T, H, W, Cin = x_nhwc.shape
    Ch = p["wch"].shape[3]

    def conv(inp, w):
        return jax.lax.conv_general_dilated(
            inp, w, window_strides=(1, 1), padding="SAME",
            dimension_numbers=("NHWC", "HWIO", "NHWC"))

    h = jnp.zeros((B, H, W, Ch), jnp.float32)
    ys = []
    for t in range(T):
        xt = x_nhwc[:, t]
        gates = conv(xt, p["wgx"]) + conv(h, p["wgh"]) + p["bg"]
        reset = jax.nn.sigmoid(gates[..., :Ch])
        update = jax.nn.sigmoid(gates[..., Ch:])
        cand = jnp.tanh(conv(xt, p["wcx"]) + conv(reset * h, p["wch"]) + p["bc"])
        h = (1.0 - update) * h + update * cand
        ys.append(h)
    return jnp.stack(ys, axis=1), h


if __name__ == "__main__":
    B, T, Cin, H, W = 2, 8, 4, 16, 16
    Ch = 32  # hidden / out_channels (384 in the real module; small for the test)

    key = jax.random.PRNGKey(0)
    k_x, k_p = jax.random.split(key)
    x = jax.random.normal(k_x, (B, T, Cin, H, W), jnp.float32)  # PyTorch (B,T,C,H,W)
    params = _make_params(k_p, Cin, Ch)

    y, h_last = temporal_encoder(x, params)
    y = jax.block_until_ready(y)
    h_last = jax.block_until_ready(h_last)

    # Validate against a pure-JAX f32 reference of the same ConvGRU math.
    x_nhwc = jnp.transpose(x, (0, 1, 3, 4, 2))
    y_ref, h_last_ref = _reference_nhwc(x_nhwc, params)
    y_ref = jnp.transpose(y_ref, (0, 1, 4, 2, 3))
    h_last_ref = jnp.transpose(h_last_ref, (0, 3, 1, 2))

    assert y.shape == (B, T, Ch, H, W) and h_last.shape == (B, Ch, H, W)
    # bf16 MXU operands inside the recurrence -> slightly looser tolerance.
    assert jnp.allclose(y, y_ref, atol=3e-2, rtol=3e-2), \
        float(jnp.max(jnp.abs(y - y_ref)))
    assert jnp.allclose(h_last, h_last_ref, atol=3e-2, rtol=3e-2), \
        float(jnp.max(jnp.abs(h_last - h_last_ref)))

    print("KERNEL_OK")
</pallas_src>

<mosaic_0001>
module attributes {stable_mosaic.version = 11 : i64} {
  func.func @_convgru_kernel(%arg0: i32, %arg1: i32, %arg2: memref<1x1x288x64xf32, #tpu.memory_space<vmem>>, %arg3: memref<1x1x288x32xf32, #tpu.memory_space<vmem>>, %arg4: memref<9x32x64xbf16, #tpu.memory_space<vmem>>, %arg5: memref<9x32x32xbf16, #tpu.memory_space<vmem>>, %arg6: memref<1x1x288x32xf32, #tpu.memory_space<vmem>>, %arg7: memref<1x288x32xf32, #tpu.memory_space<vmem>>, %arg8: memref<339x32xbf16, #tpu.memory_space<vmem>>, %arg9: memref<288x32xf32, #tpu.memory_space<vmem>>) attributes {dimension_semantics = [#tpu.dimension_semantics<parallel>, #tpu.dimension_semantics<arbitrary>], iteration_bounds = array<i64: 2, 8>, scalar_prefetch = 0 : i64, scratch_operands = 2 : i64, tpu.core_type = #tpu.core_type<tc>, window_params = [{transform_indices = @transform_0, window_bounds = array<i64: 1, 1, 288, 64>}, {transform_indices = @transform_1, window_bounds = array<i64: 1, 1, 288, 32>}, {pipeline_mode = #tpu.pipeline_mode<synchronous>, transform_indices = @transform_2, window_bounds = array<i64: 9, 32, 64>}, {pipeline_mode = #tpu.pipeline_mode<synchronous>, transform_indices = @transform_3, window_bounds = array<i64: 9, 32, 32>}, {transform_indices = @transform_4, window_bounds = array<i64: 1, 1, 288, 32>}, {transform_indices = @transform_5, window_bounds = array<i64: 1, 288, 32>}]} {
    %c0_i32 = arith.constant 0 : i32
    %0 = arith.cmpi eq, %arg1, %c0_i32 : i32
    %1 = arith.extui %0 : i1 to i32
    %c0_i32_0 = arith.constant 0 : i32
    %2 = arith.cmpi ne, %1, %c0_i32_0 : i32
    scf.if %2 {
      %cst_114 = arith.constant 0.000000e+00 : bf16
      %137 = vector.broadcast %cst_114 : bf16 to vector<339x32xbf16>
      %c0_115 = arith.constant 0 : index
      %c0_116 = arith.constant 0 : index
      %138 = vector.load %arg8[%c0_115, %c0_116] : memref<339x32xbf16, #tpu.memory_space<vmem>>, vector<339x32xbf16>
      tpu.vector_store %arg8[%c0_115, %c0_116], %137 {strides = array<i32>} : memref<339x32xbf16, #tpu.memory_space<vmem>>, vector<339x32xbf16>,
      %cst_117 = arith.constant 0.000000e+00 : f32
      %139 = vector.broadcast %cst_117 : f32 to vector<288x32xf32>
      %c0_118 = arith.constant 0 : index
      %c0_119 = arith.constant 0 : index
      %140 = vector.load %arg9[%c0_118, %c0_119] : memref<288x32xf32, #tpu.memory_space<vmem>>, vector<288x32xf32>
      tpu.vector_store %arg9[%c0_118, %c0_119], %139 {strides = array<i32>} : memref<288x32xf32, #tpu.memory_space<vmem>>, vector<288x32xf32>,
    } else {
    }
    %3 = tpu.iota {dimensions = array<i32: 1>} : vector<16x18x1xi32>
    %c0_i32_1 = arith.constant 0 : i32
    %4 = vector.broadcast %c0_i32_1 : i32 to vector<16x18x1xi32>
    %5 = arith.cmpi sgt, %3, %4 : vector<16x18x1xi32>
    %c17_i32 = arith.constant 17 : i32
    %6 = vector.broadcast %c17_i32 : i32 to vector<16x18x1xi32>
    %7 = arith.cmpi slt, %3, %6 : vector<16x18x1xi32>
    %8 = arith.andi %5, %7 : vector<16x18x1xi1>
    %9 = arith.extui %8 : vector<16x18x1xi1> to vector<16x18x1xi32>
    %10 = arith.sitofp %9 : vector<16x18x1xi32> to vector<16x18x1xf32>
    %11 = vector.shape_cast %10 : vector<16x18x1xf32> to vector<288x1xf32>
    %c0 = arith.constant 0 : index
    %c0_2 = arith.constant 0 : index
    %12 = vector.load %arg9[%c0, %c0_2] : memref<288x32xf32, #tpu.memory_space<vmem>>, vector<288x32xf32>
    %c0_3 = arith.constant 0 : index
    %c0_4 = arith.constant 0 : index
    %c0_5 = arith.constant 0 : index
    %c0_6 = arith.constant 0 : index
    %13 = vector.load %arg2[%c0_3, %c0_4, %c0_5, %c0_6] : memref<1x1x288x64xf32, #tpu.memory_space<vmem>>, vector<1x1x288x64xf32>
    %14 = vector.shape_cast %13 : vector<1x1x288x64xf32> to vector<288x64xf32>
    %c13 = arith.constant 13 : index
    %c0_7 = arith.constant 0 : index
    %15 = vector.load %arg8[%c13, %c0_7] : memref<339x32xbf16, #tpu.memory_space<vmem>>, vector<288x32xbf16>
    %c0_8 = arith.constant 0 : index
    %c0_9 = arith.constant 0 : index
    %c0_10 = arith.constant 0 : index
    %16 = vector.load %arg4[%c0_8, %c0_9, %c0_10] : memref<9x32x64xbf16, #tpu.memory_space<vmem>>, vector<1x32x64xbf16>
    %17 = vector.shape_cast %16 : vector<1x32x64xbf16> to vector<32x64xbf16>
    %cst = arith.constant dense<0.000000e+00> : vector<288x64xf32>
    %18 = tpu.matmul %15, %17, %cst {dimension_numbers = #tpu.dot_dimension_numbers<[1], [0], [0], [1], [0, 0, 1, 1], [], []>} : vector<288x32xbf16>, vector<32x64xbf16>, vector<288x64xf32> -> vector<288x64xf32>
    %19 = arith.addf %14, %18 : vector<288x64xf32>
    %c14 = arith.constant 14 : index
    %c0_11 = arith.constant 0 : index
    %20 = vector.load %arg8[%c14, %c0_11] : memref<339x32xbf16, #tpu.memory_space<vmem>>, vector<288x32xbf16>
    %c1 = arith.constant 1 : index
    %c0_12 = arith.constant 0 : index
    %c0_13 = arith.constant 0 : index
    %21 = vector.load %arg4[%c1, %c0_12, %c0_13] : memref<9x32x64xbf16, #tpu.memory_space<vmem>>, vector<1x32x64xbf16>
    %22 = vector.shape_cast %21 : vector<1x32x64xbf16> to vector<32x64xbf16>
    %cst_14 = arith.constant dense<0.000000e+00> : vector<288x64xf32>
    %23 = tpu.matmul %20, %22, %cst_14 {dimension_numbers = #tpu.dot_dimension_numbers<[1], [0], [0], [1], [0, 0, 1, 1], [], []>} : vector<288x32xbf16>, vector<32x64xbf16>, vector<288x64xf32> -> vector<288x64xf32>
    %24 = arith.addf %19, %23 : vector<288x64xf32>
    %c15 = arith.constant 15 : index
    %c0_15 = arith.constant 0 : index
    %25 = vector.load %arg8[%c15, %c0_15] : memref<339x32xbf16, #tpu.memory_space<vmem>>, vector<288x32xbf16>
    %c2 = arith.constant 2 : index
    %c0_16 = arith.constant 0 : index
    %c0_17 = arith.constant 0 : index
    %26 = vector.load %arg4[%c2, %c0_16, %c0_17] : memref<9x32x64xbf16, #tpu.memory_space<vmem>>, vector<1x32x64xbf16>
    %27 = vector.shape_cast %26 : vector<1x32x64xbf16> to vector<32x64xbf16>
    %cst_18 = arith.constant dense<0.000000e+00> : vector<288x64xf32>
    %28 = tpu.matmul %25, %27, %cst_18 {dimension_numbers = #tpu.dot_dimension_numbers<[1], [0], [0], [1], [0, 0, 1, 1], [], []>} : vector<288x32xbf16>, vector<32x64xbf16>, vector<288x64xf32> -> vector<288x64xf32>
    %29 = arith.addf %24, %28 : vector<288x64xf32>
    %c31 = arith.constant 31 : index
    %c0_19 = arith.constant 0 : index
    %30 = vector.load %arg8[%c31, %c0_19] : memref<339x32xbf16, #tpu.memory_space<vmem>>, vector<288x32xbf16>
    %c3 = arith.constant 3 : index
    %c0_20 = arith.constant 0 : index
    %c0_21 = arith.constant 0 : index
    %31 = vector.load %arg4[%c3, %c0_20, %c0_21] : memref<9x32x64xbf16, #tpu.memory_space<vmem>>, vector<1x32x64xbf16>
    %32 = vector.shape_cast %31 : vector<1x32x64xbf16> to vector<32x64xbf16>
    %cst_22 = arith.constant dense<0.000000e+00> : vector<288x64xf32>
    %33 = tpu.matmul %30, %32, %cst_22 {dimension_numbers = #tpu.dot_dimension_numbers<[1], [0], [0], [1], [0, 0, 1, 1], [], []>} : vector<288x32xbf16>, vector<32x64xbf16>, vector<288x64xf32> -> vector<288x64xf32>
    %34 = arith.addf %29, %33 : vector<288x64xf32>
    %c32 = arith.constant 32 : index
    %c0_23 = arith.constant 0 : index
    %35 = vector.load %arg8[%c32, %c0_23] : memref<339x32xbf16, #tpu.memory_space<vmem>>, vector<288x32xbf16>
    %c4 = arith.constant 4 : index
    %c0_24 = arith.constant 0 : index
    %c0_25 = arith.constant 0 : index
    %36 = vector.load %arg4[%c4, %c0_24, %c0_25] : memref<9x32x64xbf16, #tpu.memory_space<vmem>>, vector<1x32x64xbf16>
    %37 = vector.shape_cast %36 : vector<1x32x64xbf16> to vector<32x64xbf16>
    %cst_26 = arith.constant dense<0.000000e+00> : vector<288x64xf32>
    %38 = tpu.matmul %35, %37, %cst_26 {dimension_numbers = #tpu.dot_dimension_numbers<[1], [0], [0], [1], [0, 0, 1, 1], [], []>} : vector<288x32xbf16>, vector<32x64xbf16>, vector<288x64xf32> -> vector<288x64xf32>
    %39 = arith.addf %34, %38 : vector<288x64xf32>
    %c33 = arith.constant 33 : index
    %c0_27 = arith.constant 0 : index
    %40 = vector.load %arg8[%c33, %c0_27] : memref<339x32xbf16, #tpu.memory_space<vmem>>, vector<288x32xbf16>
    %c5 = arith.constant 5 : index
    %c0_28 = arith.constant 0 : index
    %c0_29 = arith.constant 0 : index
    %41 = vector.load %arg4[%c5, %c0_28, %c0_29] : memref<9x32x64xbf16, #tpu.memory_space<vmem>>, vector<1x32x64xbf16>
    %42 = vector.shape_cast %41 : vector<1x32x64xbf16> to vector<32x64xbf16>
    %cst_30 = arith.constant dense<0.000000e+00> : vector<288x64xf32>
    %43 = tpu.matmul %40, %42, %cst_30 {dimension_numbers = #tpu.dot_dimension_numbers<[1], [0], [0], [1], [0, 0, 1, 1], [], []>} : vector<288x32xbf16>, vector<32x64xbf16>, vector<288x64xf32> -> vector<288x64xf32>
    %44 = arith.addf %39, %43 : vector<288x64xf32>
    %c49 = arith.constant 49 : index
    %c0_31 = arith.constant 0 : index
    %45 = vector.load %arg8[%c49, %c0_31] : memref<339x32xbf16, #tpu.memory_space<vmem>>, vector<288x32xbf16>
    %c6 = arith.constant 6 : index
    %c0_32 = arith.constant 0 : index
    %c0_33 = arith.constant 0 : index
    %46 = vector.load %arg4[%c6, %c0_32, %c0_33] : memref<9x32x64xbf16, #tpu.memory_space<vmem>>, vector<1x32x64xbf16>
    %47 = vector.shape_cast %46 : vector<1x32x64xbf16> to vector<32x64xbf16>
    %cst_34 = arith.constant dense<0.000000e+00> : vector<288x64xf32>
    %48 = tpu.matmul %45, %47, %cst_34 {dimension_numbers = #tpu.dot_dimension_numbers<[1], [0], [0], [1], [0, 0, 1, 1], [], []>} : vector<288x32xbf16>, vector<32x64xbf16>, vector<288x64xf32> -> vector<288x64xf32>
    %49 = arith.addf %44, %48 : vector<288x64xf32>
    %c50 = arith.constant 50 : index
    %c0_35 = arith.constant 0 : index
    %50 = vector.load %arg8[%c50, %c0_35] : memref<339x32xbf16, #tpu.memory_space<vmem>>, vector<288x32xbf16>
    %c7 = arith.constant 7 : index
    %c0_36 = arith.constant 0 : index
    %c0_37 = arith.constant 0 : index
    %51 = vector.load %arg4[%c7, %c0_36, %c0_37] : memref<9x32x64xbf16, #tpu.memory_space<vmem>>, vector<1x32x64xbf16>
    %52 = vector.shape_cast %51 : vector<1x32x64xbf16> to vector<32x64xbf16>
    %cst_38 = arith.constant dense<0.000000e+00> : vector<288x64xf32>
    %53 = tpu.matmul %50, %52, %cst_38 {dimension_numbers = #tpu.dot_dimension_numbers<[1], [0], [0], [1], [0, 0, 1, 1], [], []>} : vector<288x32xbf16>, vector<32x64xbf16>, vector<288x64xf32> -> vector<288x64xf32>
    %54 = arith.addf %49, %53 : vector<288x64xf32>
    %c51 = arith.constant 51 : index
    %c0_39 = arith.constant 0 : index
    %55 = vector.load %arg8[%c51, %c0_39] : memref<339x32xbf16, #tpu.memory_space<vmem>>, vector<288x32xbf16>
    %c8 = arith.constant 8 : index
    %c0_40 = arith.constant 0 : index
    %c0_41 = arith.constant 0 : index
    %56 = vector.load %arg4[%c8, %c0_40, %c0_41] : memref<9x32x64xbf16, #tpu.memory_space<vmem>>, vector<1x32x64xbf16>
    %57 = vector.shape_cast %56 : vector<1x32x64xbf16> to vector<32x64xbf16>
    %cst_42 = arith.constant dense<0.000000e+00> : vector<288x64xf32>
    %58 = tpu.matmul %55, %57, %cst_42 {dimension_numbers = #tpu.dot_dimension_numbers<[1], [0], [0], [1], [0, 0, 1, 1], [], []>} : vector<288x32xbf16>, vector<32x64xbf16>, vector<288x64xf32> -> vector<288x64xf32>
    %59 = arith.addf %54, %58 : vector<288x64xf32>
    %60 = vector.extract_strided_slice %59 {offsets = [0, 0], sizes = [288, 32], strides = [1, 1]} : vector<288x64xf32> to vector<288x32xf32>
    %61 = arith.negf %60 : vector<288x32xf32>
    %62 = math.exp %61 : vector<288x32xf32>
    %cst_43 = arith.constant 1.000000e+00 : f32
    %63 = vector.broadcast %cst_43 : f32 to vector<288x32xf32>
    %64 = arith.addf %63, %62 : vector<288x32xf32>
    %65 = arith.divf %63, %64 : vector<288x32xf32>
    %66 = vector.extract_strided_slice %59 {offsets = [0, 32], sizes = [288, 32], strides = [1, 1]} : vector<288x64xf32> to vector<288x32xf32>
    %67 = arith.negf %66 : vector<288x32xf32>
    %68 = math.exp %67 : vector<288x32xf32>
    %cst_44 = arith.constant 1.000000e+00 : f32
    %69 = vector.broadcast %cst_44 : f32 to vector<288x32xf32>
    %70 = arith.addf %69, %68 : vector<288x32xf32>
    %71 = arith.divf %69, %70 : vector<288x32xf32>
    %72 = arith.mulf %65, %12 : vector<288x32xf32>
    %73 = arith.truncf %72 : vector<288x32xf32> to vector<288x32xbf16>
    %c32_45 = arith.constant 32 : index
    %c0_46 = arith.constant 0 : index
    %74 = vector.load %arg8[%c32_45, %c0_46] : memref<339x32xbf16, #tpu.memory_space<vmem>>, vector<288x32xbf16>
    tpu.vector_store %arg8[%c32_45, %c0_46], %73 {strides = array<i32>} : memref<339x32xbf16, #tpu.memory_space<vmem>>, vector<288x32xbf16>,
    %c0_47 = arith.constant 0 : index
    %c0_48 = arith.constant 0 : index
    %c0_49 = arith.constant 0 : index
    %c0_50 = arith.constant 0 : index
    %75 = vector.load %arg3[%c0_47, %c0_48, %c0_49, %c0_50] : memref<1x1x288x32xf32, #tpu.memory_space<vmem>>, vector<1x1x288x32xf32>
    %76 = vector.shape_cast %75 : vector<1x1x288x32xf32> to vector<288x32xf32>
    %c13_51 = arith.constant 13 : index
    %c0_52 = arith.constant 0 : index
    %77 = vector.load %arg8[%c13_51, %c0_52] : memref<339x32xbf16, #tpu.memory_space<vmem>>, vector<288x32xbf16>
    %c0_53 = arith.constant 0 : index
    %c0_54 = arith.constant 0 : index
    %c0_55 = arith.constant 0 : index
    %78 = vector.load %arg5[%c0_53, %c0_54, %c0_55] : memref<9x32x32xbf16, #tpu.memory_space<vmem>>, vector<1x32x32xbf16>
    %79 = vector.shape_cast %78 : vector<1x32x32xbf16> to vector<32x32xbf16>
    %cst_56 = arith.constant dense<0.000000e+00> : vector<288x32xf32>
    %80 = tpu.matmul %77, %79, %cst_56 {dimension_numbers = #tpu.dot_dimension_numbers<[1], [0], [0], [1], [0, 0, 1, 1], [], []>} : vector<288x32xbf16>, vector<32x32xbf16>, vector<288x32xf32> -> vector<288x32xf32>
    %81 = arith.addf %76, %80 : vector<288x32xf32>
    %c14_57 = arith.constant 14 : index
    %c0_58 = arith.constant 0 : index
    %82 = vector.load %arg8[%c14_57, %c0_58] : memref<339x32xbf16, #tpu.memory_space<vmem>>, vector<288x32xbf16>
    %c1_59 = arith.constant 1 : index
    %c0_60 = arith.constant 0 : index
    %c0_61 = arith.constant 0 : index
    %83 = vector.load %arg5[%c1_59, %c0_60, %c0_61] : memref<9x32x32xbf16, #tpu.memory_space<vmem>>, vector<1x32x32xbf16>
    %84 = vector.shape_cast %83 : vector<1x32x32xbf16> to vector<32x32xbf16>
    %cst_62 = arith.constant dense<0.000000e+00> : vector<288x32xf32>
    %85 = tpu.matmul %82, %84, %cst_62 {dimension_numbers = #tpu.dot_dimension_numbers<[1], [0], [0], [1], [0, 0, 1, 1], [], []>} : vector<288x32xbf16>, vector<32x32xbf16>, vector<288x32xf32> -> vector<288x32xf32>
    %86 = arith.addf %81, %85 : vector<288x32xf32>
    %c15_63 = arith.constant 15 : index
    %c0_64 = arith.constant 0 : index
    %87 = vector.load %arg8[%c15_63, %c0_64] : memref<339x32xbf16, #tpu.memory_space<vmem>>, vector<288x32xbf16>
    %c2_65 = arith.constant 2 : index
    %c0_66 = arith.constant 0 : index
    %c0_67 = arith.constant 0 : index
    %88 = vector.load %arg5[%c2_65, %c0_66, %c0_67] : memref<9x32x32xbf16, #tpu.memory_space<vmem>>, vector<1x32x32xbf16>
    %89 = vector.shape_cast %88 : vector<1x32x32xbf16> to vector<32x32xbf16>
    %cst_68 = arith.constant dense<0.000000e+00> : vector<288x32xf32>
    %90 = tpu.matmul %87, %89, %cst_68 {dimension_numbers = #tpu.dot_dimension_numbers<[1], [0], [0], [1], [0, 0, 1, 1], [], []>} : vector<288x32xbf16>, vector<32x32xbf16>, vector<288x32xf32> -> vector<288x32xf32>
    %91 = arith.addf %86, %90 : vector<288x32xf32>
    %c31_69 = arith.constant 31 : index
    %c0_70 = arith.constant 0 : index
    %92 = vector.load %arg8[%c31_69, %c0_70] : memref<339x32xbf16, #tpu.memory_space<vmem>>, vector<288x32xbf16>
    %c3_71 = arith.constant 3 : index
    %c0_72 = arith.constant 0 : index
    %c0_73 = arith.constant 0 : index
    %93 = vector.load %arg5[%c3_71, %c0_72, %c0_73] : memref<9x32x32xbf16, #tpu.memory_space<vmem>>, vector<1x32x32xbf16>
    %94 = vector.shape_cast %93 : vector<1x32x32xbf16> to vector<32x32xbf16>
    %cst_74 = arith.constant dense<0.000000e+00> : vector<288x32xf32>
    %95 = tpu.matmul %92, %94, %cst_74 {dimension_numbers = #tpu.dot_dimension_numbers<[1], [0], [0], [1], [0, 0, 1, 1], [], []>} : vector<288x32xbf16>, vector<32x32xbf16>, vector<288x32xf32> -> vector<288x32xf32>
    %96 = arith.addf %91, %95 : vector<288x32xf32>
    %c32_75 = arith.constant 32 : index
    %c0_76 = arith.constant 0 : index
    %97 = vector.load %arg8[%c32_75, %c0_76] : memref<339x32xbf16, #tpu.memory_space<vmem>>, vector<288x32xbf16>
    %c4_77 = arith.constant 4 : index
    %c0_78 = arith.constant 0 : index
    %c0_79 = arith.constant 0 : index
    %98 = vector.load %arg5[%c4_77, %c0_78, %c0_79] : memref<9x32x32xbf16, #tpu.memory_space<vmem>>, vector<1x32x32xbf16>
    %99 = vector.shape_cast %98 : vector<1x32x32xbf16> to vector<32x32xbf16>
    %cst_80 = arith.constant dense<0.000000e+00> : vector<288x32xf32>
    %100 = tpu.matmul %97, %99, %cst_80 {dimension_numbers = #tpu.dot_dimension_numbers<[1], [0], [0], [1], [0, 0, 1, 1], [], []>} : vector<288x32xbf16>, vector<32x32xbf16>, vector<288x32xf32> -> vector<288x32xf32>
    %101 = arith.addf %96, %100 : vector<288x32xf32>
    %c33_81 = arith.constant 33 : index
    %c0_82 = arith.constant 0 : index
    %102 = vector.load %arg8[%c33_81, %c0_82] : memref<339x32xbf16, #tpu.memory_space<vmem>>, vector<288x32xbf16>
    %c5_83 = arith.constant 5 : index
    %c0_84 = arith.constant 0 : index
    %c0_85 = arith.constant 0 : index
    %103 = vector.load %arg5[%c5_83, %c0_84, %c0_85] : memref<9x32x32xbf16, #tpu.memory_space<vmem>>, vector<1x32x32xbf16>
    %104 = vector.shape_cast %103 : vector<1x32x32xbf16> to vector<32x32xbf16>
    %cst_86 = arith.constant dense<0.000000e+00> : vector<288x32xf32>
    %105 = tpu.matmul %102, %104, %cst_86 {dimension_numbers = #tpu.dot_dimension_numbers<[1], [0], [0], [1], [0, 0, 1, 1], [], []>} : vector<288x32xbf16>, vector<32x32xbf16>, vector<288x32xf32> -> vector<288x32xf32>
    %106 = arith.addf %101, %105 : vector<288x32xf32>
    %c49_87 = arith.constant 49 : index
    %c0_88 = arith.constant 0 : index
    %107 = vector.load %arg8[%c49_87, %c0_88] : memref<339x32xbf16, #tpu.memory_space<vmem>>, vector<288x32xbf16>
    %c6_89 = arith.constant 6 : index
    %c0_90 = arith.constant 0 : index
    %c0_91 = arith.constant 0 : index
    %108 = vector.load %arg5[%c6_89, %c0_90, %c0_91] : memref<9x32x32xbf16, #tpu.memory_space<vmem>>, vector<1x32x32xbf16>
    %109 = vector.shape_cast %108 : vector<1x32x32xbf16> to vector<32x32xbf16>
    %cst_92 = arith.constant dense<0.000000e+00> : vector<288x32xf32>
    %110 = tpu.matmul %107, %109, %cst_92 {dimension_numbers = #tpu.dot_dimension_numbers<[1], [0], [0], [1], [0, 0, 1, 1], [], []>} : vector<288x32xbf16>, vector<32x32xbf16>, vector<288x32xf32> -> vector<288x32xf32>
    %111 = arith.addf %106, %110 : vector<288x32xf32>
    %c50_93 = arith.constant 50 : index
    %c0_94 = arith.constant 0 : index
    %112 = vector.load %arg8[%c50_93, %c0_94] : memref<339x32xbf16, #tpu.memory_space<vmem>>, vector<288x32xbf16>
    %c7_95 = arith.constant 7 : index
    %c0_96 = arith.constant 0 : index
    %c0_97 = arith.constant 0 : index
    %113 = vector.load %arg5[%c7_95, %c0_96, %c0_97] : memref<9x32x32xbf16, #tpu.memory_space<vmem>>, vector<1x32x32xbf16>
    %114 = vector.shape_cast %113 : vector<1x32x32xbf16> to vector<32x32xbf16>
    %cst_98 = arith.constant dense<0.000000e+00> : vector<288x32xf32>
    %115 = tpu.matmul %112, %114, %cst_98 {dimension_numbers = #tpu.dot_dimension_numbers<[1], [0], [0], [1], [0, 0, 1, 1], [], []>} : vector<288x32xbf16>, vector<32x32xbf16>, vector<288x32xf32> -> vector<288x32xf32>
    %116 = arith.addf %111, %115 : vector<288x32xf32>
    %c51_99 = arith.constant 51 : index
    %c0_100 = arith.constant 0 : index
    %117 = vector.load %arg8[%c51_99, %c0_100] : memref<339x32xbf16, #tpu.memory_space<vmem>>, vector<288x32xbf16>
    %c8_101 = arith.constant 8 : index
    %c0_102 = arith.constant 0 : index
    %c0_103 = arith.constant 0 : index
    %118 = vector.load %arg5[%c8_101, %c0_102, %c0_103] : memref<9x32x32xbf16, #tpu.memory_space<vmem>>, vector<1x32x32xbf16>
    %119 = vector.shape_cast %118 : vector<1x32x32xbf16> to vector<32x32xbf16>
    %cst_104 = arith.constant dense<0.000000e+00> : vector<288x32xf32>
    %120 = tpu.matmul %117, %119, %cst_104 {dimension_numbers = #tpu.dot_dimension_numbers<[1], [0], [0], [1], [0, 0, 1, 1], [], []>} : vector<288x32xbf16>, vector<32x32xbf16>, vector<288x32xf32> -> vector<288x32xf32>
    %121 = arith.addf %116, %120 : vector<288x32xf32>
    %122 = math.tanh %121 : vector<288x32xf32>
    %123 = arith.subf %122, %12 : vector<288x32xf32>
    %124 = arith.mulf %71, %123 : vector<288x32xf32>
    %125 = arith.addf %12, %124 : vector<288x32xf32>
    %126 = vector.broadcast %11 : vector<288x1xf32> to vector<288x32xf32>
    %127 = arith.mulf %125, %126 : vector<288x32xf32>
    %c0_105 = arith.constant 0 : index
    %c0_106 = arith.constant 0 : index
    %128 = vector.load %arg9[%c0_105, %c0_106] : memref<288x32xf32, #tpu.memory_space<vmem>>, vector<288x32xf32>
    tpu.vector_store %arg9[%c0_105, %c0_106], %127 {strides = array<i32>} : memref<288x32xf32, #tpu.memory_space<vmem>>, vector<288x32xf32>,
    %129 = arith.truncf %127 : vector<288x32xf32> to vector<288x32xbf16>
    %c32_107 = arith.constant 32 : index
    %c0_108 = arith.constant 0 : index
    %130 = vector.load %arg8[%c32_107, %c0_108] : memref<339x32xbf16, #tpu.memory_space<vmem>>, vector<288x32xbf16>
    tpu.vector_store %arg8[%c32_107, %c0_108], %129 {strides = array<i32>} : memref<339x32xbf16, #tpu.memory_space<vmem>>, vector<288x32xbf16>,
    %c0_109 = arith.constant 0 : index
    %c0_110 = arith.constant 0 : index
    %c0_111 = arith.constant 0 : index
    %c0_112 = arith.constant 0 : index
    %131 = vector.load %arg6[%c0_109, %c0_110, %c0_111, %c0_112] : memref<1x1x288x32xf32, #tpu.memory_space<vmem>>, vector<1x1x288x32xf32>
    %132 = vector.shape_cast %131 : vector<1x1x288x32xf32> to vector<288x32xf32>
    %133 = vector.shape_cast %127 : vector<288x32xf32> to vector<1x1x288x32xf32>
    tpu.vector_store %arg6[%c0_109, %c0_110, %c0_111, %c0_112], %133 {strides = array<i32>} : memref<1x1x288x32xf32, #tpu.memory_space<vmem>>, vector<1x1x288x32xf32>,
    %c7_i32 = arith.constant 7 : i32
    %134 = arith.cmpi eq, %arg1, %c7_i32 : i32
    %135 = arith.extui %134 : i1 to i32
    %c0_i32_113 = arith.constant 0 : i32
    %136 = arith.cmpi ne, %135, %c0_i32_113 : i32
    scf.if %136 {
      %c0_114 = arith.constant 0 : index
      %c0_115 = arith.constant 0 : index
      %c0_116 = arith.constant 0 : index
      %137 = vector.load %arg7[%c0_114, %c0_115, %c0_116] : memref<1x288x32xf32, #tpu.memory_space<vmem>>, vector<1x288x32xf32>
      %138 = vector.shape_cast %137 : vector<1x288x32xf32> to vector<288x32xf32>
      %139 = vector.shape_cast %127 : vector<288x32xf32> to vector<1x288x32xf32>
      tpu.vector_store %arg7[%c0_114, %c0_115, %c0_116], %139 {strides = array<i32>} : memref<1x288x32xf32, #tpu.memory_space<vmem>>, vector<1x288x32xf32>,
    } else {
    }
    return
  }
  func.func @transform_0(%arg0: i32, %arg1: i32) -> (i32, i32, i32, i32) {
    %c0_i32 = arith.constant 0 : i32
    %c0_i32_0 = arith.constant 0 : i32
    %c0_i32_1 = arith.constant 0 : i32
    return %arg0, %arg1, %c0_i32, %c0_i32_0 : i32, i32, i32, i32
  }
  func.func @transform_1(%arg0: i32, %arg1: i32) -> (i32, i32, i32, i32) {
    %c0_i32 = arith.constant 0 : i32
    %c0_i32_0 = arith.constant 0 : i32
    %c0_i32_1 = arith.constant 0 : i32
    return %arg0, %arg1, %c0_i32, %c0_i32_0 : i32, i32, i32, i32
  }
  func.func @transform_2(%arg0: i32, %arg1: i32) -> (i32, i32, i32) {
    %c0_i32 = arith.constant 0 : i32
    %c0_i32_0 = arith.constant 0 : i32
    %c0_i32_1 = arith.constant 0 : i32
    %c0_i32_2 = arith.constant 0 : i32
    return %c0_i32, %c0_i32_0, %c0_i32_1 : i32, i32, i32
  }
  func.func @transform_3(%arg0: i32, %arg1: i32) -> (i32, i32, i32) {
    %c0_i32 = arith.constant 0 : i32
    %c0_i32_0 = arith.constant 0 : i32
    %c0_i32_1 = arith.constant 0 : i32
    %c0_i32_2 = arith.constant 0 : i32
    return %c0_i32, %c0_i32_0, %c0_i32_1 : i32, i32, i32
  }
  func.func @transform_4(%arg0: i32, %arg1: i32) -> (i32, i32, i32, i32) {
    %c0_i32 = arith.constant 0 : i32
    %c0_i32_0 = arith.constant 0 : i32
    %c0_i32_1 = arith.constant 0 : i32
    return %arg0, %arg1, %c0_i32, %c0_i32_0 : i32, i32, i32, i32
  }
  func.func @transform_5(%arg0: i32, %arg1: i32) -> (i32, i32, i32) {
    %c0_i32 = arith.constant 0 : i32
    %c0_i32_0 = arith.constant 0 : i32
    %c0_i32_1 = arith.constant 0 : i32
    return %arg0, %c0_i32, %c0_i32_0 : i32, i32, i32
  }
}

</mosaic_0001>

<llo_original>
// kernel: tpu_custom_call.1
$region0: #{tpu_custom_call.1}
  #allocation0 [shape = 'u32[]', space=smem, size = 0x4, offset = 0x4, fixed_abs, tag = 'smem constant byte address 0x4 - core index']
  #allocation1 [shape = 'u32[144,128]{1,0:T(1,128)}', space=vmem, size = 0x12000, scoped, tag = 'internal scratch']
  #allocation2 [shape = 'bf16[339,32]{1,0:T(8,128)(2,1)}', space=vmem, size = 0x15800, scoped, tag = 'scratch operand']
  #allocation3 [shape = 'f32[288,32]{1,0:T(8,128)}', space=vmem, size = 0x24000, scoped, tag = 'scratch operand']
  %s0 = inlined_call_operand.vmem [shape: f32[2,8,288,64], index: 0, kind: input, shape index: {}]
  %s1 = inlined_call_operand.vmem [shape: f32[2,8,288,32], index: 1, kind: input, shape index: {}]
  %s2 = inlined_call_operand.vmem [shape: bf16[9,32,64], index: 2, kind: input, shape index: {}]
  %s3 = inlined_call_operand.vmem [shape: bf16[9,32,32], index: 3, kind: input, shape index: {}]
  %s4 = inlined_call_operand.vmem [shape: f32[2,8,288,32], index: 4, kind: output, shape index: {0}]
  %s5 = inlined_call_operand.vmem [shape: f32[2,288,32], index: 5, kind: output, shape index: {1}]
  %6 = xla_tuple %s4, %s5
  %s7 = sld [smem:[#allocation0]]
  $region65: #{tpu_custom_call.1} parent=0
    _
  %s9 = ssub.s32 1, %s7
  %s10 = scalar_select 0, %s9, %s7
  loop: start=0, step=1, limit=18
  $region2: #{tpu_custom_call.1} parent=0 // loop_pre_header
    _
  $region3: #{tpu_custom_call.1} parent=0 // loop_header
    %s12 = sphi 0, %s16
    %p13 = scmp.ge.s32.totalorder %s12, 18
    %s19 = sphi 0, %s31
    %s20 = sphi 0, %s27
    %s21 = sphi 0, %s19
    %s22 = sphi 0, %s20
    %s23 = sphi 0, %s21
    %s24 = sphi 0, %s22
    %s36 = sphi 0, %s38
    %s39 = sphi 0, %s36
    %s40 = sphi 0, %s39
    %s56 = sphi 0, %s40
    %s64 = sphi 0, %s66
    %s67 = sphi 0, %s64
    %s68 = sphi 0, %s67
    %s84 = sphi 0, %s68
    %s88 = sphi 0, %s88
    %s90 = sphi 0, %s88
    %s91 = sphi 0, %s90
    %s105 = sphi 0, %s91
    %s109 = sphi 0, %s109
    %s111 = sphi 0, %s109
    %s112 = sphi 0, %s111
    %s126 = sphi 0, %s112
    %s134 = sphi 0, %s136
    %s137 = sphi 0, %s134
    %s138 = sphi 0, %s137
    %s154 = sphi 0, %s138
    %s160 = sphi 0, %s162
    %s163 = sphi 0, %s160
    %s164 = sphi 0, %s163
    %s180 = sphi 0, %s164
  $region4: #{tpu_custom_call.1} parent=0 // loop_header_branch
    %15 = sbr.rel (%p13) target = $region8
  $region5: #{tpu_custom_call.1} parent=0 // loop_body
    %s17 = ssub.s32 %s12, 1
    %s18 = ssub.s32 %s12, 2
    %s25 = sadd.s32 1, %s20
    %p26 = scmp.ge.s32.totalorder %s25, 8
    %s27 = scalar_select %p26, 0, %s25
    %s28 = sadd.s32 1, %s19
    %s29 = scalar_select %p26, %s28, %s19
    %p30 = scmp.ge.s32.totalorder %s29, 2
    %s31 = scalar_select %p30, 0, %s29
    %s32 = ssub.s32 %s19, %s31
    %s33 = ssub.s32 %s20, %s27
    %s34 = sor.u32 %s32, %s33
    %p35 = scmp.eq.s32.totalorder %s34, 0
    %s37 = sadd.s32 %s36, 1
    %s38 = scalar_select %p35, %s36, %s37
    %p41 = pneg %p35
    %p42 = scmp.eq.s32.totalorder %s12, 15
    %p43 = por %p41, %p42
    %p44 = scmp.ne.s32.totalorder %s36, %s39
    %p45 = scmp.eq.s32.totalorder %s12, 0
    %p46 = por %p44, %p45
    %p47 = scmp.ne.s32.totalorder %s36, %s39
    %p48 = scmp.eq.s32.totalorder %s17, 15
    %p49 = por %p47, %p48
    %p50 = scmp.ne.s32.totalorder %s39, %s40
    %p51 = scmp.eq.s32.totalorder %s17, 0
    %p52 = por %p50, %p51
    %p53 = scmp.ne.s32.totalorder %s39, %s40
    %p54 = scmp.eq.s32.totalorder %s18, 15
    %p55 = por %p53, %p54
    %p57 = scmp.ne.s32.totalorder %s40, %s56
    %p58 = scmp.eq.s32.totalorder %s18, 0
    %p59 = por %p57, %p58
    %s60 = ssub.s32 %s19, %s31
    %s61 = ssub.s32 %s20, %s27
    %s62 = sor.u32 %s60, %s61
    %p63 = scmp.eq.s32.totalorder %s62, 0
    %s65 = sadd.s32 %s64, 1
    %s66 = scalar_select %p63, %s64, %s65
    %p69 = pneg %p63
    %p70 = scmp.eq.s32.totalorder %s12, 15
    %p71 = por %p69, %p70
    %p72 = scmp.ne.s32.totalorder %s64, %s67
    %p73 = scmp.eq.s32.totalorder %s12, 0
    %p74 = por %p72, %p73
    %p75 = scmp.ne.s32.totalorder %s64, %s67
    %p76 = scmp.eq.s32.totalorder %s17, 15
    %p77 = por %p75, %p76
    %p78 = scmp.ne.s32.totalorder %s67, %s68
    %p79 = scmp.eq.s32.totalorder %s17, 0
    %p80 = por %p78, %p79
    %p81 = scmp.ne.s32.totalorder %s67, %s68
    %p82 = scmp.eq.s32.totalorder %s18, 15
    %p83 = por %p81, %p82
    %p85 = scmp.ne.s32.totalorder %s68, %s84
    %p86 = scmp.eq.s32.totalorder %s18, 0
    %p87 = por %p85, %p86
    %s89 = sadd.s32 %s88, 1
    %p92 = scmp.eq.s32.totalorder %s12, 15
    %p93 = scmp.ne.s32.totalorder %s88, %s90
    %p94 = scmp.eq.s32.totalorder %s12, 0
    %p95 = por %p93, %p94
    %p96 = scmp.ne.s32.totalorder %s88, %s90
    %p97 = scmp.eq.s32.totalorder %s17, 15
    %p98 = por %p96, %p97
    %p99 = scmp.ne.s32.totalorder %s90, %s91
    %p100 = scmp.eq.s32.totalorder %s17, 0
    %p101 = por %p99, %p100
    %p102 = scmp.ne.s32.totalorder %s90, %s91
    %p103 = scmp.eq.s32.totalorder %s18, 15
    %p104 = por %p102, %p103
    %p106 = scmp.ne.s32.totalorder %s91, %s105
    %p107 = scmp.eq.s32.totalorder %s18, 0
    %p108 = por %p106, %p107
    %s110 = sadd.s32 %s109, 1
    %p113 = scmp.eq.s32.totalorder %s12, 15
    %p114 = scmp.ne.s32.totalorder %s109, %s111
    %p115 = scmp.eq.s32.totalorder %s12, 0
    %p116 = por %p114, %p115
    %p117 = scmp.ne.s32.totalorder %s109, %s111
    %p118 = scmp.eq.s32.totalorder %s17, 15
    %p119 = por %p117, %p118
    %p120 = scmp.ne.s32.totalorder %s111, %s112
    %p121 = scmp.eq.s32.totalorder %s17, 0
    %p122 = por %p120, %p121
    %p123 = scmp.ne.s32.totalorder %s111, %s112
    %p124 = scmp.eq.s32.totalorder %s18, 15
    %p125 = por %p123, %p124
    %p127 = scmp.ne.s32.totalorder %s112, %s126
    %p128 = scmp.eq.s32.totalorder %s18, 0
    %p129 = por %p127, %p128
    %s130 = ssub.s32 %s19, %s31
    %s131 = ssub.s32 %s20, %s27
    %s132 = sor.u32 %s130, %s131
    %p133 = scmp.eq.s32.totalorder %s132, 0
    %s135 = sadd.s32 %s134, 1
    %s136 = scalar_select %p133, %s134, %s135
    %p139 = pneg %p133
    %p140 = scmp.eq.s32.totalorder %s12, 15
    %p141 = por %p139, %p140
    %p142 = scmp.ne.s32.totalorder %s134, %s137
    %p143 = scmp.eq.s32.totalorder %s12, 0
    %p144 = por %p142, %p143
    %p145 = scmp.ne.s32.totalorder %s134, %s137
    %p146 = scmp.eq.s32.totalorder %s17, 15
    %p147 = por %p145, %p146
    %p148 = scmp.ne.s32.totalorder %s137, %s138
    %p149 = scmp.eq.s32.totalorder %s17, 0
    %p150 = por %p148, %p149
    %p151 = scmp.ne.s32.totalorder %s137, %s138
    %p152 = scmp.eq.s32.totalorder %s18, 15
    %p153 = por %p151, %p152
    %p155 = scmp.ne.s32.totalorder %s138, %s154
    %p156 = scmp.eq.s32.totalorder %s18, 0
    %p157 = por %p155, %p156
    %s158 = ssub.s32 %s19, %s31
    %p159 = scmp.eq.s32.totalorder %s158, 0
    %s161 = sadd.s32 %s160, 1
    %s162 = scalar_select %p159, %s160, %s161
    %p165 = pneg %p159
    %p166 = scmp.eq.s32.totalorder %s12, 15
    %p167 = por %p165, %p166
    %p168 = scmp.ne.s32.totalorder %s160, %s163
    %p169 = scmp.eq.s32.totalorder %s12, 0
    %p170 = por %p168, %p169
    %p171 = scmp.ne.s32.totalorder %s160, %s163
    %p172 = scmp.eq.s32.totalorder %s17, 15
    %p173 = por %p171, %p172
    %p174 = scmp.ne.s32.totalorder %s163, %s164
    %p175 = scmp.eq.s32.totalorder %s17, 0
    %p176 = por %p174, %p175
    %p177 = scmp.ne.s32.totalorder %s163, %s164
    %p178 = scmp.eq.s32.totalorder %s18, 15
    %p179 = por %p177, %p178
    %p181 = scmp.ne.s32.totalorder %s164, %s180
    %p182 = scmp.eq.s32.totalorder %s18, 0
    %p183 = por %p181, %p182
    %p184 = scmp.le.s32.totalorder 1, %s12
    %p185 = scmp.lt.s32.totalorder %s12, 17
    %p186 = pnand %p184, %p185
    %p187 = pneg %p186
    // Predicated region
    $region9: #{tpu_custom_call.1} parent=5 // pred_check
      _
    $region10: #{tpu_custom_call.1} parent=5 // pred_check_branch
      %189 = sbr.rel (%p186) target = $region12
    $region11: #{tpu_custom_call.1} parent=5 // pred_region
      %s190 = ssub.s32 %s12, 1
      // Predicated region
      $region13: #{tpu_custom_call.1} parent=11 // pred_check
        %p191 = pneg %p101
      $region14: #{tpu_custom_call.1} parent=11 // pred_check_branch
        %193 = sbr.rel (%p191) target = $region16
      $region15: #{tpu_custom_call.1} parent=11 // pred_region
        _
      $region16: #{tpu_custom_call.1} parent=11 // pred_fallthru
        _
      // Predicated region
      $region17: #{tpu_custom_call.1} parent=11 // pred_check
        %p194 = pneg %p122
      $region18: #{tpu_custom_call.1} parent=11 // pred_check_branch
        %196 = sbr.rel (%p194) target = $region20
      $region19: #{tpu_custom_call.1} parent=11 // pred_region
        _
      $region20: #{tpu_custom_call.1} parent=11 // pred_fallthru
        _
    $region12: #{tpu_custom_call.1} parent=5 // pred_fallthru
      _
    %p197 = scmp.lt.s32.totalorder %s12, 16
    // Predicated region
    $region21: #{tpu_custom_call.1} parent=5 // pred_check
      %p198 = pneg %p197
    $region22: #{tpu_custom_call.1} parent=5 // pred_check_branch
      %200 = sbr.rel (%p198) target = $region24
    $region23: #{tpu_custom_call.1} parent=5 // pred_region
      // Predicated region
      $region25: #{tpu_custom_call.1} parent=23 // pred_check
        %p201 = pneg %p46
      $region26: #{tpu_custom_call.1} parent=23 // pred_check_branch
        %203 = sbr.rel (%p201) target = $region28
      $region27: #{tpu_custom_call.1} parent=23 // pred_region
        %p204 = scmp.lt.s32.totalorder %s19, 1
        %s205 = scalar_select %p204, %s19, 1
        %p206 = scmp.lt.s32.totalorder %s20, 7
        %s207 = scalar_select %p206, %s20, 7
        %s208 = smul.addr %s207, 36
        %s209 = smul.addr %s205, 288
        %s210 = sadd.s32 %s208, %s209
        %s211 = smul.addr %s210, 8
        %s212 = scalar_lea.vmem %s0, %s211
      $region28: #{tpu_custom_call.1} parent=23 // pred_fallthru
        _
      // Predicated region
      $region29: #{tpu_custom_call.1} parent=23 // pred_check
        %p213 = pneg %p74
      $region30: #{tpu_custom_call.1} parent=23 // pred_check_branch
        %215 = sbr.rel (%p213) target = $region32
      $region31: #{tpu_custom_call.1} parent=23 // pred_region
        %p216 = scmp.lt.s32.totalorder %s19, 1
        %s217 = scalar_select %p216, %s19, 1
        %p218 = scmp.lt.s32.totalorder %s20, 7
        %s219 = scalar_select %p218, %s20, 7
        %s220 = smul.addr %s219, 36
        %s221 = smul.addr %s217, 288
        %s222 = sadd.s32 %s220, %s221
        %s223 = smul.addr %s222, 8
        %s224 = scalar_lea.vmem %s1, %s223
      $region32: #{tpu_custom_call.1} parent=23 // pred_fallthru
        _
    $region24: #{tpu_custom_call.1} parent=5 // pred_fallthru
      _
    %p225 = scmp.le.s32.totalorder 1, %s12
    %p226 = scmp.lt.s32.totalorder %s12, 17
    %p227 = pnand %p225, %p226
    %p228 = pneg %p227
    // Predicated region
    $region33: #{tpu_custom_call.1} parent=5 // pred_check
      _
    $region34: #{tpu_custom_call.1} parent=5 // pred_check_branch
      %230 = sbr.rel (%p227) target = $region36
    $region35: #{tpu_custom_call.1} parent=5 // pred_region
      %s231 = ssub.s32 %s12, 1
      %p232 = scmp.lt.s32.totalorder %s21, 1
      %s233 = scalar_select %p232, %s21, 1
      %p234 = scmp.lt.s32.totalorder %s22, 7
      %s235 = scalar_select %p234, %s22, 7
      %s236 = smul.addr %s235, 36
      %s237 = smul.addr %s233, 288
      %s238 = sadd.s32 %s236, %s237
      %s239 = smul.addr %s238, 8
      %s240 = scalar_lea.vmem %s0, %s239
      %p241 = pneg %p52
      %p242 = pneg %p49
      %p243 = scmp.lt.s32.totalorder %s21, 1
      %s244 = scalar_select %p243, %s21, 1
      %p245 = scmp.lt.s32.totalorder %s22, 7
      %s246 = scalar_select %p245, %s22, 7
      %s247 = smul.addr %s246, 36
      %s248 = smul.addr %s244, 288
      %s249 = sadd.s32 %s247, %s248
      %s250 = smul.addr %s249, 8
      %s251 = scalar_lea.vmem %s1, %s250
      %p252 = pneg %p80
      %p253 = pneg %p77
      %p254 = pneg %p101
      %p255 = pneg %p98
      %p256 = pneg %p122
      %p257 = pneg %p119
      %p258 = pneg %p150
      %p259 = pneg %p147
      %p260 = scmp.lt.s32.totalorder %s21, 1
      %s261 = scalar_select %p260, %s21, 1
      %p262 = scmp.lt.s32.totalorder %s22, 7
      %s263 = scalar_select %p262, %s22, 7
      %s264 = smul.addr %s263, 36
      %s265 = smul.addr %s261, 288
      %s266 = sadd.s32 %s264, %s265
      %s267 = smul.addr %s266, 8
      %s268 = scalar_lea.vmem %s4, %s267
      %p269 = pneg %p176
      %p270 = pneg %p173
      %p271 = scmp.lt.s32.totalorder %s21, 1
      %s272 = scalar_select %p271, %s21, 1
      %s273 = smul.addr %s272, 36
      %s274 = smul.addr %s273, 8
      %s275 = scalar_lea.vmem %s5, %s274
      %p276 = scmp.lt.s32.totalorder %s21, 1
      %s277 = scalar_select %p276, %s21, 1
      %p278 = scmp.lt.s32.totalorder %s22, 7
      %s279 = scalar_select %p278, %s22, 7
      %s280 = smul.addr %s279, 36
      %s281 = smul.addr %s277, 288
      %s282 = sadd.s32 %s280, %s281
      %s283 = smul.addr %s282, 8
      %s284 = scalar_lea.vmem %s0, %s283
      %p285 = scmp.lt.s32.totalorder %s21, 1
      %s286 = scalar_select %p285, %s21, 1
      %p287 = scmp.lt.s32.totalorder %s22, 7
      %s288 = scalar_select %p287, %s22, 7
      %s289 = smul.addr %s288, 36
      %s290 = smul.addr %s286, 288
      %s291 = sadd.s32 %s289, %s290
      %s292 = smul.addr %s291, 8
      %s293 = scalar_lea.vmem %s1, %s292
      %p294 = scmp.lt.s32.totalorder %s21, 1
      %s295 = scalar_select %p294, %s21, 1
      %p296 = scmp.lt.s32.totalorder %s22, 7
      %s297 = scalar_select %p296, %s22, 7
      %s298 = smul.addr %s297, 36
      %s299 = smul.addr %s295, 288
      %s300 = sadd.s32 %s298, %s299
      %s301 = smul.addr %s300, 8
      %s302 = scalar_lea.vmem %s4, %s301
      %p303 = scmp.lt.s32.totalorder %s21, 1
      %s304 = scalar_select %p303, %s21, 1
      %s305 = smul.addr %s304, 36
      %s306 = smul.addr %s305, 8
      %s307 = scalar_lea.vmem %s5, %s306
      %p309 = scmp.eq.s32.totalorder %s22, 0
      // Predicated region
      $region37: #{tpu_custom_call.1} parent=35 // pred_check
        %p310 = pneg %p309
      $region38: #{tpu_custom_call.1} parent=35 // pred_check_branch
        %312 = sbr.rel (%p310) target = $region40
      $region39: #{tpu_custom_call.1} parent=35 // pred_region
        %vm313 = vcmask 257024
        %314 = vst.msk [vmem:[#allocation2] sm:$0xf] %vm313, 0
        %315 = vst.msk [vmem:[#allocation2 + $0x4] sm:$0xf] %vm313, 0
        %316 = vst.msk [vmem:[#allocation2 + $0x8] sm:$0xf] %vm313, 0
        %317 = vst.msk [vmem:[#allocation2 + $0xc] sm:$0xf] %vm313, 0
        %318 = vst.msk [vmem:[#allocation2 + $0x10] sm:$0xf] %vm313, 0
        %319 = vst.msk [vmem:[#allocation2 + $0x14] sm:$0xf] %vm313, 0
        %320 = vst.msk [vmem:[#allocation2 + $0x18] sm:$0xf] %vm313, 0
        %321 = vst.msk [vmem:[#allocation2 + $0x1c] sm:$0xf] %vm313, 0
        %322 = vst.msk [vmem:[#allocation2 + $0x20] sm:$0xf] %vm313, 0
        %323 = vst.msk [vmem:[#allocation2 + $0x24] sm:$0xf] %vm313, 0
        %324 = vst.msk [vmem:[#allocation2 + $0x28] sm:$0xf] %vm313, 0
        %325 = vst.msk [vmem:[#allocation2 + $0x2c] sm:$0xf] %vm313, 0
        %326 = vst.msk [vmem:[#allocation2 + $0x30] sm:$0xf] %vm313, 0
        %327 = vst.msk [vmem:[#allocation2 + $0x34] sm:$0xf] %vm313, 0
        %328 = vst.msk [vmem:[#allocation2 + $0x38] sm:$0xf] %vm313, 0
        %329 = vst.msk [vmem:[#allocation2 + $0x3c] sm:$0xf] %vm313, 0
        %330 = vst.msk [vmem:[#allocation2 + $0x40] sm:$0xf] %vm313, 0
        %331 = vst.msk [vmem:[#allocation2 + $0x44] sm:$0xf] %vm313, 0
        %332 = vst.msk [vmem:[#allocation2 + $0x48] sm:$0xf] %vm313, 0
        %333 = vst.msk [vmem:[#allocation2 + $0x4c] sm:$0xf] %vm313, 0
        %334 = vst.msk [vmem:[#allocation2 + $0x50] sm:$0xf] %vm313, 0
        %335 = vst.msk [vmem:[#allocation2 + $0x54] sm:$0xf] %vm313, 0
        %336 = vst.msk [vmem:[#allocation2 + $0x58] sm:$0xf] %vm313, 0
        %337 = vst.msk [vmem:[#allocation2 + $0x5c] sm:$0xf] %vm313, 0
        %338 = vst.msk [vmem:[#allocation2 + $0x60] sm:$0xf] %vm313, 0
        %339 = vst.msk [vmem:[#allocation2 + $0x64] sm:$0xf] %vm313, 0
        %340 = vst.msk [vmem:[#allocation2 + $0x68] sm:$0xf] %vm313, 0
        %341 = vst.msk [vmem:[#allocation2 + $0x6c] sm:$0xf] %vm313, 0
        %342 = vst.msk [vmem:[#allocation2 + $0x70] sm:$0xf] %vm313, 0
        %343 = vst.msk [vmem:[#allocation2 + $0x74] sm:$0xf] %vm313, 0
        %344 = vst.msk [vmem:[#allocation2 + $0x78] sm:$0xf] %vm313, 0
        %345 = vst.msk [vmem:[#allocation2 + $0x7c] sm:$0xf] %vm313, 0
        %346 = vst.msk [vmem:[#allocation2 + $0x80] sm:$0xf] %vm313, 0
        %347 = vst.msk [vmem:[#allocation2 + $0x84] sm:$0xf] %vm313, 0
        %348 = vst.msk [vmem:[#allocation2 + $0x88] sm:$0xf] %vm313, 0
        %349 = vst.msk [vmem:[#allocation2 + $0x8c] sm:$0xf] %vm313, 0
        %350 = vst.msk [vmem:[#allocation2 + $0x90] sm:$0xf] %vm313, 0
        %351 = vst.msk [vmem:[#allocation2 + $0x94] sm:$0xf] %vm313, 0
        %352 = vst.msk [vmem:[#allocation2 + $0x98] sm:$0xf] %vm313, 0
        %353 = vst.msk [vmem:[#allocation2 + $0x9c] sm:$0xf] %vm313, 0
        %354 = vst.msk [vmem:[#allocation2 + $0xa0] sm:$0xf] %vm313, 0
        %355 = vst.msk [vmem:[#allocation2 + $0xa4] sm:$0xf] %vm313, 0
        %vm356 = vcmask 254976
        %vm357 = vsmask.f32 1280
        %vm358 = vmand %vm356, %vm357
        %v359 = vld [vmem:[#allocation2 + $0xa8] sm:$0x3]
        %v360 = vsel %vm358, 0, %v359
        %361 = vst [vmem:[#allocation2 + $0xa8] sm:$0x3] %v360
        %vm362 = vcmask 261120
        %363 = vst.msk [vmem:[#allocation3] sm:$0xff] %vm362, 0.0
        %364 = vst.msk [vmem:[#allocation3 + $0x8] sm:$0xff] %vm362, 0.0
        %365 = vst.msk [vmem:[#allocation3 + $0x10] sm:$0xff] %vm362, 0.0
        %366 = vst.msk [vmem:[#allocation3 + $0x18] sm:$0xff] %vm362, 0.0
        %367 = vst.msk [vmem:[#allocation3 + $0x20] sm:$0xff] %vm362, 0.0
        %368 = vst.msk [vmem:[#allocation3 + $0x28] sm:$0xff] %vm362, 0.0
        %369 = vst.msk [vmem:[#allocation3 + $0x30] sm:$0xff] %vm362, 0.0
        %370 = vst.msk [vmem:[#allocation3 + $0x38] sm:$0xff] %vm362, 0.0
        %371 = vst.msk [vmem:[#allocation3 + $0x40] sm:$0xff] %vm362, 0.0
        %372 = vst.msk [vmem:[#allocation3 + $0x48] sm:$0xff] %vm362, 0.0
        %373 = vst.msk [vmem:[#allocation3 + $0x50] sm:$0xff] %vm362, 0.0
        %374 = vst.msk [vmem:[#allocation3 + $0x58] sm:$0xff] %vm362, 0.0
        %375 = vst.msk [vmem:[#allocation3 + $0x60] sm:$0xff] %vm362, 0.0
        %376 = vst.msk [vmem:[#allocation3 + $0x68] sm:$0xff] %vm362, 0.0
        %377 = vst.msk [vmem:[#allocation3 + $0x70] sm:$0xff] %vm362, 0.0
        %378 = vst.msk [vmem:[#allocation3 + $0x78] sm:$0xff] %vm362, 0.0
        %379 = vst.msk [vmem:[#allocation3 + $0x80] sm:$0xff] %vm362, 0.0
        %380 = vst.msk [vmem:[#allocation3 + $0x88] sm:$0xff] %vm362, 0.0
        %381 = vst.msk [vmem:[#allocation3 + $0x90] sm:$0xff] %vm362, 0.0
        %382 = vst.msk [vmem:[#allocation3 + $0x98] sm:$0xff] %vm362, 0.0
        %383 = vst.msk [vmem:[#allocation3 + $0xa0] sm:$0xff] %vm362, 0.0
        %384 = vst.msk [vmem:[#allocation3 + $0xa8] sm:$0xff] %vm362, 0.0
        %385 = vst.msk [vmem:[#allocation3 + $0xb0] sm:$0xff] %vm362, 0.0
        %386 = vst.msk [vmem:[#allocation3 + $0xb8] sm:$0xff] %vm362, 0.0
        %387 = vst.msk [vmem:[#allocation3 + $0xc0] sm:$0xff] %vm362, 0.0
        %388 = vst.msk [vmem:[#allocation3 + $0xc8] sm:$0xff] %vm362, 0.0
        %389 = vst.msk [vmem:[#allocation3 + $0xd0] sm:$0xff] %vm362, 0.0
        %390 = vst.msk [vmem:[#allocation3 + $0xd8] sm:$0xff] %vm362, 0.0
        %391 = vst.msk [vmem:[#allocation3 + $0xe0] sm:$0xff] %vm362, 0.0
        %392 = vst.msk [vmem:[#allocation3 + $0xe8] sm:$0xff] %vm362, 0.0
        %393 = vst.msk [vmem:[#allocation3 + $0xf0] sm:$0xff] %vm362, 0.0
        %394 = vst.msk [vmem:[#allocation3 + $0xf8] sm:$0xff] %vm362, 0.0
        %395 = vst.msk [vmem:[#allocation3 + $0x100] sm:$0xff] %vm362, 0.0
        %396 = vst.msk [vmem:[#allocation3 + $0x108] sm:$0xff] %vm362, 0.0
        %397 = vst.msk [vmem:[#allocation3 + $0x110] sm:$0xff] %vm362, 0.0
        %398 = vst.msk [vmem:[#allocation3 + $0x118] sm:$0xff] %vm362, 0.0
      $region40: #{tpu_custom_call.1} parent=35 // pred_fallthru
        _
      %v399 = vlaneseq
      %v400 = vshrl.u32 %v399, 7
      %v401 = vadd.s32 %v400, 8
      %v402 = vadd.s32 %v400, 16
      %vm403 = vcmp.gt.s32.totalorder %v400, 0
      %vm404 = vcmp.gt.s32.totalorder %v401, 0
      %vm405 = vcmp.gt.s32.totalorder %v402, 0
      %vm406 = vcmp.lt.s32.totalorder %v400, 17
      %vm407 = vcmp.lt.s32.totalorder %v401, 17
      %vm408 = vcmp.lt.s32.totalorder %v402, 17
      %vm409 = vmand %vm403, %vm406
      %vm410 = vmand %vm404, %vm407
      %vm411 = vmand %vm405, %vm408
      %v412 = vsel %vm409, 1, 0
      %v413 = vsel %vm410, 1, 0
      %v414 = vsel %vm411, 1, 0
      %v415 = vcvt.s32.f32 %v412
      %v416 = vcvt.s32.f32 %v413
      %v417 = vcvt.s32.f32 %v414
      %v422 = vunpack.c.l.s4 269488144
      %v423 = vunpack.c.0.s8 %v422
      %v424 = vlaneseq
      %v425 = vshrl.u32 %v424, 7
      %v426 = vsub.s32 %v423, %v425
      %v427 = vrot.slane %v415, %v426
      %v429 = vunpack.c.l.s4 842150450
      %v430 = vunpack.c.0.s8 %v429
      %v431 = vlaneseq
      %v432 = vshrl.u32 %v431, 7
      %v433 = vsub.s32 %v430, %v432
      %v434 = vrot.slane %v415, %v433
      %v436 = vunpack.c.l.s4 1414812756
      %v437 = vunpack.c.0.s8 %v436
      %v438 = vlaneseq
      %v439 = vshrl.u32 %v438, 7
      %v440 = vsub.s32 %v437, %v439
      %v441 = vrot.slane %v415, %v440
      %v443 = vunpack.c.l.s4 1987475062
      %v444 = vunpack.c.0.s8 %v443
      %v445 = vlaneseq
      %v446 = vshrl.u32 %v445, 7
      %v447 = vsub.s32 %v444, %v446
      %v448 = vrot.slane %v415, %v447
      %v450 = vunpack.c.l.s4 269488144
      %v451 = vunpack.c.0.s8 %v450
      %v452 = vlaneseq
      %v453 = vshrl.u32 %v452, 7
      %v454 = vsub.s32 %v451, %v453
      %v455 = vrot.slane %v416, %v454
      %v457 = vunpack.c.l.s4 842150450
      %v458 = vunpack.c.0.s8 %v457
      %v459 = vlaneseq
      %v460 = vshrl.u32 %v459, 7
      %v461 = vsub.s32 %v458, %v460
      %v462 = vrot.slane %v416, %v461
      %v464 = vunpack.c.l.s4 1414812756
      %v465 = vunpack.c.0.s8 %v464
      %v466 = vlaneseq
      %v467 = vshrl.u32 %v466, 7
      %v468 = vsub.s32 %v465, %v467
      %v469 = vrot.slane %v416, %v468
      %v471 = vunpack.c.l.s4 1987475062
      %v472 = vunpack.c.0.s8 %v471
      %v473 = vlaneseq
      %v474 = vshrl.u32 %v473, 7
      %v475 = vsub.s32 %v472, %v474
      %v476 = vrot.slane %v416, %v475
      %v478 = vunpack.c.l.s4 269488144
      %v479 = vunpack.c.0.s8 %v478
      %v480 = vlaneseq
      %v481 = vshrl.u32 %v480, 7
      %v482 = vsub.s32 %v479, %v481
      %v483 = vrot.slane %v417, %v482
      %v484 = vld [vmem:[#allocation3] sm:$0xff]
      %v485 = vld [vmem:[#allocation3 + $0x8] sm:$0xff]
      %v486 = vld [vmem:[#allocation3 + $0x10] sm:$0xff]
      %v487 = vld [vmem:[#allocation3 + $0x18] sm:$0xff]
      %v488 = vld [vmem:[#allocation3 + $0x20] sm:$0xff]
      %v489 = vld [vmem:[#allocation3 + $0x28] sm:$0xff]
      %v490 = vld [vmem:[#allocation3 + $0x30] sm:$0xff]
      %v491 = vld [vmem:[#allocation3 + $0x38] sm:$0xff]
      %v492 = vld [vmem:[#allocation3 + $0x40] sm:$0xff]
      %v493 = vld [vmem:[#allocation3 + $0x48] sm:$0xff]
      %v494 = vld [vmem:[#allocation3 + $0x50] sm:$0xff]
      %v495 = vld [vmem:[#allocation3 + $0x58] sm:$0xff]
      %v496 = vld [vmem:[#allocation3 + $0x60] sm:$0xff]
      %v497 = vld [vmem:[#allocation3 + $0x68] sm:$0xff]
      %v498 = vld [vmem:[#allocation3 + $0x70] sm:$0xff]
      %v499 = vld [vmem:[#allocation3 + $0x78] sm:$0xff]
      %v500 = vld [vmem:[#allocation3 + $0x80] sm:$0xff]
      %v501 = vld [vmem:[#allocation3 + $0x88] sm:$0xff]
      %v502 = vld [vmem:[#allocation3 + $0x90] sm:$0xff]
      %v503 = vld [vmem:[#allocation3 + $0x98] sm:$0xff]
      %v504 = vld [vmem:[#allocation3 + $0xa0] sm:$0xff]
      %v505 = vld [vmem:[#allocation3 + $0xa8] sm:$0xff]
      %v506 = vld [vmem:[#allocation3 + $0xb0] sm:$0xff]
      %v507 = vld [vmem:[#allocation3 + $0xb8] sm:$0xff]
      %v508 = vld [vmem:[#allocation3 + $0xc0] sm:$0xff]
      %v509 = vld [vmem:[#allocation3 + $0xc8] sm:$0xff]
      %v510 = vld [vmem:[#allocation3 + $0xd0] sm:$0xff]
      %v511 = vld [vmem:[#allocation3 + $0xd8] sm:$0xff]
      %v512 = vld [vmem:[#allocation3 + $0xe0] sm:$0xff]
      %v513 = vld [vmem:[#allocation3 + $0xe8] sm:$0xff]
      %v514 = vld [vmem:[#allocation3 + $0xf0] sm:$0xff]
      %v515 = vld [vmem:[#allocation3 + $0xf8] sm:$0xff]
      %v516 = vld [vmem:[#allocation3 + $0x100] sm:$0xff]
      %v517 = vld [vmem:[#allocation3 + $0x108] sm:$0xff]
      %v518 = vld [vmem:[#allocation3 + $0x110] sm:$0xff]
      %v519 = vld [vmem:[#allocation3 + $0x118] sm:$0xff]
      %v520 = vld [vmem:[%s284] sm:$0xff]
      %v521 = vld [vmem:[%s284 + $0x8] sm:$0xff]
      %v522 = vld [vmem:[%s284 + $0x10] sm:$0xff]
      %v523 = vld [vmem:[%s284 + $0x18] sm:$0xff]
      %v524 = vld [vmem:[%s284 + $0x20] sm:$0xff]
      %v525 = vld [vmem:[%s284 + $0x28] sm:$0xff]
      %v526 = vld [vmem:[%s284 + $0x30] sm:$0xff]
      %v527 = vld [vmem:[%s284 + $0x38] sm:$0xff]
      %v528 = vld [vmem:[%s284 + $0x40] sm:$0xff]
      %v529 = vld [vmem:[%s284 + $0x48] sm:$0xff]
      %v530 = vld [vmem:[%s284 + $0x50] sm:$0xff]
      %v531 = vld [vmem:[%s284 + $0x58] sm:$0xff]
      %v532 = vld [vmem:[%s284 + $0x60] sm:$0xff]
      %v533 = vld [vmem:[%s284 + $0x68] sm:$0xff]
      %v534 = vld [vmem:[%s284 + $0x70] sm:$0xff]
      %v535 = vld [vmem:[%s284 + $0x78] sm:$0xff]
      %v536 = vld [vmem:[%s284 + $0x80] sm:$0xff]
      %v537 = vld [vmem:[%s284 + $0x88] sm:$0xff]
      %v538 = vld [vmem:[%s284 + $0x90] sm:$0xff]
      %v539 = vld [vmem:[%s284 + $0x98] sm:$0xff]
      %v540 = vld [vmem:[%s284 + $0xa0] sm:$0xff]
      %v541 = vld [vmem:[%s284 + $0xa8] sm:$0xff]
      %v542 = vld [vmem:[%s284 + $0xb0] sm:$0xff]
      %v543 = vld [vmem:[%s284 + $0xb8] sm:$0xff]
      %v544 = vld [vmem:[%s284 + $0xc0] sm:$0xff]
      %v545 = vld [vmem:[%s284 + $0xc8] sm:$0xff]
      %v546 = vld [vmem:[%s284 + $0xd0] sm:$0xff]
      %v547 = vld [vmem:[%s284 + $0xd8] sm:$0xff]
      %v548 = vld [vmem:[%s284 + $0xe0] sm:$0xff]
      %v549 = vld [vmem:[%s284 + $0xe8] sm:$0xff]
      %v550 = vld [vmem:[%s284 + $0xf0] sm:$0xff]
      %v551 = vld [vmem:[%s284 + $0xf8] sm:$0xff]
      %v552 = vld [vmem:[%s284 + $0x100] sm:$0xff]
      %v553 = vld [vmem:[%s284 + $0x108] sm:$0xff]
      %v554 = vld [vmem:[%s284 + $0x110] sm:$0xff]
      %v555 = vld [vmem:[%s284 + $0x118] sm:$0xff]
      %v556 = vld [vmem:[#allocation2 + $0x4] sm:$0xc]
      %v557 = vld [vmem:[#allocation2 + $0x8] sm:$0xf]
      %v558 = vld [vmem:[#allocation2 + $0xc] sm:$0xf]
      %v559 = vld [vmem:[#allocation2 + $0x10] sm:$0xf]
      %v560 = vld [vmem:[#allocation2 + $0x14] sm:$0xf]
      %v561 = vld [vmem:[#allocation2 + $0x18] sm:$0xf]
      %v562 = vld [vmem:[#allocation2 + $0x1c] sm:$0xf]
      %v563 = vld [vmem:[#allocation2 + $0x20] sm:$0xf]
      %v564 = vld [vmem:[#allocation2 + $0x24] sm:$0xf]
      %v565 = vld [vmem:[#allocation2 + $0x28] sm:$0xf]
      %v566 = vld [vmem:[#allocation2 + $0x2c] sm:$0xf]
      %v567 = vld [vmem:[#allocation2 + $0x30] sm:$0xf]
      %v568 = vld [vmem:[#allocation2 + $0x34] sm:$0xf]
      %v569 = vld [vmem:[#allocation2 + $0x38] sm:$0xf]
      %v570 = vld [vmem:[#allocation2 + $0x3c] sm:$0xf]
      %v571 = vld [vmem:[#allocation2 + $0x40] sm:$0xf]
      %v572 = vld [vmem:[#allocation2 + $0x44] sm:$0xf]
      %v573 = vld [vmem:[#allocation2 + $0x48] sm:$0xf]
      %v574 = vld [vmem:[#allocation2 + $0x4c] sm:$0xf]
      %v575 = vld [vmem:[#allocation2 + $0x50] sm:$0xf]
      %v576 = vld [vmem:[#allocation2 + $0x54] sm:$0xf]
      %v577 = vld [vmem:[#allocation2 + $0x58] sm:$0xf]
      %v578 = vld [vmem:[#allocation2 + $0x5c] sm:$0xf]
      %v579 = vld [vmem:[#allocation2 + $0x60] sm:$0xf]
      %v580 = vld [vmem:[#allocation2 + $0x64] sm:$0xf]
      %v581 = vld [vmem:[#allocation2 + $0x68] sm:$0xf]
      %v582 = vld [vmem:[#allocation2 + $0x6c] sm:$0xf]
      %v583 = vld [vmem:[#allocation2 + $0x70] sm:$0xf]
      %v584 = vld [vmem:[#allocation2 + $0x74] sm:$0xf]
      %v585 = vld [vmem:[#allocation2 + $0x78] sm:$0xf]
      %v586 = vld [vmem:[#allocation2 + $0x7c] sm:$0xf]
      %v587 = vld [vmem:[#allocation2 + $0x80] sm:$0xf]
      %v588 = vld [vmem:[#allocation2 + $0x84] sm:$0xf]
      %v589 = vld [vmem:[#allocation2 + $0x88] sm:$0xf]
      %v590 = vld [vmem:[#allocation2 + $0x8c] sm:$0xf]
      %v591 = vld [vmem:[#allocation2 + $0x90] sm:$0xf]
      %v592 = vld [vmem:[#allocation2 + $0x94] sm:$0x7]
      %v593 = vld [vmem:[%s2] sm:$0xf]
      %v594 = vld [vmem:[%s2 + $0x4] sm:$0xf]
      %v595 = vld [vmem:[%s2 + $0x8] sm:$0xf]
      %v596 = vld [vmem:[%s2 + $0xc] sm:$0xf]
      %v634 = vunpack.c.l.b16 %v556
      %v635 = vunpack.c.l.b16 %v557
      %v636 = vunpack.c.l.b16 %v558
      %v637 = vunpack.c.l.b16 %v559
      %v638 = vunpack.c.l.b16 %v560
      %v639 = vunpack.c.l.b16 %v561
      %v640 = vunpack.c.l.b16 %v562
      %v641 = vunpack.c.l.b16 %v563
      %v642 = vunpack.c.l.b16 %v564
      %v643 = vunpack.c.l.b16 %v565
      %v644 = vunpack.c.l.b16 %v566
      %v645 = vunpack.c.l.b16 %v567
      %v646 = vunpack.c.l.b16 %v568
      %v647 = vunpack.c.l.b16 %v569
      %v648 = vunpack.c.l.b16 %v570
      %v649 = vunpack.c.l.b16 %v571
      %v650 = vunpack.c.l.b16 %v572
      %v651 = vunpack.c.l.b16 %v573
      %v652 = vunpack.c.l.b16 %v574
      %v653 = vunpack.c.l.b16 %v575
      %v654 = vunpack.c.l.b16 %v576
      %v655 = vunpack.c.l.b16 %v577
      %v656 = vunpack.c.l.b16 %v578
      %v657 = vunpack.c.l.b16 %v579
      %v658 = vunpack.c.l.b16 %v580
      %v659 = vunpack.c.l.b16 %v581
      %v660 = vunpack.c.l.b16 %v582
      %v661 = vunpack.c.l.b16 %v583
      %v662 = vunpack.c.l.b16 %v584
      %v663 = vunpack.c.l.b16 %v585
      %v664 = vunpack.c.l.b16 %v586
      %v665 = vunpack.c.l.b16 %v587
      %v666 = vunpack.c.l.b16 %v588
      %v667 = vunpack.c.l.b16 %v589
      %v668 = vunpack.c.l.b16 %v590
      %v669 = vunpack.c.l.b16 %v591
      %v670 = vunpack.c.l.b16 %v592
      %v671 = vpack.c.b16 %v635, %v634
      %v672 = vpack.c.b16 %v637, %v636
      %v673 = vpack.c.b16 %v639, %v638
      %v674 = vpack.c.b16 %v641, %v640
      %v675 = vpack.c.b16 %v643, %v642
      %v676 = vpack.c.b16 %v645, %v644
      %v677 = vpack.c.b16 %v647, %v646
      %v678 = vpack.c.b16 %v649, %v648
      %v679 = vpack.c.b16 %v651, %v650
      %v680 = vpack.c.b16 %v653, %v652
      %v681 = vpack.c.b16 %v655, %v654
      %v682 = vpack.c.b16 %v657, %v656
      %v683 = vpack.c.b16 %v659, %v658
      %v684 = vpack.c.b16 %v661, %v660
      %v685 = vpack.c.b16 %v663, %v662
      %v686 = vpack.c.b16 %v665, %v664
      %v687 = vpack.c.b16 %v667, %v666
      %v688 = vpack.c.b16 %v669, %v668
      %v689 = vpack.c.b16 %v670, %v670
      %vm690 = vsmask.f32 5376
      %v692 = vshrl.u32 %v671, 16
      %v694 = vrot.slane %v692, 2
      %v695 = vshll.u32 %v671, 16
      %v697 = vrot.slane %v695, 3
      %v698 = vor.u32 %v694, %v697
      %v700 = vshrl.u32 %v672, 16
      %v702 = vrot.slane %v700, 2
      %v703 = vshll.u32 %v672, 16
      %v705 = vrot.slane %v703, 3
      %v706 = vor.u32 %v702, %v705
      %v707 = vsel %vm690, %v698, %v706
      %v709 = vshrl.u32 %v673, 16
      %v711 = vrot.slane %v709, 2
      %v712 = vshll.u32 %v673, 16
      %v714 = vrot.slane %v712, 3
      %v715 = vor.u32 %v711, %v714
      %v716 = vsel %vm690, %v706, %v715
      %v718 = vshrl.u32 %v674, 16
      %v720 = vrot.slane %v718, 2
      %v721 = vshll.u32 %v674, 16
      %v723 = vrot.slane %v721, 3
      %v724 = vor.u32 %v720, %v723
      %v725 = vsel %vm690, %v715, %v724
      %v727 = vshrl.u32 %v675, 16
      %v729 = vrot.slane %v727, 2
      %v730 = vshll.u32 %v675, 16
      %v732 = vrot.slane %v730, 3
      %v733 = vor.u32 %v729, %v732
      %v734 = vsel %vm690, %v724, %v733
      %v736 = vshrl.u32 %v676, 16
      %v738 = vrot.slane %v736, 2
      %v739 = vshll.u32 %v676, 16
      %v741 = vrot.slane %v739, 3
      %v742 = vor.u32 %v738, %v741
      %v743 = vsel %vm690, %v733, %v742
      %v745 = vshrl.u32 %v677, 16
      %v747 = vrot.slane %v745, 2
      %v748 = vshll.u32 %v677, 16
      %v750 = vrot.slane %v748, 3
      %v751 = vor.u32 %v747, %v750
      %v752 = vsel %vm690, %v742, %v751
      %v754 = vshrl.u32 %v678, 16
      %v756 = vrot.slane %v754, 2
      %v757 = vshll.u32 %v678, 16
      %v759 = vrot.slane %v757, 3
      %v760 = vor.u32 %v756, %v759
      %v761 = vsel %vm690, %v751, %v760
      %v763 = vshrl.u32 %v679, 16
      %v765 = vrot.slane %v763, 2
      %v766 = vshll.u32 %v679, 16
      %v768 = vrot.slane %v766, 3
      %v769 = vor.u32 %v765, %v768
      %v770 = vsel %vm690, %v760, %v769
      %v772 = vshrl.u32 %v680, 16
      %v774 = vrot.slane %v772, 2
      %v775 = vshll.u32 %v680, 16
      %v777 = vrot.slane %v775, 3
      %v778 = vor.u32 %v774, %v777
      %v779 = vsel %vm690, %v769, %v778
      %v781 = vshrl.u32 %v681, 16
      %v783 = vrot.slane %v781, 2
      %v784 = vshll.u32 %v681, 16
      %v786 = vrot.slane %v784, 3
      %v787 = vor.u32 %v783, %v786
      %v788 = vsel %vm690, %v778, %v787
      %v790 = vshrl.u32 %v682, 16
      %v792 = vrot.slane %v790, 2
      %v793 = vshll.u32 %v682, 16
      %v795 = vrot.slane %v793, 3
      %v796 = vor.u32 %v792, %v795
      %v797 = vsel %vm690, %v787, %v796
      %v799 = vshrl.u32 %v683, 16
      %v801 = vrot.slane %v799, 2
      %v802 = vshll.u32 %v683, 16
      %v804 = vrot.slane %v802, 3
      %v805 = vor.u32 %v801, %v804
      %v806 = vsel %vm690, %v796, %v805
      %v808 = vshrl.u32 %v684, 16
      %v810 = vrot.slane %v808, 2
      %v811 = vshll.u32 %v684, 16
      %v813 = vrot.slane %v811, 3
      %v814 = vor.u32 %v810, %v813
      %v815 = vsel %vm690, %v805, %v814
      %v817 = vshrl.u32 %v685, 16
      %v819 = vrot.slane %v817, 2
      %v820 = vshll.u32 %v685, 16
      %v822 = vrot.slane %v820, 3
      %v823 = vor.u32 %v819, %v822
      %v824 = vsel %vm690, %v814, %v823
      %v826 = vshrl.u32 %v686, 16
      %v828 = vrot.slane %v826, 2
      %v829 = vshll.u32 %v686, 16
      %v831 = vrot.slane %v829, 3
      %v832 = vor.u32 %v828, %v831
      %v833 = vsel %vm690, %v823, %v832
      %v835 = vshrl.u32 %v687, 16
      %v837 = vrot.slane %v835, 2
      %v838 = vshll.u32 %v687, 16
      %v840 = vrot.slane %v838, 3
      %v841 = vor.u32 %v837, %v840
      %v842 = vsel %vm690, %v832, %v841
      %v844 = vshrl.u32 %v688, 16
      %v846 = vrot.slane %v844, 2
      %v847 = vshll.u32 %v688, 16
      %v849 = vrot.slane %v847, 3
      %v850 = vor.u32 %v846, %v849
      %v851 = vsel %vm690, %v841, %v850
      %v853 = vshrl.u32 %v689, 16
      %v855 = vrot.slane %v853, 2
      %v856 = vshll.u32 %v689, 16
      %v858 = vrot.slane %v856, 3
      %v859 = vor.u32 %v855, %v858
      %v860 = vsel %vm690, %v850, %v859
      %v865 = vunpack.c.l.b16 %v593
      %v866 = vunpack.c.l.b16 %v594
      %v867 = vunpack.c.l.b16 %v595
      %v868 = vunpack.c.l.b16 %v596
      %v869 = vpack.c.b16 %v866, %v865
      %v870 = vpack.c.b16 %v868, %v867
      %vm873 = vcmask 261120
      %v875 = vsel %vm873, %v707, 0
      %v878 = vsel %vm873, %v716, 0
      %v881 = vsel %vm873, %v725, 0
      %v884 = vsel %vm873, %v734, 0
      %v887 = vsel %vm873, %v743, 0
      %v890 = vsel %vm873, %v752, 0
      %v893 = vsel %vm873, %v761, 0
      %v896 = vsel %vm873, %v770, 0
      %v899 = vsel %vm873, %v779, 0
      %v902 = vsel %vm873, %v788, 0
      %v905 = vsel %vm873, %v797, 0
      %v908 = vsel %vm873, %v806, 0
      %v911 = vsel %vm873, %v815, 0
      %v914 = vsel %vm873, %v824, 0
      %v917 = vsel %vm873, %v833, 0
      %v920 = vsel %vm873, %v842, 0
      %v923 = vsel %vm873, %v851, 0
      %v926 = vsel %vm873, %v860, 0
      %928 = vmatprep.subr.bf16.mxu0 0
      %929 = vmatpush1.bf16.msra.mxu0 0
      %930 = vmatprep.subr.bf16.mxu0 0
      %931 = vmatpush1.bf16.msra.mxu0 0
      %932 = vmatprep.subr.bf16.mxu0 0
      %933 = vmatpush1.bf16.msra.mxu0 0
      %934 = vmatprep.subr.bf16.mxu0 0
      %935 = vmatpush1.bf16.msra.mxu0 0
      %936 = vmatprep.subr.bf16.mxu0 0
      %937 = vmatpush1.bf16.msra.mxu0 0
      %938 = vmatprep.subr.bf16.mxu0 0
      %939 = vmatpush1.bf16.msra.mxu0 0
      %940 = vmatprep.subr.bf16.mxu0 0
      %941 = vmatpush1.bf16.msra.mxu0 %v870
      %942 = vmatprep.subr.bf16.mxu0 0
      %943 = vmatpush1.bf16.msra.mxu0 %v869
      %944 = vmatprep.subr.bf16.mxu0 0
      %945 = vmatpush2.bf16.msra.mxu0 0
      %946 = vmatprep.subr.bf16.mxu0 0
      %947 = vmatpush2.bf16.msra.mxu0 0
      %948 = vmatprep.subr.bf16.mxu0 0
      %949 = vmatpush2.bf16.msra.mxu0 0
      %950 = vmatprep.subr.bf16.mxu0 0
      %951 = vmatpush2.bf16.msra.mxu0 0
      %952 = vmatprep.subr.bf16.mxu0 0
      %953 = vmatpush2.bf16.msra.mxu0 0
      %954 = vmatprep.subr.bf16.mxu0 0
      %955 = vmatpush2.bf16.msra.mxu0 0
      %956 = vmatprep.subr.bf16.mxu0 0
      %957 = vmatpush2.bf16.msra.mxu0 0
      %958 = vmatprep.subr.bf16.mxu0 0
      %959 = vmatpush2.bf16.msra.mxu0 0
      %960 = vmatprep.mubr.bf16.mxu0 0
      %961 = vmatmul.mubr.bf16.gmra.mxu0 %v875
      %v962 = vpop.f32.mrf.mxu0
      %v963 = vadd.f32 0.0, %v962
      %v964 = vpop.f32.mrf.mxu0
      %v965 = vpop.f32.mrf.mxu0
      %v966 = vadd.f32 0.0, %v965
      %v967 = vpop.f32.mrf.mxu0
      %968 = vmatprep.mubr.bf16.mxu0 0
      %969 = vmatmul.mubr.bf16.gmra.mxu0 %v878
      %v970 = vpop.f32.mrf.mxu0
      %v971 = vadd.f32 0.0, %v970
      %v972 = vpop.f32.mrf.mxu0
      %v973 = vpop.f32.mrf.mxu0
      %v974 = vadd.f32 0.0, %v973
      %v975 = vpop.f32.mrf.mxu0
      %976 = vmatprep.mubr.bf16.mxu0 0
      %977 = vmatmul.mubr.bf16.gmra.mxu0 %v881
      %v978 = vpop.f32.mrf.mxu0
      %v979 = vadd.f32 0.0, %v978
      %v980 = vpop.f32.mrf.mxu0
      %v981 = vpop.f32.mrf.mxu0
      %v982 = vadd.f32 0.0, %v981
      %v983 = vpop.f32.mrf.mxu0
      %984 = vmatprep.mubr.bf16.mxu0 0
      %985 = vmatmul.mubr.bf16.gmra.mxu0 %v884
      %v986 = vpop.f32.mrf.mxu0
      %v987 = vadd.f32 0.0, %v986
      %v988 = vpop.f32.mrf.mxu0
      %v989 = vpop.f32.mrf.mxu0
      %v990 = vadd.f32 0.0, %v989
      %v991 = vpop.f32.mrf.mxu0
      %992 = vmatprep.mubr.bf16.mxu0 0
      %993 = vmatmul.mubr.bf16.gmra.mxu0 %v887
      %v994 = vpop.f32.mrf.mxu0
      %v995 = vadd.f32 0.0, %v994
      %v996 = vpop.f32.mrf.mxu0
      %v997 = vpop.f32.mrf.mxu0
      %v998 = vadd.f32 0.0, %v997
      %v999 = vpop.f32.mrf.mxu0
      %1000 = vmatprep.mubr.bf16.mxu0 0
      %1001 = vmatmul.mubr.bf16.gmra.mxu0 %v890
      %v1002 = vpop.f32.mrf.mxu0
      %v1003 = vadd.f32 0.0, %v1002
      %v1004 = vpop.f32.mrf.mxu0
      %v1005 = vpop.f32.mrf.mxu0
      %v1006 = vadd.f32 0.0, %v1005
      %v1007 = vpop.f32.mrf.mxu0
      %1008 = vmatprep.mubr.bf16.mxu0 0
      %1009 = vmatmul.mubr.bf16.gmra.mxu0 %v893
      %v1010 = vpop.f32.mrf.mxu0
      %v1011 = vadd.f32 0.0, %v1010
      %v1012 = vpop.f32.mrf.mxu0
      %v1013 = vpop.f32.mrf.mxu0
      %v1014 = vadd.f32 0.0, %v1013
      %v1015 = vpop.f32.mrf.mxu0
      %1016 = vmatprep.mubr.bf16.mxu0 0
      %1017 = vmatmul.mubr.bf16.gmra.mxu0 %v896
      %v1018 = vpop.f32.mrf.mxu0
      %v1019 = vadd.f32 0.0, %v1018
      %v1020 = vpop.f32.mrf.mxu0
      %v1021 = vpop.f32.mrf.mxu0
      %v1022 = vadd.f32 0.0, %v1021
      %v1023 = vpop.f32.mrf.mxu0
      %1024 = vmatprep.mubr.bf16.mxu0 0
      %1025 = vmatmul.mubr.bf16.gmra.mxu0 %v899
      %v1026 = vpop.f32.mrf.mxu0
      %v1027 = vadd.f32 0.0, %v1026
      %v1028 = vpop.f32.mrf.mxu0
      %v1029 = vpop.f32.mrf.mxu0
      %v1030 = vadd.f32 0.0, %v1029
      %v1031 = vpop.f32.mrf.mxu0
      %1032 = vmatprep.mubr.bf16.mxu0 0
      %1033 = vmatmul.mubr.bf16.gmra.mxu0 %v902
      %v1034 = vpop.f32.mrf.mxu0
      %v1035 = vadd.f32 0.0, %v1034
      %v1036 = vpop.f32.mrf.mxu0
      %v1037 = vpop.f32.mrf.mxu0
      %v1038 = vadd.f32 0.0, %v1037
      %v1039 = vpop.f32.mrf.mxu0
      %1040 = vmatprep.mubr.bf16.mxu0 0
      %1041 = vmatmul.mubr.bf16.gmra.mxu0 %v905
      %v1042 = vpop.f32.mrf.mxu0
      %v1043 = vadd.f32 0.0, %v1042
      %v1044 = vpop.f32.mrf.mxu0
      %v1045 = vpop.f32.mrf.mxu0
      %v1046 = vadd.f32 0.0, %v1045
      %v1047 = vpop.f32.mrf.mxu0
      %1048 = vmatprep.mubr.bf16.mxu0 0
      %1049 = vmatmul.mubr.bf16.gmra.mxu0 %v908
      %v1050 = vpop.f32.mrf.mxu0
      %v1051 = vadd.f32 0.0, %v1050
      %v1052 = vpop.f32.mrf.mxu0
      %v1053 = vpop.f32.mrf.mxu0
      %v1054 = vadd.f32 0.0, %v1053
      %v1055 = vpop.f32.mrf.mxu0
      %1056 = vmatprep.mubr.bf16.mxu0 0
      %1057 = vmatmul.mubr.bf16.gmra.mxu0 %v911
      %v1058 = vpop.f32.mrf.mxu0
      %v1059 = vadd.f32 0.0, %v1058
      %v1060 = vpop.f32.mrf.mxu0
      %v1061 = vpop.f32.mrf.mxu0
      %v1062 = vadd.f32 0.0, %v1061
      %v1063 = vpop.f32.mrf.mxu0
      %1064 = vmatprep.mubr.bf16.mxu0 0
      %1065 = vmatmul.mubr.bf16.gmra.mxu0 %v914
      %v1066 = vpop.f32.mrf.mxu0
      %v1067 = vadd.f32 0.0, %v1066
      %v1068 = vpop.f32.mrf.mxu0
      %v1069 = vpop.f32.mrf.mxu0
      %v1070 = vadd.f32 0.0, %v1069
      %v1071 = vpop.f32.mrf.mxu0
      %1072 = vmatprep.mubr.bf16.mxu0 0
      %1073 = vmatmul.mubr.bf16.gmra.mxu0 %v917
      %v1074 = vpop.f32.mrf.mxu0
      %v1075 = vadd.f32 0.0, %v1074
      %v1076 = vpop.f32.mrf.mxu0
      %v1077 = vpop.f32.mrf.mxu0
      %v1078 = vadd.f32 0.0, %v1077
      %v1079 = vpop.f32.mrf.mxu0
      %1080 = vmatprep.mubr.bf16.mxu0 0
      %1081 = vmatmul.mubr.bf16.gmra.mxu0 %v920
      %v1082 = vpop.f32.mrf.mxu0
      %v1083 = vadd.f32 0.0, %v1082
      %v1084 = vpop.f32.mrf.mxu0
      %v1085 = vpop.f32.mrf.mxu0
      %v1086 = vadd.f32 0.0, %v1085
      %v1087 = vpop.f32.mrf.mxu0
      %1088 = vmatprep.mubr.bf16.mxu0 0
      %1089 = vmatmul.mubr.bf16.gmra.mxu0 %v923
      %v1090 = vpop.f32.mrf.mxu0
      %v1091 = vadd.f32 0.0, %v1090
      %v1092 = vpop.f32.mrf.mxu0
      %v1093 = vpop.f32.mrf.mxu0
      %v1094 = vadd.f32 0.0, %v1093
      %v1095 = vpop.f32.mrf.mxu0
      %1096 = vmatprep.mubr.bf16.mxu0 0
      %1097 = vmatmul.mubr.bf16.gmra.mxu0 %v926
      %v1098 = vpop.f32.mrf.mxu0
      %v1099 = vadd.f32 0.0, %v1098
      %v1100 = vpop.f32.mrf.mxu0
      %v1101 = vpop.f32.mrf.mxu0
      %v1102 = vadd.f32 0.0, %v1101
      %v1103 = vpop.f32.mrf.mxu0
      %1104 = vdwg.mxu0
      %v1105 = vadd.f32 %v520, %v963
      %v1106 = vadd.f32 %v521, %v966
      %v1107 = vadd.f32 %v522, %v971
      %v1108 = vadd.f32 %v523, %v974
      %v1109 = vadd.f32 %v524, %v979
      %v1110 = vadd.f32 %v525, %v982
      %v1111 = vadd.f32 %v526, %v987
      %v1112 = vadd.f32 %v527, %v990
      %v1113 = vadd.f32 %v528, %v995
      %v1114 = vadd.f32 %v529, %v998
      %v1115 = vadd.f32 %v530, %v1003
      %v1116 = vadd.f32 %v531, %v1006
      %v1117 = vadd.f32 %v532, %v1011
      %v1118 = vadd.f32 %v533, %v1014
      %v1119 = vadd.f32 %v534, %v1019
      %v1120 = vadd.f32 %v535, %v1022
      %v1121 = vadd.f32 %v536, %v1027
      %v1122 = vadd.f32 %v537, %v1030
      %v1123 = vadd.f32 %v538, %v1035
      %v1124 = vadd.f32 %v539, %v1038
      %v1125 = vadd.f32 %v540, %v1043
      %v1126 = vadd.f32 %v541, %v1046
      %v1127 = vadd.f32 %v542, %v1051
      %v1128 = vadd.f32 %v543, %v1054
      %v1129 = vadd.f32 %v544, %v1059
      %v1130 = vadd.f32 %v545, %v1062
      %v1131 = vadd.f32 %v546, %v1067
      %v1132 = vadd.f32 %v547, %v1070
      %v1133 = vadd.f32 %v548, %v1075
      %v1134 = vadd.f32 %v549, %v1078
      %v1135 = vadd.f32 %v550, %v1083
      %v1136 = vadd.f32 %v551, %v1086
      %v1137 = vadd.f32 %v552, %v1091
      %v1138 = vadd.f32 %v553, %v1094
      %v1139 = vadd.f32 %v554, %v1099
      %v1140 = vadd.f32 %v555, %v1102
      %v1141 = vld [vmem:[#allocation2 + $0x4] sm:$0x8]
      %s1142 = scalar_lea.vmem %s2, 16
      %v1143 = vld [vmem:[%s1142] sm:$0xf]
      %v1144 = vld [vmem:[%s1142 + $0x4] sm:$0xf]
      %v1145 = vld [vmem:[%s1142 + $0x8] sm:$0xf]
      %v1146 = vld [vmem:[%s1142 + $0xc] sm:$0xf]
      %v1148 = vunpack.c.l.b16 %v1141
      %v1149 = vpack.c.b16 %v635, %v1148
      %vm1150 = vcmask 1044480
      %v1151 = vrot.slane %v1149, 3
      %v1152 = vrot.slane %v672, 3
      %v1153 = vsel %vm1150, %v1151, %v1152
      %v1154 = vrot.slane %v673, 3
      %v1155 = vsel %vm1150, %v1152, %v1154
      %v1156 = vrot.slane %v674, 3
      %v1157 = vsel %vm1150, %v1154, %v1156
      %v1158 = vrot.slane %v675, 3
      %v1159 = vsel %vm1150, %v1156, %v1158
      %v1160 = vrot.slane %v676, 3
      %v1161 = vsel %vm1150, %v1158, %v1160
      %v1162 = vrot.slane %v677, 3
      %v1163 = vsel %vm1150, %v1160, %v1162
      %v1164 = vrot.slane %v678, 3
      %v1165 = vsel %vm1150, %v1162, %v1164
      %v1166 = vrot.slane %v679, 3
      %v1167 = vsel %vm1150, %v1164, %v1166
      %v1168 = vrot.slane %v680, 3
      %v1169 = vsel %vm1150, %v1166, %v1168
      %v1170 = vrot.slane %v681, 3
      %v1171 = vsel %vm1150, %v1168, %v1170
      %v1172 = vrot.slane %v682, 3
      %v1173 = vsel %vm1150, %v1170, %v1172
      %v1174 = vrot.slane %v683, 3
      %v1175 = vsel %vm1150, %v1172, %v1174
      %v1176 = vrot.slane %v684, 3
      %v1177 = vsel %vm1150, %v1174, %v1176
      %v1178 = vrot.slane %v685, 3
      %v1179 = vsel %vm1150, %v1176, %v1178
      %v1180 = vrot.slane %v686, 3
      %v1181 = vsel %vm1150, %v1178, %v1180
      %v1182 = vrot.slane %v687, 3
      %v1183 = vsel %vm1150, %v1180, %v1182
      %v1184 = vrot.slane %v688, 3
      %v1185 = vsel %vm1150, %v1182, %v1184
      %v1186 = vrot.slane %v689, 3
      %v1187 = vsel %vm1150, %v1184, %v1186
      %v1192 = vunpack.c.l.b16 %v1143
      %v1193 = vunpack.c.l.b16 %v1144
      %v1194 = vunpack.c.l.b16 %v1145
      %v1195 = vunpack.c.l.b16 %v1146
      %v1196 = vpack.c.b16 %v1193, %v1192
      %v1197 = vpack.c.b16 %v1195, %v1194
      %v1201 = vsel %vm873, %v1153, 0
      %v1204 = vsel %vm873, %v1155, 0
      %v1207 = vsel %vm873, %v1157, 0
      %v1210 = vsel %vm873, %v1159, 0
      %v1213 = vsel %vm873, %v1161, 0
      %v1216 = vsel %vm873, %v1163, 0
      %v1219 = vsel %vm873, %v1165, 0
      %v1222 = vsel %vm873, %v1167, 0
      %v1225 = vsel %vm873, %v1169, 0
      %v1228 = vsel %vm873, %v1171, 0
      %v1231 = vsel %vm873, %v1173, 0
      %v1234 = vsel %vm873, %v1175, 0
      %v1237 = vsel %vm873, %v1177, 0
      %v1240 = vsel %vm873, %v1179, 0
      %v1243 = vsel %vm873, %v1181, 0
      %v1246 = vsel %vm873, %v1183, 0
      %v1249 = vsel %vm873, %v1185, 0
      %v1252 = vsel %vm873, %v1187, 0
      %1254 = vmatprep.subr.bf16.mxu0 0
      %1255 = vmatpush1.bf16.msra.mxu0 0
      %1256 = vmatprep.subr.bf16.mxu0 0
      %1257 = vmatpush1.bf16.msra.mxu0 0
      %1258 = vmatprep.subr.bf16.mxu0 0
      %1259 = vmatpush1.bf16.msra.mxu0 0
      %1260 = vmatprep.subr.bf16.mxu0 0
      %1261 = vmatpush1.bf16.msra.mxu0 0
      %1262 = vmatprep.subr.bf16.mxu0 0
      %1263 = vmatpush1.bf16.msra.mxu0 0
      %1264 = vmatprep.subr.bf16.mxu0 0
      %1265 = vmatpush1.bf16.msra.mxu0 0
      %1266 = vmatprep.subr.bf16.mxu0 0
      %1267 = vmatpush1.bf16.msra.mxu0 %v1197
      %1268 = vmatprep.subr.bf16.mxu0 0
      %1269 = vmatpush1.bf16.msra.mxu0 %v1196
      %1270 = vmatprep.subr.bf16.mxu0 0
      %1271 = vmatpush2.bf16.msra.mxu0 0
      %1272 = vmatprep.subr.bf16.mxu0 0
      %1273 = vmatpush2.bf16.msra.mxu0 0
      %1274 = vmatprep.subr.bf16.mxu0 0
      %1275 = vmatpush2.bf16.msra.mxu0 0
      %1276 = vmatprep.subr.bf16.mxu0 0
      %1277 = vmatpush2.bf16.msra.mxu0 0
      %1278 = vmatprep.subr.bf16.mxu0 0
      %1279 = vmatpush2.bf16.msra.mxu0 0
      %1280 = vmatprep.subr.bf16.mxu0 0
      %1281 = vmatpush2.bf16.msra.mxu0 0
      %1282 = vmatprep.subr.bf16.mxu0 0
      %1283 = vmatpush2.bf16.msra.mxu0 0
      %1284 = vmatprep.subr.bf16.mxu0 0
      %1285 = vmatpush2.bf16.msra.mxu0 0
      %1286 = vmatprep.mubr.bf16.mxu0 0
      %1287 = vmatmul.mubr.bf16.gmra.mxu0 %v1201
      %v1288 = vpop.f32.mrf.mxu0
      %v1289 = vadd.f32 0.0, %v1288
      %v1290 = vpop.f32.mrf.mxu0
      %v1291 = vpop.f32.mrf.mxu0
      %v1292 = vadd.f32 0.0, %v1291
      %v1293 = vpop.f32.mrf.mxu0
      %1294 = vmatprep.mubr.bf16.mxu0 0
      %1295 = vmatmul.mubr.bf16.gmra.mxu0 %v1204
      %v1296 = vpop.f32.mrf.mxu0
      %v1297 = vadd.f32 0.0, %v1296
      %v1298 = vpop.f32.mrf.mxu0
      %v1299 = vpop.f32.mrf.mxu0
      %v1300 = vadd.f32 0.0, %v1299
      %v1301 = vpop.f32.mrf.mxu0
      %1302 = vmatprep.mubr.bf16.mxu0 0
      %1303 = vmatmul.mubr.bf16.gmra.mxu0 %v1207
      %v1304 = vpop.f32.mrf.mxu0
      %v1305 = vadd.f32 0.0, %v1304
      %v1306 = vpop.f32.mrf.mxu0
      %v1307 = vpop.f32.mrf.mxu0
      %v1308 = vadd.f32 0.0, %v1307
      %v1309 = vpop.f32.mrf.mxu0
      %1310 = vmatprep.mubr.bf16.mxu0 0
      %1311 = vmatmul.mubr.bf16.gmra.mxu0 %v1210
      %v1312 = vpop.f32.mrf.mxu0
      %v1313 = vadd.f32 0.0, %v1312
      %v1314 = vpop.f32.mrf.mxu0
      %v1315 = vpop.f32.mrf.mxu0
      %v1316 = vadd.f32 0.0, %v1315
      %v1317 = vpop.f32.mrf.mxu0
      %1318 = vmatprep.mubr.bf16.mxu0 0
      %1319 = vmatmul.mubr.bf16.gmra.mxu0 %v1213
      %v1320 = vpop.f32.mrf.mxu0
      %v1321 = vadd.f32 0.0, %v1320
      %v1322 = vpop.f32.mrf.mxu0
      %v1323 = vpop.f32.mrf.mxu0
      %v1324 = vadd.f32 0.0, %v1323
      %v1325 = vpop.f32.mrf.mxu0
      %1326 = vmatprep.mubr.bf16.mxu0 0
      %1327 = vmatmul.mubr.bf16.gmra.mxu0 %v1216
      %v1328 = vpop.f32.mrf.mxu0
      %v1329 = vadd.f32 0.0, %v1328
      %v1330 = vpop.f32.mrf.mxu0
      %v1331 = vpop.f32.mrf.mxu0
      %v1332 = vadd.f32 0.0, %v1331
      %v1333 = vpop.f32.mrf.mxu0
      %1334 = vmatprep.mubr.bf16.mxu0 0
      %1335 = vmatmul.mubr.bf16.gmra.mxu0 %v1219
      %v1336 = vpop.f32.mrf.mxu0
      %v1337 = vadd.f32 0.0, %v1336
      %v1338 = vpop.f32.mrf.mxu0
      %v1339 = vpop.f32.mrf.mxu0
      %v1340 = vadd.f32 0.0, %v1339
      %v1341 = vpop.f32.mrf.mxu0
      %1342 = vmatprep.mubr.bf16.mxu0 0
      %1343 = vmatmul.mubr.bf16.gmra.mxu0 %v1222
      %v1344 = vpop.f32.mrf.mxu0
      %v1345 = vadd.f32 0.0, %v1344
      %v1346 = vpop.f32.mrf.mxu0
      %v1347 = vpop.f32.mrf.mxu0
      %v1348 = vadd.f32 0.0, %v1347
      %v1349 = vpop.f32.mrf.mxu0
      %1350 = vmatprep.mubr.bf16.mxu0 0
      %1351 = vmatmul.mubr.bf16.gmra.mxu0 %v1225
      %v1352 = vpop.f32.mrf.mxu0
      %v1353 = vadd.f32 0.0, %v1352
      %v1354 = vpop.f32.mrf.mxu0
      %v1355 = vpop.f32.mrf.mxu0
      %v1356 = vadd.f32 0.0, %v1355
      %v1357 = vpop.f32.mrf.mxu0
      %1358 = vmatprep.mubr.bf16.mxu0 0
      %1359 = vmatmul.mubr.bf16.gmra.mxu0 %v1228
      %v1360 = vpop.f32.mrf.mxu0
      %v1361 = vadd.f32 0.0, %v1360
      %v1362 = vpop.f32.mrf.mxu0
      %v1363 = vpop.f32.mrf.mxu0
      %v1364 = vadd.f32 0.0, %v1363
      %v1365 = vpop.f32.mrf.mxu0
      %1366 = vmatprep.mubr.bf16.mxu0 0
      %1367 = vmatmul.mubr.bf16.gmra.mxu0 %v1231
      %v1368 = vpop.f32.mrf.mxu0
      %v1369 = vadd.f32 0.0, %v1368
      %v1370 = vpop.f32.mrf.mxu0
      %v1371 = vpop.f32.mrf.mxu0
      %v1372 = vadd.f32 0.0, %v1371
      %v1373 = vpop.f32.mrf.mxu0
      %1374 = vmatprep.mubr.bf16.mxu0 0
      %1375 = vmatmul.mubr.bf16.gmra.mxu0 %v1234
      %v1376 = vpop.f32.mrf.mxu0
      %v1377 = vadd.f32 0.0, %v1376
      %v1378 = vpop.f32.mrf.mxu0
      %v1379 = vpop.f32.mrf.mxu0
      %v1380 = vadd.f32 0.0, %v1379
      %v1381 = vpop.f32.mrf.mxu0
      %1382 = vmatprep.mubr.bf16.mxu0 0
      %1383 = vmatmul.mubr.bf16.gmra.mxu0 %v1237
      %v1384 = vpop.f32.mrf.mxu0
      %v1385 = vadd.f32 0.0, %v1384
      %v1386 = vpop.f32.mrf.mxu0
      %v1387 = vpop.f32.mrf.mxu0
      %v1388 = vadd.f32 0.0, %v1387
      %v1389 = vpop.f32.mrf.mxu0
      %1390 = vmatprep.mubr.bf16.mxu0 0
      %1391 = vmatmul.mubr.bf16.gmra.mxu0 %v1240
      %v1392 = vpop.f32.mrf.mxu0
      %v1393 = vadd.f32 0.0, %v1392
      %v1394 = vpop.f32.mrf.mxu0
      %v1395 = vpop.f32.mrf.mxu0
      %v1396 = vadd.f32 0.0, %v1395
      %v1397 = vpop.f32.mrf.mxu0
      %1398 = vmatprep.mubr.bf16.mxu0 0
      %1399 = vmatmul.mubr.bf16.gmra.mxu0 %v1243
      %v1400 = vpop.f32.mrf.mxu0
      %v1401 = vadd.f32 0.0, %v1400
      %v1402 = vpop.f32.mrf.mxu0
      %v1403 = vpop.f32.mrf.mxu0
      %v1404 = vadd.f32 0.0, %v1403
      %v1405 = vpop.f32.mrf.mxu0
      %1406 = vmatprep.mubr.bf16.mxu0 0
      %1407 = vmatmul.mubr.bf16.gmra.mxu0 %v1246
      %v1408 = vpop.f32.mrf.mxu0
      %v1409 = vadd.f32 0.0, %v1408
      %v1410 = vpop.f32.mrf.mxu0
      %v1411 = vpop.f32.mrf.mxu0
      %v1412 = vadd.f32 0.0, %v1411
      %v1413 = vpop.f32.mrf.mxu0
      %1414 = vmatprep.mubr.bf16.mxu0 0
      %1415 = vmatmul.mubr.bf16.gmra.mxu0 %v1249
      %v1416 = vpop.f32.mrf.mxu0
      %v1417 = vadd.f32 0.0, %v1416
      %v1418 = vpop.f32.mrf.mxu0
      %v1419 = vpop.f32.mrf.mxu0
      %v1420 = vadd.f32 0.0, %v1419
      %v1421 = vpop.f32.mrf.mxu0
      %1422 = vmatprep.mubr.bf16.mxu0 0
      %1423 = vmatmul.mubr.bf16.gmra.mxu0 %v1252
      %v1424 = vpop.f32.mrf.mxu0
      %v1425 = vadd.f32 0.0, %v1424
      %v1426 = vpop.f32.mrf.mxu0
      %v1427 = vpop.f32.mrf.mxu0
      %v1428 = vadd.f32 0.0, %v1427
      %v1429 = vpop.f32.mrf.mxu0
      %1430 = vdwg.mxu0
      %v1431 = vadd.f32 %v1105, %v1289
      %v1432 = vadd.f32 %v1106, %v1292
      %v1433 = vadd.f32 %v1107, %v1297
      %v1434 = vadd.f32 %v1108, %v1300
      %v1435 = vadd.f32 %v1109, %v1305
      %v1436 = vadd.f32 %v1110, %v1308
      %v1437 = vadd.f32 %v1111, %v1313
      %v1438 = vadd.f32 %v1112, %v1316
      %v1439 = vadd.f32 %v1113, %v1321
      %v1440 = vadd.f32 %v1114, %v1324
      %v1441 = vadd.f32 %v1115, %v1329
      %v1442 = vadd.f32 %v1116, %v1332
      %v1443 = vadd.f32 %v1117, %v1337
      %v1444 = vadd.f32 %v1118, %v1340
      %v1445 = vadd.f32 %v1119, %v1345
      %v1446 = vadd.f32 %v1120, %v1348
      %v1447 = vadd.f32 %v1121, %v1353
      %v1448 = vadd.f32 %v1122, %v1356
      %v1449 = vadd.f32 %v1123, %v1361
      %v1450 = vadd.f32 %v1124, %v1364
      %v1451 = vadd.f32 %v1125, %v1369
      %v1452 = vadd.f32 %v1126, %v1372
      %v1453 = vadd.f32 %v1127, %v1377
      %v1454 = vadd.f32 %v1128, %v1380
      %v1455 = vadd.f32 %v1129, %v1385
      %v1456 = vadd.f32 %v1130, %v1388
      %v1457 = vadd.f32 %v1131, %v1393
      %v1458 = vadd.f32 %v1132, %v1396
      %v1459 = vadd.f32 %v1133, %v1401
      %v1460 = vadd.f32 %v1134, %v1404
      %v1461 = vadd.f32 %v1135, %v1409
      %v1462 = vadd.f32 %v1136, %v1412
      %v1463 = vadd.f32 %v1137, %v1417
      %v1464 = vadd.f32 %v1138, %v1420
      %v1465 = vadd.f32 %v1139, %v1425
      %v1466 = vadd.f32 %v1140, %v1428
      %v1467 = vld [vmem:[#allocation2 + $0x94] sm:$0xf]
      %s1468 = scalar_lea.vmem %s2, 32
      %v1469 = vld [vmem:[%s1468] sm:$0xf]
      %v1470 = vld [vmem:[%s1468 + $0x4] sm:$0xf]
      %v1471 = vld [vmem:[%s1468 + $0x8] sm:$0xf]
      %v1472 = vld [vmem:[%s1468 + $0xc] sm:$0xf]
      %v1474 = vunpack.c.l.b16 %v1467
      %v1475 = vpack.c.b16 %v1474, %v1474
      %vm1476 = vsmask.f32 4352
      %v1478 = vshrl.u32 %v1149, 16
      %v1480 = vrot.slane %v1478, 3
      %v1481 = vshll.u32 %v1149, 16
      %v1483 = vrot.slane %v1481, 4
      %v1484 = vor.u32 %v1480, %v1483
      %v1485 = vrot.slane %v700, 3
      %v1486 = vrot.slane %v703, 4
      %v1487 = vor.u32 %v1485, %v1486
      %v1488 = vsel %vm1476, %v1484, %v1487
      %v1489 = vrot.slane %v709, 3
      %v1490 = vrot.slane %v712, 4
      %v1491 = vor.u32 %v1489, %v1490
      %v1492 = vsel %vm1476, %v1487, %v1491
      %v1493 = vrot.slane %v718, 3
      %v1494 = vrot.slane %v721, 4
      %v1495 = vor.u32 %v1493, %v1494
      %v1496 = vsel %vm1476, %v1491, %v1495
      %v1497 = vrot.slane %v727, 3
      %v1498 = vrot.slane %v730, 4
      %v1499 = vor.u32 %v1497, %v1498
      %v1500 = vsel %vm1476, %v1495, %v1499
      %v1501 = vrot.slane %v736, 3
      %v1502 = vrot.slane %v739, 4
      %v1503 = vor.u32 %v1501, %v1502
      %v1504 = vsel %vm1476, %v1499, %v1503
      %v1505 = vrot.slane %v745, 3
      %v1506 = vrot.slane %v748, 4
      %v1507 = vor.u32 %v1505, %v1506
      %v1508 = vsel %vm1476, %v1503, %v1507
      %v1509 = vrot.slane %v754, 3
      %v1510 = vrot.slane %v757, 4
      %v1511 = vor.u32 %v1509, %v1510
      %v1512 = vsel %vm1476, %v1507, %v1511
      %v1513 = vrot.slane %v763, 3
      %v1514 = vrot.slane %v766, 4
      %v1515 = vor.u32 %v1513, %v1514
      %v1516 = vsel %vm1476, %v1511, %v1515
      %v1517 = vrot.slane %v772, 3
      %v1518 = vrot.slane %v775, 4
      %v1519 = vor.u32 %v1517, %v1518
      %v1520 = vsel %vm1476, %v1515, %v1519
      %v1521 = vrot.slane %v781, 3
      %v1522 = vrot.slane %v784, 4
      %v1523 = vor.u32 %v1521, %v1522
      %v1524 = vsel %vm1476, %v1519, %v1523
      %v1525 = vrot.slane %v790, 3
      %v1526 = vrot.slane %v793, 4
      %v1527 = vor.u32 %v1525, %v1526
      %v1528 = vsel %vm1476, %v1523, %v1527
      %v1529 = vrot.slane %v799, 3
      %v1530 = vrot.slane %v802, 4
      %v1531 = vor.u32 %v1529, %v1530
      %v1532 = vsel %vm1476, %v1527, %v1531
      %v1533 = vrot.slane %v808, 3
      %v1534 = vrot.slane %v811, 4
      %v1535 = vor.u32 %v1533, %v1534
      %v1536 = vsel %vm1476, %v1531, %v1535
      %v1537 = vrot.slane %v817, 3
      %v1538 = vrot.slane %v820, 4
      %v1539 = vor.u32 %v1537, %v1538
      %v1540 = vsel %vm1476, %v1535, %v1539
      %v1541 = vrot.slane %v826, 3
      %v1542 = vrot.slane %v829, 4
      %v1543 = vor.u32 %v1541, %v1542
      %v1544 = vsel %vm1476, %v1539, %v1543
      %v1545 = vrot.slane %v835, 3
      %v1546 = vrot.slane %v838, 4
      %v1547 = vor.u32 %v1545, %v1546
      %v1548 = vsel %vm1476, %v1543, %v1547
      %v1549 = vrot.slane %v844, 3
      %v1550 = vrot.slane %v847, 4
      %v1551 = vor.u32 %v1549, %v1550
      %v1552 = vsel %vm1476, %v1547, %v1551
      %v1554 = vshrl.u32 %v1475, 16
      %v1556 = vrot.slane %v1554, 3
      %v1557 = vshll.u32 %v1475, 16
      %v1559 = vrot.slane %v1557, 4
      %v1560 = vor.u32 %v1556, %v1559
      %v1561 = vsel %vm1476, %v1551, %v1560
      %v1566 = vunpack.c.l.b16 %v1469
      %v1567 = vunpack.c.l.b16 %v1470
      %v1568 = vunpack.c.l.b16 %v1471
      %v1569 = vunpack.c.l.b16 %v1472
      %v1570 = vpack.c.b16 %v1567, %v1566
      %v1571 = vpack.c.b16 %v1569, %v1568
      %v1575 = vsel %vm873, %v1488, 0
      %v1578 = vsel %vm873, %v1492, 0
      %v1581 = vsel %vm873, %v1496, 0
      %v1584 = vsel %vm873, %v1500, 0
      %v1587 = vsel %vm873, %v1504, 0
      %v1590 = vsel %vm873, %v1508, 0
      %v1593 = vsel %vm873, %v1512, 0
      %v1596 = vsel %vm873, %v1516, 0
      %v1599 = vsel %vm873, %v1520, 0
      %v1602 = vsel %vm873, %v1524, 0
      %v1605 = vsel %vm873, %v1528, 0
      %v1608 = vsel %vm873, %v1532, 0
      %v1611 = vsel %vm873, %v1536, 0
      %v1614 = vsel %vm873, %v1540, 0
      %v1617 = vsel %vm873, %v1544, 0
      %v1620 = vsel %vm873, %v1548, 0
      %v1623 = vsel %vm873, %v1552, 0
      %v1626 = vsel %vm873, %v1561, 0
      %1628 = vmatprep.subr.bf16.mxu0 0
      %1629 = vmatpush1.bf16.msra.mxu0 0
      %1630 = vmatprep.subr.bf16.mxu0 0
      %1631 = vmatpush1.bf16.msra.mxu0 0
      %1632 = vmatprep.subr.bf16.mxu0 0
      %1633 = vmatpush1.bf16.msra.mxu0 0
      %1634 = vmatprep.subr.bf16.mxu0 0
      %1635 = vmatpush1.bf16.msra.mxu0 0
      %1636 = vmatprep.subr.bf16.mxu0 0
      %1637 = vmatpush1.bf16.msra.mxu0 0
      %1638 = vmatprep.subr.bf16.mxu0 0
      %1639 = vmatpush1.bf16.msra.mxu0 0
      %1640 = vmatprep.subr.bf16.mxu0 0
      %1641 = vmatpush1.bf16.msra.mxu0 %v1571
      %1642 = vmatprep.subr.bf16.mxu0 0
      %1643 = vmatpush1.bf16.msra.mxu0 %v1570
      %1644 = vmatprep.subr.bf16.mxu0 0
      %1645 = vmatpush2.bf16.msra.mxu0 0
      %1646 = vmatprep.subr.bf16.mxu0 0
      %1647 = vmatpush2.bf16.msra.mxu0 0
      %1648 = vmatprep.subr.bf16.mxu0 0
      %1649 = vmatpush2.bf16.msra.mxu0 0
      %1650 = vmatprep.subr.bf16.mxu0 0
      %1651 = vmatpush2.bf16.msra.mxu0 0
      %1652 = vmatprep.subr.bf16.mxu0 0
      %1653 = vmatpush2.bf16.msra.mxu0 0
      %1654 = vmatprep.subr.bf16.mxu0 0
      %1655 = vmatpush2.bf16.msra.mxu0 0
      %1656 = vmatprep.subr.bf16.mxu0 0
      %1657 = vmatpush2.bf16.msra.mxu0 0
      %1658 = vmatprep.subr.bf16.mxu0 0
      %1659 = vmatpush2.bf16.msra.mxu0 0
      %1660 = vmatprep.mubr.bf16.mxu0 0
      %1661 = vmatmul.mubr.bf16.gmra.mxu0 %v1575
      %v1662 = vpop.f32.mrf.mxu0
      %v1663 = vadd.f32 0.0, %v1662
      %v1664 = vpop.f32.mrf.mxu0
      %v1665 = vpop.f32.mrf.mxu0
      %v1666 = vadd.f32 0.0, %v1665
      %v1667 = vpop.f32.mrf.mxu0
      %1668 = vmatprep.mubr.bf16.mxu0 0
      %1669 = vmatmul.mubr.bf16.gmra.mxu0 %v1578
      %v1670 = vpop.f32.mrf.mxu0
      %v1671 = vadd.f32 0.0, %v1670
      %v1672 = vpop.f32.mrf.mxu0
      %v1673 = vpop.f32.mrf.mxu0
      %v1674 = vadd.f32 0.0, %v1673
      %v1675 = vpop.f32.mrf.mxu0
      %1676 = vmatprep.mubr.bf16.mxu0 0
      %1677 = vmatmul.mubr.bf16.gmra.mxu0 %v1581
      %v1678 = vpop.f32.mrf.mxu0
      %v1679 = vadd.f32 0.0, %v1678
      %v1680 = vpop.f32.mrf.mxu0
      %v1681 = vpop.f32.mrf.mxu0
      %v1682 = vadd.f32 0.0, %v1681
      %v1683 = vpop.f32.mrf.mxu0
      %1684 = vmatprep.mubr.bf16.mxu0 0
      %1685 = vmatmul.mubr.bf16.gmra.mxu0 %v1584
      %v1686 = vpop.f32.mrf.mxu0
      %v1687 = vadd.f32 0.0, %v1686
      %v1688 = vpop.f32.mrf.mxu0
      %v1689 = vpop.f32.mrf.mxu0
      %v1690 = vadd.f32 0.0, %v1689
      %v1691 = vpop.f32.mrf.mxu0
      %1692 = vmatprep.mubr.bf16.mxu0 0
      %1693 = vmatmul.mubr.bf16.gmra.mxu0 %v1587
      %v1694 = vpop.f32.mrf.mxu0
      %v1695 = vadd.f32 0.0, %v1694
      %v1696 = vpop.f32.mrf.mxu0
      %v1697 = vpop.f32.mrf.mxu0
      %v1698 = vadd.f32 0.0, %v1697
      %v1699 = vpop.f32.mrf.mxu0
      %1700 = vmatprep.mubr.bf16.mxu0 0
      %1701 = vmatmul.mubr.bf16.gmra.mxu0 %v1590
      %v1702 = vpop.f32.mrf.mxu0
      %v1703 = vadd.f32 0.0, %v1702
      %v1704 = vpop.f32.mrf.mxu0
      %v1705 = vpop.f32.mrf.mxu0
      %v1706 = vadd.f32 0.0, %v1705
      %v1707 = vpop.f32.mrf.mxu0
      %1708 = vmatprep.mubr.bf16.mxu0 0
      %1709 = vmatmul.mubr.bf16.gmra.mxu0 %v1593
      %v1710 = vpop.f32.mrf.mxu0
      %v1711 = vadd.f32 0.0, %v1710
      %v1712 = vpop.f32.mrf.mxu0
      %v1713 = vpop.f32.mrf.mxu0
      %v1714 = vadd.f32 0.0, %v1713
      %v1715 = vpop.f32.mrf.mxu0
      %1716 = vmatprep.mubr.bf16.mxu0 0
      %1717 = vmatmul.mubr.bf16.gmra.mxu0 %v1596
      %v1718 = vpop.f32.mrf.mxu0
      %v1719 = vadd.f32 0.0, %v1718
      %v1720 = vpop.f32.mrf.mxu0
      %v1721 = vpop.f32.mrf.mxu0
      %v1722 = vadd.f32 0.0, %v1721
      %v1723 = vpop.f32.mrf.mxu0
      %1724 = vmatprep.mubr.bf16.mxu0 0
      %1725 = vmatmul.mubr.bf16.gmra.mxu0 %v1599
      %v1726 = vpop.f32.mrf.mxu0
      %v1727 = vadd.f32 0.0, %v1726
      %v1728 = vpop.f32.mrf.mxu0
      %v1729 = vpop.f32.mrf.mxu0
      %v1730 = vadd.f32 0.0, %v1729
      %v1731 = vpop.f32.mrf.mxu0
      %1732 = vmatprep.mubr.bf16.mxu0 0
      %1733 = vmatmul.mubr.bf16.gmra.mxu0 %v1602
      %v1734 = vpop.f32.mrf.mxu0
      %v1735 = vadd.f32 0.0, %v1734
      %v1736 = vpop.f32.mrf.mxu0
      %v1737 = vpop.f32.mrf.mxu0
      %v1738 = vadd.f32 0.0, %v1737
      %v1739 = vpop.f32.mrf.mxu0
      %1740 = vmatprep.mubr.bf16.mxu0 0
      %1741 = vmatmul.mubr.bf16.gmra.mxu0 %v1605
      %v1742 = vpop.f32.mrf.mxu0
      %v1743 = vadd.f32 0.0, %v1742
      %v1744 = vpop.f32.mrf.mxu0
      %v1745 = vpop.f32.mrf.mxu0
      %v1746 = vadd.f32 0.0, %v1745
      %v1747 = vpop.f32.mrf.mxu0
      %1748 = vmatprep.mubr.bf16.mxu0 0
      %1749 = vmatmul.mubr.bf16.gmra.mxu0 %v1608
      %v1750 = vpop.f32.mrf.mxu0
      %v1751 = vadd.f32 0.0, %v1750
      %v1752 = vpop.f32.mrf.mxu0
      %v1753 = vpop.f32.mrf.mxu0
      %v1754 = vadd.f32 0.0, %v1753
      %v1755 = vpop.f32.mrf.mxu0
      %1756 = vmatprep.mubr.bf16.mxu0 0
      %1757 = vmatmul.mubr.bf16.gmra.mxu0 %v1611
      %v1758 = vpop.f32.mrf.mxu0
      %v1759 = vadd.f32 0.0, %v1758
      %v1760 = vpop.f32.mrf.mxu0
      %v1761 = vpop.f32.mrf.mxu0
      %v1762 = vadd.f32 0.0, %v1761
      %v1763 = vpop.f32.mrf.mxu0
      %1764 = vmatprep.mubr.bf16.mxu0 0
      %1765 = vmatmul.mubr.bf16.gmra.mxu0 %v1614
      %v1766 = vpop.f32.mrf.mxu0
      %v1767 = vadd.f32 0.0, %v1766
      %v1768 = vpop.f32.mrf.mxu0
      %v1769 = vpop.f32.mrf.mxu0
      %v1770 = vadd.f32 0.0, %v1769
      %v1771 = vpop.f32.mrf.mxu0
      %1772 = vmatprep.mubr.bf16.mxu0 0
      %1773 = vmatmul.mubr.bf16.gmra.mxu0 %v1617
      %v1774 = vpop.f32.mrf.mxu0
      %v1775 = vadd.f32 0.0, %v1774
      %v1776 = vpop.f32.mrf.mxu0
      %v1777 = vpop.f32.mrf.mxu0
      %v1778 = vadd.f32 0.0, %v1777
      %v1779 = vpop.f32.mrf.mxu0
      %1780 = vmatprep.mubr.bf16.mxu0 0
      %1781 = vmatmul.mubr.bf16.gmra.mxu0 %v1620
      %v1782 = vpop.f32.mrf.mxu0
      %v1783 = vadd.f32 0.0, %v1782
      %v1784 = vpop.f32.mrf.mxu0
      %v1785 = vpop.f32.mrf.mxu0
      %v1786 = vadd.f32 0.0, %v1785
      %v1787 = vpop.f32.mrf.mxu0
      %1788 = vmatprep.mubr.bf16.mxu0 0
      %1789 = vmatmul.mubr.bf16.gmra.mxu0 %v1623
      %v1790 = vpop.f32.mrf.mxu0
      %v1791 = vadd.f32 0.0, %v1790
      %v1792 = vpop.f32.mrf.mxu0
      %v1793 = vpop.f32.mrf.mxu0
      %v1794 = vadd.f32 0.0, %v1793
      %v1795 = vpop.f32.mrf.mxu0
      %1796 = vmatprep.mubr.bf16.mxu0 0
      %1797 = vmatmul.mubr.bf16.gmra.mxu0 %v1626
      %v1798 = vpop.f32.mrf.mxu0
      %v1799 = vadd.f32 0.0, %v1798
      %v1800 = vpop.f32.mrf.mxu0
      %v1801 = vpop.f32.mrf.mxu0
      %v1802 = vadd.f32 0.0, %v1801
      %v1803 = vpop.f32.mrf.mxu0
      %1804 = vdwg.mxu0
      %v1805 = vadd.f32 %v1431, %v1663
      %v1806 = vadd.f32 %v1432, %v1666
      %v1807 = vadd.f32 %v1433, %v1671
      %v1808 = vadd.f32 %v1434, %v1674
      %v1809 = vadd.f32 %v1435, %v1679
      %v1810 = vadd.f32 %v1436, %v1682
      %v1811 = vadd.f32 %v1437, %v1687
      %v1812 = vadd.f32 %v1438, %v1690
      %v1813 = vadd.f32 %v1439, %v1695
      %v1814 = vadd.f32 %v1440, %v1698
      %v1815 = vadd.f32 %v1441, %v1703
      %v1816 = vadd.f32 %v1442, %v1706
      %v1817 = vadd.f32 %v1443, %v1711
      %v1818 = vadd.f32 %v1444, %v1714
      %v1819 = vadd.f32 %v1445, %v1719
      %v1820 = vadd.f32 %v1446, %v1722
      %v1821 = vadd.f32 %v1447, %v1727
      %v1822 = vadd.f32 %v1448, %v1730
      %v1823 = vadd.f32 %v1449, %v1735
      %v1824 = vadd.f32 %v1450, %v1738
      %v1825 = vadd.f32 %v1451, %v1743
      %v1826 = vadd.f32 %v1452, %v1746
      %v1827 = vadd.f32 %v1453, %v1751
      %v1828 = vadd.f32 %v1454, %v1754
      %v1829 = vadd.f32 %v1455, %v1759
      %v1830 = vadd.f32 %v1456, %v1762
      %v1831 = vadd.f32 %v1457, %v1767
      %v1832 = vadd.f32 %v1458, %v1770
      %v1833 = vadd.f32 %v1459, %v1775
      %v1834 = vadd.f32 %v1460, %v1778
      %v1835 = vadd.f32 %v1461, %v1783
      %v1836 = vadd.f32 %v1462, %v1786
      %v1837 = vadd.f32 %v1463, %v1791
      %v1838 = vadd.f32 %v1464, %v1794
      %v1839 = vadd.f32 %v1465, %v1799
      %v1840 = vadd.f32 %v1466, %v1802
      %v1841 = vld [vmem:[#allocation2 + $0xc] sm:$0x8]
      %v1842 = vld [vmem:[#allocation2 + $0x10] sm:$0xf]
      %v1843 = vld [vmem:[#allocation2 + $0x14] sm:$0xf]
      %v1844 = vld [vmem:[#allocation2 + $0x18] sm:$0xf]
      %v1845 = vld [vmem:[#allocation2 + $0x1c] sm:$0xf]
      %v1846 = vld [vmem:[#allocation2 + $0x20] sm:$0xf]
      %v1847 = vld [vmem:[#allocation2 + $0x24] sm:$0xf]
      %v1848 = vld [vmem:[#allocation2 + $0x28] sm:$0xf]
      %v1849 = vld [vmem:[#allocation2 + $0x2c] sm:$0xf]
      %v1850 = vld [vmem:[#allocation2 + $0x30] sm:$0xf]
      %v1851 = vld [vmem:[#allocation2 + $0x34] sm:$0xf]
      %v1852 = vld [vmem:[#allocation2 + $0x38] sm:$0xf]
      %v1853 = vld [vmem:[#allocation2 + $0x3c] sm:$0xf]
      %v1854 = vld [vmem:[#allocation2 + $0x40] sm:$0xf]
      %v1855 = vld [vmem:[#allocation2 + $0x44] sm:$0xf]
      %v1856 = vld [vmem:[#allocation2 + $0x48] sm:$0xf]
      %v1857 = vld [vmem:[#allocation2 + $0x4c] sm:$0xf]
      %v1858 = vld [vmem:[#allocation2 + $0x50] sm:$0xf]
      %v1859 = vld [vmem:[#allocation2 + $0x54] sm:$0xf]
      %v1860 = vld [vmem:[#allocation2 + $0x58] sm:$0xf]
      %v1861 = vld [vmem:[#allocation2 + $0x5c] sm:$0xf]
      %v1862 = vld [vmem:[#allocation2 + $0x60] sm:$0xf]
      %v1863 = vld [vmem:[#allocation2 + $0x64] sm:$0xf]
      %v1864 = vld [vmem:[#allocation2 + $0x68] sm:$0xf]
      %v1865 = vld [vmem:[#allocation2 + $0x6c] sm:$0xf]
      %v1866 = vld [vmem:[#allocation2 + $0x70] sm:$0xf]
      %v1867 = vld [vmem:[#allocation2 + $0x74] sm:$0xf]
      %v1868 = vld [vmem:[#allocation2 + $0x78] sm:$0xf]
      %v1869 = vld [vmem:[#allocation2 + $0x7c] sm:$0xf]
      %v1870 = vld [vmem:[#allocation2 + $0x80] sm:$0xf]
      %v1871 = vld [vmem:[#allocation2 + $0x84] sm:$0xf]
      %v1872 = vld [vmem:[#allocation2 + $0x88] sm:$0xf]
      %v1873 = vld [vmem:[#allocation2 + $0x8c] sm:$0xf]
      %v1874 = vld [vmem:[#allocation2 + $0x90] sm:$0xf]
      %v1875 = vld [vmem:[#allocation2 + $0x94] sm:$0xf]
      %v1876 = vld [vmem:[#allocation2 + $0x98] sm:$0xf]
      %v1877 = vld [vmem:[#allocation2 + $0x9c] sm:$0xf]
      %s1878 = scalar_lea.vmem %s2, 48
      %v1879 = vld [vmem:[%s1878] sm:$0xf]
      %v1880 = vld [vmem:[%s1878 + $0x4] sm:$0xf]
      %v1881 = vld [vmem:[%s1878 + $0x8] sm:$0xf]
      %v1882 = vld [vmem:[%s1878 + $0xc] sm:$0xf]
      %v1920 = vunpack.c.l.b16 %v1841
      %v1921 = vunpack.c.l.b16 %v1842
      %v1922 = vunpack.c.l.b16 %v1843
      %v1923 = vunpack.c.l.b16 %v1844
      %v1924 = vunpack.c.l.b16 %v1845
      %v1925 = vunpack.c.l.b16 %v1846
      %v1926 = vunpack.c.l.b16 %v1847
      %v1927 = vunpack.c.l.b16 %v1848
      %v1928 = vunpack.c.l.b16 %v1849
      %v1929 = vunpack.c.l.b16 %v1850
      %v1930 = vunpack.c.l.b16 %v1851
      %v1931 = vunpack.c.l.b16 %v1852
      %v1932 = vunpack.c.l.b16 %v1853
      %v1933 = vunpack.c.l.b16 %v1854
      %v1934 = vunpack.c.l.b16 %v1855
      %v1935 = vunpack.c.l.b16 %v1856
      %v1936 = vunpack.c.l.b16 %v1857
      %v1937 = vunpack.c.l.b16 %v1858
      %v1938 = vunpack.c.l.b16 %v1859
      %v1939 = vunpack.c.l.b16 %v1860
      %v1940 = vunpack.c.l.b16 %v1861
      %v1941 = vunpack.c.l.b16 %v1862
      %v1942 = vunpack.c.l.b16 %v1863
      %v1943 = vunpack.c.l.b16 %v1864
      %v1944 = vunpack.c.l.b16 %v1865
      %v1945 = vunpack.c.l.b16 %v1866
      %v1946 = vunpack.c.l.b16 %v1867
      %v1947 = vunpack.c.l.b16 %v1868
      %v1948 = vunpack.c.l.b16 %v1869
      %v1949 = vunpack.c.l.b16 %v1870
      %v1950 = vunpack.c.l.b16 %v1871
      %v1951 = vunpack.c.l.b16 %v1872
      %v1952 = vunpack.c.l.b16 %v1873
      %v1953 = vunpack.c.l.b16 %v1874
      %v1954 = vunpack.c.l.b16 %v1875
      %v1955 = vunpack.c.l.b16 %v1876
      %v1956 = vunpack.c.l.b16 %v1877
      %v1957 = vpack.c.b16 %v1921, %v1920
      %v1958 = vpack.c.b16 %v1923, %v1922
      %v1959 = vpack.c.b16 %v1925, %v1924
      %v1960 = vpack.c.b16 %v1927, %v1926
      %v1961 = vpack.c.b16 %v1929, %v1928
      %v1962 = vpack.c.b16 %v1931, %v1930
      %v1963 = vpack.c.b16 %v1933, %v1932
      %v1964 = vpack.c.b16 %v1935, %v1934
      %v1965 = vpack.c.b16 %v1937, %v1936
      %v1966 = vpack.c.b16 %v1939, %v1938
      %v1967 = vpack.c.b16 %v1941, %v1940
      %v1968 = vpack.c.b16 %v1943, %v1942
      %v1969 = vpack.c.b16 %v1945, %v1944
      %v1970 = vpack.c.b16 %v1947, %v1946
      %v1971 = vpack.c.b16 %v1949, %v1948
      %v1972 = vpack.c.b16 %v1951, %v1950
      %v1973 = vpack.c.b16 %v1953, %v1952
      %v1974 = vpack.c.b16 %v1955, %v1954
      %v1975 = vpack.c.b16 %v1956, %v1956
      %v1977 = vshrl.u32 %v1957, 16
      %v1979 = vrot.slane %v1977, 3
      %v1980 = vshll.u32 %v1957, 16
      %v1982 = vrot.slane %v1980, 4
      %v1983 = vor.u32 %v1979, %v1982
      %v1985 = vshrl.u32 %v1958, 16
      %v1987 = vrot.slane %v1985, 3
      %v1988 = vshll.u32 %v1958, 16
      %v1990 = vrot.slane %v1988, 4
      %v1991 = vor.u32 %v1987, %v1990
      %v1992 = vsel %vm1476, %v1983, %v1991
      %v1994 = vshrl.u32 %v1959, 16
      %v1996 = vrot.slane %v1994, 3
      %v1997 = vshll.u32 %v1959, 16
      %v1999 = vrot.slane %v1997, 4
      %v2000 = vor.u32 %v1996, %v1999
      %v2001 = vsel %vm1476, %v1991, %v2000
      %v2003 = vshrl.u32 %v1960, 16
      %v2005 = vrot.slane %v2003, 3
      %v2006 = vshll.u32 %v1960, 16
      %v2008 = vrot.slane %v2006, 4
      %v2009 = vor.u32 %v2005, %v2008
      %v2010 = vsel %vm1476, %v2000, %v2009
      %v2012 = vshrl.u32 %v1961, 16
      %v2014 = vrot.slane %v2012, 3
      %v2015 = vshll.u32 %v1961, 16
      %v2017 = vrot.slane %v2015, 4
      %v2018 = vor.u32 %v2014, %v2017
      %v2019 = vsel %vm1476, %v2009, %v2018
      %v2021 = vshrl.u32 %v1962, 16
      %v2023 = vrot.slane %v2021, 3
      %v2024 = vshll.u32 %v1962, 16
      %v2026 = vrot.slane %v2024, 4
      %v2027 = vor.u32 %v2023, %v2026
      %v2028 = vsel %vm1476, %v2018, %v2027
      %v2030 = vshrl.u32 %v1963, 16
      %v2032 = vrot.slane %v2030, 3
      %v2033 = vshll.u32 %v1963, 16
      %v2035 = vrot.slane %v2033, 4
      %v2036 = vor.u32 %v2032, %v2035
      %v2037 = vsel %vm1476, %v2027, %v2036
      %v2039 = vshrl.u32 %v1964, 16
      %v2041 = vrot.slane %v2039, 3
      %v2042 = vshll.u32 %v1964, 16
      %v2044 = vrot.slane %v2042, 4
      %v2045 = vor.u32 %v2041, %v2044
      %v2046 = vsel %vm1476, %v2036, %v2045
      %v2048 = vshrl.u32 %v1965, 16
      %v2050 = vrot.slane %v2048, 3
      %v2051 = vshll.u32 %v1965, 16
      %v2053 = vrot.slane %v2051, 4
      %v2054 = vor.u32 %v2050, %v2053
      %v2055 = vsel %vm1476, %v2045, %v2054
      %v2057 = vshrl.u32 %v1966, 16
      %v2059 = vrot.slane %v2057, 3
      %v2060 = vshll.u32 %v1966, 16
      %v2062 = vrot.slane %v2060, 4
      %v2063 = vor.u32 %v2059, %v2062
      %v2064 = vsel %vm1476, %v2054, %v2063
      %v2066 = vshrl.u32 %v1967, 16
      %v2068 = vrot.slane %v2066, 3
      %v2069 = vshll.u32 %v1967, 16
      %v2071 = vrot.slane %v2069, 4
      %v2072 = vor.u32 %v2068, %v2071
      %v2073 = vsel %vm1476, %v2063, %v2072
      %v2075 = vshrl.u32 %v1968, 16
      %v2077 = vrot.slane %v2075, 3
      %v2078 = vshll.u32 %v1968, 16
      %v2080 = vrot.slane %v2078, 4
      %v2081 = vor.u32 %v2077, %v2080
      %v2082 = vsel %vm1476, %v2072, %v2081
      %v2084 = vshrl.u32 %v1969, 16
      %v2086 = vrot.slane %v2084, 3
      %v2087 = vshll.u32 %v1969, 16
      %v2089 = vrot.slane %v2087, 4
      %v2090 = vor.u32 %v2086, %v2089
      %v2091 = vsel %vm1476, %v2081, %v2090
      %v2093 = vshrl.u32 %v1970, 16
      %v2095 = vrot.slane %v2093, 3
      %v2096 = vshll.u32 %v1970, 16
      %v2098 = vrot.slane %v2096, 4
      %v2099 = vor.u32 %v2095, %v2098
      %v2100 = vsel %vm1476, %v2090, %v2099
      %v2102 = vshrl.u32 %v1971, 16
      %v2104 = vrot.slane %v2102, 3
      %v2105 = vshll.u32 %v1971, 16
      %v2107 = vrot.slane %v2105, 4
      %v2108 = vor.u32 %v2104, %v2107
      %v2109 = vsel %vm1476, %v2099, %v2108
      %v2111 = vshrl.u32 %v1972, 16
      %v2113 = vrot.slane %v2111, 3
      %v2114 = vshll.u32 %v1972, 16
      %v2116 = vrot.slane %v2114, 4
      %v2117 = vor.u32 %v2113, %v2116
      %v2118 = vsel %vm1476, %v2108, %v2117
      %v2120 = vshrl.u32 %v1973, 16
      %v2122 = vrot.slane %v2120, 3
      %v2123 = vshll.u32 %v1973, 16
      %v2125 = vrot.slane %v2123, 4
      %v2126 = vor.u32 %v2122, %v2125
      %v2127 = vsel %vm1476, %v2117, %v2126
      %v2129 = vshrl.u32 %v1974, 16
      %v2131 = vrot.slane %v2129, 3
      %v2132 = vshll.u32 %v1974, 16
      %v2134 = vrot.slane %v2132, 4
      %v2135 = vor.u32 %v2131, %v2134
      %v2136 = vsel %vm1476, %v2126, %v2135
      %v2138 = vshrl.u32 %v1975, 16
      %v2140 = vrot.slane %v2138, 3
      %v2141 = vshll.u32 %v1975, 16
      %v2143 = vrot.slane %v2141, 4
      %v2144 = vor.u32 %v2140, %v2143
      %v2145 = vsel %vm1476, %v2135, %v2144
      %v2150 = vunpack.c.l.b16 %v1879
      %v2151 = vunpack.c.l.b16 %v1880
      %v2152 = vunpack.c.l.b16 %v1881
      %v2153 = vunpack.c.l.b16 %v1882
      %v2154 = vpack.c.b16 %v2151, %v2150
      %v2155 = vpack.c.b16 %v2153, %v2152
      %v2159 = vsel %vm873, %v1992, 0
      %v2162 = vsel %vm873, %v2001, 0
      %v2165 = vsel %vm873, %v2010, 0
      %v2168 = vsel %vm873, %v2019, 0
      %v2171 = vsel %vm873, %v2028, 0
      %v2174 = vsel %vm873, %v2037, 0
      %v2177 = vsel %vm873, %v2046, 0
      %v2180 = vsel %vm873, %v2055, 0
      %v2183 = vsel %vm873, %v2064, 0
      %v2186 = vsel %vm873, %v2073, 0
      %v2189 = vsel %vm873, %v2082, 0
      %v2192 = vsel %vm873, %v2091, 0
      %v2195 = vsel %vm873, %v2100, 0
      %v2198 = vsel %vm873, %v2109, 0
      %v2201 = vsel %vm873, %v2118, 0
      %v2204 = vsel %vm873, %v2127, 0
      %v2207 = vsel %vm873, %v2136, 0
      %v2210 = vsel %vm873, %v2145, 0
      %2212 = vmatprep.subr.bf16.mxu0 0
      %2213 = vmatpush1.bf16.msra.mxu0 0
      %2214 = vmatprep.subr.bf16.mxu0 0
      %2215 = vmatpush1.bf16.msra.mxu0 0
      %2216 = vmatprep.subr.bf16.mxu0 0
      %2217 = vmatpush1.bf16.msra.mxu0 0
      %2218 = vmatprep.subr.bf16.mxu0 0
      %2219 = vmatpush1.bf16.msra.mxu0 0
      %2220 = vmatprep.subr.bf16.mxu0 0
      %2221 = vmatpush1.bf16.msra.mxu0 0
      %2222 = vmatprep.subr.bf16.mxu0 0
      %2223 = vmatpush1.bf16.msra.mxu0 0
      %2224 = vmatprep.subr.bf16.mxu0 0
      %2225 = vmatpush1.bf16.msra.mxu0 %v2155
      %2226 = vmatprep.subr.bf16.mxu0 0
      %2227 = vmatpush1.bf16.msra.mxu0 %v2154
      %2228 = vmatprep.subr.bf16.mxu0 0
      %2229 = vmatpush2.bf16.msra.mxu0 0
      %2230 = vmatprep.subr.bf16.mxu0 0
      %2231 = vmatpush2.bf16.msra.mxu0 0
      %2232 = vmatprep.subr.bf16.mxu0 0
      %2233 = vmatpush2.bf16.msra.mxu0 0
      %2234 = vmatprep.subr.bf16.mxu0 0
      %2235 = vmatpush2.bf16.msra.mxu0 0
      %2236 = vmatprep.subr.bf16.mxu0 0
      %2237 = vmatpush2.bf16.msra.mxu0 0
      %2238 = vmatprep.subr.bf16.mxu0 0
      %2239 = vmatpush2.bf16.msra.mxu0 0
      %2240 = vmatprep.subr.bf16.mxu0 0
      %2241 = vmatpush2.bf16.msra.mxu0 0
      %2242 = vmatprep.subr.bf16.mxu0 0
      %2243 = vmatpush2.bf16.msra.mxu0 0
      %2244 = vmatprep.mubr.bf16.mxu0 0
      %2245 = vmatmul.mubr.bf16.gmra.mxu0 %v2159
      %v2246 = vpop.f32.mrf.mxu0
      %v2247 = vadd.f32 0.0, %v2246
      %v2248 = vpop.f32.mrf.mxu0
      %v2249 = vpop.f32.mrf.mxu0
      %v2250 = vadd.f32 0.0, %v2249
      %v2251 = vpop.f32.mrf.mxu0
      %2252 = vmatprep.mubr.bf16.mxu0 0
      %2253 = vmatmul.mubr.bf16.gmra.mxu0 %v2162
      %v2254 = vpop.f32.mrf.mxu0
      %v2255 = vadd.f32 0.0, %v2254
      %v2256 = vpop.f32.mrf.mxu0
      %v2257 = vpop.f32.mrf.mxu0
      %v2258 = vadd.f32 0.0, %v2257
      %v2259 = vpop.f32.mrf.mxu0
      %2260 = vmatprep.mubr.bf16.mxu0 0
      %2261 = vmatmul.mubr.bf16.gmra.mxu0 %v2165
      %v2262 = vpop.f32.mrf.mxu0
      %v2263 = vadd.f32 0.0, %v2262
      %v2264 = vpop.f32.mrf.mxu0
      %v2265 = vpop.f32.mrf.mxu0
      %v2266 = vadd.f32 0.0, %v2265
      %v2267 = vpop.f32.mrf.mxu0
      %2268 = vmatprep.mubr.bf16.mxu0 0
      %2269 = vmatmul.mubr.bf16.gmra.mxu0 %v2168
      %v2270 = vpop.f32.mrf.mxu0
      %v2271 = vadd.f32 0.0, %v2270
      %v2272 = vpop.f32.mrf.mxu0
      %v2273 = vpop.f32.mrf.mxu0
      %v2274 = vadd.f32 0.0, %v2273
      %v2275 = vpop.f32.mrf.mxu0
      %2276 = vmatprep.mubr.bf16.mxu0 0
      %2277 = vmatmul.mubr.bf16.gmra.mxu0 %v2171
      %v2278 = vpop.f32.mrf.mxu0
      %v2279 = vadd.f32 0.0, %v2278
      %v2280 = vpop.f32.mrf.mxu0
      %v2281 = vpop.f32.mrf.mxu0
      %v2282 = vadd.f32 0.0, %v2281
      %v2283 = vpop.f32.mrf.mxu0
      %2284 = vmatprep.mubr.bf16.mxu0 0
      %2285 = vmatmul.mubr.bf16.gmra.mxu0 %v2174
      %v2286 = vpop.f32.mrf.mxu0
      %v2287 = vadd.f32 0.0, %v2286
      %v2288 = vpop.f32.mrf.mxu0
      %v2289 = vpop.f32.mrf.mxu0
      %v2290 = vadd.f32 0.0, %v2289
      %v2291 = vpop.f32.mrf.mxu0
      %2292 = vmatprep.mubr.bf16.mxu0 0
      %2293 = vmatmul.mubr.bf16.gmra.mxu0 %v2177
      %v2294 = vpop.f32.mrf.mxu0
      %v2295 = vadd.f32 0.0, %v2294
      %v2296 = vpop.f32.mrf.mxu0
      %v2297 = vpop.f32.mrf.mxu0
      %v2298 = vadd.f32 0.0, %v2297
      %v2299 = vpop.f32.mrf.mxu0
      %2300 = vmatprep.mubr.bf16.mxu0 0
      %2301 = vmatmul.mubr.bf16.gmra.mxu0 %v2180
      %v2302 = vpop.f32.mrf.mxu0
      %v2303 = vadd.f32 0.0, %v2302
      %v2304 = vpop.f32.mrf.mxu0
      %v2305 = vpop.f32.mrf.mxu0
      %v2306 = vadd.f32 0.0, %v2305
      %v2307 = vpop.f32.mrf.mxu0
      %2308 = vmatprep.mubr.bf16.mxu0 0
      %2309 = vmatmul.mubr.bf16.gmra.mxu0 %v2183
      %v2310 = vpop.f32.mrf.mxu0
      %v2311 = vadd.f32 0.0, %v2310
      %v2312 = vpop.f32.mrf.mxu0
      %v2313 = vpop.f32.mrf.mxu0
      %v2314 = vadd.f32 0.0, %v2313
      %v2315 = vpop.f32.mrf.mxu0
      %2316 = vmatprep.mubr.bf16.mxu0 0
      %2317 = vmatmul.mubr.bf16.gmra.mxu0 %v2186
      %v2318 = vpop.f32.mrf.mxu0
      %v2319 = vadd.f32 0.0, %v2318
      %v2320 = vpop.f32.mrf.mxu0
      %v2321 = vpop.f32.mrf.mxu0
      %v2322 = vadd.f32 0.0, %v2321
      %v2323 = vpop.f32.mrf.mxu0
      %2324 = vmatprep.mubr.bf16.mxu0 0
      %2325 = vmatmul.mubr.bf16.gmra.mxu0 %v2189
      %v2326 = vpop.f32.mrf.mxu0
      %v2327 = vadd.f32 0.0, %v2326
      %v2328 = vpop.f32.mrf.mxu0
      %v2329 = vpop.f32.mrf.mxu0
      %v2330 = vadd.f32 0.0, %v2329
      %v2331 = vpop.f32.mrf.mxu0
      %2332 = vmatprep.mubr.bf16.mxu0 0
      %2333 = vmatmul.mubr.bf16.gmra.mxu0 %v2192
      %v2334 = vpop.f32.mrf.mxu0
      %v2335 = vadd.f32 0.0, %v2334
      %v2336 = vpop.f32.mrf.mxu0
      %v2337 = vpop.f32.mrf.mxu0
      %v2338 = vadd.f32 0.0, %v2337
      %v2339 = vpop.f32.mrf.mxu0
      %2340 = vmatprep.mubr.bf16.mxu0 0
      %2341 = vmatmul.mubr.bf16.gmra.mxu0 %v2195
      %v2342 = vpop.f32.mrf.mxu0
      %v2343 = vadd.f32 0.0, %v2342
      %v2344 = vpop.f32.mrf.mxu0
      %v2345 = vpop.f32.mrf.mxu0
      %v2346 = vadd.f32 0.0, %v2345
      %v2347 = vpop.f32.mrf.mxu0
      %2348 = vmatprep.mubr.bf16.mxu0 0
      %2349 = vmatmul.mubr.bf16.gmra.mxu0 %v2198
      %v2350 = vpop.f32.mrf.mxu0
      %v2351 = vadd.f32 0.0, %v2350
      %v2352 = vpop.f32.mrf.mxu0
      %v2353 = vpop.f32.mrf.mxu0
      %v2354 = vadd.f32 0.0, %v2353
      %v2355 = vpop.f32.mrf.mxu0
      %2356 = vmatprep.mubr.bf16.mxu0 0
      %2357 = vmatmul.mubr.bf16.gmra.mxu0 %v2201
      %v2358 = vpop.f32.mrf.mxu0
      %v2359 = vadd.f32 0.0, %v2358
      %v2360 = vpop.f32.mrf.mxu0
      %v2361 = vpop.f32.mrf.mxu0
      %v2362 = vadd.f32 0.0, %v2361
      %v2363 = vpop.f32.mrf.mxu0
      %2364 = vmatprep.mubr.bf16.mxu0 0
      %2365 = vmatmul.mubr.bf16.gmra.mxu0 %v2204
      %v2366 = vpop.f32.mrf.mxu0
      %v2367 = vadd.f32 0.0, %v2366
      %v2368 = vpop.f32.mrf.mxu0
      %v2369 = vpop.f32.mrf.mxu0
      %v2370 = vadd.f32 0.0, %v2369
      %v2371 = vpop.f32.mrf.mxu0
      %2372 = vmatprep.mubr.bf16.mxu0 0
      %2373 = vmatmul.mubr.bf16.gmra.mxu0 %v2207
      %v2374 = vpop.f32.mrf.mxu0
      %v2375 = vadd.f32 0.0, %v2374
      %v2376 = vpop.f32.mrf.mxu0
      %v2377 = vpop.f32.mrf.mxu0
      %v2378 = vadd.f32 0.0, %v2377
      %v2379 = vpop.f32.mrf.mxu0
      %2380 = vmatprep.mubr.bf16.mxu0 0
      %2381 = vmatmul.mubr.bf16.gmra.mxu0 %v2210
      %v2382 = vpop.f32.mrf.mxu0
      %v2383 = vadd.f32 0.0, %v2382
      %v2384 = vpop.f32.mrf.mxu0
      %v2385 = vpop.f32.mrf.mxu0
      %v2386 = vadd.f32 0.0, %v2385
      %v2387 = vpop.f32.mrf.mxu0
      %2388 = vdwg.mxu0
      %v2389 = vadd.f32 %v1805, %v2247
      %v2390 = vadd.f32 %v1806, %v2250
      %v2391 = vadd.f32 %v1807, %v2255
      %v2392 = vadd.f32 %v1808, %v2258
      %v2393 = vadd.f32 %v1809, %v2263
      %v2394 = vadd.f32 %v1810, %v2266
      %v2395 = vadd.f32 %v1811, %v2271
      %v2396 = vadd.f32 %v1812, %v2274
      %v2397 = vadd.f32 %v1813, %v2279
      %v2398 = vadd.f32 %v1814, %v2282
      %v2399 = vadd.f32 %v1815, %v2287
      %v2400 = vadd.f32 %v1816, %v2290
      %v2401 = vadd.f32 %v1817, %v2295
      %v2402 = vadd.f32 %v1818, %v2298
      %v2403 = vadd.f32 %v1819, %v2303
      %v2404 = vadd.f32 %v1820, %v2306
      %v2405 = vadd.f32 %v1821, %v2311
      %v2406 = vadd.f32 %v1822, %v2314
      %v2407 = vadd.f32 %v1823, %v2319
      %v2408 = vadd.f32 %v1824, %v2322
      %v2409 = vadd.f32 %v1825, %v2327
      %v2410 = vadd.f32 %v1826, %v2330
      %v2411 = vadd.f32 %v1827, %v2335
      %v2412 = vadd.f32 %v1828, %v2338
      %v2413 = vadd.f32 %v1829, %v2343
      %v2414 = vadd.f32 %v1830, %v2346
      %v2415 = vadd.f32 %v1831, %v2351
      %v2416 = vadd.f32 %v1832, %v2354
      %v2417 = vadd.f32 %v1833, %v2359
      %v2418 = vadd.f32 %v1834, %v2362
      %v2419 = vadd.f32 %v1835, %v2367
      %v2420 = vadd.f32 %v1836, %v2370
      %v2421 = vadd.f32 %v1837, %v2375
      %v2422 = vadd.f32 %v1838, %v2378
      %v2423 = vadd.f32 %v1839, %v2383
      %v2424 = vadd.f32 %v1840, %v2386
      %s2425 = scalar_lea.vmem %s2, 64
      %v2426 = vld [vmem:[%s2425] sm:$0xf]
      %v2427 = vld [vmem:[%s2425 + $0x4] sm:$0xf]
      %v2428 = vld [vmem:[%s2425 + $0x8] sm:$0xf]
      %v2429 = vld [vmem:[%s2425 + $0xc] sm:$0xf]
      %v2430 = vpack.c.b16 %v1922, %v1921
      %v2431 = vpack.c.b16 %v1924, %v1923
      %v2432 = vpack.c.b16 %v1926, %v1925
      %v2433 = vpack.c.b16 %v1928, %v1927
      %v2434 = vpack.c.b16 %v1930, %v1929
      %v2435 = vpack.c.b16 %v1932, %v1931
      %v2436 = vpack.c.b16 %v1934, %v1933
      %v2437 = vpack.c.b16 %v1936, %v1935
      %v2438 = vpack.c.b16 %v1938, %v1937
      %v2439 = vpack.c.b16 %v1940, %v1939
      %v2440 = vpack.c.b16 %v1942, %v1941
      %v2441 = vpack.c.b16 %v1944, %v1943
      %v2442 = vpack.c.b16 %v1946, %v1945
      %v2443 = vpack.c.b16 %v1948, %v1947
      %v2444 = vpack.c.b16 %v1950, %v1949
      %v2445 = vpack.c.b16 %v1952, %v1951
      %v2446 = vpack.c.b16 %v1954, %v1953
      %v2447 = vpack.c.b16 %v1956, %v1955
      %v2452 = vunpack.c.l.b16 %v2426
      %v2453 = vunpack.c.l.b16 %v2427
      %v2454 = vunpack.c.l.b16 %v2428
      %v2455 = vunpack.c.l.b16 %v2429
      %v2456 = vpack.c.b16 %v2453, %v2452
      %v2457 = vpack.c.b16 %v2455, %v2454
      %v2461 = vsel %vm873, %v2430, 0
      %v2464 = vsel %vm873, %v2431, 0
      %v2467 = vsel %vm873, %v2432, 0
      %v2470 = vsel %vm873, %v2433, 0
      %v2473 = vsel %vm873, %v2434, 0
      %v2476 = vsel %vm873, %v2435, 0
      %v2479 = vsel %vm873, %v2436, 0
      %v2482 = vsel %vm873, %v2437, 0
      %v2485 = vsel %vm873, %v2438, 0
      %v2488 = vsel %vm873, %v2439, 0
      %v2491 = vsel %vm873, %v2440, 0
      %v2494 = vsel %vm873, %v2441, 0
      %v2497 = vsel %vm873, %v2442, 0
      %v2500 = vsel %vm873, %v2443, 0
      %v2503 = vsel %vm873, %v2444, 0
      %v2506 = vsel %vm873, %v2445, 0
      %v2509 = vsel %vm873, %v2446, 0
      %v2512 = vsel %vm873, %v2447, 0
      %2514 = vmatprep.subr.bf16.mxu0 0
      %2515 = vmatpush1.bf16.msra.mxu0 0
      %2516 = vmatprep.subr.bf16.mxu0 0
      %2517 = vmatpush1.bf16.msra.mxu0 0
      %2518 = vmatprep.subr.bf16.mxu0 0
      %2519 = vmatpush1.bf16.msra.mxu0 0
      %2520 = vmatprep.subr.bf16.mxu0 0
      %2521 = vmatpush1.bf16.msra.mxu0 0
      %2522 = vmatprep.subr.bf16.mxu0 0
      %2523 = vmatpush1.bf16.msra.mxu0 0
      %2524 = vmatprep.subr.bf16.mxu0 0
      %2525 = vmatpush1.bf16.msra.mxu0 0
      %2526 = vmatprep.subr.bf16.mxu0 0
      %2527 = vmatpush1.bf16.msra.mxu0 %v2457
      %2528 = vmatprep.subr.bf16.mxu0 0
      %2529 = vmatpush1.bf16.msra.mxu0 %v2456
      %2530 = vmatprep.subr.bf16.mxu0 0
      %2531 = vmatpush2.bf16.msra.mxu0 0
      %2532 = vmatprep.subr.bf16.mxu0 0
      %2533 = vmatpush2.bf16.msra.mxu0 0
      %2534 = vmatprep.subr.bf16.mxu0 0
      %2535 = vmatpush2.bf16.msra.mxu0 0
      %2536 = vmatprep.subr.bf16.mxu0 0
      %2537 = vmatpush2.bf16.msra.mxu0 0
      %2538 = vmatprep.subr.bf16.mxu0 0
      %2539 = vmatpush2.bf16.msra.mxu0 0
      %2540 = vmatprep.subr.bf16.mxu0 0
      %2541 = vmatpush2.bf16.msra.mxu0 0
      %2542 = vmatprep.subr.bf16.mxu0 0
      %2543 = vmatpush2.bf16.msra.mxu0 0
      %2544 = vmatprep.subr.bf16.mxu0 0
      %2545 = vmatpush2.bf16.msra.mxu0 0
      %2546 = vmatprep.mubr.bf16.mxu0 0
      %2547 = vmatmul.mubr.bf16.gmra.mxu0 %v2461
      %v2548 = vpop.f32.mrf.mxu0
      %v2549 = vadd.f32 0.0, %v2548
      %v2550 = vpop.f32.mrf.mxu0
      %v2551 = vpop.f32.mrf.mxu0
      %v2552 = vadd.f32 0.0, %v2551
      %v2553 = vpop.f32.mrf.mxu0
      %2554 = vmatprep.mubr.bf16.mxu0 0
      %2555 = vmatmul.mubr.bf16.gmra.mxu0 %v2464
      %v2556 = vpop.f32.mrf.mxu0
      %v2557 = vadd.f32 0.0, %v2556
      %v2558 = vpop.f32.mrf.mxu0
      %v2559 = vpop.f32.mrf.mxu0
      %v2560 = vadd.f32 0.0, %v2559
      %v2561 = vpop.f32.mrf.mxu0
      %2562 = vmatprep.mubr.bf16.mxu0 0
      %2563 = vmatmul.mubr.bf16.gmra.mxu0 %v2467
      %v2564 = vpop.f32.mrf.mxu0
      %v2565 = vadd.f32 0.0, %v2564
      %v2566 = vpop.f32.mrf.mxu0
      %v2567 = vpop.f32.mrf.mxu0
      %v2568 = vadd.f32 0.0, %v2567
      %v2569 = vpop.f32.mrf.mxu0
      %2570 = vmatprep.mubr.bf16.mxu0 0
      %2571 = vmatmul.mubr.bf16.gmra.mxu0 %v2470
      %v2572 = vpop.f32.mrf.mxu0
      %v2573 = vadd.f32 0.0, %v2572
      %v2574 = vpop.f32.mrf.mxu0
      %v2575 = vpop.f32.mrf.mxu0
      %v2576 = vadd.f32 0.0, %v2575
      %v2577 = vpop.f32.mrf.mxu0
      %2578 = vmatprep.mubr.bf16.mxu0 0
      %2579 = vmatmul.mubr.bf16.gmra.mxu0 %v2473
      %v2580 = vpop.f32.mrf.mxu0
      %v2581 = vadd.f32 0.0, %v2580
      %v2582 = vpop.f32.mrf.mxu0
      %v2583 = vpop.f32.mrf.mxu0
      %v2584 = vadd.f32 0.0, %v2583
      %v2585 = vpop.f32.mrf.mxu0
      %2586 = vmatprep.mubr.bf16.mxu0 0
      %2587 = vmatmul.mubr.bf16.gmra.mxu0 %v2476
      %v2588 = vpop.f32.mrf.mxu0
      %v2589 = vadd.f32 0.0, %v2588
      %v2590 = vpop.f32.mrf.mxu0
      %v2591 = vpop.f32.mrf.mxu0
      %v2592 = vadd.f32 0.0, %v2591
      %v2593 = vpop.f32.mrf.mxu0
      %2594 = vmatprep.mubr.bf16.mxu0 0
      %2595 = vmatmul.mubr.bf16.gmra.mxu0 %v2479
      %v2596 = vpop.f32.mrf.mxu0
      %v2597 = vadd.f32 0.0, %v2596
      %v2598 = vpop.f32.mrf.mxu0
      %v2599 = vpop.f32.mrf.mxu0
      %v2600 = vadd.f32 0.0, %v2599
      %v2601 = vpop.f32.mrf.mxu0
      %2602 = vmatprep.mubr.bf16.mxu0 0
      %2603 = vmatmul.mubr.bf16.gmra.mxu0 %v2482
      %v2604 = vpop.f32.mrf.mxu0
      %v2605 = vadd.f32 0.0, %v2604
      %v2606 = vpop.f32.mrf.mxu0
      %v2607 = vpop.f32.mrf.mxu0
      %v2608 = vadd.f32 0.0, %v2607
      %v2609 = vpop.f32.mrf.mxu0
      %2610 = vmatprep.mubr.bf16.mxu0 0
      %2611 = vmatmul.mubr.bf16.gmra.mxu0 %v2485
      %v2612 = vpop.f32.mrf.mxu0
      %v2613 = vadd.f32 0.0, %v2612
      %v2614 = vpop.f32.mrf.mxu0
      %v2615 = vpop.f32.mrf.mxu0
      %v2616 = vadd.f32 0.0, %v2615
      %v2617 = vpop.f32.mrf.mxu0
      %2618 = vmatprep.mubr.bf16.mxu0 0
      %2619 = vmatmul.mubr.bf16.gmra.mxu0 %v2488
      %v2620 = vpop.f32.mrf.mxu0
      %v2621 = vadd.f32 0.0, %v2620
      %v2622 = vpop.f32.mrf.mxu0
      %v2623 = vpop.f32.mrf.mxu0
      %v2624 = vadd.f32 0.0, %v2623
      %v2625 = vpop.f32.mrf.mxu0
      %2626 = vmatprep.mubr.bf16.mxu0 0
      %2627 = vmatmul.mubr.bf16.gmra.mxu0 %v2491
      %v2628 = vpop.f32.mrf.mxu0
      %v2629 = vadd.f32 0.0, %v2628
      %v2630 = vpop.f32.mrf.mxu0
      %v2631 = vpop.f32.mrf.mxu0
      %v2632 = vadd.f32 0.0, %v2631
      %v2633 = vpop.f32.mrf.mxu0
      %2634 = vmatprep.mubr.bf16.mxu0 0
      %2635 = vmatmul.mubr.bf16.gmra.mxu0 %v2494
      %v2636 = vpop.f32.mrf.mxu0
      %v2637 = vadd.f32 0.0, %v2636
      %v2638 = vpop.f32.mrf.mxu0
      %v2639 = vpop.f32.mrf.mxu0
      %v2640 = vadd.f32 0.0, %v2639
      %v2641 = vpop.f32.mrf.mxu0
      %2642 = vmatprep.mubr.bf16.mxu0 0
      %2643 = vmatmul.mubr.bf16.gmra.mxu0 %v2497
      %v2644 = vpop.f32.mrf.mxu0
      %v2645 = vadd.f32 0.0, %v2644
      %v2646 = vpop.f32.mrf.mxu0
      %v2647 = vpop.f32.mrf.mxu0
      %v2648 = vadd.f32 0.0, %v2647
      %v2649 = vpop.f32.mrf.mxu0
      %2650 = vmatprep.mubr.bf16.mxu0 0
      %2651 = vmatmul.mubr.bf16.gmra.mxu0 %v2500
      %v2652 = vpop.f32.mrf.mxu0
      %v2653 = vadd.f32 0.0, %v2652
      %v2654 = vpop.f32.mrf.mxu0
      %v2655 = vpop.f32.mrf.mxu0
      %v2656 = vadd.f32 0.0, %v2655
      %v2657 = vpop.f32.mrf.mxu0
      %2658 = vmatprep.mubr.bf16.mxu0 0
      %2659 = vmatmul.mubr.bf16.gmra.mxu0 %v2503
      %v2660 = vpop.f32.mrf.mxu0
      %v2661 = vadd.f32 0.0, %v2660
      %v2662 = vpop.f32.mrf.mxu0
      %v2663 = vpop.f32.mrf.mxu0
      %v2664 = vadd.f32 0.0, %v2663
      %v2665 = vpop.f32.mrf.mxu0
      %2666 = vmatprep.mubr.bf16.mxu0 0
      %2667 = vmatmul.mubr.bf16.gmra.mxu0 %v2506
      %v2668 = vpop.f32.mrf.mxu0
      %v2669 = vadd.f32 0.0, %v2668
      %v2670 = vpop.f32.mrf.mxu0
      %v2671 = vpop.f32.mrf.mxu0
      %v2672 = vadd.f32 0.0, %v2671
      %v2673 = vpop.f32.mrf.mxu0
      %2674 = vmatprep.mubr.bf16.mxu0 0
      %2675 = vmatmul.mubr.bf16.gmra.mxu0 %v2509
      %v2676 = vpop.f32.mrf.mxu0
      %v2677 = vadd.f32 0.0, %v2676
      %v2678 = vpop.f32.mrf.mxu0
      %v2679 = vpop.f32.mrf.mxu0
      %v2680 = vadd.f32 0.0, %v2679
      %v2681 = vpop.f32.mrf.mxu0
      %2682 = vmatprep.mubr.bf16.mxu0 0
      %2683 = vmatmul.mubr.bf16.gmra.mxu0 %v2512
      %v2684 = vpop.f32.mrf.mxu0
      %v2685 = vadd.f32 0.0, %v2684
      %v2686 = vpop.f32.mrf.mxu0
      %v2687 = vpop.f32.mrf.mxu0
      %v2688 = vadd.f32 0.0, %v2687
      %v2689 = vpop.f32.mrf.mxu0
      %2690 = vdwg.mxu0
      %v2691 = vadd.f32 %v2389, %v2549
      %v2692 = vadd.f32 %v2390, %v2552
      %v2693 = vadd.f32 %v2391, %v2557
      %v2694 = vadd.f32 %v2392, %v2560
      %v2695 = vadd.f32 %v2393, %v2565
      %v2696 = vadd.f32 %v2394, %v2568
      %v2697 = vadd.f32 %v2395, %v2573
      %v2698 = vadd.f32 %v2396, %v2576
      %v2699 = vadd.f32 %v2397, %v2581
      %v2700 = vadd.f32 %v2398, %v2584
      %v2701 = vadd.f32 %v2399, %v2589
      %v2702 = vadd.f32 %v2400, %v2592
      %v2703 = vadd.f32 %v2401, %v2597
      %v2704 = vadd.f32 %v2402, %v2600
      %v2705 = vadd.f32 %v2403, %v2605
      %v2706 = vadd.f32 %v2404, %v2608
      %v2707 = vadd.f32 %v2405, %v2613
      %v2708 = vadd.f32 %v2406, %v2616
      %v2709 = vadd.f32 %v2407, %v2621
      %v2710 = vadd.f32 %v2408, %v2624
      %v2711 = vadd.f32 %v2409, %v2629
      %v2712 = vadd.f32 %v2410, %v2632
      %v2713 = vadd.f32 %v2411, %v2637
      %v2714 = vadd.f32 %v2412, %v2640
      %v2715 = vadd.f32 %v2413, %v2645
      %v2716 = vadd.f32 %v2414, %v2648
      %v2717 = vadd.f32 %v2415, %v2653
      %v2718 = vadd.f32 %v2416, %v2656
      %v2719 = vadd.f32 %v2417, %v2661
      %v2720 = vadd.f32 %v2418, %v2664
      %v2721 = vadd.f32 %v2419, %v2669
      %v2722 = vadd.f32 %v2420, %v2672
      %v2723 = vadd.f32 %v2421, %v2677
      %v2724 = vadd.f32 %v2422, %v2680
      %v2725 = vadd.f32 %v2423, %v2685
      %v2726 = vadd.f32 %v2424, %v2688
      %v2727 = vld [vmem:[#allocation2 + $0x10] sm:$0xf]
      %v2728 = vld [vmem:[#allocation2 + $0x14] sm:$0xf]
      %v2729 = vld [vmem:[#allocation2 + $0x18] sm:$0xf]
      %v2730 = vld [vmem:[#allocation2 + $0x1c] sm:$0xf]
      %v2731 = vld [vmem:[#allocation2 + $0x20] sm:$0xf]
      %v2732 = vld [vmem:[#allocation2 + $0x24] sm:$0xf]
      %v2733 = vld [vmem:[#allocation2 + $0x28] sm:$0xf]
      %v2734 = vld [vmem:[#allocation2 + $0x2c] sm:$0xf]
      %v2735 = vld [vmem:[#allocation2 + $0x30] sm:$0xf]
      %v2736 = vld [vmem:[#allocation2 + $0x34] sm:$0xf]
      %v2737 = vld [vmem:[#allocation2 + $0x38] sm:$0xf]
      %v2738 = vld [vmem:[#allocation2 + $0x3c] sm:$0xf]
      %v2739 = vld [vmem:[#allocation2 + $0x40] sm:$0xf]
      %v2740 = vld [vmem:[#allocation2 + $0x44] sm:$0xf]
      %v2741 = vld [vmem:[#allocation2 + $0x48] sm:$0xf]
      %v2742 = vld [vmem:[#allocation2 + $0x4c] sm:$0xf]
      %v2743 = vld [vmem:[#allocation2 + $0x50] sm:$0xf]
      %v2744 = vld [vmem:[#allocation2 + $0x54] sm:$0xf]
      %v2745 = vld [vmem:[#allocation2 + $0x58] sm:$0xf]
      %v2746 = vld [vmem:[#allocation2 + $0x5c] sm:$0xf]
      %v2747 = vld [vmem:[#allocation2 + $0x60] sm:$0xf]
      %v2748 = vld [vmem:[#allocation2 + $0x64] sm:$0xf]
      %v2749 = vld [vmem:[#allocation2 + $0x68] sm:$0xf]
      %v2750 = vld [vmem:[#allocation2 + $0x6c] sm:$0xf]
      %v2751 = vld [vmem:[#allocation2 + $0x70] sm:$0xf]
      %v2752 = vld [vmem:[#allocation2 + $0x74] sm:$0xf]
      %v2753 = vld [vmem:[#allocation2 + $0x78] sm:$0xf]
      %v2754 = vld [vmem:[#allocation2 + $0x7c] sm:$0xf]
      %v2755 = vld [vmem:[#allocation2 + $0x80] sm:$0xf]
      %v2756 = vld [vmem:[#allocation2 + $0x84] sm:$0xf]
      %v2757 = vld [vmem:[#allocation2 + $0x88] sm:$0xf]
      %v2758 = vld [vmem:[#allocation2 + $0x8c] sm:$0xf]
      %v2759 = vld [vmem:[#allocation2 + $0x90] sm:$0xf]
      %v2760 = vld [vmem:[#allocation2 + $0x94] sm:$0xf]
      %v2761 = vld [vmem:[#allocation2 + $0x98] sm:$0xf]
      %v2762 = vld [vmem:[#allocation2 + $0x9c] sm:$0xf]
      %v2763 = vld [vmem:[#allocation2 + $0xa0] sm:$0x1]
      %s2764 = scalar_lea.vmem %s2, 80
      %v2765 = vld [vmem:[%s2764] sm:$0xf]
      %v2766 = vld [vmem:[%s2764 + $0x4] sm:$0xf]
      %v2767 = vld [vmem:[%s2764 + $0x8] sm:$0xf]
      %v2768 = vld [vmem:[%s2764 + $0xc] sm:$0xf]
      %v2806 = vunpack.c.l.b16 %v2727
      %v2807 = vunpack.c.l.b16 %v2728
      %v2808 = vunpack.c.l.b16 %v2729
      %v2809 = vunpack.c.l.b16 %v2730
      %v2810 = vunpack.c.l.b16 %v2731
      %v2811 = vunpack.c.l.b16 %v2732
      %v2812 = vunpack.c.l.b16 %v2733
      %v2813 = vunpack.c.l.b16 %v2734
      %v2814 = vunpack.c.l.b16 %v2735
      %v2815 = vunpack.c.l.b16 %v2736
      %v2816 = vunpack.c.l.b16 %v2737
      %v2817 = vunpack.c.l.b16 %v2738
      %v2818 = vunpack.c.l.b16 %v2739
      %v2819 = vunpack.c.l.b16 %v2740
      %v2820 = vunpack.c.l.b16 %v2741
      %v2821 = vunpack.c.l.b16 %v2742
      %v2822 = vunpack.c.l.b16 %v2743
      %v2823 = vunpack.c.l.b16 %v2744
      %v2824 = vunpack.c.l.b16 %v2745
      %v2825 = vunpack.c.l.b16 %v2746
      %v2826 = vunpack.c.l.b16 %v2747
      %v2827 = vunpack.c.l.b16 %v2748
      %v2828 = vunpack.c.l.b16 %v2749
      %v2829 = vunpack.c.l.b16 %v2750
      %v2830 = vunpack.c.l.b16 %v2751
      %v2831 = vunpack.c.l.b16 %v2752
      %v2832 = vunpack.c.l.b16 %v2753
      %v2833 = vunpack.c.l.b16 %v2754
      %v2834 = vunpack.c.l.b16 %v2755
      %v2835 = vunpack.c.l.b16 %v2756
      %v2836 = vunpack.c.l.b16 %v2757
      %v2837 = vunpack.c.l.b16 %v2758
      %v2838 = vunpack.c.l.b16 %v2759
      %v2839 = vunpack.c.l.b16 %v2760
      %v2840 = vunpack.c.l.b16 %v2761
      %v2841 = vunpack.c.l.b16 %v2762
      %v2842 = vunpack.c.l.b16 %v2763
      %v2843 = vpack.c.b16 %v2807, %v2806
      %v2844 = vpack.c.b16 %v2809, %v2808
      %v2845 = vpack.c.b16 %v2811, %v2810
      %v2846 = vpack.c.b16 %v2813, %v2812
      %v2847 = vpack.c.b16 %v2815, %v2814
      %v2848 = vpack.c.b16 %v2817, %v2816
      %v2849 = vpack.c.b16 %v2819, %v2818
      %v2850 = vpack.c.b16 %v2821, %v2820
      %v2851 = vpack.c.b16 %v2823, %v2822
      %v2852 = vpack.c.b16 %v2825, %v2824
      %v2853 = vpack.c.b16 %v2827, %v2826
      %v2854 = vpack.c.b16 %v2829, %v2828
      %v2855 = vpack.c.b16 %v2831, %v2830
      %v2856 = vpack.c.b16 %v2833, %v2832
      %v2857 = vpack.c.b16 %v2835, %v2834
      %v2858 = vpack.c.b16 %v2837, %v2836
      %v2859 = vpack.c.b16 %v2839, %v2838
      %v2860 = vpack.c.b16 %v2841, %v2840
      %v2861 = vpack.c.b16 %v2842, %v2842
      %vm2862 = vsmask.f32 7424
      %v2864 = vshrl.u32 %v2843, 16
      %v2866 = vshll.u32 %v2843, 16
      %v2868 = vrot.slane %v2866, 1
      %v2869 = vor.u32 %v2864, %v2868
      %v2871 = vshll.u32 %v2844, 16
      %v2873 = vrot.slane %v2871, 1
      %v2874 = vsel %vm2862, %v2869, %v2873
      %v2875 = vshrl.u32 %v2844, 16
      %v2877 = vor.u32 %v2875, %v2873
      %v2879 = vshll.u32 %v2845, 16
      %v2881 = vrot.slane %v2879, 1
      %v2882 = vsel %vm2862, %v2877, %v2881
      %v2883 = vshrl.u32 %v2845, 16
      %v2885 = vor.u32 %v2883, %v2881
      %v2887 = vshll.u32 %v2846, 16
      %v2889 = vrot.slane %v2887, 1
      %v2890 = vsel %vm2862, %v2885, %v2889
      %v2891 = vshrl.u32 %v2846, 16
      %v2893 = vor.u32 %v2891, %v2889
      %v2895 = vshll.u32 %v2847, 16
      %v2897 = vrot.slane %v2895, 1
      %v2898 = vsel %vm2862, %v2893, %v2897
      %v2899 = vshrl.u32 %v2847, 16
      %v2901 = vor.u32 %v2899, %v2897
      %v2903 = vshll.u32 %v2848, 16
      %v2905 = vrot.slane %v2903, 1
      %v2906 = vsel %vm2862, %v2901, %v2905
      %v2907 = vshrl.u32 %v2848, 16
      %v2909 = vor.u32 %v2907, %v2905
      %v2911 = vshll.u32 %v2849, 16
      %v2913 = vrot.slane %v2911, 1
      %v2914 = vsel %vm2862, %v2909, %v2913
      %v2915 = vshrl.u32 %v2849, 16
      %v2917 = vor.u32 %v2915, %v2913
      %v2919 = vshll.u32 %v2850, 16
      %v2921 = vrot.slane %v2919, 1
      %v2922 = vsel %vm2862, %v2917, %v2921
      %v2923 = vshrl.u32 %v2850, 16
      %v2925 = vor.u32 %v2923, %v2921
      %v2927 = vshll.u32 %v2851, 16
      %v2929 = vrot.slane %v2927, 1
      %v2930 = vsel %vm2862, %v2925, %v2929
      %v2931 = vshrl.u32 %v2851, 16
      %v2933 = vor.u32 %v2931, %v2929
      %v2935 = vshll.u32 %v2852, 16
      %v2937 = vrot.slane %v2935, 1
      %v2938 = vsel %vm2862, %v2933, %v2937
      %v2939 = vshrl.u32 %v2852, 16
      %v2941 = vor.u32 %v2939, %v2937
      %v2943 = vshll.u32 %v2853, 16
      %v2945 = vrot.slane %v2943, 1
      %v2946 = vsel %vm2862, %v2941, %v2945
      %v2947 = vshrl.u32 %v2853, 16
      %v2949 = vor.u32 %v2947, %v2945
      %v2951 = vshll.u32 %v2854, 16
      %v2953 = vrot.slane %v2951, 1
      %v2954 = vsel %vm2862, %v2949, %v2953
      %v2955 = vshrl.u32 %v2854, 16
      %v2957 = vor.u32 %v2955, %v2953
      %v2959 = vshll.u32 %v2855, 16
      %v2961 = vrot.slane %v2959, 1
      %v2962 = vsel %vm2862, %v2957, %v2961
      %v2963 = vshrl.u32 %v2855, 16
      %v2965 = vor.u32 %v2963, %v2961
      %v2967 = vshll.u32 %v2856, 16
      %v2969 = vrot.slane %v2967, 1
      %v2970 = vsel %vm2862, %v2965, %v2969
      %v2971 = vshrl.u32 %v2856, 16
      %v2973 = vor.u32 %v2971, %v2969
      %v2975 = vshll.u32 %v2857, 16
      %v2977 = vrot.slane %v2975, 1
      %v2978 = vsel %vm2862, %v2973, %v2977
      %v2979 = vshrl.u32 %v2857, 16
      %v2981 = vor.u32 %v2979, %v2977
      %v2983 = vshll.u32 %v2858, 16
      %v2985 = vrot.slane %v2983, 1
      %v2986 = vsel %vm2862, %v2981, %v2985
      %v2987 = vshrl.u32 %v2858, 16
      %v2989 = vor.u32 %v2987, %v2985
      %v2991 = vshll.u32 %v2859, 16
      %v2993 = vrot.slane %v2991, 1
      %v2994 = vsel %vm2862, %v2989, %v2993
      %v2995 = vshrl.u32 %v2859, 16
      %v2997 = vor.u32 %v2995, %v2993
      %v2999 = vshll.u32 %v2860, 16
      %v3001 = vrot.slane %v2999, 1
      %v3002 = vsel %vm2862, %v2997, %v3001
      %v3003 = vshrl.u32 %v2860, 16
      %v3005 = vor.u32 %v3003, %v3001
      %v3007 = vshll.u32 %v2861, 16
      %v3009 = vrot.slane %v3007, 1
      %v3010 = vsel %vm2862, %v3005, %v3009
      %v3015 = vunpack.c.l.b16 %v2765
      %v3016 = vunpack.c.l.b16 %v2766
      %v3017 = vunpack.c.l.b16 %v2767
      %v3018 = vunpack.c.l.b16 %v2768
      %v3019 = vpack.c.b16 %v3016, %v3015
      %v3020 = vpack.c.b16 %v3018, %v3017
      %v3024 = vsel %vm873, %v2874, 0
      %v3027 = vsel %vm873, %v2882, 0
      %v3030 = vsel %vm873, %v2890, 0
      %v3033 = vsel %vm873, %v2898, 0
      %v3036 = vsel %vm873, %v2906, 0
      %v3039 = vsel %vm873, %v2914, 0
      %v3042 = vsel %vm873, %v2922, 0
      %v3045 = vsel %vm873, %v2930, 0
      %v3048 = vsel %vm873, %v2938, 0
      %v3051 = vsel %vm873, %v2946, 0
      %v3054 = vsel %vm873, %v2954, 0
      %v3057 = vsel %vm873, %v2962, 0
      %v3060 = vsel %vm873, %v2970, 0
      %v3063 = vsel %vm873, %v2978, 0
      %v3066 = vsel %vm873, %v2986, 0
      %v3069 = vsel %vm873, %v2994, 0
      %v3072 = vsel %vm873, %v3002, 0
      %v3075 = vsel %vm873, %v3010, 0
      %3077 = vmatprep.subr.bf16.mxu0 0
      %3078 = vmatpush1.bf16.msra.mxu0 0
      %3079 = vmatprep.subr.bf16.mxu0 0
      %3080 = vmatpush1.bf16.msra.mxu0 0
      %3081 = vmatprep.subr.bf16.mxu0 0
      %3082 = vmatpush1.bf16.msra.mxu0 0
      %3083 = vmatprep.subr.bf16.mxu0 0
      %3084 = vmatpush1.bf16.msra.mxu0 0
      %3085 = vmatprep.subr.bf16.mxu0 0
      %3086 = vmatpush1.bf16.msra.mxu0 0
      %3087 = vmatprep.subr.bf16.mxu0 0
      %3088 = vmatpush1.bf16.msra.mxu0 0
      %3089 = vmatprep.subr.bf16.mxu0 0
      %3090 = vmatpush1.bf16.msra.mxu0 %v3020
      %3091 = vmatprep.subr.bf16.mxu0 0
      %3092 = vmatpush1.bf16.msra.mxu0 %v3019
      %3093 = vmatprep.subr.bf16.mxu0 0
      %3094 = vmatpush2.bf16.msra.mxu0 0
      %3095 = vmatprep.subr.bf16.mxu0 0
      %3096 = vmatpush2.bf16.msra.mxu0 0
      %3097 = vmatprep.subr.bf16.mxu0 0
      %3098 = vmatpush2.bf16.msra.mxu0 0
      %3099 = vmatprep.subr.bf16.mxu0 0
      %3100 = vmatpush2.bf16.msra.mxu0 0
      %3101 = vmatprep.subr.bf16.mxu0 0
      %3102 = vmatpush2.bf16.msra.mxu0 0
      %3103 = vmatprep.subr.bf16.mxu0 0
      %3104 = vmatpush2.bf16.msra.mxu0 0
      %3105 = vmatprep.subr.bf16.mxu0 0
      %3106 = vmatpush2.bf16.msra.mxu0 0
      %3107 = vmatprep.subr.bf16.mxu0 0
      %3108 = vmatpush2.bf16.msra.mxu0 0
      %3109 = vmatprep.mubr.bf16.mxu0 0
      %3110 = vmatmul.mubr.bf16.gmra.mxu0 %v3024
      %v3111 = vpop.f32.mrf.mxu0
      %v3112 = vadd.f32 0.0, %v3111
      %v3113 = vpop.f32.mrf.mxu0
      %v3114 = vpop.f32.mrf.mxu0
      %v3115 = vadd.f32 0.0, %v3114
      %v3116 = vpop.f32.mrf.mxu0
      %3117 = vmatprep.mubr.bf16.mxu0 0
      %3118 = vmatmul.mubr.bf16.gmra.mxu0 %v3027
      %v3119 = vpop.f32.mrf.mxu0
      %v3120 = vadd.f32 0.0, %v3119
      %v3121 = vpop.f32.mrf.mxu0
      %v3122 = vpop.f32.mrf.mxu0
      %v3123 = vadd.f32 0.0, %v3122
      %v3124 = vpop.f32.mrf.mxu0
      %3125 = vmatprep.mubr.bf16.mxu0 0
      %3126 = vmatmul.mubr.bf16.gmra.mxu0 %v3030
      %v3127 = vpop.f32.mrf.mxu0
      %v3128 = vadd.f32 0.0, %v3127
      %v3129 = vpop.f32.mrf.mxu0
      %v3130 = vpop.f32.mrf.mxu0
      %v3131 = vadd.f32 0.0, %v3130
      %v3132 = vpop.f32.mrf.mxu0
      %3133 = vmatprep.mubr.bf16.mxu0 0
      %3134 = vmatmul.mubr.bf16.gmra.mxu0 %v3033
      %v3135 = vpop.f32.mrf.mxu0
      %v3136 = vadd.f32 0.0, %v3135
      %v3137 = vpop.f32.mrf.mxu0
      %v3138 = vpop.f32.mrf.mxu0
      %v3139 = vadd.f32 0.0, %v3138
      %v3140 = vpop.f32.mrf.mxu0
      %3141 = vmatprep.mubr.bf16.mxu0 0
      %3142 = vmatmul.mubr.bf16.gmra.mxu0 %v3036
      %v3143 = vpop.f32.mrf.mxu0
      %v3144 = vadd.f32 0.0, %v3143
      %v3145 = vpop.f32.mrf.mxu0
      %v3146 = vpop.f32.mrf.mxu0
      %v3147 = vadd.f32 0.0, %v3146
      %v3148 = vpop.f32.mrf.mxu0
      %3149 = vmatprep.mubr.bf16.mxu0 0
      %3150 = vmatmul.mubr.bf16.gmra.mxu0 %v3039
      %v3151 = vpop.f32.mrf.mxu0
      %v3152 = vadd.f32 0.0, %v3151
      %v3153 = vpop.f32.mrf.mxu0
      %v3154 = vpop.f32.mrf.mxu0
      %v3155 = vadd.f32 0.0, %v3154
      %v3156 = vpop.f32.mrf.mxu0
      %3157 = vmatprep.mubr.bf16.mxu0 0
      %3158 = vmatmul.mubr.bf16.gmra.mxu0 %v3042
      %v3159 = vpop.f32.mrf.mxu0
      %v3160 = vadd.f32 0.0, %v3159
      %v3161 = vpop.f32.mrf.mxu0
      %v3162 = vpop.f32.mrf.mxu0
      %v3163 = vadd.f32 0.0, %v3162
      %v3164 = vpop.f32.mrf.mxu0
      %3165 = vmatprep.mubr.bf16.mxu0 0
      %3166 = vmatmul.mubr.bf16.gmra.mxu0 %v3045
      %v3167 = vpop.f32.mrf.mxu0
      %v3168 = vadd.f32 0.0, %v3167
      %v3169 = vpop.f32.mrf.mxu0
      %v3170 = vpop.f32.mrf.mxu0
      %v3171 = vadd.f32 0.0, %v3170
      %v3172 = vpop.f32.mrf.mxu0
      %3173 = vmatprep.mubr.bf16.mxu0 0
      %3174 = vmatmul.mubr.bf16.gmra.mxu0 %v3048
      %v3175 = vpop.f32.mrf.mxu0
      %v3176 = vadd.f32 0.0, %v3175
      %v3177 = vpop.f32.mrf.mxu0
      %v3178 = vpop.f32.mrf.mxu0
      %v3179 = vadd.f32 0.0, %v3178
      %v3180 = vpop.f32.mrf.mxu0
      %3181 = vmatprep.mubr.bf16.mxu0 0
      %3182 = vmatmul.mubr.bf16.gmra.mxu0 %v3051
      %v3183 = vpop.f32.mrf.mxu0
      %v3184 = vadd.f32 0.0, %v3183
      %v3185 = vpop.f32.mrf.mxu0
      %v3186 = vpop.f32.mrf.mxu0
      %v3187 = vadd.f32 0.0, %v3186
      %v3188 = vpop.f32.mrf.mxu0
      %3189 = vmatprep.mubr.bf16.mxu0 0
      %3190 = vmatmul.mubr.bf16.gmra.mxu0 %v3054
      %v3191 = vpop.f32.mrf.mxu0
      %v3192 = vadd.f32 0.0, %v3191
      %v3193 = vpop.f32.mrf.mxu0
      %v3194 = vpop.f32.mrf.mxu0
      %v3195 = vadd.f32 0.0, %v3194
      %v3196 = vpop.f32.mrf.mxu0
      %3197 = vmatprep.mubr.bf16.mxu0 0
      %3198 = vmatmul.mubr.bf16.gmra.mxu0 %v3057
      %v3199 = vpop.f32.mrf.mxu0
      %v3200 = vadd.f32 0.0, %v3199
      %v3201 = vpop.f32.mrf.mxu0
      %v3202 = vpop.f32.mrf.mxu0
      %v3203 = vadd.f32 0.0, %v3202
      %v3204 = vpop.f32.mrf.mxu0
      %3205 = vmatprep.mubr.bf16.mxu0 0
      %3206 = vmatmul.mubr.bf16.gmra.mxu0 %v3060
      %v3207 = vpop.f32.mrf.mxu0
      %v3208 = vadd.f32 0.0, %v3207
      %v3209 = vpop.f32.mrf.mxu0
      %v3210 = vpop.f32.mrf.mxu0
      %v3211 = vadd.f32 0.0, %v3210
      %v3212 = vpop.f32.mrf.mxu0
      %3213 = vmatprep.mubr.bf16.mxu0 0
      %3214 = vmatmul.mubr.bf16.gmra.mxu0 %v3063
      %v3215 = vpop.f32.mrf.mxu0
      %v3216 = vadd.f32 0.0, %v3215
      %v3217 = vpop.f32.mrf.mxu0
      %v3218 = vpop.f32.mrf.mxu0
      %v3219 = vadd.f32 0.0, %v3218
      %v3220 = vpop.f32.mrf.mxu0
      %3221 = vmatprep.mubr.bf16.mxu0 0
      %3222 = vmatmul.mubr.bf16.gmra.mxu0 %v3066
      %v3223 = vpop.f32.mrf.mxu0
      %v3224 = vadd.f32 0.0, %v3223
      %v3225 = vpop.f32.mrf.mxu0
      %v3226 = vpop.f32.mrf.mxu0
      %v3227 = vadd.f32 0.0, %v3226
      %v3228 = vpop.f32.mrf.mxu0
      %3229 = vmatprep.mubr.bf16.mxu0 0
      %3230 = vmatmul.mubr.bf16.gmra.mxu0 %v3069
      %v3231 = vpop.f32.mrf.mxu0
      %v3232 = vadd.f32 0.0, %v3231
      %v3233 = vpop.f32.mrf.mxu0
      %v3234 = vpop.f32.mrf.mxu0
      %v3235 = vadd.f32 0.0, %v3234
      %v3236 = vpop.f32.mrf.mxu0
      %3237 = vmatprep.mubr.bf16.mxu0 0
      %3238 = vmatmul.mubr.bf16.gmra.mxu0 %v3072
      %v3239 = vpop.f32.mrf.mxu0
      %v3240 = vadd.f32 0.0, %v3239
      %v3241 = vpop.f32.mrf.mxu0
      %v3242 = vpop.f32.mrf.mxu0
      %v3243 = vadd.f32 0.0, %v3242
      %v3244 = vpop.f32.mrf.mxu0
      %3245 = vmatprep.mubr.bf16.mxu0 0
      %3246 = vmatmul.mubr.bf16.gmra.mxu0 %v3075
      %v3247 = vpop.f32.mrf.mxu0
      %v3248 = vadd.f32 0.0, %v3247
      %v3249 = vpop.f32.mrf.mxu0
      %v3250 = vpop.f32.mrf.mxu0
      %v3251 = vadd.f32 0.0, %v3250
      %v3252 = vpop.f32.mrf.mxu0
      %3253 = vdwg.mxu0
      %v3254 = vadd.f32 %v2691, %v3112
      %v3255 = vadd.f32 %v2692, %v3115
      %v3256 = vadd.f32 %v2693, %v3120
      %v3257 = vadd.f32 %v2694, %v3123
      %v3258 = vadd.f32 %v2695, %v3128
      %v3259 = vadd.f32 %v2696, %v3131
      %v3260 = vadd.f32 %v2697, %v3136
      %v3261 = vadd.f32 %v2698, %v3139
      %v3262 = vadd.f32 %v2699, %v3144
      %v3263 = vadd.f32 %v2700, %v3147
      %v3264 = vadd.f32 %v2701, %v3152
      %v3265 = vadd.f32 %v2702, %v3155
      %v3266 = vadd.f32 %v2703, %v3160
      %v3267 = vadd.f32 %v2704, %v3163
      %v3268 = vadd.f32 %v2705, %v3168
      %v3269 = vadd.f32 %v2706, %v3171
      %v3270 = vadd.f32 %v2707, %v3176
      %v3271 = vadd.f32 %v2708, %v3179
      %v3272 = vadd.f32 %v2709, %v3184
      %v3273 = vadd.f32 %v2710, %v3187
      %v3274 = vadd.f32 %v2711, %v3192
      %v3275 = vadd.f32 %v2712, %v3195
      %v3276 = vadd.f32 %v2713, %v3200
      %v3277 = vadd.f32 %v2714, %v3203
      %v3278 = vadd.f32 %v2715, %v3208
      %v3279 = vadd.f32 %v2716, %v3211
      %v3280 = vadd.f32 %v2717, %v3216
      %v3281 = vadd.f32 %v2718, %v3219
      %v3282 = vadd.f32 %v2719, %v3224
      %v3283 = vadd.f32 %v2720, %v3227
      %v3284 = vadd.f32 %v2721, %v3232
      %v3285 = vadd.f32 %v2722, %v3235
      %v3286 = vadd.f32 %v2723, %v3240
      %v3287 = vadd.f32 %v2724, %v3243
      %v3288 = vadd.f32 %v2725, %v3248
      %v3289 = vadd.f32 %v2726, %v3251
      %v3290 = vld [vmem:[#allocation2 + $0x18] sm:$0xf]
      %v3291 = vld [vmem:[#allocation2 + $0x1c] sm:$0xf]
      %v3292 = vld [vmem:[#allocation2 + $0x20] sm:$0xf]
      %v3293 = vld [vmem:[#allocation2 + $0x24] sm:$0xf]
      %v3294 = vld [vmem:[#allocation2 + $0x28] sm:$0xf]
      %v3295 = vld [vmem:[#allocation2 + $0x2c] sm:$0xf]
      %v3296 = vld [vmem:[#allocation2 + $0x30] sm:$0xf]
      %v3297 = vld [vmem:[#allocation2 + $0x34] sm:$0xf]
      %v3298 = vld [vmem:[#allocation2 + $0x38] sm:$0xf]
      %v3299 = vld [vmem:[#allocation2 + $0x3c] sm:$0xf]
      %v3300 = vld [vmem:[#allocation2 + $0x40] sm:$0xf]
      %v3301 = vld [vmem:[#allocation2 + $0x44] sm:$0xf]
      %v3302 = vld [vmem:[#allocation2 + $0x48] sm:$0xf]
      %v3303 = vld [vmem:[#allocation2 + $0x4c] sm:$0xf]
      %v3304 = vld [vmem:[#allocation2 + $0x50] sm:$0xf]
      %v3305 = vld [vmem:[#allocation2 + $0x54] sm:$0xf]
      %v3306 = vld [vmem:[#allocation2 + $0x58] sm:$0xf]
      %v3307 = vld [vmem:[#allocation2 + $0x5c] sm:$0xf]
      %v3308 = vld [vmem:[#allocation2 + $0x60] sm:$0xf]
      %v3309 = vld [vmem:[#allocation2 + $0x64] sm:$0xf]
      %v3310 = vld [vmem:[#allocation2 + $0x68] sm:$0xf]
      %v3311 = vld [vmem:[#allocation2 + $0x6c] sm:$0xf]
      %v3312 = vld [vmem:[#allocation2 + $0x70] sm:$0xf]
      %v3313 = vld [vmem:[#allocation2 + $0x74] sm:$0xf]
      %v3314 = vld [vmem:[#allocation2 + $0x78] sm:$0xf]
      %v3315 = vld [vmem:[#allocation2 + $0x7c] sm:$0xf]
      %v3316 = vld [vmem:[#allocation2 + $0x80] sm:$0xf]
      %v3317 = vld [vmem:[#allocation2 + $0x84] sm:$0xf]
      %v3318 = vld [vmem:[#allocation2 + $0x88] sm:$0xf]
      %v3319 = vld [vmem:[#allocation2 + $0x8c] sm:$0xf]
      %v3320 = vld [vmem:[#allocation2 + $0x90] sm:$0xf]
      %v3321 = vld [vmem:[#allocation2 + $0x94] sm:$0xf]
      %v3322 = vld [vmem:[#allocation2 + $0x98] sm:$0xf]
      %v3323 = vld [vmem:[#allocation2 + $0x9c] sm:$0xf]
      %v3324 = vld [vmem:[#allocation2 + $0xa0] sm:$0xf]
      %v3325 = vld [vmem:[#allocation2 + $0xa4] sm:$0xf]
      %v3326 = vld [vmem:[#allocation2 + $0xa8] sm:$0x1]
      %s3327 = scalar_lea.vmem %s2, 96
      %v3328 = vld [vmem:[%s3327] sm:$0xf]
      %v3329 = vld [vmem:[%s3327 + $0x4] sm:$0xf]
      %v3330 = vld [vmem:[%s3327 + $0x8] sm:$0xf]
      %v3331 = vld [vmem:[%s3327 + $0xc] sm:$0xf]
      %v3369 = vunpack.c.l.b16 %v3290
      %v3370 = vunpack.c.l.b16 %v3291
      %v3371 = vunpack.c.l.b16 %v3292
      %v3372 = vunpack.c.l.b16 %v3293
      %v3373 = vunpack.c.l.b16 %v3294
      %v3374 = vunpack.c.l.b16 %v3295
      %v3375 = vunpack.c.l.b16 %v3296
      %v3376 = vunpack.c.l.b16 %v3297
      %v3377 = vunpack.c.l.b16 %v3298
      %v3378 = vunpack.c.l.b16 %v3299
      %v3379 = vunpack.c.l.b16 %v3300
      %v3380 = vunpack.c.l.b16 %v3301
      %v3381 = vunpack.c.l.b16 %v3302
      %v3382 = vunpack.c.l.b16 %v3303
      %v3383 = vunpack.c.l.b16 %v3304
      %v3384 = vunpack.c.l.b16 %v3305
      %v3385 = vunpack.c.l.b16 %v3306
      %v3386 = vunpack.c.l.b16 %v3307
      %v3387 = vunpack.c.l.b16 %v3308
      %v3388 = vunpack.c.l.b16 %v3309
      %v3389 = vunpack.c.l.b16 %v3310
      %v3390 = vunpack.c.l.b16 %v3311
      %v3391 = vunpack.c.l.b16 %v3312
      %v3392 = vunpack.c.l.b16 %v3313
      %v3393 = vunpack.c.l.b16 %v3314
      %v3394 = vunpack.c.l.b16 %v3315
      %v3395 = vunpack.c.l.b16 %v3316
      %v3396 = vunpack.c.l.b16 %v3317
      %v3397 = vunpack.c.l.b16 %v3318
      %v3398 = vunpack.c.l.b16 %v3319
      %v3399 = vunpack.c.l.b16 %v3320
      %v3400 = vunpack.c.l.b16 %v3321
      %v3401 = vunpack.c.l.b16 %v3322
      %v3402 = vunpack.c.l.b16 %v3323
      %v3403 = vunpack.c.l.b16 %v3324
      %v3404 = vunpack.c.l.b16 %v3325
      %v3405 = vunpack.c.l.b16 %v3326
      %v3406 = vpack.c.b16 %v3370, %v3369
      %v3407 = vpack.c.b16 %v3372, %v3371
      %v3408 = vpack.c.b16 %v3374, %v3373
      %v3409 = vpack.c.b16 %v3376, %v3375
      %v3410 = vpack.c.b16 %v3378, %v3377
      %v3411 = vpack.c.b16 %v3380, %v3379
      %v3412 = vpack.c.b16 %v3382, %v3381
      %v3413 = vpack.c.b16 %v3384, %v3383
      %v3414 = vpack.c.b16 %v3386, %v3385
      %v3415 = vpack.c.b16 %v3388, %v3387
      %v3416 = vpack.c.b16 %v3390, %v3389
      %v3417 = vpack.c.b16 %v3392, %v3391
      %v3418 = vpack.c.b16 %v3394, %v3393
      %v3419 = vpack.c.b16 %v3396, %v3395
      %v3420 = vpack.c.b16 %v3398, %v3397
      %v3421 = vpack.c.b16 %v3400, %v3399
      %v3422 = vpack.c.b16 %v3402, %v3401
      %v3423 = vpack.c.b16 %v3404, %v3403
      %v3424 = vpack.c.b16 %v3405, %v3405
      %v3426 = vshrl.u32 %v3406, 16
      %v3428 = vshll.u32 %v3406, 16
      %v3430 = vrot.slane %v3428, 1
      %v3431 = vor.u32 %v3426, %v3430
      %v3433 = vshll.u32 %v3407, 16
      %v3435 = vrot.slane %v3433, 1
      %v3436 = vsel %vm2862, %v3431, %v3435
      %v3437 = vshrl.u32 %v3407, 16
      %v3439 = vor.u32 %v3437, %v3435
      %v3441 = vshll.u32 %v3408, 16
      %v3443 = vrot.slane %v3441, 1
      %v3444 = vsel %vm2862, %v3439, %v3443
      %v3445 = vshrl.u32 %v3408, 16
      %v3447 = vor.u32 %v3445, %v3443
      %v3449 = vshll.u32 %v3409, 16
      %v3451 = vrot.slane %v3449, 1
      %v3452 = vsel %vm2862, %v3447, %v3451
      %v3453 = vshrl.u32 %v3409, 16
      %v3455 = vor.u32 %v3453, %v3451
      %v3457 = vshll.u32 %v3410, 16
      %v3459 = vrot.slane %v3457, 1
      %v3460 = vsel %vm2862, %v3455, %v3459
      %v3461 = vshrl.u32 %v3410, 16
      %v3463 = vor.u32 %v3461, %v3459
      %v3465 = vshll.u32 %v3411, 16
      %v3467 = vrot.slane %v3465, 1
      %v3468 = vsel %vm2862, %v3463, %v3467
      %v3469 = vshrl.u32 %v3411, 16
      %v3471 = vor.u32 %v3469, %v3467
      %v3473 = vshll.u32 %v3412, 16
      %v3475 = vrot.slane %v3473, 1
      %v3476 = vsel %vm2862, %v3471, %v3475
      %v3477 = vshrl.u32 %v3412, 16
      %v3479 = vor.u32 %v3477, %v3475
      %v3481 = vshll.u32 %v3413, 16
      %v3483 = vrot.slane %v3481, 1
      %v3484 = vsel %vm2862, %v3479, %v3483
      %v3485 = vshrl.u32 %v3413, 16
      %v3487 = vor.u32 %v3485, %v3483
      %v3489 = vshll.u32 %v3414, 16
      %v3491 = vrot.slane %v3489, 1
      %v3492 = vsel %vm2862, %v3487, %v3491
      %v3493 = vshrl.u32 %v3414, 16
      %v3495 = vor.u32 %v3493, %v3491
      %v3497 = vshll.u32 %v3415, 16
      %v3499 = vrot.slane %v3497, 1
      %v3500 = vsel %vm2862, %v3495, %v3499
      %v3501 = vshrl.u32 %v3415, 16
      %v3503 = vor.u32 %v3501, %v3499
      %v3505 = vshll.u32 %v3416, 16
      %v3507 = vrot.slane %v3505, 1
      %v3508 = vsel %vm2862, %v3503, %v3507
      %v3509 = vshrl.u32 %v3416, 16
      %v3511 = vor.u32 %v3509, %v3507
      %v3513 = vshll.u32 %v3417, 16
      %v3515 = vrot.slane %v3513, 1
      %v3516 = vsel %vm2862, %v3511, %v3515
      %v3517 = vshrl.u32 %v3417, 16
      %v3519 = vor.u32 %v3517, %v3515
      %v3521 = vshll.u32 %v3418, 16
      %v3523 = vrot.slane %v3521, 1
      %v3524 = vsel %vm2862, %v3519, %v3523
      %v3525 = vshrl.u32 %v3418, 16
      %v3527 = vor.u32 %v3525, %v3523
      %v3529 = vshll.u32 %v3419, 16
      %v3531 = vrot.slane %v3529, 1
      %v3532 = vsel %vm2862, %v3527, %v3531
      %v3533 = vshrl.u32 %v3419, 16
      %v3535 = vor.u32 %v3533, %v3531
      %v3537 = vshll.u32 %v3420, 16
      %v3539 = vrot.slane %v3537, 1
      %v3540 = vsel %vm2862, %v3535, %v3539
      %v3541 = vshrl.u32 %v3420, 16
      %v3543 = vor.u32 %v3541, %v3539
      %v3545 = vshll.u32 %v3421, 16
      %v3547 = vrot.slane %v3545, 1
      %v3548 = vsel %vm2862, %v3543, %v3547
      %v3549 = vshrl.u32 %v3421, 16
      %v3551 = vor.u32 %v3549, %v3547
      %v3553 = vshll.u32 %v3422, 16
      %v3555 = vrot.slane %v3553, 1
      %v3556 = vsel %vm2862, %v3551, %v3555
      %v3557 = vshrl.u32 %v3422, 16
      %v3559 = vor.u32 %v3557, %v3555
      %v3561 = vshll.u32 %v3423, 16
      %v3563 = vrot.slane %v3561, 1
      %v3564 = vsel %vm2862, %v3559, %v3563
      %v3565 = vshrl.u32 %v3423, 16
      %v3567 = vor.u32 %v3565, %v3563
      %v3569 = vshll.u32 %v3424, 16
      %v3571 = vrot.slane %v3569, 1
      %v3572 = vsel %vm2862, %v3567, %v3571
      %v3577 = vunpack.c.l.b16 %v3328
      %v3578 = vunpack.c.l.b16 %v3329
      %v3579 = vunpack.c.l.b16 %v3330
      %v3580 = vunpack.c.l.b16 %v3331
      %v3581 = vpack.c.b16 %v3578, %v3577
      %v3582 = vpack.c.b16 %v3580, %v3579
      %v3586 = vsel %vm873, %v3436, 0
      %v3589 = vsel %vm873, %v3444, 0
      %v3592 = vsel %vm873, %v3452, 0
      %v3595 = vsel %vm873, %v3460, 0
      %v3598 = vsel %vm873, %v3468, 0
      %v3601 = vsel %vm873, %v3476, 0
      %v3604 = vsel %vm873, %v3484, 0
      %v3607 = vsel %vm873, %v3492, 0
      %v3610 = vsel %vm873, %v3500, 0
      %v3613 = vsel %vm873, %v3508, 0
      %v3616 = vsel %vm873, %v3516, 0
      %v3619 = vsel %vm873, %v3524, 0
      %v3622 = vsel %vm873, %v3532, 0
      %v3625 = vsel %vm873, %v3540, 0
      %v3628 = vsel %vm873, %v3548, 0
      %v3631 = vsel %vm873, %v3556, 0
      %v3634 = vsel %vm873, %v3564, 0
      %v3637 = vsel %vm873, %v3572, 0
      %3639 = vmatprep.subr.bf16.mxu0 0
      %3640 = vmatpush1.bf16.msra.mxu0 0
      %3641 = vmatprep.subr.bf16.mxu0 0
      %3642 = vmatpush1.bf16.msra.mxu0 0
      %3643 = vmatprep.subr.bf16.mxu0 0
      %3644 = vmatpush1.bf16.msra.mxu0 0
      %3645 = vmatprep.subr.bf16.mxu0 0
      %3646 = vmatpush1.bf16.msra.mxu0 0
      %3647 = vmatprep.subr.bf16.mxu0 0
      %3648 = vmatpush1.bf16.msra.mxu0 0
      %3649 = vmatprep.subr.bf16.mxu0 0
      %3650 = vmatpush1.bf16.msra.mxu0 0
      %3651 = vmatprep.subr.bf16.mxu0 0
      %3652 = vmatpush1.bf16.msra.mxu0 %v3582
      %3653 = vmatprep.subr.bf16.mxu0 0
      %3654 = vmatpush1.bf16.msra.mxu0 %v3581
      %3655 = vmatprep.subr.bf16.mxu0 0
      %3656 = vmatpush2.bf16.msra.mxu0 0
      %3657 = vmatprep.subr.bf16.mxu0 0
      %3658 = vmatpush2.bf16.msra.mxu0 0
      %3659 = vmatprep.subr.bf16.mxu0 0
      %3660 = vmatpush2.bf16.msra.mxu0 0
      %3661 = vmatprep.subr.bf16.mxu0 0
      %3662 = vmatpush2.bf16.msra.mxu0 0
      %3663 = vmatprep.subr.bf16.mxu0 0
      %3664 = vmatpush2.bf16.msra.mxu0 0
      %3665 = vmatprep.subr.bf16.mxu0 0
      %3666 = vmatpush2.bf16.msra.mxu0 0
      %3667 = vmatprep.subr.bf16.mxu0 0
      %3668 = vmatpush2.bf16.msra.mxu0 0
      %3669 = vmatprep.subr.bf16.mxu0 0
      %3670 = vmatpush2.bf16.msra.mxu0 0
      %3671 = vmatprep.mubr.bf16.mxu0 0
      %3672 = vmatmul.mubr.bf16.gmra.mxu0 %v3586
      %v3673 = vpop.f32.mrf.mxu0
      %v3674 = vadd.f32 0.0, %v3673
      %v3675 = vpop.f32.mrf.mxu0
      %v3676 = vpop.f32.mrf.mxu0
      %v3677 = vadd.f32 0.0, %v3676
      %v3678 = vpop.f32.mrf.mxu0
      %3679 = vmatprep.mubr.bf16.mxu0 0
      %3680 = vmatmul.mubr.bf16.gmra.mxu0 %v3589
      %v3681 = vpop.f32.mrf.mxu0
      %v3682 = vadd.f32 0.0, %v3681
      %v3683 = vpop.f32.mrf.mxu0
      %v3684 = vpop.f32.mrf.mxu0
      %v3685 = vadd.f32 0.0, %v3684
      %v3686 = vpop.f32.mrf.mxu0
      %3687 = vmatprep.mubr.bf16.mxu0 0
      %3688 = vmatmul.mubr.bf16.gmra.mxu0 %v3592
      %v3689 = vpop.f32.mrf.mxu0
      %v3690 = vadd.f32 0.0, %v3689
      %v3691 = vpop.f32.mrf.mxu0
      %v3692 = vpop.f32.mrf.mxu0
      %v3693 = vadd.f32 0.0, %v3692
      %v3694 = vpop.f32.mrf.mxu0
      %3695 = vmatprep.mubr.bf16.mxu0 0
      %3696 = vmatmul.mubr.bf16.gmra.mxu0 %v3595
      %v3697 = vpop.f32.mrf.mxu0
      %v3698 = vadd.f32 0.0, %v3697
      %v3699 = vpop.f32.mrf.mxu0
      %v3700 = vpop.f32.mrf.mxu0
      %v3701 = vadd.f32 0.0, %v3700
      %v3702 = vpop.f32.mrf.mxu0
      %3703 = vmatprep.mubr.bf16.mxu0 0
      %3704 = vmatmul.mubr.bf16.gmra.mxu0 %v3598
      %v3705 = vpop.f32.mrf.mxu0
      %v3706 = vadd.f32 0.0, %v3705
      %v3707 = vpop.f32.mrf.mxu0
      %v3708 = vpop.f32.mrf.mxu0
      %v3709 = vadd.f32 0.0, %v3708
      %v3710 = vpop.f32.mrf.mxu0
      %3711 = vmatprep.mubr.bf16.mxu0 0
      %3712 = vmatmul.mubr.bf16.gmra.mxu0 %v3601
      %v3713 = vpop.f32.mrf.mxu0
      %v3714 = vadd.f32 0.0, %v3713
      %v3715 = vpop.f32.mrf.mxu0
      %v3716 = vpop.f32.mrf.mxu0
      %v3717 = vadd.f32 0.0, %v3716
      %v3718 = vpop.f32.mrf.mxu0
      %3719 = vmatprep.mubr.bf16.mxu0 0
      %3720 = vmatmul.mubr.bf16.gmra.mxu0 %v3604
      %v3721 = vpop.f32.mrf.mxu0
      %v3722 = vadd.f32 0.0, %v3721
      %v3723 = vpop.f32.mrf.mxu0
      %v3724 = vpop.f32.mrf.mxu0
      %v3725 = vadd.f32 0.0, %v3724
      %v3726 = vpop.f32.mrf.mxu0
      %3727 = vmatprep.mubr.bf16.mxu0 0
      %3728 = vmatmul.mubr.bf16.gmra.mxu0 %v3607
      %v3729 = vpop.f32.mrf.mxu0
      %v3730 = vadd.f32 0.0, %v3729
      %v3731 = vpop.f32.mrf.mxu0
      %v3732 = vpop.f32.mrf.mxu0
      %v3733 = vadd.f32 0.0, %v3732
      %v3734 = vpop.f32.mrf.mxu0
      %3735 = vmatprep.mubr.bf16.mxu0 0
      %3736 = vmatmul.mubr.bf16.gmra.mxu0 %v3610
      %v3737 = vpop.f32.mrf.mxu0
      %v3738 = vadd.f32 0.0, %v3737
      %v3739 = vpop.f32.mrf.mxu0
      %v3740 = vpop.f32.mrf.mxu0
      %v3741 = vadd.f32 0.0, %v3740
      %v3742 = vpop.f32.mrf.mxu0
      %3743 = vmatprep.mubr.bf16.mxu0 0
      %3744 = vmatmul.mubr.bf16.gmra.mxu0 %v3613
      %v3745 = vpop.f32.mrf.mxu0
      %v3746 = vadd.f32 0.0, %v3745
      %v3747 = vpop.f32.mrf.mxu0
      %v3748 = vpop.f32.mrf.mxu0
      %v3749 = vadd.f32 0.0, %v3748
      %v3750 = vpop.f32.mrf.mxu0
      %3751 = vmatprep.mubr.bf16.mxu0 0
      %3752 = vmatmul.mubr.bf16.gmra.mxu0 %v3616
      %v3753 = vpop.f32.mrf.mxu0
      %v3754 = vadd.f32 0.0, %v3753
      %v3755 = vpop.f32.mrf.mxu0
      %v3756 = vpop.f32.mrf.mxu0
      %v3757 = vadd.f32 0.0, %v3756
      %v3758 = vpop.f32.mrf.mxu0
      %3759 = vmatprep.mubr.bf16.mxu0 0
      %3760 = vmatmul.mubr.bf16.gmra.mxu0 %v3619
      %v3761 = vpop.f32.mrf.mxu0
      %v3762 = vadd.f32 0.0, %v3761
      %v3763 = vpop.f32.mrf.mxu0
      %v3764 = vpop.f32.mrf.mxu0
      %v3765 = vadd.f32 0.0, %v3764
      %v3766 = vpop.f32.mrf.mxu0
      %3767 = vmatprep.mubr.bf16.mxu0 0
      %3768 = vmatmul.mubr.bf16.gmra.mxu0 %v3622
      %v3769 = vpop.f32.mrf.mxu0
      %v3770 = vadd.f32 0.0, %v3769
      %v3771 = vpop.f32.mrf.mxu0
      %v3772 = vpop.f32.mrf.mxu0
      %v3773 = vadd.f32 0.0, %v3772
      %v3774 = vpop.f32.mrf.mxu0
      %3775 = vmatprep.mubr.bf16.mxu0 0
      %3776 = vmatmul.mubr.bf16.gmra.mxu0 %v3625
      %v3777 = vpop.f32.mrf.mxu0
      %v3778 = vadd.f32 0.0, %v3777
      %v3779 = vpop.f32.mrf.mxu0
      %v3780 = vpop.f32.mrf.mxu0
      %v3781 = vadd.f32 0.0, %v3780
      %v3782 = vpop.f32.mrf.mxu0
      %3783 = vmatprep.mubr.bf16.mxu0 0
      %3784 = vmatmul.mubr.bf16.gmra.mxu0 %v3628
      %v3785 = vpop.f32.mrf.mxu0
      %v3786 = vadd.f32 0.0, %v3785
      %v3787 = vpop.f32.mrf.mxu0
      %v3788 = vpop.f32.mrf.mxu0
      %v3789 = vadd.f32 0.0, %v3788
      %v3790 = vpop.f32.mrf.mxu0
      %3791 = vmatprep.mubr.bf16.mxu0 0
      %3792 = vmatmul.mubr.bf16.gmra.mxu0 %v3631
      %v3793 = vpop.f32.mrf.mxu0
      %v3794 = vadd.f32 0.0, %v3793
      %v3795 = vpop.f32.mrf.mxu0
      %v3796 = vpop.f32.mrf.mxu0
      %v3797 = vadd.f32 0.0, %v3796
      %v3798 = vpop.f32.mrf.mxu0
      %3799 = vmatprep.mubr.bf16.mxu0 0
      %3800 = vmatmul.mubr.bf16.gmra.mxu0 %v3634
      %v3801 = vpop.f32.mrf.mxu0
      %v3802 = vadd.f32 0.0, %v3801
      %v3803 = vpop.f32.mrf.mxu0
      %v3804 = vpop.f32.mrf.mxu0
      %v3805 = vadd.f32 0.0, %v3804
      %v3806 = vpop.f32.mrf.mxu0
      %3807 = vmatprep.mubr.bf16.mxu0 0
      %3808 = vmatmul.mubr.bf16.gmra.mxu0 %v3637
      %v3809 = vpop.f32.mrf.mxu0
      %v3810 = vadd.f32 0.0, %v3809
      %v3811 = vpop.f32.mrf.mxu0
      %v3812 = vpop.f32.mrf.mxu0
      %v3813 = vadd.f32 0.0, %v3812
      %v3814 = vpop.f32.mrf.mxu0
      %3815 = vdwg.mxu0
      %v3816 = vadd.f32 %v3254, %v3674
      %v3817 = vadd.f32 %v3255, %v3677
      %v3818 = vadd.f32 %v3256, %v3682
      %v3819 = vadd.f32 %v3257, %v3685
      %v3820 = vadd.f32 %v3258, %v3690
      %v3821 = vadd.f32 %v3259, %v3693
      %v3822 = vadd.f32 %v3260, %v3698
      %v3823 = vadd.f32 %v3261, %v3701
      %v3824 = vadd.f32 %v3262, %v3706
      %v3825 = vadd.f32 %v3263, %v3709
      %v3826 = vadd.f32 %v3264, %v3714
      %v3827 = vadd.f32 %v3265, %v3717
      %v3828 = vadd.f32 %v3266, %v3722
      %v3829 = vadd.f32 %v3267, %v3725
      %v3830 = vadd.f32 %v3268, %v3730
      %v3831 = vadd.f32 %v3269, %v3733
      %v3832 = vadd.f32 %v3270, %v3738
      %v3833 = vadd.f32 %v3271, %v3741
      %v3834 = vadd.f32 %v3272, %v3746
      %v3835 = vadd.f32 %v3273, %v3749
      %v3836 = vadd.f32 %v3274, %v3754
      %v3837 = vadd.f32 %v3275, %v3757
      %v3838 = vadd.f32 %v3276, %v3762
      %v3839 = vadd.f32 %v3277, %v3765
      %v3840 = vadd.f32 %v3278, %v3770
      %v3841 = vadd.f32 %v3279, %v3773
      %v3842 = vadd.f32 %v3280, %v3778
      %v3843 = vadd.f32 %v3281, %v3781
      %v3844 = vadd.f32 %v3282, %v3786
      %v3845 = vadd.f32 %v3283, %v3789
      %v3846 = vadd.f32 %v3284, %v3794
      %v3847 = vadd.f32 %v3285, %v3797
      %v3848 = vadd.f32 %v3286, %v3802
      %v3849 = vadd.f32 %v3287, %v3805
      %v3850 = vadd.f32 %v3288, %v3810
      %v3851 = vadd.f32 %v3289, %v3813
      %v3852 = vld [vmem:[#allocation2 + $0x18] sm:$0xe]
      %s3853 = scalar_lea.vmem %s2, 112
      %v3854 = vld [vmem:[%s3853] sm:$0xf]
      %v3855 = vld [vmem:[%s3853 + $0x4] sm:$0xf]
      %v3856 = vld [vmem:[%s3853 + $0x8] sm:$0xf]
      %v3857 = vld [vmem:[%s3853 + $0xc] sm:$0xf]
      %v3859 = vunpack.c.l.b16 %v3852
      %v3860 = vpack.c.b16 %v3370, %v3859
      %vm3861 = vcmask 1046528
      %v3862 = vrot.slane %v3860, 1
      %v3863 = vrot.slane %v3407, 1
      %v3864 = vsel %vm3861, %v3862, %v3863
      %v3865 = vrot.slane %v3408, 1
      %v3866 = vsel %vm3861, %v3863, %v3865
      %v3867 = vrot.slane %v3409, 1
      %v3868 = vsel %vm3861, %v3865, %v3867
      %v3869 = vrot.slane %v3410, 1
      %v3870 = vsel %vm3861, %v3867, %v3869
      %v3871 = vrot.slane %v3411, 1
      %v3872 = vsel %vm3861, %v3869, %v3871
      %v3873 = vrot.slane %v3412, 1
      %v3874 = vsel %vm3861, %v3871, %v3873
      %v3875 = vrot.slane %v3413, 1
      %v3876 = vsel %vm3861, %v3873, %v3875
      %v3877 = vrot.slane %v3414, 1
      %v3878 = vsel %vm3861, %v3875, %v3877
      %v3879 = vrot.slane %v3415, 1
      %v3880 = vsel %vm3861, %v3877, %v3879
      %v3881 = vrot.slane %v3416, 1
      %v3882 = vsel %vm3861, %v3879, %v3881
      %v3883 = vrot.slane %v3417, 1
      %v3884 = vsel %vm3861, %v3881, %v3883
      %v3885 = vrot.slane %v3418, 1
      %v3886 = vsel %vm3861, %v3883, %v3885
      %v3887 = vrot.slane %v3419, 1
      %v3888 = vsel %vm3861, %v3885, %v3887
      %v3889 = vrot.slane %v3420, 1
      %v3890 = vsel %vm3861, %v3887, %v3889
      %v3891 = vrot.slane %v3421, 1
      %v3892 = vsel %vm3861, %v3889, %v3891
      %v3893 = vrot.slane %v3422, 1
      %v3894 = vsel %vm3861, %v3891, %v3893
      %v3895 = vrot.slane %v3423, 1
      %v3896 = vsel %vm3861, %v3893, %v3895
      %v3897 = vrot.slane %v3424, 1
      %v3898 = vsel %vm3861, %v3895, %v3897
      %v3903 = vunpack.c.l.b16 %v3854
      %v3904 = vunpack.c.l.b16 %v3855
      %v3905 = vunpack.c.l.b16 %v3856
      %v3906 = vunpack.c.l.b16 %v3857
      %v3907 = vpack.c.b16 %v3904, %v3903
      %v3908 = vpack.c.b16 %v3906, %v3905
      %v3912 = vsel %vm873, %v3864, 0
      %v3915 = vsel %vm873, %v3866, 0
      %v3918 = vsel %vm873, %v3868, 0
      %v3921 = vsel %vm873, %v3870, 0
      %v3924 = vsel %vm873, %v3872, 0
      %v3927 = vsel %vm873, %v3874, 0
      %v3930 = vsel %vm873, %v3876, 0
      %v3933 = vsel %vm873, %v3878, 0
      %v3936 = vsel %vm873, %v3880, 0
      %v3939 = vsel %vm873, %v3882, 0
      %v3942 = vsel %vm873, %v3884, 0
      %v3945 = vsel %vm873, %v3886, 0
      %v3948 = vsel %vm873, %v3888, 0
      %v3951 = vsel %vm873, %v3890, 0
      %v3954 = vsel %vm873, %v3892, 0
      %v3957 = vsel %vm873, %v3894, 0
      %v3960 = vsel %vm873, %v3896, 0
      %v3963 = vsel %vm873, %v3898, 0
      %3965 = vmatprep.subr.bf16.mxu0 0
      %3966 = vmatpush1.bf16.msra.mxu0 0
      %3967 = vmatprep.subr.bf16.mxu0 0
      %3968 = vmatpush1.bf16.msra.mxu0 0
      %3969 = vmatprep.subr.bf16.mxu0 0
      %3970 = vmatpush1.bf16.msra.mxu0 0
      %3971 = vmatprep.subr.bf16.mxu0 0
      %3972 = vmatpush1.bf16.msra.mxu0 0
      %3973 = vmatprep.subr.bf16.mxu0 0
      %3974 = vmatpush1.bf16.msra.mxu0 0
      %3975 = vmatprep.subr.bf16.mxu0 0
      %3976 = vmatpush1.bf16.msra.mxu0 0
      %3977 = vmatprep.subr.bf16.mxu0 0
      %3978 = vmatpush1.bf16.msra.mxu0 %v3908
      %3979 = vmatprep.subr.bf16.mxu0 0
      %3980 = vmatpush1.bf16.msra.mxu0 %v3907
      %3981 = vmatprep.subr.bf16.mxu0 0
      %3982 = vmatpush2.bf16.msra.mxu0 0
      %3983 = vmatprep.subr.bf16.mxu0 0
      %3984 = vmatpush2.bf16.msra.mxu0 0
      %3985 = vmatprep.subr.bf16.mxu0 0
      %3986 = vmatpush2.bf16.msra.mxu0 0
      %3987 = vmatprep.subr.bf16.mxu0 0
      %3988 = vmatpush2.bf16.msra.mxu0 0
      %3989 = vmatprep.subr.bf16.mxu0 0
      %3990 = vmatpush2.bf16.msra.mxu0 0
      %3991 = vmatprep.subr.bf16.mxu0 0
      %3992 = vmatpush2.bf16.msra.mxu0 0
      %3993 = vmatprep.subr.bf16.mxu0 0
      %3994 = vmatpush2.bf16.msra.mxu0 0
      %3995 = vmatprep.subr.bf16.mxu0 0
      %3996 = vmatpush2.bf16.msra.mxu0 0
      %3997 = vmatprep.mubr.bf16.mxu0 0
      %3998 = vmatmul.mubr.bf16.gmra.mxu0 %v3912
      %v3999 = vpop.f32.mrf.mxu0
      %v4000 = vadd.f32 0.0, %v3999
      %v4001 = vpop.f32.mrf.mxu0
      %v4002 = vpop.f32.mrf.mxu0
      %v4003 = vadd.f32 0.0, %v4002
      %v4004 = vpop.f32.mrf.mxu0
      %4005 = vmatprep.mubr.bf16.mxu0 0
      %4006 = vmatmul.mubr.bf16.gmra.mxu0 %v3915
      %v4007 = vpop.f32.mrf.mxu0
      %v4008 = vadd.f32 0.0, %v4007
      %v4009 = vpop.f32.mrf.mxu0
      %v4010 = vpop.f32.mrf.mxu0
      %v4011 = vadd.f32 0.0, %v4010
      %v4012 = vpop.f32.mrf.mxu0
      %4013 = vmatprep.mubr.bf16.mxu0 0
      %4014 = vmatmul.mubr.bf16.gmra.mxu0 %v3918
      %v4015 = vpop.f32.mrf.mxu0
      %v4016 = vadd.f32 0.0, %v4015
      %v4017 = vpop.f32.mrf.mxu0
      %v4018 = vpop.f32.mrf.mxu0
      %v4019 = vadd.f32 0.0, %v4018
      %v4020 = vpop.f32.mrf.mxu0
      %4021 = vmatprep.mubr.bf16.mxu0 0
      %4022 = vmatmul.mubr.bf16.gmra.mxu0 %v3921
      %v4023 = vpop.f32.mrf.mxu0
      %v4024 = vadd.f32 0.0, %v4023
      %v4025 = vpop.f32.mrf.mxu0
      %v4026 = vpop.f32.mrf.mxu0
      %v4027 = vadd.f32 0.0, %v4026
      %v4028 = vpop.f32.mrf.mxu0
      %4029 = vmatprep.mubr.bf16.mxu0 0
      %4030 = vmatmul.mubr.bf16.gmra.mxu0 %v3924
      %v4031 = vpop.f32.mrf.mxu0
      %v4032 = vadd.f32 0.0, %v4031
      %v4033 = vpop.f32.mrf.mxu0
      %v4034 = vpop.f32.mrf.mxu0
      %v4035 = vadd.f32 0.0, %v4034
      %v4036 = vpop.f32.mrf.mxu0
      %4037 = vmatprep.mubr.bf16.mxu0 0
      %4038 = vmatmul.mubr.bf16.gmra.mxu0 %v3927
      %v4039 = vpop.f32.mrf.mxu0
      %v4040 = vadd.f32 0.0, %v4039
      %v4041 = vpop.f32.mrf.mxu0
      %v4042 = vpop.f32.mrf.mxu0
      %v4043 = vadd.f32 0.0, %v4042
      %v4044 = vpop.f32.mrf.mxu0
      %4045 = vmatprep.mubr.bf16.mxu0 0
      %4046 = vmatmul.mubr.bf16.gmra.mxu0 %v3930
      %v4047 = vpop.f32.mrf.mxu0
      %v4048 = vadd.f32 0.0, %v4047
      %v4049 = vpop.f32.mrf.mxu0
      %v4050 = vpop.f32.mrf.mxu0
      %v4051 = vadd.f32 0.0, %v4050
      %v4052 = vpop.f32.mrf.mxu0
      %4053 = vmatprep.mubr.bf16.mxu0 0
      %4054 = vmatmul.mubr.bf16.gmra.mxu0 %v3933
      %v4055 = vpop.f32.mrf.mxu0
      %v4056 = vadd.f32 0.0, %v4055
      %v4057 = vpop.f32.mrf.mxu0
      %v4058 = vpop.f32.mrf.mxu0
      %v4059 = vadd.f32 0.0, %v4058
      %v4060 = vpop.f32.mrf.mxu0
      %4061 = vmatprep.mubr.bf16.mxu0 0
      %4062 = vmatmul.mubr.bf16.gmra.mxu0 %v3936
      %v4063 = vpop.f32.mrf.mxu0
      %v4064 = vadd.f32 0.0, %v4063
      %v4065 = vpop.f32.mrf.mxu0
      %v4066 = vpop.f32.mrf.mxu0
      %v4067 = vadd.f32 0.0, %v4066
      %v4068 = vpop.f32.mrf.mxu0
      %4069 = vmatprep.mubr.bf16.mxu0 0
      %4070 = vmatmul.mubr.bf16.gmra.mxu0 %v3939
      %v4071 = vpop.f32.mrf.mxu0
      %v4072 = vadd.f32 0.0, %v4071
      %v4073 = vpop.f32.mrf.mxu0
      %v4074 = vpop.f32.mrf.mxu0
      %v4075 = vadd.f32 0.0, %v4074
      %v4076 = vpop.f32.mrf.mxu0
      %4077 = vmatprep.mubr.bf16.mxu0 0
      %4078 = vmatmul.mubr.bf16.gmra.mxu0 %v3942
      %v4079 = vpop.f32.mrf.mxu0
      %v4080 = vadd.f32 0.0, %v4079
      %v4081 = vpop.f32.mrf.mxu0
      %v4082 = vpop.f32.mrf.mxu0
      %v4083 = vadd.f32 0.0, %v4082
      %v4084 = vpop.f32.mrf.mxu0
      %4085 = vmatprep.mubr.bf16.mxu0 0
      %4086 = vmatmul.mubr.bf16.gmra.mxu0 %v3945
      %v4087 = vpop.f32.mrf.mxu0
      %v4088 = vadd.f32 0.0, %v4087
      %v4089 = vpop.f32.mrf.mxu0
      %v4090 = vpop.f32.mrf.mxu0
      %v4091 = vadd.f32 0.0, %v4090
      %v4092 = vpop.f32.mrf.mxu0
      %4093 = vmatprep.mubr.bf16.mxu0 0
      %4094 = vmatmul.mubr.bf16.gmra.mxu0 %v3948
      %v4095 = vpop.f32.mrf.mxu0
      %v4096 = vadd.f32 0.0, %v4095
      %v4097 = vpop.f32.mrf.mxu0
      %v4098 = vpop.f32.mrf.mxu0
      %v4099 = vadd.f32 0.0, %v4098
      %v4100 = vpop.f32.mrf.mxu0
      %4101 = vmatprep.mubr.bf16.mxu0 0
      %4102 = vmatmul.mubr.bf16.gmra.mxu0 %v3951
      %v4103 = vpop.f32.mrf.mxu0
      %v4104 = vadd.f32 0.0, %v4103
      %v4105 = vpop.f32.mrf.mxu0
      %v4106 = vpop.f32.mrf.mxu0
      %v4107 = vadd.f32 0.0, %v4106
      %v4108 = vpop.f32.mrf.mxu0
      %4109 = vmatprep.mubr.bf16.mxu0 0
      %4110 = vmatmul.mubr.bf16.gmra.mxu0 %v3954
      %v4111 = vpop.f32.mrf.mxu0
      %v4112 = vadd.f32 0.0, %v4111
      %v4113 = vpop.f32.mrf.mxu0
      %v4114 = vpop.f32.mrf.mxu0
      %v4115 = vadd.f32 0.0, %v4114
      %v4116 = vpop.f32.mrf.mxu0
      %4117 = vmatprep.mubr.bf16.mxu0 0
      %4118 = vmatmul.mubr.bf16.gmra.mxu0 %v3957
      %v4119 = vpop.f32.mrf.mxu0
      %v4120 = vadd.f32 0.0, %v4119
      %v4121 = vpop.f32.mrf.mxu0
      %v4122 = vpop.f32.mrf.mxu0
      %v4123 = vadd.f32 0.0, %v4122
      %v4124 = vpop.f32.mrf.mxu0
      %4125 = vmatprep.mubr.bf16.mxu0 0
      %4126 = vmatmul.mubr.bf16.gmra.mxu0 %v3960
      %v4127 = vpop.f32.mrf.mxu0
      %v4128 = vadd.f32 0.0, %v4127
      %v4129 = vpop.f32.mrf.mxu0
      %v4130 = vpop.f32.mrf.mxu0
      %v4131 = vadd.f32 0.0, %v4130
      %v4132 = vpop.f32.mrf.mxu0
      %4133 = vmatprep.mubr.bf16.mxu0 0
      %4134 = vmatmul.mubr.bf16.gmra.mxu0 %v3963
      %v4135 = vpop.f32.mrf.mxu0
      %v4136 = vadd.f32 0.0, %v4135
      %v4137 = vpop.f32.mrf.mxu0
      %v4138 = vpop.f32.mrf.mxu0
      %v4139 = vadd.f32 0.0, %v4138
      %v4140 = vpop.f32.mrf.mxu0
      %4141 = vdwg.mxu0
      %v4142 = vadd.f32 %v3816, %v4000
      %v4143 = vadd.f32 %v3817, %v4003
      %v4144 = vadd.f32 %v3818, %v4008
      %v4145 = vadd.f32 %v3819, %v4011
      %v4146 = vadd.f32 %v3820, %v4016
      %v4147 = vadd.f32 %v3821, %v4019
      %v4148 = vadd.f32 %v3822, %v4024
      %v4149 = vadd.f32 %v3823, %v4027
      %v4150 = vadd.f32 %v3824, %v4032
      %v4151 = vadd.f32 %v3825, %v4035
      %v4152 = vadd.f32 %v3826, %v4040
      %v4153 = vadd.f32 %v3827, %v4043
      %v4154 = vadd.f32 %v3828, %v4048
      %v4155 = vadd.f32 %v3829, %v4051
      %v4156 = vadd.f32 %v3830, %v4056
      %v4157 = vadd.f32 %v3831, %v4059
      %v4158 = vadd.f32 %v3832, %v4064
      %v4159 = vadd.f32 %v3833, %v4067
      %v4160 = vadd.f32 %v3834, %v4072
      %v4161 = vadd.f32 %v3835, %v4075
      %v4162 = vadd.f32 %v3836, %v4080
      %v4163 = vadd.f32 %v3837, %v4083
      %v4164 = vadd.f32 %v3838, %v4088
      %v4165 = vadd.f32 %v3839, %v4091
      %v4166 = vadd.f32 %v3840, %v4096
      %v4167 = vadd.f32 %v3841, %v4099
      %v4168 = vadd.f32 %v3842, %v4104
      %v4169 = vadd.f32 %v3843, %v4107
      %v4170 = vadd.f32 %v3844, %v4112
      %v4171 = vadd.f32 %v3845, %v4115
      %v4172 = vadd.f32 %v3846, %v4120
      %v4173 = vadd.f32 %v3847, %v4123
      %v4174 = vadd.f32 %v3848, %v4128
      %v4175 = vadd.f32 %v3849, %v4131
      %v4176 = vadd.f32 %v3850, %v4136
      %v4177 = vadd.f32 %v3851, %v4139
      %v4178 = vld [vmem:[#allocation2 + $0xa8] sm:$0x3]
      %s4179 = scalar_lea.vmem %s2, 128
      %v4180 = vld [vmem:[%s4179] sm:$0xf]
      %v4181 = vld [vmem:[%s4179 + $0x4] sm:$0xf]
      %v4182 = vld [vmem:[%s4179 + $0x8] sm:$0xf]
      %v4183 = vld [vmem:[%s4179 + $0xc] sm:$0xf]
      %v4185 = vunpack.c.l.b16 %v4178
      %v4186 = vpack.c.b16 %v4185, %v4185
      %vm4187 = vsmask.f32 6400
      %v4189 = vshrl.u32 %v3860, 16
      %v4191 = vrot.slane %v4189, 1
      %v4192 = vshll.u32 %v3860, 16
      %v4194 = vrot.slane %v4192, 2
      %v4195 = vor.u32 %v4191, %v4194
      %v4196 = vrot.slane %v3437, 1
      %v4197 = vrot.slane %v3433, 2
      %v4198 = vor.u32 %v4196, %v4197
      %v4199 = vsel %vm4187, %v4195, %v4198
      %v4200 = vrot.slane %v3445, 1
      %v4201 = vrot.slane %v3441, 2
      %v4202 = vor.u32 %v4200, %v4201
      %v4203 = vsel %vm4187, %v4198, %v4202
      %v4204 = vrot.slane %v3453, 1
      %v4205 = vrot.slane %v3449, 2
      %v4206 = vor.u32 %v4204, %v4205
      %v4207 = vsel %vm4187, %v4202, %v4206
      %v4208 = vrot.slane %v3461, 1
      %v4209 = vrot.slane %v3457, 2
      %v4210 = vor.u32 %v4208, %v4209
      %v4211 = vsel %vm4187, %v4206, %v4210
      %v4212 = vrot.slane %v3469, 1
      %v4213 = vrot.slane %v3465, 2
      %v4214 = vor.u32 %v4212, %v4213
      %v4215 = vsel %vm4187, %v4210, %v4214
      %v4216 = vrot.slane %v3477, 1
      %v4217 = vrot.slane %v3473, 2
      %v4218 = vor.u32 %v4216, %v4217
      %v4219 = vsel %vm4187, %v4214, %v4218
      %v4220 = vrot.slane %v3485, 1
      %v4221 = vrot.slane %v3481, 2
      %v4222 = vor.u32 %v4220, %v4221
      %v4223 = vsel %vm4187, %v4218, %v4222
      %v4224 = vrot.slane %v3493, 1
      %v4225 = vrot.slane %v3489, 2
      %v4226 = vor.u32 %v4224, %v4225
      %v4227 = vsel %vm4187, %v4222, %v4226
      %v4228 = vrot.slane %v3501, 1
      %v4229 = vrot.slane %v3497, 2
      %v4230 = vor.u32 %v4228, %v4229
      %v4231 = vsel %vm4187, %v4226, %v4230
      %v4232 = vrot.slane %v3509, 1
      %v4233 = vrot.slane %v3505, 2
      %v4234 = vor.u32 %v4232, %v4233
      %v4235 = vsel %vm4187, %v4230, %v4234
      %v4236 = vrot.slane %v3517, 1
      %v4237 = vrot.slane %v3513, 2
      %v4238 = vor.u32 %v4236, %v4237
      %v4239 = vsel %vm4187, %v4234, %v4238
      %v4240 = vrot.slane %v3525, 1
      %v4241 = vrot.slane %v3521, 2
      %v4242 = vor.u32 %v4240, %v4241
      %v4243 = vsel %vm4187, %v4238, %v4242
      %v4244 = vrot.slane %v3533, 1
      %v4245 = vrot.slane %v3529, 2
      %v4246 = vor.u32 %v4244, %v4245
      %v4247 = vsel %vm4187, %v4242, %v4246
      %v4248 = vrot.slane %v3541, 1
      %v4249 = vrot.slane %v3537, 2
      %v4250 = vor.u32 %v4248, %v4249
      %v4251 = vsel %vm4187, %v4246, %v4250
      %v4252 = vrot.slane %v3549, 1
      %v4253 = vrot.slane %v3545, 2
      %v4254 = vor.u32 %v4252, %v4253
      %v4255 = vsel %vm4187, %v4250, %v4254
      %v4256 = vrot.slane %v3557, 1
      %v4257 = vrot.slane %v3553, 2
      %v4258 = vor.u32 %v4256, %v4257
      %v4259 = vsel %vm4187, %v4254, %v4258
      %v4260 = vrot.slane %v3565, 1
      %v4261 = vrot.slane %v3561, 2
      %v4262 = vor.u32 %v4260, %v4261
      %v4263 = vsel %vm4187, %v4258, %v4262
      %v4265 = vshrl.u32 %v4186, 16
      %v4267 = vrot.slane %v4265, 1
      %v4268 = vshll.u32 %v4186, 16
      %v4270 = vrot.slane %v4268, 2
      %v4271 = vor.u32 %v4267, %v4270
      %v4272 = vsel %vm4187, %v4262, %v4271
      %v4277 = vunpack.c.l.b16 %v4180
      %v4278 = vunpack.c.l.b16 %v4181
      %v4279 = vunpack.c.l.b16 %v4182
      %v4280 = vunpack.c.l.b16 %v4183
      %v4281 = vpack.c.b16 %v4278, %v4277
      %v4282 = vpack.c.b16 %v4280, %v4279
      %v4286 = vsel %vm873, %v4199, 0
      %v4289 = vsel %vm873, %v4203, 0
      %v4292 = vsel %vm873, %v4207, 0
      %v4295 = vsel %vm873, %v4211, 0
      %v4298 = vsel %vm873, %v4215, 0
      %v4301 = vsel %vm873, %v4219, 0
      %v4304 = vsel %vm873, %v4223, 0
      %v4307 = vsel %vm873, %v4227, 0
      %v4310 = vsel %vm873, %v4231, 0
      %v4313 = vsel %vm873, %v4235, 0
      %v4316 = vsel %vm873, %v4239, 0
      %v4319 = vsel %vm873, %v4243, 0
      %v4322 = vsel %vm873, %v4247, 0
      %v4325 = vsel %vm873, %v4251, 0
      %v4328 = vsel %vm873, %v4255, 0
      %v4331 = vsel %vm873, %v4259, 0
      %v4334 = vsel %vm873, %v4263, 0
      %v4337 = vsel %vm873, %v4272, 0
      %4339 = vmatprep.subr.bf16.mxu0 0
      %4340 = vmatpush1.bf16.msra.mxu0 0
      %4341 = vmatprep.subr.bf16.mxu0 0
      %4342 = vmatpush1.bf16.msra.mxu0 0
      %4343 = vmatprep.subr.bf16.mxu0 0
      %4344 = vmatpush1.bf16.msra.mxu0 0
      %4345 = vmatprep.subr.bf16.mxu0 0
      %4346 = vmatpush1.bf16.msra.mxu0 0
      %4347 = vmatprep.subr.bf16.mxu0 0
      %4348 = vmatpush1.bf16.msra.mxu0 0
      %4349 = vmatprep.subr.bf16.mxu0 0
      %4350 = vmatpush1.bf16.msra.mxu0 0
      %4351 = vmatprep.subr.bf16.mxu0 0
      %4352 = vmatpush1.bf16.msra.mxu0 %v4282
      %4353 = vmatprep.subr.bf16.mxu0 0
      %4354 = vmatpush1.bf16.msra.mxu0 %v4281
      %4355 = vmatprep.subr.bf16.mxu0 0
      %4356 = vmatpush2.bf16.msra.mxu0 0
      %4357 = vmatprep.subr.bf16.mxu0 0
      %4358 = vmatpush2.bf16.msra.mxu0 0
      %4359 = vmatprep.subr.bf16.mxu0 0
      %4360 = vmatpush2.bf16.msra.mxu0 0
      %4361 = vmatprep.subr.bf16.mxu0 0
      %4362 = vmatpush2.bf16.msra.mxu0 0
      %4363 = vmatprep.subr.bf16.mxu0 0
      %4364 = vmatpush2.bf16.msra.mxu0 0
      %4365 = vmatprep.subr.bf16.mxu0 0
      %4366 = vmatpush2.bf16.msra.mxu0 0
      %4367 = vmatprep.subr.bf16.mxu0 0
      %4368 = vmatpush2.bf16.msra.mxu0 0
      %4369 = vmatprep.subr.bf16.mxu0 0
      %4370 = vmatpush2.bf16.msra.mxu0 0
      %4371 = vmatprep.mubr.bf16.mxu0 0
      %4372 = vmatmul.mubr.bf16.gmra.mxu0 %v4286
      %v4373 = vpop.f32.mrf.mxu0
      %v4374 = vadd.f32 0.0, %v4373
      %v4375 = vpop.f32.mrf.mxu0
      %v4376 = vpop.f32.mrf.mxu0
      %v4377 = vadd.f32 0.0, %v4376
      %v4378 = vpop.f32.mrf.mxu0
      %4379 = vmatprep.mubr.bf16.mxu0 0
      %4380 = vmatmul.mubr.bf16.gmra.mxu0 %v4289
      %v4381 = vpop.f32.mrf.mxu0
      %v4382 = vadd.f32 0.0, %v4381
      %v4383 = vpop.f32.mrf.mxu0
      %v4384 = vpop.f32.mrf.mxu0
      %v4385 = vadd.f32 0.0, %v4384
      %v4386 = vpop.f32.mrf.mxu0
      %4387 = vmatprep.mubr.bf16.mxu0 0
      %4388 = vmatmul.mubr.bf16.gmra.mxu0 %v4292
      %v4389 = vpop.f32.mrf.mxu0
      %v4390 = vadd.f32 0.0, %v4389
      %v4391 = vpop.f32.mrf.mxu0
      %v4392 = vpop.f32.mrf.mxu0
      %v4393 = vadd.f32 0.0, %v4392
      %v4394 = vpop.f32.mrf.mxu0
      %4395 = vmatprep.mubr.bf16.mxu0 0
      %4396 = vmatmul.mubr.bf16.gmra.mxu0 %v4295
      %v4397 = vpop.f32.mrf.mxu0
      %v4398 = vadd.f32 0.0, %v4397
      %v4399 = vpop.f32.mrf.mxu0
      %v4400 = vpop.f32.mrf.mxu0
      %v4401 = vadd.f32 0.0, %v4400
      %v4402 = vpop.f32.mrf.mxu0
      %4403 = vmatprep.mubr.bf16.mxu0 0
      %4404 = vmatmul.mubr.bf16.gmra.mxu0 %v4298
      %v4405 = vpop.f32.mrf.mxu0
      %v4406 = vadd.f32 0.0, %v4405
      %v4407 = vpop.f32.mrf.mxu0
      %v4408 = vpop.f32.mrf.mxu0
      %v4409 = vadd.f32 0.0, %v4408
      %v4410 = vpop.f32.mrf.mxu0
      %4411 = vmatprep.mubr.bf16.mxu0 0
      %4412 = vmatmul.mubr.bf16.gmra.mxu0 %v4301
      %v4413 = vpop.f32.mrf.mxu0
      %v4414 = vadd.f32 0.0, %v4413
      %v4415 = vpop.f32.mrf.mxu0
      %v4416 = vpop.f32.mrf.mxu0
      %v4417 = vadd.f32 0.0, %v4416
      %v4418 = vpop.f32.mrf.mxu0
      %4419 = vmatprep.mubr.bf16.mxu0 0
      %4420 = vmatmul.mubr.bf16.gmra.mxu0 %v4304
      %v4421 = vpop.f32.mrf.mxu0
      %v4422 = vadd.f32 0.0, %v4421
      %v4423 = vpop.f32.mrf.mxu0
      %v4424 = vpop.f32.mrf.mxu0
      %v4425 = vadd.f32 0.0, %v4424
      %v4426 = vpop.f32.mrf.mxu0
      %4427 = vmatprep.mubr.bf16.mxu0 0
      %4428 = vmatmul.mubr.bf16.gmra.mxu0 %v4307
      %v4429 = vpop.f32.mrf.mxu0
      %v4430 = vadd.f32 0.0, %v4429
      %v4431 = vpop.f32.mrf.mxu0
      %v4432 = vpop.f32.mrf.mxu0
      %v4433 = vadd.f32 0.0, %v4432
      %v4434 = vpop.f32.mrf.mxu0
      %4435 = vmatprep.mubr.bf16.mxu0 0
      %4436 = vmatmul.mubr.bf16.gmra.mxu0 %v4310
      %v4437 = vpop.f32.mrf.mxu0
      %v4438 = vadd.f32 0.0, %v4437
      %v4439 = vpop.f32.mrf.mxu0
      %v4440 = vpop.f32.mrf.mxu0
      %v4441 = vadd.f32 0.0, %v4440
      %v4442 = vpop.f32.mrf.mxu0
      %4443 = vmatprep.mubr.bf16.mxu0 0
      %4444 = vmatmul.mubr.bf16.gmra.mxu0 %v4313
      %v4445 = vpop.f32.mrf.mxu0
      %v4446 = vadd.f32 0.0, %v4445
      %v4447 = vpop.f32.mrf.mxu0
      %v4448 = vpop.f32.mrf.mxu0
      %v4449 = vadd.f32 0.0, %v4448
      %v4450 = vpop.f32.mrf.mxu0
      %4451 = vmatprep.mubr.bf16.mxu0 0
      %4452 = vmatmul.mubr.bf16.gmra.mxu0 %v4316
      %v4453 = vpop.f32.mrf.mxu0
      %v4454 = vadd.f32 0.0, %v4453
      %v4455 = vpop.f32.mrf.mxu0
      %v4456 = vpop.f32.mrf.mxu0
      %v4457 = vadd.f32 0.0, %v4456
      %v4458 = vpop.f32.mrf.mxu0
      %4459 = vmatprep.mubr.bf16.mxu0 0
      %4460 = vmatmul.mubr.bf16.gmra.mxu0 %v4319
      %v4461 = vpop.f32.mrf.mxu0
      %v4462 = vadd.f32 0.0, %v4461
      %v4463 = vpop.f32.mrf.mxu0
      %v4464 = vpop.f32.mrf.mxu0
      %v4465 = vadd.f32 0.0, %v4464
      %v4466 = vpop.f32.mrf.mxu0
      %4467 = vmatprep.mubr.bf16.mxu0 0
      %4468 = vmatmul.mubr.bf16.gmra.mxu0 %v4322
      %v4469 = vpop.f32.mrf.mxu0
      %v4470 = vadd.f32 0.0, %v4469
      %v4471 = vpop.f32.mrf.mxu0
      %v4472 = vpop.f32.mrf.mxu0
      %v4473 = vadd.f32 0.0, %v4472
      %v4474 = vpop.f32.mrf.mxu0
      %4475 = vmatprep.mubr.bf16.mxu0 0
      %4476 = vmatmul.mubr.bf16.gmra.mxu0 %v4325
      %v4477 = vpop.f32.mrf.mxu0
      %v4478 = vadd.f32 0.0, %v4477
      %v4479 = vpop.f32.mrf.mxu0
      %v4480 = vpop.f32.mrf.mxu0
      %v4481 = vadd.f32 0.0, %v4480
      %v4482 = vpop.f32.mrf.mxu0
      %4483 = vmatprep.mubr.bf16.mxu0 0
      %4484 = vmatmul.mubr.bf16.gmra.mxu0 %v4328
      %v4485 = vpop.f32.mrf.mxu0
      %v4486 = vadd.f32 0.0, %v4485
      %v4487 = vpop.f32.mrf.mxu0
      %v4488 = vpop.f32.mrf.mxu0
      %v4489 = vadd.f32 0.0, %v4488
      %v4490 = vpop.f32.mrf.mxu0
      %4491 = vmatprep.mubr.bf16.mxu0 0
      %4492 = vmatmul.mubr.bf16.gmra.mxu0 %v4331
      %v4493 = vpop.f32.mrf.mxu0
      %v4494 = vadd.f32 0.0, %v4493
      %v4495 = vpop.f32.mrf.mxu0
      %v4496 = vpop.f32.mrf.mxu0
      %v4497 = vadd.f32 0.0, %v4496
      %v4498 = vpop.f32.mrf.mxu0
      %4499 = vmatprep.mubr.bf16.mxu0 0
      %4500 = vmatmul.mubr.bf16.gmra.mxu0 %v4334
      %v4501 = vpop.f32.mrf.mxu0
      %v4502 = vadd.f32 0.0, %v4501
      %v4503 = vpop.f32.mrf.mxu0
      %v4504 = vpop.f32.mrf.mxu0
      %v4505 = vadd.f32 0.0, %v4504
      %v4506 = vpop.f32.mrf.mxu0
      %4507 = vmatprep.mubr.bf16.mxu0 0
      %4508 = vmatmul.mubr.bf16.gmra.mxu0 %v4337
      %v4509 = vpop.f32.mrf.mxu0
      %v4510 = vadd.f32 0.0, %v4509
      %v4511 = vpop.f32.mrf.mxu0
      %v4512 = vpop.f32.mrf.mxu0
      %v4513 = vadd.f32 0.0, %v4512
      %v4514 = vpop.f32.mrf.mxu0
      %4515 = vdwg.mxu0
      %v4516 = vadd.f32 %v4142, %v4374
      %v4517 = vadd.f32 %v4143, %v4377
      %v4518 = vadd.f32 %v4144, %v4382
      %v4519 = vadd.f32 %v4145, %v4385
      %v4520 = vadd.f32 %v4146, %v4390
      %v4521 = vadd.f32 %v4147, %v4393
      %v4522 = vadd.f32 %v4148, %v4398
      %v4523 = vadd.f32 %v4149, %v4401
      %v4524 = vadd.f32 %v4150, %v4406
      %v4525 = vadd.f32 %v4151, %v4409
      %v4526 = vadd.f32 %v4152, %v4414
      %v4527 = vadd.f32 %v4153, %v4417
      %v4528 = vadd.f32 %v4154, %v4422
      %v4529 = vadd.f32 %v4155, %v4425
      %v4530 = vadd.f32 %v4156, %v4430
      %v4531 = vadd.f32 %v4157, %v4433
      %v4532 = vadd.f32 %v4158, %v4438
      %v4533 = vadd.f32 %v4159, %v4441
      %v4534 = vadd.f32 %v4160, %v4446
      %v4535 = vadd.f32 %v4161, %v4449
      %v4536 = vadd.f32 %v4162, %v4454
      %v4537 = vadd.f32 %v4163, %v4457
      %v4538 = vadd.f32 %v4164, %v4462
      %v4539 = vadd.f32 %v4165, %v4465
      %v4540 = vadd.f32 %v4166, %v4470
      %v4541 = vadd.f32 %v4167, %v4473
      %v4542 = vadd.f32 %v4168, %v4478
      %v4543 = vadd.f32 %v4169, %v4481
      %v4544 = vadd.f32 %v4170, %v4486
      %v4545 = vadd.f32 %v4171, %v4489
      %v4546 = vadd.f32 %v4172, %v4494
      %v4547 = vadd.f32 %v4173, %v4497
      %v4548 = vadd.f32 %v4174, %v4502
      %v4549 = vadd.f32 %v4175, %v4505
      %v4550 = vadd.f32 %v4176, %v4510
      %v4551 = vadd.f32 %v4177, %v4513
      %v4552 = vxor.u32 %v4516, 2147483648
      %v4553 = vxor.u32 %v4517, 2147483648
      %v4554 = vxor.u32 %v4518, 2147483648
      %v4555 = vxor.u32 %v4519, 2147483648
      %v4556 = vxor.u32 %v4520, 2147483648
      %v4557 = vxor.u32 %v4521, 2147483648
      %v4558 = vxor.u32 %v4522, 2147483648
      %v4559 = vxor.u32 %v4523, 2147483648
      %v4560 = vxor.u32 %v4524, 2147483648
      %v4561 = vxor.u32 %v4525, 2147483648
      %v4562 = vxor.u32 %v4526, 2147483648
      %v4563 = vxor.u32 %v4527, 2147483648
      %v4564 = vxor.u32 %v4528, 2147483648
      %v4565 = vxor.u32 %v4529, 2147483648
      %v4566 = vxor.u32 %v4530, 2147483648
      %v4567 = vxor.u32 %v4531, 2147483648
      %v4568 = vxor.u32 %v4532, 2147483648
      %v4569 = vxor.u32 %v4533, 2147483648
      %v4570 = vxor.u32 %v4534, 2147483648
      %v4571 = vxor.u32 %v4535, 2147483648
      %v4572 = vxor.u32 %v4536, 2147483648
      %v4573 = vxor.u32 %v4537, 2147483648
      %v4574 = vxor.u32 %v4538, 2147483648
      %v4575 = vxor.u32 %v4539, 2147483648
      %v4576 = vxor.u32 %v4540, 2147483648
      %v4577 = vxor.u32 %v4541, 2147483648
      %v4578 = vxor.u32 %v4542, 2147483648
      %v4579 = vxor.u32 %v4543, 2147483648
      %v4580 = vxor.u32 %v4544, 2147483648
      %v4581 = vxor.u32 %v4545, 2147483648
      %v4582 = vxor.u32 %v4546, 2147483648
      %v4583 = vxor.u32 %v4547, 2147483648
      %v4584 = vxor.u32 %v4548, 2147483648
      %v4585 = vxor.u32 %v4549, 2147483648
      %v4586 = vxor.u32 %v4550, 2147483648
      %v4587 = vxor.u32 %v4551, 2147483648
      %v4588 = vmul.f32 %v4552, 1.442695
      %v4589 = vpow.pop %v4588
      %v4590 = vmul.f32 %v4553, 1.442695
      %v4591 = vpow.pop %v4590
      %v4592 = vmul.f32 %v4554, 1.442695
      %v4593 = vpow.pop %v4592
      %v4594 = vmul.f32 %v4555, 1.442695
      %v4595 = vpow.pop %v4594
      %v4596 = vmul.f32 %v4556, 1.442695
      %v4597 = vpow.pop %v4596
      %v4598 = vmul.f32 %v4557, 1.442695
      %v4599 = vpow.pop %v4598
      %v4600 = vmul.f32 %v4558, 1.442695
      %v4601 = vpow.pop %v4600
      %v4602 = vmul.f32 %v4559, 1.442695
      %v4603 = vpow.pop %v4602
      %v4604 = vmul.f32 %v4560, 1.442695
      %v4605 = vpow.pop %v4604
      %v4606 = vmul.f32 %v4561, 1.442695
      %v4607 = vpow.pop %v4606
      %v4608 = vmul.f32 %v4562, 1.442695
      %v4609 = vpow.pop %v4608
      %v4610 = vmul.f32 %v4563, 1.442695
      %v4611 = vpow.pop %v4610
      %v4612 = vmul.f32 %v4564, 1.442695
      %v4613 = vpow.pop %v4612
      %v4614 = vmul.f32 %v4565, 1.442695
      %v4615 = vpow.pop %v4614
      %v4616 = vmul.f32 %v4566, 1.442695
      %v4617 = vpow.pop %v4616
      %v4618 = vmul.f32 %v4567, 1.442695
      %v4619 = vpow.pop %v4618
      %v4620 = vmul.f32 %v4568, 1.442695
      %v4621 = vpow.pop %v4620
      %v4622 = vmul.f32 %v4569, 1.442695
      %v4623 = vpow.pop %v4622
      %v4624 = vmul.f32 %v4570, 1.442695
      %v4625 = vpow.pop %v4624
      %v4626 = vmul.f32 %v4571, 1.442695
      %v4627 = vpow.pop %v4626
      %v4628 = vmul.f32 %v4572, 1.442695
      %v4629 = vpow.pop %v4628
      %v4630 = vmul.f32 %v4573, 1.442695
      %v4631 = vpow.pop %v4630
      %v4632 = vmul.f32 %v4574, 1.442695
      %v4633 = vpow.pop %v4632
      %v4634 = vmul.f32 %v4575, 1.442695
      %v4635 = vpow.pop %v4634
      %v4636 = vmul.f32 %v4576, 1.442695
      %v4637 = vpow.pop %v4636
      %v4638 = vmul.f32 %v4577, 1.442695
      %v4639 = vpow.pop %v4638
      %v4640 = vmul.f32 %v4578, 1.442695
      %v4641 = vpow.pop %v4640
      %v4642 = vmul.f32 %v4579, 1.442695
      %v4643 = vpow.pop %v4642
      %v4644 = vmul.f32 %v4580, 1.442695
      %v4645 = vpow.pop %v4644
      %v4646 = vmul.f32 %v4581, 1.442695
      %v4647 = vpow.pop %v4646
      %v4648 = vmul.f32 %v4582, 1.442695
      %v4649 = vpow.pop %v4648
      %v4650 = vmul.f32 %v4583, 1.442695
      %v4651 = vpow.pop %v4650
      %v4652 = vmul.f32 %v4584, 1.442695
      %v4653 = vpow.pop %v4652
      %v4654 = vmul.f32 %v4585, 1.442695
      %v4655 = vpow.pop %v4654
      %v4656 = vmul.f32 %v4586, 1.442695
      %v4657 = vpow.pop %v4656
      %v4658 = vmul.f32 %v4587, 1.442695
      %v4659 = vpow.pop %v4658
      %v4660 = vadd.f32 %v4589, 1.0
      %v4661 = vadd.f32 %v4591, 1.0
      %v4662 = vadd.f32 %v4593, 1.0
      %v4663 = vadd.f32 %v4595, 1.0
      %v4664 = vadd.f32 %v4597, 1.0
      %v4665 = vadd.f32 %v4599, 1.0
      %v4666 = vadd.f32 %v4601, 1.0
      %v4667 = vadd.f32 %v4603, 1.0
      %v4668 = vadd.f32 %v4605, 1.0
      %v4669 = vadd.f32 %v4607, 1.0
      %v4670 = vadd.f32 %v4609, 1.0
      %v4671 = vadd.f32 %v4611, 1.0
      %v4672 = vadd.f32 %v4613, 1.0
      %v4673 = vadd.f32 %v4615, 1.0
      %v4674 = vadd.f32 %v4617, 1.0
      %v4675 = vadd.f32 %v4619, 1.0
      %v4676 = vadd.f32 %v4621, 1.0
      %v4677 = vadd.f32 %v4623, 1.0
      %v4678 = vadd.f32 %v4625, 1.0
      %v4679 = vadd.f32 %v4627, 1.0
      %v4680 = vadd.f32 %v4629, 1.0
      %v4681 = vadd.f32 %v4631, 1.0
      %v4682 = vadd.f32 %v4633, 1.0
      %v4683 = vadd.f32 %v4635, 1.0
      %v4684 = vadd.f32 %v4637, 1.0
      %v4685 = vadd.f32 %v4639, 1.0
      %v4686 = vadd.f32 %v4641, 1.0
      %v4687 = vadd.f32 %v4643, 1.0
      %v4688 = vadd.f32 %v4645, 1.0
      %v4689 = vadd.f32 %v4647, 1.0
      %v4690 = vadd.f32 %v4649, 1.0
      %v4691 = vadd.f32 %v4651, 1.0
      %v4692 = vadd.f32 %v4653, 1.0
      %v4693 = vadd.f32 %v4655, 1.0
      %v4694 = vadd.f32 %v4657, 1.0
      %v4695 = vadd.f32 %v4659, 1.0
      %v4696 = vrcp.pop %v4660
      %v4697 = vmul.f32 1.0, %v4696
      %v4698 = vrcp.pop %v4661
      %v4699 = vmul.f32 1.0, %v4698
      %v4700 = vrcp.pop %v4662
      %v4701 = vmul.f32 1.0, %v4700
      %v4702 = vrcp.pop %v4663
      %v4703 = vmul.f32 1.0, %v4702
      %v4704 = vrcp.pop %v4664
      %v4705 = vmul.f32 1.0, %v4704
      %v4706 = vrcp.pop %v4665
      %v4707 = vmul.f32 1.0, %v4706
      %v4708 = vrcp.pop %v4666
      %v4709 = vmul.f32 1.0, %v4708
      %v4710 = vrcp.pop %v4667
      %v4711 = vmul.f32 1.0, %v4710
      %v4712 = vrcp.pop %v4668
      %v4713 = vmul.f32 1.0, %v4712
      %v4714 = vrcp.pop %v4669
      %v4715 = vmul.f32 1.0, %v4714
      %v4716 = vrcp.pop %v4670
      %v4717 = vmul.f32 1.0, %v4716
      %v4718 = vrcp.pop %v4671
      %v4719 = vmul.f32 1.0, %v4718
      %v4720 = vrcp.pop %v4672
      %v4721 = vmul.f32 1.0, %v4720
      %v4722 = vrcp.pop %v4673
      %v4723 = vmul.f32 1.0, %v4722
      %v4724 = vrcp.pop %v4674
      %v4725 = vmul.f32 1.0, %v4724
      %v4726 = vrcp.pop %v4675
      %v4727 = vmul.f32 1.0, %v4726
      %v4728 = vrcp.pop %v4676
      %v4729 = vmul.f32 1.0, %v4728
      %v4730 = vrcp.pop %v4677
      %v4731 = vmul.f32 1.0, %v4730
      %v4732 = vrcp.pop %v4678
      %v4733 = vmul.f32 1.0, %v4732
      %v4734 = vrcp.pop %v4679
      %v4735 = vmul.f32 1.0, %v4734
      %v4736 = vrcp.pop %v4680
      %v4737 = vmul.f32 1.0, %v4736
      %v4738 = vrcp.pop %v4681
      %v4739 = vmul.f32 1.0, %v4738
      %v4740 = vrcp.pop %v4682
      %v4741 = vmul.f32 1.0, %v4740
      %v4742 = vrcp.pop %v4683
      %v4743 = vmul.f32 1.0, %v4742
      %v4744 = vrcp.pop %v4684
      %v4745 = vmul.f32 1.0, %v4744
      %v4746 = vrcp.pop %v4685
      %v4747 = vmul.f32 1.0, %v4746
      %v4748 = vrcp.pop %v4686
      %v4749 = vmul.f32 1.0, %v4748
      %v4750 = vrcp.pop %v4687
      %v4751 = vmul.f32 1.0, %v4750
      %v4752 = vrcp.pop %v4688
      %v4753 = vmul.f32 1.0, %v4752
      %v4754 = vrcp.pop %v4689
      %v4755 = vmul.f32 1.0, %v4754
      %v4756 = vrcp.pop %v4690
      %v4757 = vmul.f32 1.0, %v4756
      %v4758 = vrcp.pop %v4691
      %v4759 = vmul.f32 1.0, %v4758
      %v4760 = vrcp.pop %v4692
      %v4761 = vmul.f32 1.0, %v4760
      %v4762 = vrcp.pop %v4693
      %v4763 = vmul.f32 1.0, %v4762
      %v4764 = vrcp.pop %v4694
      %v4765 = vmul.f32 1.0, %v4764
      %v4766 = vrcp.pop %v4695
      %v4767 = vmul.f32 1.0, %v4766
      %v4768 = vmul.f32 %v4697, %v484
      %v4769 = vmul.f32 %v4699, %v485
      %v4770 = vmul.f32 %v4701, %v486
      %v4771 = vmul.f32 %v4703, %v487
      %v4772 = vmul.f32 %v4705, %v488
      %v4773 = vmul.f32 %v4707, %v489
      %v4774 = vmul.f32 %v4709, %v490
      %v4775 = vmul.f32 %v4711, %v491
      %v4776 = vmul.f32 %v4713, %v492
      %v4777 = vmul.f32 %v4715, %v493
      %v4778 = vmul.f32 %v4717, %v494
      %v4779 = vmul.f32 %v4719, %v495
      %v4780 = vmul.f32 %v4721, %v496
      %v4781 = vmul.f32 %v4723, %v497
      %v4782 = vmul.f32 %v4725, %v498
      %v4783 = vmul.f32 %v4727, %v499
      %v4784 = vmul.f32 %v4729, %v500
      %v4785 = vmul.f32 %v4731, %v501
      %v4786 = vmul.f32 %v4733, %v502
      %v4787 = vmul.f32 %v4735, %v503
      %v4788 = vmul.f32 %v4737, %v504
      %v4789 = vmul.f32 %v4739, %v505
      %v4790 = vmul.f32 %v4741, %v506
      %v4791 = vmul.f32 %v4743, %v507
      %v4792 = vmul.f32 %v4745, %v508
      %v4793 = vmul.f32 %v4747, %v509
      %v4794 = vmul.f32 %v4749, %v510
      %v4795 = vmul.f32 %v4751, %v511
      %v4796 = vmul.f32 %v4753, %v512
      %v4797 = vmul.f32 %v4755, %v513
      %v4798 = vmul.f32 %v4757, %v514
      %v4799 = vmul.f32 %v4759, %v515
      %v4800 = vmul.f32 %v4761, %v516
      %v4801 = vmul.f32 %v4763, %v517
      %v4802 = vmul.f32 %v4765, %v518
      %v4803 = vmul.f32 %v4767, %v519
      %v4804 = vpack.c.bf16 %v4769, %v4768
      %v4805 = vpack.c.bf16 %v4771, %v4770
      %v4806 = vpack.c.bf16 %v4773, %v4772
      %v4807 = vpack.c.bf16 %v4775, %v4774
      %v4808 = vpack.c.bf16 %v4777, %v4776
      %v4809 = vpack.c.bf16 %v4779, %v4778
      %v4810 = vpack.c.bf16 %v4781, %v4780
      %v4811 = vpack.c.bf16 %v4783, %v4782
      %v4812 = vpack.c.bf16 %v4785, %v4784
      %v4813 = vpack.c.bf16 %v4787, %v4786
      %v4814 = vpack.c.bf16 %v4789, %v4788
      %v4815 = vpack.c.bf16 %v4791, %v4790
      %v4816 = vpack.c.bf16 %v4793, %v4792
      %v4817 = vpack.c.bf16 %v4795, %v4794
      %v4818 = vpack.c.bf16 %v4797, %v4796
      %v4819 = vpack.c.bf16 %v4799, %v4798
      %v4820 = vpack.c.bf16 %v4801, %v4800
      %v4821 = vpack.c.bf16 %v4803, %v4802
      %v4840 = vunpack.c.l.b16 %v4804
      %v4841 = vunpack.c.h.b16 %v4804
      %v4842 = vunpack.c.l.b16 %v4805
      %v4843 = vunpack.c.h.b16 %v4805
      %v4844 = vunpack.c.l.b16 %v4806
      %v4845 = vunpack.c.h.b16 %v4806
      %v4846 = vunpack.c.l.b16 %v4807
      %v4847 = vunpack.c.h.b16 %v4807
      %v4848 = vunpack.c.l.b16 %v4808
      %v4849 = vunpack.c.h.b16 %v4808
      %v4850 = vunpack.c.l.b16 %v4809
      %v4851 = vunpack.c.h.b16 %v4809
      %v4852 = vunpack.c.l.b16 %v4810
      %v4853 = vunpack.c.h.b16 %v4810
      %v4854 = vunpack.c.l.b16 %v4811
      %v4855 = vunpack.c.h.b16 %v4811
      %v4856 = vunpack.c.l.b16 %v4812
      %v4857 = vunpack.c.h.b16 %v4812
      %v4858 = vunpack.c.l.b16 %v4813
      %v4859 = vunpack.c.h.b16 %v4813
      %v4860 = vunpack.c.l.b16 %v4814
      %v4861 = vunpack.c.h.b16 %v4814
      %v4862 = vunpack.c.l.b16 %v4815
      %v4863 = vunpack.c.h.b16 %v4815
      %v4864 = vunpack.c.l.b16 %v4816
      %v4865 = vunpack.c.h.b16 %v4816
      %v4866 = vunpack.c.l.b16 %v4817
      %v4867 = vunpack.c.h.b16 %v4817
      %v4868 = vunpack.c.l.b16 %v4818
      %v4869 = vunpack.c.h.b16 %v4818
      %v4870 = vunpack.c.l.b16 %v4819
      %v4871 = vunpack.c.h.b16 %v4819
      %v4872 = vunpack.c.l.b16 %v4820
      %v4873 = vunpack.c.h.b16 %v4820
      %v4874 = vunpack.c.l.b16 %v4821
      %v4875 = vunpack.c.h.b16 %v4821
      %v4876 = vpack.c.b16 %v4840, %v4840
      %v4877 = vpack.c.b16 %v4841, %v4841
      %v4878 = vpack.c.b16 %v4842, %v4842
      %v4879 = vpack.c.b16 %v4843, %v4843
      %v4880 = vpack.c.b16 %v4844, %v4844
      %v4881 = vpack.c.b16 %v4845, %v4845
      %v4882 = vpack.c.b16 %v4846, %v4846
      %v4883 = vpack.c.b16 %v4847, %v4847
      %v4884 = vpack.c.b16 %v4848, %v4848
      %v4885 = vpack.c.b16 %v4849, %v4849
      %v4886 = vpack.c.b16 %v4850, %v4850
      %v4887 = vpack.c.b16 %v4851, %v4851
      %v4888 = vpack.c.b16 %v4852, %v4852
      %v4889 = vpack.c.b16 %v4853, %v4853
      %v4890 = vpack.c.b16 %v4854, %v4854
      %v4891 = vpack.c.b16 %v4855, %v4855
      %v4892 = vpack.c.b16 %v4856, %v4856
      %v4893 = vpack.c.b16 %v4857, %v4857
      %v4894 = vpack.c.b16 %v4858, %v4858
      %v4895 = vpack.c.b16 %v4859, %v4859
      %v4896 = vpack.c.b16 %v4860, %v4860
      %v4897 = vpack.c.b16 %v4861, %v4861
      %v4898 = vpack.c.b16 %v4862, %v4862
      %v4899 = vpack.c.b16 %v4863, %v4863
      %v4900 = vpack.c.b16 %v4864, %v4864
      %v4901 = vpack.c.b16 %v4865, %v4865
      %v4902 = vpack.c.b16 %v4866, %v4866
      %v4903 = vpack.c.b16 %v4867, %v4867
      %v4904 = vpack.c.b16 %v4868, %v4868
      %v4905 = vpack.c.b16 %v4869, %v4869
      %v4906 = vpack.c.b16 %v4870, %v4870
      %v4907 = vpack.c.b16 %v4871, %v4871
      %v4908 = vpack.c.b16 %v4872, %v4872
      %v4909 = vpack.c.b16 %v4873, %v4873
      %v4910 = vpack.c.b16 %v4874, %v4874
      %v4911 = vpack.c.b16 %v4875, %v4875
      %vm4948 = vcmask 257024
      %4949 = vst.msk [vmem:[#allocation2 + $0x10] sm:$0xf] %vm4948, %v4876
      %4950 = vst.msk [vmem:[#allocation2 + $0x14] sm:$0xf] %vm4948, %v4877
      %4951 = vst.msk [vmem:[#allocation2 + $0x18] sm:$0xf] %vm4948, %v4878
      %4952 = vst.msk [vmem:[#allocation2 + $0x1c] sm:$0xf] %vm4948, %v4879
      %4953 = vst.msk [vmem:[#allocation2 + $0x20] sm:$0xf] %vm4948, %v4880
      %4954 = vst.msk [vmem:[#allocation2 + $0x24] sm:$0xf] %vm4948, %v4881
      %4955 = vst.msk [vmem:[#allocation2 + $0x28] sm:$0xf] %vm4948, %v4882
      %4956 = vst.msk [vmem:[#allocation2 + $0x2c] sm:$0xf] %vm4948, %v4883
      %4957 = vst.msk [vmem:[#allocation2 + $0x30] sm:$0xf] %vm4948, %v4884
      %4958 = vst.msk [vmem:[#allocation2 + $0x34] sm:$0xf] %vm4948, %v4885
      %4959 = vst.msk [vmem:[#allocation2 + $0x38] sm:$0xf] %vm4948, %v4886
      %4960 = vst.msk [vmem:[#allocation2 + $0x3c] sm:$0xf] %vm4948, %v4887
      %4961 = vst.msk [vmem:[#allocation2 + $0x40] sm:$0xf] %vm4948, %v4888
      %4962 = vst.msk [vmem:[#allocation2 + $0x44] sm:$0xf] %vm4948, %v4889
      %4963 = vst.msk [vmem:[#allocation2 + $0x48] sm:$0xf] %vm4948, %v4890
      %4964 = vst.msk [vmem:[#allocation2 + $0x4c] sm:$0xf] %vm4948, %v4891
      %4965 = vst.msk [vmem:[#allocation2 + $0x50] sm:$0xf] %vm4948, %v4892
      %4966 = vst.msk [vmem:[#allocation2 + $0x54] sm:$0xf] %vm4948, %v4893
      %4967 = vst.msk [vmem:[#allocation2 + $0x58] sm:$0xf] %vm4948, %v4894
      %4968 = vst.msk [vmem:[#allocation2 + $0x5c] sm:$0xf] %vm4948, %v4895
      %4969 = vst.msk [vmem:[#allocation2 + $0x60] sm:$0xf] %vm4948, %v4896
      %4970 = vst.msk [vmem:[#allocation2 + $0x64] sm:$0xf] %vm4948, %v4897
      %4971 = vst.msk [vmem:[#allocation2 + $0x68] sm:$0xf] %vm4948, %v4898
      %4972 = vst.msk [vmem:[#allocation2 + $0x6c] sm:$0xf] %vm4948, %v4899
      %4973 = vst.msk [vmem:[#allocation2 + $0x70] sm:$0xf] %vm4948, %v4900
      %4974 = vst.msk [vmem:[#allocation2 + $0x74] sm:$0xf] %vm4948, %v4901
      %4975 = vst.msk [vmem:[#allocation2 + $0x78] sm:$0xf] %vm4948, %v4902
      %4976 = vst.msk [vmem:[#allocation2 + $0x7c] sm:$0xf] %vm4948, %v4903
      %4977 = vst.msk [vmem:[#allocation2 + $0x80] sm:$0xf] %vm4948, %v4904
      %4978 = vst.msk [vmem:[#allocation2 + $0x84] sm:$0xf] %vm4948, %v4905
      %4979 = vst.msk [vmem:[#allocation2 + $0x88] sm:$0xf] %vm4948, %v4906
      %4980 = vst.msk [vmem:[#allocation2 + $0x8c] sm:$0xf] %vm4948, %v4907
      %4981 = vst.msk [vmem:[#allocation2 + $0x90] sm:$0xf] %vm4948, %v4908
      %4982 = vst.msk [vmem:[#allocation2 + $0x94] sm:$0xf] %vm4948, %v4909
      %4983 = vst.msk [vmem:[#allocation2 + $0x98] sm:$0xf] %vm4948, %v4910
      %4984 = vst.msk [vmem:[#allocation2 + $0x9c] sm:$0xf] %vm4948, %v4911
      %v4985 = vld [vmem:[%s293] sm:$0xff]
      %v4986 = vld [vmem:[%s293 + $0x8] sm:$0xff]
      %v4987 = vld [vmem:[%s293 + $0x10] sm:$0xff]
      %v4988 = vld [vmem:[%s293 + $0x18] sm:$0xff]
      %v4989 = vld [vmem:[%s293 + $0x20] sm:$0xff]
      %v4990 = vld [vmem:[%s293 + $0x28] sm:$0xff]
      %v4991 = vld [vmem:[%s293 + $0x30] sm:$0xff]
      %v4992 = vld [vmem:[%s293 + $0x38] sm:$0xff]
      %v4993 = vld [vmem:[%s293 + $0x40] sm:$0xff]
      %v4994 = vld [vmem:[%s293 + $0x48] sm:$0xff]
      %v4995 = vld [vmem:[%s293 + $0x50] sm:$0xff]
      %v4996 = vld [vmem:[%s293 + $0x58] sm:$0xff]
      %v4997 = vld [vmem:[%s293 + $0x60] sm:$0xff]
      %v4998 = vld [vmem:[%s293 + $0x68] sm:$0xff]
      %v4999 = vld [vmem:[%s293 + $0x70] sm:$0xff]
      %v5000 = vld [vmem:[%s293 + $0x78] sm:$0xff]
      %v5001 = vld [vmem:[%s293 + $0x80] sm:$0xff]
      %v5002 = vld [vmem:[%s293 + $0x88] sm:$0xff]
      %v5003 = vld [vmem:[%s293 + $0x90] sm:$0xff]
      %v5004 = vld [vmem:[%s293 + $0x98] sm:$0xff]
      %v5005 = vld [vmem:[%s293 + $0xa0] sm:$0xff]
      %v5006 = vld [vmem:[%s293 + $0xa8] sm:$0xff]
      %v5007 = vld [vmem:[%s293 + $0xb0] sm:$0xff]
      %v5008 = vld [vmem:[%s293 + $0xb8] sm:$0xff]
      %v5009 = vld [vmem:[%s293 + $0xc0] sm:$0xff]
      %v5010 = vld [vmem:[%s293 + $0xc8] sm:$0xff]
      %v5011 = vld [vmem:[%s293 + $0xd0] sm:$0xff]
      %v5012 = vld [vmem:[%s293 + $0xd8] sm:$0xff]
      %v5013 = vld [vmem:[%s293 + $0xe0] sm:$0xff]
      %v5014 = vld [vmem:[%s293 + $0xe8] sm:$0xff]
      %v5015 = vld [vmem:[%s293 + $0xf0] sm:$0xff]
      %v5016 = vld [vmem:[%s293 + $0xf8] sm:$0xff]
      %v5017 = vld [vmem:[%s293 + $0x100] sm:$0xff]
      %v5018 = vld [vmem:[%s293 + $0x108] sm:$0xff]
      %v5019 = vld [vmem:[%s293 + $0x110] sm:$0xff]
      %v5020 = vld [vmem:[%s293 + $0x118] sm:$0xff]
      %v5021 = vld [vmem:[#allocation2 + $0x4] sm:$0xc]
      %v5022 = vld [vmem:[#allocation2 + $0x8] sm:$0xf]
      %v5023 = vld [vmem:[#allocation2 + $0xc] sm:$0xf]
      %v5024 = vld [vmem:[#allocation2 + $0x10] sm:$0xf]
      %v5025 = vld [vmem:[#allocation2 + $0x14] sm:$0xf]
      %v5026 = vld [vmem:[#allocation2 + $0x18] sm:$0xf]
      %v5027 = vld [vmem:[#allocation2 + $0x1c] sm:$0xf]
      %v5028 = vld [vmem:[#allocation2 + $0x20] sm:$0xf]
      %v5029 = vld [vmem:[#allocation2 + $0x24] sm:$0xf]
      %v5030 = vld [vmem:[#allocation2 + $0x28] sm:$0xf]
      %v5031 = vld [vmem:[#allocation2 + $0x2c] sm:$0xf]
      %v5032 = vld [vmem:[#allocation2 + $0x30] sm:$0xf]
      %v5033 = vld [vmem:[#allocation2 + $0x34] sm:$0xf]
      %v5034 = vld [vmem:[#allocation2 + $0x38] sm:$0xf]
      %v5035 = vld [vmem:[#allocation2 + $0x3c] sm:$0xf]
      %v5036 = vld [vmem:[#allocation2 + $0x40] sm:$0xf]
      %v5037 = vld [vmem:[#allocation2 + $0x44] sm:$0xf]
      %v5038 = vld [vmem:[#allocation2 + $0x48] sm:$0xf]
      %v5039 = vld [vmem:[#allocation2 + $0x4c] sm:$0xf]
      %v5040 = vld [vmem:[#allocation2 + $0x50] sm:$0xf]
      %v5041 = vld [vmem:[#allocation2 + $0x54] sm:$0xf]
      %v5042 = vld [vmem:[#allocation2 + $0x58] sm:$0xf]
      %v5043 = vld [vmem:[#allocation2 + $0x5c] sm:$0xf]
      %v5044 = vld [vmem:[#allocation2 + $0x60] sm:$0xf]
      %v5045 = vld [vmem:[#allocation2 + $0x64] sm:$0xf]
      %v5046 = vld [vmem:[#allocation2 + $0x68] sm:$0xf]
      %v5047 = vld [vmem:[#allocation2 + $0x6c] sm:$0xf]
      %v5048 = vld [vmem:[#allocation2 + $0x70] sm:$0xf]
      %v5049 = vld [vmem:[#allocation2 + $0x74] sm:$0xf]
      %v5050 = vld [vmem:[#allocation2 + $0x78] sm:$0xf]
      %v5051 = vld [vmem:[#allocation2 + $0x7c] sm:$0xf]
      %v5052 = vld [vmem:[#allocation2 + $0x80] sm:$0xf]
      %v5053 = vld [vmem:[#allocation2 + $0x84] sm:$0xf]
      %v5054 = vld [vmem:[#allocation2 + $0x88] sm:$0xf]
      %v5055 = vld [vmem:[#allocation2 + $0x8c] sm:$0xf]
      %v5056 = vld [vmem:[#allocation2 + $0x90] sm:$0xf]
      %v5057 = vld [vmem:[#allocation2 + $0x94] sm:$0x7]
      %v5058 = vld [vmem:[%s3] sm:$0xf]
      %v5059 = vld [vmem:[%s3 + $0x4] sm:$0xf]
      %v5060 = vld [vmem:[%s3 + $0x8] sm:$0xf]
      %v5061 = vld [vmem:[%s3 + $0xc] sm:$0xf]
      %v5099 = vunpack.c.l.b16 %v5021
      %v5100 = vunpack.c.l.b16 %v5022
      %v5101 = vunpack.c.l.b16 %v5023
      %v5102 = vunpack.c.l.b16 %v5024
      %v5103 = vunpack.c.l.b16 %v5025
      %v5104 = vunpack.c.l.b16 %v5026
      %v5105 = vunpack.c.l.b16 %v5027
      %v5106 = vunpack.c.l.b16 %v5028
      %v5107 = vunpack.c.l.b16 %v5029
      %v5108 = vunpack.c.l.b16 %v5030
      %v5109 = vunpack.c.l.b16 %v5031
      %v5110 = vunpack.c.l.b16 %v5032
      %v5111 = vunpack.c.l.b16 %v5033
      %v5112 = vunpack.c.l.b16 %v5034
      %v5113 = vunpack.c.l.b16 %v5035
      %v5114 = vunpack.c.l.b16 %v5036
      %v5115 = vunpack.c.l.b16 %v5037
      %v5116 = vunpack.c.l.b16 %v5038
      %v5117 = vunpack.c.l.b16 %v5039
      %v5118 = vunpack.c.l.b16 %v5040
      %v5119 = vunpack.c.l.b16 %v5041
      %v5120 = vunpack.c.l.b16 %v5042
      %v5121 = vunpack.c.l.b16 %v5043
      %v5122 = vunpack.c.l.b16 %v5044
      %v5123 = vunpack.c.l.b16 %v5045
      %v5124 = vunpack.c.l.b16 %v5046
      %v5125 = vunpack.c.l.b16 %v5047
      %v5126 = vunpack.c.l.b16 %v5048
      %v5127 = vunpack.c.l.b16 %v5049
      %v5128 = vunpack.c.l.b16 %v5050
      %v5129 = vunpack.c.l.b16 %v5051
      %v5130 = vunpack.c.l.b16 %v5052
      %v5131 = vunpack.c.l.b16 %v5053
      %v5132 = vunpack.c.l.b16 %v5054
      %v5133 = vunpack.c.l.b16 %v5055
      %v5134 = vunpack.c.l.b16 %v5056
      %v5135 = vunpack.c.l.b16 %v5057
      %v5136 = vpack.c.b16 %v5100, %v5099
      %v5137 = vpack.c.b16 %v5102, %v5101
      %v5138 = vpack.c.b16 %v5104, %v5103
      %v5139 = vpack.c.b16 %v5106, %v5105
      %v5140 = vpack.c.b16 %v5108, %v5107
      %v5141 = vpack.c.b16 %v5110, %v5109
      %v5142 = vpack.c.b16 %v5112, %v5111
      %v5143 = vpack.c.b16 %v5114, %v5113
      %v5144 = vpack.c.b16 %v5116, %v5115
      %v5145 = vpack.c.b16 %v5118, %v5117
      %v5146 = vpack.c.b16 %v5120, %v5119
      %v5147 = vpack.c.b16 %v5122, %v5121
      %v5148 = vpack.c.b16 %v5124, %v5123
      %v5149 = vpack.c.b16 %v5126, %v5125
      %v5150 = vpack.c.b16 %v5128, %v5127
      %v5151 = vpack.c.b16 %v5130, %v5129
      %v5152 = vpack.c.b16 %v5132, %v5131
      %v5153 = vpack.c.b16 %v5134, %v5133
      %v5154 = vpack.c.b16 %v5135, %v5135
      %v5156 = vshrl.u32 %v5136, 16
      %v5158 = vrot.slane %v5156, 2
      %v5159 = vshll.u32 %v5136, 16
      %v5161 = vrot.slane %v5159, 3
      %v5162 = vor.u32 %v5158, %v5161
      %v5164 = vshrl.u32 %v5137, 16
      %v5166 = vrot.slane %v5164, 2
      %v5167 = vshll.u32 %v5137, 16
      %v5169 = vrot.slane %v5167, 3
      %v5170 = vor.u32 %v5166, %v5169
      %v5171 = vsel %vm690, %v5162, %v5170
      %v5173 = vshrl.u32 %v5138, 16
      %v5175 = vrot.slane %v5173, 2
      %v5176 = vshll.u32 %v5138, 16
      %v5178 = vrot.slane %v5176, 3
      %v5179 = vor.u32 %v5175, %v5178
      %v5180 = vsel %vm690, %v5170, %v5179
      %v5182 = vshrl.u32 %v5139, 16
      %v5184 = vrot.slane %v5182, 2
      %v5185 = vshll.u32 %v5139, 16
      %v5187 = vrot.slane %v5185, 3
      %v5188 = vor.u32 %v5184, %v5187
      %v5189 = vsel %vm690, %v5179, %v5188
      %v5191 = vshrl.u32 %v5140, 16
      %v5193 = vrot.slane %v5191, 2
      %v5194 = vshll.u32 %v5140, 16
      %v5196 = vrot.slane %v5194, 3
      %v5197 = vor.u32 %v5193, %v5196
      %v5198 = vsel %vm690, %v5188, %v5197
      %v5200 = vshrl.u32 %v5141, 16
      %v5202 = vrot.slane %v5200, 2
      %v5203 = vshll.u32 %v5141, 16
      %v5205 = vrot.slane %v5203, 3
      %v5206 = vor.u32 %v5202, %v5205
      %v5207 = vsel %vm690, %v5197, %v5206
      %v5209 = vshrl.u32 %v5142, 16
      %v5211 = vrot.slane %v5209, 2
      %v5212 = vshll.u32 %v5142, 16
      %v5214 = vrot.slane %v5212, 3
      %v5215 = vor.u32 %v5211, %v5214
      %v5216 = vsel %vm690, %v5206, %v5215
      %v5218 = vshrl.u32 %v5143, 16
      %v5220 = vrot.slane %v5218, 2
      %v5221 = vshll.u32 %v5143, 16
      %v5223 = vrot.slane %v5221, 3
      %v5224 = vor.u32 %v5220, %v5223
      %v5225 = vsel %vm690, %v5215, %v5224
      %v5227 = vshrl.u32 %v5144, 16
      %v5229 = vrot.slane %v5227, 2
      %v5230 = vshll.u32 %v5144, 16
      %v5232 = vrot.slane %v5230, 3
      %v5233 = vor.u32 %v5229, %v5232
      %v5234 = vsel %vm690, %v5224, %v5233
      %v5236 = vshrl.u32 %v5145, 16
      %v5238 = vrot.slane %v5236, 2
      %v5239 = vshll.u32 %v5145, 16
      %v5241 = vrot.slane %v5239, 3
      %v5242 = vor.u32 %v5238, %v5241
      %v5243 = vsel %vm690, %v5233, %v5242
      %v5245 = vshrl.u32 %v5146, 16
      %v5247 = vrot.slane %v5245, 2
      %v5248 = vshll.u32 %v5146, 16
      %v5250 = vrot.slane %v5248, 3
      %v5251 = vor.u32 %v5247, %v5250
      %v5252 = vsel %vm690, %v5242, %v5251
      %v5254 = vshrl.u32 %v5147, 16
      %v5256 = vrot.slane %v5254, 2
      %v5257 = vshll.u32 %v5147, 16
      %v5259 = vrot.slane %v5257, 3
      %v5260 = vor.u32 %v5256, %v5259
      %v5261 = vsel %vm690, %v5251, %v5260
      %v5263 = vshrl.u32 %v5148, 16
      %v5265 = vrot.slane %v5263, 2
      %v5266 = vshll.u32 %v5148, 16
      %v5268 = vrot.slane %v5266, 3
      %v5269 = vor.u32 %v5265, %v5268
      %v5270 = vsel %vm690, %v5260, %v5269
      %v5272 = vshrl.u32 %v5149, 16
      %v5274 = vrot.slane %v5272, 2
      %v5275 = vshll.u32 %v5149, 16
      %v5277 = vrot.slane %v5275, 3
      %v5278 = vor.u32 %v5274, %v5277
      %v5279 = vsel %vm690, %v5269, %v5278
      %v5281 = vshrl.u32 %v5150, 16
      %v5283 = vrot.slane %v5281, 2
      %v5284 = vshll.u32 %v5150, 16
      %v5286 = vrot.slane %v5284, 3
      %v5287 = vor.u32 %v5283, %v5286
      %v5288 = vsel %vm690, %v5278, %v5287
      %v5290 = vshrl.u32 %v5151, 16
      %v5292 = vrot.slane %v5290, 2
      %v5293 = vshll.u32 %v5151, 16
      %v5295 = vrot.slane %v5293, 3
      %v5296 = vor.u32 %v5292, %v5295
      %v5297 = vsel %vm690, %v5287, %v5296
      %v5299 = vshrl.u32 %v5152, 16
      %v5301 = vrot.slane %v5299, 2
      %v5302 = vshll.u32 %v5152, 16
      %v5304 = vrot.slane %v5302, 3
      %v5305 = vor.u32 %v5301, %v5304
      %v5306 = vsel %vm690, %v5296, %v5305
      %v5308 = vshrl.u32 %v5153, 16
      %v5310 = vrot.slane %v5308, 2
      %v5311 = vshll.u32 %v5153, 16
      %v5313 = vrot.slane %v5311, 3
      %v5314 = vor.u32 %v5310, %v5313
      %v5315 = vsel %vm690, %v5305, %v5314
      %v5317 = vshrl.u32 %v5154, 16
      %v5319 = vrot.slane %v5317, 2
      %v5320 = vshll.u32 %v5154, 16
      %v5322 = vrot.slane %v5320, 3
      %v5323 = vor.u32 %v5319, %v5322
      %v5324 = vsel %vm690, %v5314, %v5323
      %v5329 = vunpack.c.l.b16 %v5058
      %v5330 = vunpack.c.l.b16 %v5059
      %v5331 = vunpack.c.l.b16 %v5060
      %v5332 = vunpack.c.l.b16 %v5061
      %v5333 = vpack.c.b16 %v5330, %v5329
      %v5334 = vpack.c.b16 %v5332, %v5331
      %v5338 = vsel %vm873, %v5171, 0
      %v5341 = vsel %vm873, %v5180, 0
      %v5344 = vsel %vm873, %v5189, 0
      %v5347 = vsel %vm873, %v5198, 0
      %v5350 = vsel %vm873, %v5207, 0
      %v5353 = vsel %vm873, %v5216, 0
      %v5356 = vsel %vm873, %v5225, 0
      %v5359 = vsel %vm873, %v5234, 0
      %v5362 = vsel %vm873, %v5243, 0
      %v5365 = vsel %vm873, %v5252, 0
      %v5368 = vsel %vm873, %v5261, 0
      %v5371 = vsel %vm873, %v5270, 0
      %v5374 = vsel %vm873, %v5279, 0
      %v5377 = vsel %vm873, %v5288, 0
      %v5380 = vsel %vm873, %v5297, 0
      %v5383 = vsel %vm873, %v5306, 0
      %v5386 = vsel %vm873, %v5315, 0
      %v5389 = vsel %vm873, %v5324, 0
      %5391 = vmatprep.subr.bf16.mxu0 0
      %5392 = vmatpush1.bf16.msra.mxu0 0
      %5393 = vmatprep.subr.bf16.mxu0 0
      %5394 = vmatpush1.bf16.msra.mxu0 0
      %5395 = vmatprep.subr.bf16.mxu0 0
      %5396 = vmatpush1.bf16.msra.mxu0 0
      %5397 = vmatprep.subr.bf16.mxu0 0
      %5398 = vmatpush1.bf16.msra.mxu0 0
      %5399 = vmatprep.subr.bf16.mxu0 0
      %5400 = vmatpush1.bf16.msra.mxu0 0
      %5401 = vmatprep.subr.bf16.mxu0 0
      %5402 = vmatpush1.bf16.msra.mxu0 0
      %5403 = vmatprep.subr.bf16.mxu0 0
      %5404 = vmatpush1.bf16.msra.mxu0 %v5334
      %5405 = vmatprep.subr.bf16.mxu0 0
      %5406 = vmatpush1.bf16.msra.mxu0 %v5333
      %5407 = vmatprep.subr.bf16.mxu0 0
      %5408 = vmatpush2.bf16.msra.mxu0 0
      %5409 = vmatprep.subr.bf16.mxu0 0
      %5410 = vmatpush2.bf16.msra.mxu0 0
      %5411 = vmatprep.subr.bf16.mxu0 0
      %5412 = vmatpush2.bf16.msra.mxu0 0
      %5413 = vmatprep.subr.bf16.mxu0 0
      %5414 = vmatpush2.bf16.msra.mxu0 0
      %5415 = vmatprep.subr.bf16.mxu0 0
      %5416 = vmatpush2.bf16.msra.mxu0 0
      %5417 = vmatprep.subr.bf16.mxu0 0
      %5418 = vmatpush2.bf16.msra.mxu0 0
      %5419 = vmatprep.subr.bf16.mxu0 0
      %5420 = vmatpush2.bf16.msra.mxu0 0
      %5421 = vmatprep.subr.bf16.mxu0 0
      %5422 = vmatpush2.bf16.msra.mxu0 0
      %5423 = vmatprep.mubr.bf16.mxu0 0
      %5424 = vmatmul.mubr.bf16.gmra.mxu0 %v5338
      %v5425 = vpop.f32.mrf.mxu0
      %v5426 = vadd.f32 0.0, %v5425
      %v5427 = vpop.f32.mrf.mxu0
      %v5428 = vpop.f32.mrf.mxu0
      %v5429 = vadd.f32 0.0, %v5428
      %v5430 = vpop.f32.mrf.mxu0
      %5431 = vmatprep.mubr.bf16.mxu0 0
      %5432 = vmatmul.mubr.bf16.gmra.mxu0 %v5341
      %v5433 = vpop.f32.mrf.mxu0
      %v5434 = vadd.f32 0.0, %v5433
      %v5435 = vpop.f32.mrf.mxu0
      %v5436 = vpop.f32.mrf.mxu0
      %v5437 = vadd.f32 0.0, %v5436
      %v5438 = vpop.f32.mrf.mxu0
      %5439 = vmatprep.mubr.bf16.mxu0 0
      %5440 = vmatmul.mubr.bf16.gmra.mxu0 %v5344
      %v5441 = vpop.f32.mrf.mxu0
      %v5442 = vadd.f32 0.0, %v5441
      %v5443 = vpop.f32.mrf.mxu0
      %v5444 = vpop.f32.mrf.mxu0
      %v5445 = vadd.f32 0.0, %v5444
      %v5446 = vpop.f32.mrf.mxu0
      %5447 = vmatprep.mubr.bf16.mxu0 0
      %5448 = vmatmul.mubr.bf16.gmra.mxu0 %v5347
      %v5449 = vpop.f32.mrf.mxu0
      %v5450 = vadd.f32 0.0, %v5449
      %v5451 = vpop.f32.mrf.mxu0
      %v5452 = vpop.f32.mrf.mxu0
      %v5453 = vadd.f32 0.0, %v5452
      %v5454 = vpop.f32.mrf.mxu0
      %5455 = vmatprep.mubr.bf16.mxu0 0
      %5456 = vmatmul.mubr.bf16.gmra.mxu0 %v5350
      %v5457 = vpop.f32.mrf.mxu0
      %v5458 = vadd.f32 0.0, %v5457
      %v5459 = vpop.f32.mrf.mxu0
      %v5460 = vpop.f32.mrf.mxu0
      %v5461 = vadd.f32 0.0, %v5460
      %v5462 = vpop.f32.mrf.mxu0
      %5463 = vmatprep.mubr.bf16.mxu0 0
      %5464 = vmatmul.mubr.bf16.gmra.mxu0 %v5353
      %v5465 = vpop.f32.mrf.mxu0
      %v5466 = vadd.f32 0.0, %v5465
      %v5467 = vpop.f32.mrf.mxu0
      %v5468 = vpop.f32.mrf.mxu0
      %v5469 = vadd.f32 0.0, %v5468
      %v5470 = vpop.f32.mrf.mxu0
      %5471 = vmatprep.mubr.bf16.mxu0 0
      %5472 = vmatmul.mubr.bf16.gmra.mxu0 %v5356
      %v5473 = vpop.f32.mrf.mxu0
      %v5474 = vadd.f32 0.0, %v5473
      %v5475 = vpop.f32.mrf.mxu0
      %v5476 = vpop.f32.mrf.mxu0
      %v5477 = vadd.f32 0.0, %v5476
      %v5478 = vpop.f32.mrf.mxu0
      %5479 = vmatprep.mubr.bf16.mxu0 0
      %5480 = vmatmul.mubr.bf16.gmra.mxu0 %v5359
      %v5481 = vpop.f32.mrf.mxu0
      %v5482 = vadd.f32 0.0, %v5481
      %v5483 = vpop.f32.mrf.mxu0
      %v5484 = vpop.f32.mrf.mxu0
      %v5485 = vadd.f32 0.0, %v5484
      %v5486 = vpop.f32.mrf.mxu0
      %5487 = vmatprep.mubr.bf16.mxu0 0
      %5488 = vmatmul.mubr.bf16.gmra.mxu0 %v5362
      %v5489 = vpop.f32.mrf.mxu0
      %v5490 = vadd.f32 0.0, %v5489
      %v5491 = vpop.f32.mrf.mxu0
      %v5492 = vpop.f32.mrf.mxu0
      %v5493 = vadd.f32 0.0, %v5492
      %v5494 = vpop.f32.mrf.mxu0
      %5495 = vmatprep.mubr.bf16.mxu0 0
      %5496 = vmatmul.mubr.bf16.gmra.mxu0 %v5365
      %v5497 = vpop.f32.mrf.mxu0
      %v5498 = vadd.f32 0.0, %v5497
      %v5499 = vpop.f32.mrf.mxu0
      %v5500 = vpop.f32.mrf.mxu0
      %v5501 = vadd.f32 0.0, %v5500
      %v5502 = vpop.f32.mrf.mxu0
      %5503 = vmatprep.mubr.bf16.mxu0 0
      %5504 = vmatmul.mubr.bf16.gmra.mxu0 %v5368
      %v5505 = vpop.f32.mrf.mxu0
      %v5506 = vadd.f32 0.0, %v5505
      %v5507 = vpop.f32.mrf.mxu0
      %v5508 = vpop.f32.mrf.mxu0
      %v5509 = vadd.f32 0.0, %v5508
      %v5510 = vpop.f32.mrf.mxu0
      %5511 = vmatprep.mubr.bf16.mxu0 0
      %5512 = vmatmul.mubr.bf16.gmra.mxu0 %v5371
      %v5513 = vpop.f32.mrf.mxu0
      %v5514 = vadd.f32 0.0, %v5513
      %v5515 = vpop.f32.mrf.mxu0
      %v5516 = vpop.f32.mrf.mxu0
      %v5517 = vadd.f32 0.0, %v5516
      %v5518 = vpop.f32.mrf.mxu0
      %5519 = vmatprep.mubr.bf16.mxu0 0
      %5520 = vmatmul.mubr.bf16.gmra.mxu0 %v5374
      %v5521 = vpop.f32.mrf.mxu0
      %v5522 = vadd.f32 0.0, %v5521
      %v5523 = vpop.f32.mrf.mxu0
      %v5524 = vpop.f32.mrf.mxu0
      %v5525 = vadd.f32 0.0, %v5524
      %v5526 = vpop.f32.mrf.mxu0
      %5527 = vmatprep.mubr.bf16.mxu0 0
      %5528 = vmatmul.mubr.bf16.gmra.mxu0 %v5377
      %v5529 = vpop.f32.mrf.mxu0
      %v5530 = vadd.f32 0.0, %v5529
      %v5531 = vpop.f32.mrf.mxu0
      %v5532 = vpop.f32.mrf.mxu0
      %v5533 = vadd.f32 0.0, %v5532
      %v5534 = vpop.f32.mrf.mxu0
      %5535 = vmatprep.mubr.bf16.mxu0 0
      %5536 = vmatmul.mubr.bf16.gmra.mxu0 %v5380
      %v5537 = vpop.f32.mrf.mxu0
      %v5538 = vadd.f32 0.0, %v5537
      %v5539 = vpop.f32.mrf.mxu0
      %v5540 = vpop.f32.mrf.mxu0
      %v5541 = vadd.f32 0.0, %v5540
      %v5542 = vpop.f32.mrf.mxu0
      %5543 = vmatprep.mubr.bf16.mxu0 0
      %5544 = vmatmul.mubr.bf16.gmra.mxu0 %v5383
      %v5545 = vpop.f32.mrf.mxu0
      %v5546 = vadd.f32 0.0, %v5545
      %v5547 = vpop.f32.mrf.mxu0
      %v5548 = vpop.f32.mrf.mxu0
      %v5549 = vadd.f32 0.0, %v5548
      %v5550 = vpop.f32.mrf.mxu0
      %5551 = vmatprep.mubr.bf16.mxu0 0
      %5552 = vmatmul.mubr.bf16.gmra.mxu0 %v5386
      %v5553 = vpop.f32.mrf.mxu0
      %v5554 = vadd.f32 0.0, %v5553
      %v5555 = vpop.f32.mrf.mxu0
      %v5556 = vpop.f32.mrf.mxu0
      %v5557 = vadd.f32 0.0, %v5556
      %v5558 = vpop.f32.mrf.mxu0
      %5559 = vmatprep.mubr.bf16.mxu0 0
      %5560 = vmatmul.mubr.bf16.gmra.mxu0 %v5389
      %v5561 = vpop.f32.mrf.mxu0
      %v5562 = vadd.f32 0.0, %v5561
      %v5563 = vpop.f32.mrf.mxu0
      %v5564 = vpop.f32.mrf.mxu0
      %v5565 = vadd.f32 0.0, %v5564
      %v5566 = vpop.f32.mrf.mxu0
      %5567 = vdwg.mxu0
      %v5568 = vadd.f32 %v4985, %v5426
      %v5569 = vadd.f32 %v4986, %v5429
      %v5570 = vadd.f32 %v4987, %v5434
      %v5571 = vadd.f32 %v4988, %v5437
      %v5572 = vadd.f32 %v4989, %v5442
      %v5573 = vadd.f32 %v4990, %v5445
      %v5574 = vadd.f32 %v4991, %v5450
      %v5575 = vadd.f32 %v4992, %v5453
      %v5576 = vadd.f32 %v4993, %v5458
      %v5577 = vadd.f32 %v4994, %v5461
      %v5578 = vadd.f32 %v4995, %v5466
      %v5579 = vadd.f32 %v4996, %v5469
      %v5580 = vadd.f32 %v4997, %v5474
      %v5581 = vadd.f32 %v4998, %v5477
      %v5582 = vadd.f32 %v4999, %v5482
      %v5583 = vadd.f32 %v5000, %v5485
      %v5584 = vadd.f32 %v5001, %v5490
      %v5585 = vadd.f32 %v5002, %v5493
      %v5586 = vadd.f32 %v5003, %v5498
      %v5587 = vadd.f32 %v5004, %v5501
      %v5588 = vadd.f32 %v5005, %v5506
      %v5589 = vadd.f32 %v5006, %v5509
      %v5590 = vadd.f32 %v5007, %v5514
      %v5591 = vadd.f32 %v5008, %v5517
      %v5592 = vadd.f32 %v5009, %v5522
      %v5593 = vadd.f32 %v5010, %v5525
      %v5594 = vadd.f32 %v5011, %v5530
      %v5595 = vadd.f32 %v5012, %v5533
      %v5596 = vadd.f32 %v5013, %v5538
      %v5597 = vadd.f32 %v5014, %v5541
      %v5598 = vadd.f32 %v5015, %v5546
      %v5599 = vadd.f32 %v5016, %v5549
      %v5600 = vadd.f32 %v5017, %v5554
      %v5601 = vadd.f32 %v5018, %v5557
      %v5602 = vadd.f32 %v5019, %v5562
      %v5603 = vadd.f32 %v5020, %v5565
      %v5604 = vld [vmem:[#allocation2 + $0x4] sm:$0x8]
      %s5605 = scalar_lea.vmem %s3, 16
      %v5606 = vld [vmem:[%s5605] sm:$0xf]
      %v5607 = vld [vmem:[%s5605 + $0x4] sm:$0xf]
      %v5608 = vld [vmem:[%s5605 + $0x8] sm:$0xf]
      %v5609 = vld [vmem:[%s5605 + $0xc] sm:$0xf]
      %v5611 = vunpack.c.l.b16 %v5604
      %v5612 = vpack.c.b16 %v5100, %v5611
      %v5613 = vrot.slane %v5612, 3
      %v5614 = vrot.slane %v5137, 3
      %v5615 = vsel %vm1150, %v5613, %v5614
      %v5616 = vrot.slane %v5138, 3
      %v5617 = vsel %vm1150, %v5614, %v5616
      %v5618 = vrot.slane %v5139, 3
      %v5619 = vsel %vm1150, %v5616, %v5618
      %v5620 = vrot.slane %v5140, 3
      %v5621 = vsel %vm1150, %v5618, %v5620
      %v5622 = vrot.slane %v5141, 3
      %v5623 = vsel %vm1150, %v5620, %v5622
      %v5624 = vrot.slane %v5142, 3
      %v5625 = vsel %vm1150, %v5622, %v5624
      %v5626 = vrot.slane %v5143, 3
      %v5627 = vsel %vm1150, %v5624, %v5626
      %v5628 = vrot.slane %v5144, 3
      %v5629 = vsel %vm1150, %v5626, %v5628
      %v5630 = vrot.slane %v5145, 3
      %v5631 = vsel %vm1150, %v5628, %v5630
      %v5632 = vrot.slane %v5146, 3
      %v5633 = vsel %vm1150, %v5630, %v5632
      %v5634 = vrot.slane %v5147, 3
      %v5635 = vsel %vm1150, %v5632, %v5634
      %v5636 = vrot.slane %v5148, 3
      %v5637 = vsel %vm1150, %v5634, %v5636
      %v5638 = vrot.slane %v5149, 3
      %v5639 = vsel %vm1150, %v5636, %v5638
      %v5640 = vrot.slane %v5150, 3
      %v5641 = vsel %vm1150, %v5638, %v5640
      %v5642 = vrot.slane %v5151, 3
      %v5643 = vsel %vm1150, %v5640, %v5642
      %v5644 = vrot.slane %v5152, 3
      %v5645 = vsel %vm1150, %v5642, %v5644
      %v5646 = vrot.slane %v5153, 3
      %v5647 = vsel %vm1150, %v5644, %v5646
      %v5648 = vrot.slane %v5154, 3
      %v5649 = vsel %vm1150, %v5646, %v5648
      %v5654 = vunpack.c.l.b16 %v5606
      %v5655 = vunpack.c.l.b16 %v5607
      %v5656 = vunpack.c.l.b16 %v5608
      %v5657 = vunpack.c.l.b16 %v5609
      %v5658 = vpack.c.b16 %v5655, %v5654
      %v5659 = vpack.c.b16 %v5657, %v5656
      %v5663 = vsel %vm873, %v5615, 0
      %v5666 = vsel %vm873, %v5617, 0
      %v5669 = vsel %vm873, %v5619, 0
      %v5672 = vsel %vm873, %v5621, 0
      %v5675 = vsel %vm873, %v5623, 0
      %v5678 = vsel %vm873, %v5625, 0
      %v5681 = vsel %vm873, %v5627, 0
      %v5684 = vsel %vm873, %v5629, 0
      %v5687 = vsel %vm873, %v5631, 0
      %v5690 = vsel %vm873, %v5633, 0
      %v5693 = vsel %vm873, %v5635, 0
      %v5696 = vsel %vm873, %v5637, 0
      %v5699 = vsel %vm873, %v5639, 0
      %v5702 = vsel %vm873, %v5641, 0
      %v5705 = vsel %vm873, %v5643, 0
      %v5708 = vsel %vm873, %v5645, 0
      %v5711 = vsel %vm873, %v5647, 0
      %v5714 = vsel %vm873, %v5649, 0
      %5716 = vmatprep.subr.bf16.mxu0 0
      %5717 = vmatpush1.bf16.msra.mxu0 0
      %5718 = vmatprep.subr.bf16.mxu0 0
      %5719 = vmatpush1.bf16.msra.mxu0 0
      %5720 = vmatprep.subr.bf16.mxu0 0
      %5721 = vmatpush1.bf16.msra.mxu0 0
      %5722 = vmatprep.subr.bf16.mxu0 0
      %5723 = vmatpush1.bf16.msra.mxu0 0
      %5724 = vmatprep.subr.bf16.mxu0 0
      %5725 = vmatpush1.bf16.msra.mxu0 0
      %5726 = vmatprep.subr.bf16.mxu0 0
      %5727 = vmatpush1.bf16.msra.mxu0 0
      %5728 = vmatprep.subr.bf16.mxu0 0
      %5729 = vmatpush1.bf16.msra.mxu0 %v5659
      %5730 = vmatprep.subr.bf16.mxu0 0
      %5731 = vmatpush1.bf16.msra.mxu0 %v5658
      %5732 = vmatprep.subr.bf16.mxu0 0
      %5733 = vmatpush2.bf16.msra.mxu0 0
      %5734 = vmatprep.subr.bf16.mxu0 0
      %5735 = vmatpush2.bf16.msra.mxu0 0
      %5736 = vmatprep.subr.bf16.mxu0 0
      %5737 = vmatpush2.bf16.msra.mxu0 0
      %5738 = vmatprep.subr.bf16.mxu0 0
      %5739 = vmatpush2.bf16.msra.mxu0 0
      %5740 = vmatprep.subr.bf16.mxu0 0
      %5741 = vmatpush2.bf16.msra.mxu0 0
      %5742 = vmatprep.subr.bf16.mxu0 0
      %5743 = vmatpush2.bf16.msra.mxu0 0
      %5744 = vmatprep.subr.bf16.mxu0 0
      %5745 = vmatpush2.bf16.msra.mxu0 0
      %5746 = vmatprep.subr.bf16.mxu0 0
      %5747 = vmatpush2.bf16.msra.mxu0 0
      %5748 = vmatprep.mubr.bf16.mxu0 0
      %5749 = vmatmul.mubr.bf16.gmra.mxu0 %v5663
      %v5750 = vpop.f32.mrf.mxu0
      %v5751 = vadd.f32 0.0, %v5750
      %v5752 = vpop.f32.mrf.mxu0
      %v5753 = vpop.f32.mrf.mxu0
      %v5754 = vadd.f32 0.0, %v5753
      %v5755 = vpop.f32.mrf.mxu0
      %5756 = vmatprep.mubr.bf16.mxu0 0
      %5757 = vmatmul.mubr.bf16.gmra.mxu0 %v5666
      %v5758 = vpop.f32.mrf.mxu0
      %v5759 = vadd.f32 0.0, %v5758
      %v5760 = vpop.f32.mrf.mxu0
      %v5761 = vpop.f32.mrf.mxu0
      %v5762 = vadd.f32 0.0, %v5761
      %v5763 = vpop.f32.mrf.mxu0
      %5764 = vmatprep.mubr.bf16.mxu0 0
      %5765 = vmatmul.mubr.bf16.gmra.mxu0 %v5669
      %v5766 = vpop.f32.mrf.mxu0
      %v5767 = vadd.f32 0.0, %v5766
      %v5768 = vpop.f32.mrf.mxu0
      %v5769 = vpop.f32.mrf.mxu0
      %v5770 = vadd.f32 0.0, %v5769
      %v5771 = vpop.f32.mrf.mxu0
      %5772 = vmatprep.mubr.bf16.mxu0 0
      %5773 = vmatmul.mubr.bf16.gmra.mxu0 %v5672
      %v5774 = vpop.f32.mrf.mxu0
      %v5775 = vadd.f32 0.0, %v5774
      %v5776 = vpop.f32.mrf.mxu0
      %v5777 = vpop.f32.mrf.mxu0
      %v5778 = vadd.f32 0.0, %v5777
      %v5779 = vpop.f32.mrf.mxu0
      %5780 = vmatprep.mubr.bf16.mxu0 0
      %5781 = vmatmul.mubr.bf16.gmra.mxu0 %v5675
      %v5782 = vpop.f32.mrf.mxu0
      %v5783 = vadd.f32 0.0, %v5782
      %v5784 = vpop.f32.mrf.mxu0
      %v5785 = vpop.f32.mrf.mxu0
      %v5786 = vadd.f32 0.0, %v5785
      %v5787 = vpop.f32.mrf.mxu0
      %5788 = vmatprep.mubr.bf16.mxu0 0
      %5789 = vmatmul.mubr.bf16.gmra.mxu0 %v5678
      %v5790 = vpop.f32.mrf.mxu0
      %v5791 = vadd.f32 0.0, %v5790
      %v5792 = vpop.f32.mrf.mxu0
      %v5793 = vpop.f32.mrf.mxu0
      %v5794 = vadd.f32 0.0, %v5793
      %v5795 = vpop.f32.mrf.mxu0
      %5796 = vmatprep.mubr.bf16.mxu0 0
      %5797 = vmatmul.mubr.bf16.gmra.mxu0 %v5681
      %v5798 = vpop.f32.mrf.mxu0
      %v5799 = vadd.f32 0.0, %v5798
      %v5800 = vpop.f32.mrf.mxu0
      %v5801 = vpop.f32.mrf.mxu0
      %v5802 = vadd.f32 0.0, %v5801
      %v5803 = vpop.f32.mrf.mxu0
      %5804 = vmatprep.mubr.bf16.mxu0 0
      %5805 = vmatmul.mubr.bf16.gmra.mxu0 %v5684
      %v5806 = vpop.f32.mrf.mxu0
      %v5807 = vadd.f32 0.0, %v5806
      %v5808 = vpop.f32.mrf.mxu0
      %v5809 = vpop.f32.mrf.mxu0
      %v5810 = vadd.f32 0.0, %v5809
      %v5811 = vpop.f32.mrf.mxu0
      %5812 = vmatprep.mubr.bf16.mxu0 0
      %5813 = vmatmul.mubr.bf16.gmra.mxu0 %v5687
      %v5814 = vpop.f32.mrf.mxu0
      %v5815 = vadd.f32 0.0, %v5814
      %v5816 = vpop.f32.mrf.mxu0
      %v5817 = vpop.f32.mrf.mxu0
      %v5818 = vadd.f32 0.0, %v5817
      %v5819 = vpop.f32.mrf.mxu0
      %5820 = vmatprep.mubr.bf16.mxu0 0
      %5821 = vmatmul.mubr.bf16.gmra.mxu0 %v5690
      %v5822 = vpop.f32.mrf.mxu0
      %v5823 = vadd.f32 0.0, %v5822
      %v5824 = vpop.f32.mrf.mxu0
      %v5825 = vpop.f32.mrf.mxu0
      %v5826 = vadd.f32 0.0, %v5825
      %v5827 = vpop.f32.mrf.mxu0
      %5828 = vmatprep.mubr.bf16.mxu0 0
      %5829 = vmatmul.mubr.bf16.gmra.mxu0 %v5693
      %v5830 = vpop.f32.mrf.mxu0
      %v5831 = vadd.f32 0.0, %v5830
      %v5832 = vpop.f32.mrf.mxu0
      %v5833 = vpop.f32.mrf.mxu0
      %v5834 = vadd.f32 0.0, %v5833
      %v5835 = vpop.f32.mrf.mxu0
      %5836 = vmatprep.mubr.bf16.mxu0 0
      %5837 = vmatmul.mubr.bf16.gmra.mxu0 %v5696
      %v5838 = vpop.f32.mrf.mxu0
      %v5839 = vadd.f32 0.0, %v5838
      %v5840 = vpop.f32.mrf.mxu0
      %v5841 = vpop.f32.mrf.mxu0
      %v5842 = vadd.f32 0.0, %v5841
      %v5843 = vpop.f32.mrf.mxu0
      %5844 = vmatprep.mubr.bf16.mxu0 0
      %5845 = vmatmul.mubr.bf16.gmra.mxu0 %v5699
      %v5846 = vpop.f32.mrf.mxu0
      %v5847 = vadd.f32 0.0, %v5846
      %v5848 = vpop.f32.mrf.mxu0
      %v5849 = vpop.f32.mrf.mxu0
      %v5850 = vadd.f32 0.0, %v5849
      %v5851 = vpop.f32.mrf.mxu0
      %5852 = vmatprep.mubr.bf16.mxu0 0
      %5853 = vmatmul.mubr.bf16.gmra.mxu0 %v5702
      %v5854 = vpop.f32.mrf.mxu0
      %v5855 = vadd.f32 0.0, %v5854
      %v5856 = vpop.f32.mrf.mxu0
      %v5857 = vpop.f32.mrf.mxu0
      %v5858 = vadd.f32 0.0, %v5857
      %v5859 = vpop.f32.mrf.mxu0
      %5860 = vmatprep.mubr.bf16.mxu0 0
      %5861 = vmatmul.mubr.bf16.gmra.mxu0 %v5705
      %v5862 = vpop.f32.mrf.mxu0
      %v5863 = vadd.f32 0.0, %v5862
      %v5864 = vpop.f32.mrf.mxu0
      %v5865 = vpop.f32.mrf.mxu0
      %v5866 = vadd.f32 0.0, %v5865
      %v5867 = vpop.f32.mrf.mxu0
      %5868 = vmatprep.mubr.bf16.mxu0 0
      %5869 = vmatmul.mubr.bf16.gmra.mxu0 %v5708
      %v5870 = vpop.f32.mrf.mxu0
      %v5871 = vadd.f32 0.0, %v5870
      %v5872 = vpop.f32.mrf.mxu0
      %v5873 = vpop.f32.mrf.mxu0
      %v5874 = vadd.f32 0.0, %v5873
      %v5875 = vpop.f32.mrf.mxu0
      %5876 = vmatprep.mubr.bf16.mxu0 0
      %5877 = vmatmul.mubr.bf16.gmra.mxu0 %v5711
      %v5878 = vpop.f32.mrf.mxu0
      %v5879 = vadd.f32 0.0, %v5878
      %v5880 = vpop.f32.mrf.mxu0
      %v5881 = vpop.f32.mrf.mxu0
      %v5882 = vadd.f32 0.0, %v5881
      %v5883 = vpop.f32.mrf.mxu0
      %5884 = vmatprep.mubr.bf16.mxu0 0
      %5885 = vmatmul.mubr.bf16.gmra.mxu0 %v5714
      %v5886 = vpop.f32.mrf.mxu0
      %v5887 = vadd.f32 0.0, %v5886
      %v5888 = vpop.f32.mrf.mxu0
      %v5889 = vpop.f32.mrf.mxu0
      %v5890 = vadd.f32 0.0, %v5889
      %v5891 = vpop.f32.mrf.mxu0
      %5892 = vdwg.mxu0
      %v5893 = vadd.f32 %v5568, %v5751
      %v5894 = vadd.f32 %v5569, %v5754
      %v5895 = vadd.f32 %v5570, %v5759
      %v5896 = vadd.f32 %v5571, %v5762
      %v5897 = vadd.f32 %v5572, %v5767
      %v5898 = vadd.f32 %v5573, %v5770
      %v5899 = vadd.f32 %v5574, %v5775
      %v5900 = vadd.f32 %v5575, %v5778
      %v5901 = vadd.f32 %v5576, %v5783
      %v5902 = vadd.f32 %v5577, %v5786
      %v5903 = vadd.f32 %v5578, %v5791
      %v5904 = vadd.f32 %v5579, %v5794
      %v5905 = vadd.f32 %v5580, %v5799
      %v5906 = vadd.f32 %v5581, %v5802
      %v5907 = vadd.f32 %v5582, %v5807
      %v5908 = vadd.f32 %v5583, %v5810
      %v5909 = vadd.f32 %v5584, %v5815
      %v5910 = vadd.f32 %v5585, %v5818
      %v5911 = vadd.f32 %v5586, %v5823
      %v5912 = vadd.f32 %v5587, %v5826
      %v5913 = vadd.f32 %v5588, %v5831
      %v5914 = vadd.f32 %v5589, %v5834
      %v5915 = vadd.f32 %v5590, %v5839
      %v5916 = vadd.f32 %v5591, %v5842
      %v5917 = vadd.f32 %v5592, %v5847
      %v5918 = vadd.f32 %v5593, %v5850
      %v5919 = vadd.f32 %v5594, %v5855
      %v5920 = vadd.f32 %v5595, %v5858
      %v5921 = vadd.f32 %v5596, %v5863
      %v5922 = vadd.f32 %v5597, %v5866
      %v5923 = vadd.f32 %v5598, %v5871
      %v5924 = vadd.f32 %v5599, %v5874
      %v5925 = vadd.f32 %v5600, %v5879
      %v5926 = vadd.f32 %v5601, %v5882
      %v5927 = vadd.f32 %v5602, %v5887
      %v5928 = vadd.f32 %v5603, %v5890
      %v5929 = vld [vmem:[#allocation2 + $0x94] sm:$0xf]
      %s5930 = scalar_lea.vmem %s3, 32
      %v5931 = vld [vmem:[%s5930] sm:$0xf]
      %v5932 = vld [vmem:[%s5930 + $0x4] sm:$0xf]
      %v5933 = vld [vmem:[%s5930 + $0x8] sm:$0xf]
      %v5934 = vld [vmem:[%s5930 + $0xc] sm:$0xf]
      %v5936 = vunpack.c.l.b16 %v5929
      %v5937 = vpack.c.b16 %v5936, %v5936
      %v5939 = vshrl.u32 %v5612, 16
      %v5941 = vrot.slane %v5939, 3
      %v5942 = vshll.u32 %v5612, 16
      %v5944 = vrot.slane %v5942, 4
      %v5945 = vor.u32 %v5941, %v5944
      %v5946 = vrot.slane %v5164, 3
      %v5947 = vrot.slane %v5167, 4
      %v5948 = vor.u32 %v5946, %v5947
      %v5949 = vsel %vm1476, %v5945, %v5948
      %v5950 = vrot.slane %v5173, 3
      %v5951 = vrot.slane %v5176, 4
      %v5952 = vor.u32 %v5950, %v5951
      %v5953 = vsel %vm1476, %v5948, %v5952
      %v5954 = vrot.slane %v5182, 3
      %v5955 = vrot.slane %v5185, 4
      %v5956 = vor.u32 %v5954, %v5955
      %v5957 = vsel %vm1476, %v5952, %v5956
      %v5958 = vrot.slane %v5191, 3
      %v5959 = vrot.slane %v5194, 4
      %v5960 = vor.u32 %v5958, %v5959
      %v5961 = vsel %vm1476, %v5956, %v5960
      %v5962 = vrot.slane %v5200, 3
      %v5963 = vrot.slane %v5203, 4
      %v5964 = vor.u32 %v5962, %v5963
      %v5965 = vsel %vm1476, %v5960, %v5964
      %v5966 = vrot.slane %v5209, 3
      %v5967 = vrot.slane %v5212, 4
      %v5968 = vor.u32 %v5966, %v5967
      %v5969 = vsel %vm1476, %v5964, %v5968
      %v5970 = vrot.slane %v5218, 3
      %v5971 = vrot.slane %v5221, 4
      %v5972 = vor.u32 %v5970, %v5971
      %v5973 = vsel %vm1476, %v5968, %v5972
      %v5974 = vrot.slane %v5227, 3
      %v5975 = vrot.slane %v5230, 4
      %v5976 = vor.u32 %v5974, %v5975
      %v5977 = vsel %vm1476, %v5972, %v5976
      %v5978 = vrot.slane %v5236, 3
      %v5979 = vrot.slane %v5239, 4
      %v5980 = vor.u32 %v5978, %v5979
      %v5981 = vsel %vm1476, %v5976, %v5980
      %v5982 = vrot.slane %v5245, 3
      %v5983 = vrot.slane %v5248, 4
      %v5984 = vor.u32 %v5982, %v5983
      %v5985 = vsel %vm1476, %v5980, %v5984
      %v5986 = vrot.slane %v5254, 3
      %v5987 = vrot.slane %v5257, 4
      %v5988 = vor.u32 %v5986, %v5987
      %v5989 = vsel %vm1476, %v5984, %v5988
      %v5990 = vrot.slane %v5263, 3
      %v5991 = vrot.slane %v5266, 4
      %v5992 = vor.u32 %v5990, %v5991
      %v5993 = vsel %vm1476, %v5988, %v5992
      %v5994 = vrot.slane %v5272, 3
      %v5995 = vrot.slane %v5275, 4
      %v5996 = vor.u32 %v5994, %v5995
      %v5997 = vsel %vm1476, %v5992, %v5996
      %v5998 = vrot.slane %v5281, 3
      %v5999 = vrot.slane %v5284, 4
      %v6000 = vor.u32 %v5998, %v5999
      %v6001 = vsel %vm1476, %v5996, %v6000
      %v6002 = vrot.slane %v5290, 3
      %v6003 = vrot.slane %v5293, 4
      %v6004 = vor.u32 %v6002, %v6003
      %v6005 = vsel %vm1476, %v6000, %v6004
      %v6006 = vrot.slane %v5299, 3
      %v6007 = vrot.slane %v5302, 4
      %v6008 = vor.u32 %v6006, %v6007
      %v6009 = vsel %vm1476, %v6004, %v6008
      %v6010 = vrot.slane %v5308, 3
      %v6011 = vrot.slane %v5311, 4
      %v6012 = vor.u32 %v6010, %v6011
      %v6013 = vsel %vm1476, %v6008, %v6012
      %v6015 = vshrl.u32 %v5937, 16
      %v6017 = vrot.slane %v6015, 3
      %v6018 = vshll.u32 %v5937, 16
      %v6020 = vrot.slane %v6018, 4
      %v6021 = vor.u32 %v6017, %v6020
      %v6022 = vsel %vm1476, %v6012, %v6021
      %v6027 = vunpack.c.l.b16 %v5931
      %v6028 = vunpack.c.l.b16 %v5932
      %v6029 = vunpack.c.l.b16 %v5933
      %v6030 = vunpack.c.l.b16 %v5934
      %v6031 = vpack.c.b16 %v6028, %v6027
      %v6032 = vpack.c.b16 %v6030, %v6029
      %v6036 = vsel %vm873, %v5949, 0
      %v6039 = vsel %vm873, %v5953, 0
      %v6042 = vsel %vm873, %v5957, 0
      %v6045 = vsel %vm873, %v5961, 0
      %v6048 = vsel %vm873, %v5965, 0
      %v6051 = vsel %vm873, %v5969, 0
      %v6054 = vsel %vm873, %v5973, 0
      %v6057 = vsel %vm873, %v5977, 0
      %v6060 = vsel %vm873, %v5981, 0
      %v6063 = vsel %vm873, %v5985, 0
      %v6066 = vsel %vm873, %v5989, 0
      %v6069 = vsel %vm873, %v5993, 0
      %v6072 = vsel %vm873, %v5997, 0
      %v6075 = vsel %vm873, %v6001, 0
      %v6078 = vsel %vm873, %v6005, 0
      %v6081 = vsel %vm873, %v6009, 0
      %v6084 = vsel %vm873, %v6013, 0
      %v6087 = vsel %vm873, %v6022, 0
      %6089 = vmatprep.subr.bf16.mxu0 0
      %6090 = vmatpush1.bf16.msra.mxu0 0
      %6091 = vmatprep.subr.bf16.mxu0 0
      %6092 = vmatpush1.bf16.msra.mxu0 0
      %6093 = vmatprep.subr.bf16.mxu0 0
      %6094 = vmatpush1.bf16.msra.mxu0 0
      %6095 = vmatprep.subr.bf16.mxu0 0
      %6096 = vmatpush1.bf16.msra.mxu0 0
      %6097 = vmatprep.subr.bf16.mxu0 0
      %6098 = vmatpush1.bf16.msra.mxu0 0
      %6099 = vmatprep.subr.bf16.mxu0 0
      %6100 = vmatpush1.bf16.msra.mxu0 0
      %6101 = vmatprep.subr.bf16.mxu0 0
      %6102 = vmatpush1.bf16.msra.mxu0 %v6032
      %6103 = vmatprep.subr.bf16.mxu0 0
      %6104 = vmatpush1.bf16.msra.mxu0 %v6031
      %6105 = vmatprep.subr.bf16.mxu0 0
      %6106 = vmatpush2.bf16.msra.mxu0 0
      %6107 = vmatprep.subr.bf16.mxu0 0
      %6108 = vmatpush2.bf16.msra.mxu0 0
      %6109 = vmatprep.subr.bf16.mxu0 0
      %6110 = vmatpush2.bf16.msra.mxu0 0
      %6111 = vmatprep.subr.bf16.mxu0 0
      %6112 = vmatpush2.bf16.msra.mxu0 0
      %6113 = vmatprep.subr.bf16.mxu0 0
      %6114 = vmatpush2.bf16.msra.mxu0 0
      %6115 = vmatprep.subr.bf16.mxu0 0
      %6116 = vmatpush2.bf16.msra.mxu0 0
      %6117 = vmatprep.subr.bf16.mxu0 0
      %6118 = vmatpush2.bf16.msra.mxu0 0
      %6119 = vmatprep.subr.bf16.mxu0 0
      %6120 = vmatpush2.bf16.msra.mxu0 0
      %6121 = vmatprep.mubr.bf16.mxu0 0
      %6122 = vmatmul.mubr.bf16.gmra.mxu0 %v6036
      %v6123 = vpop.f32.mrf.mxu0
      %v6124 = vadd.f32 0.0, %v6123
      %v6125 = vpop.f32.mrf.mxu0
      %v6126 = vpop.f32.mrf.mxu0
      %v6127 = vadd.f32 0.0, %v6126
      %v6128 = vpop.f32.mrf.mxu0
      %6129 = vmatprep.mubr.bf16.mxu0 0
      %6130 = vmatmul.mubr.bf16.gmra.mxu0 %v6039
      %v6131 = vpop.f32.mrf.mxu0
      %v6132 = vadd.f32 0.0, %v6131
      %v6133 = vpop.f32.mrf.mxu0
      %v6134 = vpop.f32.mrf.mxu0
      %v6135 = vadd.f32 0.0, %v6134
      %v6136 = vpop.f32.mrf.mxu0
      %6137 = vmatprep.mubr.bf16.mxu0 0
      %6138 = vmatmul.mubr.bf16.gmra.mxu0 %v6042
      %v6139 = vpop.f32.mrf.mxu0
      %v6140 = vadd.f32 0.0, %v6139
      %v6141 = vpop.f32.mrf.mxu0
      %v6142 = vpop.f32.mrf.mxu0
      %v6143 = vadd.f32 0.0, %v6142
      %v6144 = vpop.f32.mrf.mxu0
      %6145 = vmatprep.mubr.bf16.mxu0 0
      %6146 = vmatmul.mubr.bf16.gmra.mxu0 %v6045
      %v6147 = vpop.f32.mrf.mxu0
      %v6148 = vadd.f32 0.0, %v6147
      %v6149 = vpop.f32.mrf.mxu0
      %v6150 = vpop.f32.mrf.mxu0
      %v6151 = vadd.f32 0.0, %v6150
      %v6152 = vpop.f32.mrf.mxu0
      %6153 = vmatprep.mubr.bf16.mxu0 0
      %6154 = vmatmul.mubr.bf16.gmra.mxu0 %v6048
      %v6155 = vpop.f32.mrf.mxu0
      %v6156 = vadd.f32 0.0, %v6155
      %v6157 = vpop.f32.mrf.mxu0
      %v6158 = vpop.f32.mrf.mxu0
      %v6159 = vadd.f32 0.0, %v6158
      %v6160 = vpop.f32.mrf.mxu0
      %6161 = vmatprep.mubr.bf16.mxu0 0
      %6162 = vmatmul.mubr.bf16.gmra.mxu0 %v6051
      %v6163 = vpop.f32.mrf.mxu0
      %v6164 = vadd.f32 0.0, %v6163
      %v6165 = vpop.f32.mrf.mxu0
      %v6166 = vpop.f32.mrf.mxu0
      %v6167 = vadd.f32 0.0, %v6166
      %v6168 = vpop.f32.mrf.mxu0
      %6169 = vmatprep.mubr.bf16.mxu0 0
      %6170 = vmatmul.mubr.bf16.gmra.mxu0 %v6054
      %v6171 = vpop.f32.mrf.mxu0
      %v6172 = vadd.f32 0.0, %v6171
      %v6173 = vpop.f32.mrf.mxu0
      %v6174 = vpop.f32.mrf.mxu0
      %v6175 = vadd.f32 0.0, %v6174
      %v6176 = vpop.f32.mrf.mxu0
      %6177 = vmatprep.mubr.bf16.mxu0 0
      %6178 = vmatmul.mubr.bf16.gmra.mxu0 %v6057
      %v6179 = vpop.f32.mrf.mxu0
      %v6180 = vadd.f32 0.0, %v6179
      %v6181 = vpop.f32.mrf.mxu0
      %v6182 = vpop.f32.mrf.mxu0
      %v6183 = vadd.f32 0.0, %v6182
      %v6184 = vpop.f32.mrf.mxu0
      %6185 = vmatprep.mubr.bf16.mxu0 0
      %6186 = vmatmul.mubr.bf16.gmra.mxu0 %v6060
      %v6187 = vpop.f32.mrf.mxu0
      %v6188 = vadd.f32 0.0, %v6187
      %v6189 = vpop.f32.mrf.mxu0
      %v6190 = vpop.f32.mrf.mxu0
      %v6191 = vadd.f32 0.0, %v6190
      %v6192 = vpop.f32.mrf.mxu0
      %6193 = vmatprep.mubr.bf16.mxu0 0
      %6194 = vmatmul.mubr.bf16.gmra.mxu0 %v6063
      %v6195 = vpop.f32.mrf.mxu0
      %v6196 = vadd.f32 0.0, %v6195
      %v6197 = vpop.f32.mrf.mxu0
      %v6198 = vpop.f32.mrf.mxu0
      %v6199 = vadd.f32 0.0, %v6198
      %v6200 = vpop.f32.mrf.mxu0
      %6201 = vmatprep.mubr.bf16.mxu0 0
      %6202 = vmatmul.mubr.bf16.gmra.mxu0 %v6066
      %v6203 = vpop.f32.mrf.mxu0
      %v6204 = vadd.f32 0.0, %v6203
      %v6205 = vpop.f32.mrf.mxu0
      %v6206 = vpop.f32.mrf.mxu0
      %v6207 = vadd.f32 0.0, %v6206
      %v6208 = vpop.f32.mrf.mxu0
      %6209 = vmatprep.mubr.bf16.mxu0 0
      %6210 = vmatmul.mubr.bf16.gmra.mxu0 %v6069
      %v6211 = vpop.f32.mrf.mxu0
      %v6212 = vadd.f32 0.0, %v6211
      %v6213 = vpop.f32.mrf.mxu0
      %v6214 = vpop.f32.mrf.mxu0
      %v6215 = vadd.f32 0.0, %v6214
      %v6216 = vpop.f32.mrf.mxu0
      %6217 = vmatprep.mubr.bf16.mxu0 0
      %6218 = vmatmul.mubr.bf16.gmra.mxu0 %v6072
      %v6219 = vpop.f32.mrf.mxu0
      %v6220 = vadd.f32 0.0, %v6219
      %v6221 = vpop.f32.mrf.mxu0
      %v6222 = vpop.f32.mrf.mxu0
      %v6223 = vadd.f32 0.0, %v6222
      %v6224 = vpop.f32.mrf.mxu0
      %6225 = vmatprep.mubr.bf16.mxu0 0
      %6226 = vmatmul.mubr.bf16.gmra.mxu0 %v6075
      %v6227 = vpop.f32.mrf.mxu0
      %v6228 = vadd.f32 0.0, %v6227
      %v6229 = vpop.f32.mrf.mxu0
      %v6230 = vpop.f32.mrf.mxu0
      %v6231 = vadd.f32 0.0, %v6230
      %v6232 = vpop.f32.mrf.mxu0
      %6233 = vmatprep.mubr.bf16.mxu0 0
      %6234 = vmatmul.mubr.bf16.gmra.mxu0 %v6078
      %v6235 = vpop.f32.mrf.mxu0
      %v6236 = vadd.f32 0.0, %v6235
      %v6237 = vpop.f32.mrf.mxu0
      %v6238 = vpop.f32.mrf.mxu0
      %v6239 = vadd.f32 0.0, %v6238
      %v6240 = vpop.f32.mrf.mxu0
      %6241 = vmatprep.mubr.bf16.mxu0 0
      %6242 = vmatmul.mubr.bf16.gmra.mxu0 %v6081
      %v6243 = vpop.f32.mrf.mxu0
      %v6244 = vadd.f32 0.0, %v6243
      %v6245 = vpop.f32.mrf.mxu0
      %v6246 = vpop.f32.mrf.mxu0
      %v6247 = vadd.f32 0.0, %v6246
      %v6248 = vpop.f32.mrf.mxu0
      %6249 = vmatprep.mubr.bf16.mxu0 0
      %6250 = vmatmul.mubr.bf16.gmra.mxu0 %v6084
      %v6251 = vpop.f32.mrf.mxu0
      %v6252 = vadd.f32 0.0, %v6251
      %v6253 = vpop.f32.mrf.mxu0
      %v6254 = vpop.f32.mrf.mxu0
      %v6255 = vadd.f32 0.0, %v6254
      %v6256 = vpop.f32.mrf.mxu0
      %6257 = vmatprep.mubr.bf16.mxu0 0
      %6258 = vmatmul.mubr.bf16.gmra.mxu0 %v6087
      %v6259 = vpop.f32.mrf.mxu0
      %v6260 = vadd.f32 0.0, %v6259
      %v6261 = vpop.f32.mrf.mxu0
      %v6262 = vpop.f32.mrf.mxu0
      %v6263 = vadd.f32 0.0, %v6262
      %v6264 = vpop.f32.mrf.mxu0
      %6265 = vdwg.mxu0
      %v6266 = vadd.f32 %v5893, %v6124
      %v6267 = vadd.f32 %v5894, %v6127
      %v6268 = vadd.f32 %v5895, %v6132
      %v6269 = vadd.f32 %v5896, %v6135
      %v6270 = vadd.f32 %v5897, %v6140
      %v6271 = vadd.f32 %v5898, %v6143
      %v6272 = vadd.f32 %v5899, %v6148
      %v6273 = vadd.f32 %v5900, %v6151
      %v6274 = vadd.f32 %v5901, %v6156
      %v6275 = vadd.f32 %v5902, %v6159
      %v6276 = vadd.f32 %v5903, %v6164
      %v6277 = vadd.f32 %v5904, %v6167
      %v6278 = vadd.f32 %v5905, %v6172
      %v6279 = vadd.f32 %v5906, %v6175
      %v6280 = vadd.f32 %v5907, %v6180
      %v6281 = vadd.f32 %v5908, %v6183
      %v6282 = vadd.f32 %v5909, %v6188
      %v6283 = vadd.f32 %v5910, %v6191
      %v6284 = vadd.f32 %v5911, %v6196
      %v6285 = vadd.f32 %v5912, %v6199
      %v6286 = vadd.f32 %v5913, %v6204
      %v6287 = vadd.f32 %v5914, %v6207
      %v6288 = vadd.f32 %v5915, %v6212
      %v6289 = vadd.f32 %v5916, %v6215
      %v6290 = vadd.f32 %v5917, %v6220
      %v6291 = vadd.f32 %v5918, %v6223
      %v6292 = vadd.f32 %v5919, %v6228
      %v6293 = vadd.f32 %v5920, %v6231
      %v6294 = vadd.f32 %v5921, %v6236
      %v6295 = vadd.f32 %v5922, %v6239
      %v6296 = vadd.f32 %v5923, %v6244
      %v6297 = vadd.f32 %v5924, %v6247
      %v6298 = vadd.f32 %v5925, %v6252
      %v6299 = vadd.f32 %v5926, %v6255
      %v6300 = vadd.f32 %v5927, %v6260
      %v6301 = vadd.f32 %v5928, %v6263
      %v6302 = vld [vmem:[#allocation2 + $0xc] sm:$0x8]
      %v6303 = vld [vmem:[#allocation2 + $0x10] sm:$0xf]
      %v6304 = vld [vmem:[#allocation2 + $0x14] sm:$0xf]
      %v6305 = vld [vmem:[#allocation2 + $0x18] sm:$0xf]
      %v6306 = vld [vmem:[#allocation2 + $0x1c] sm:$0xf]
      %v6307 = vld [vmem:[#allocation2 + $0x20] sm:$0xf]
      %v6308 = vld [vmem:[#allocation2 + $0x24] sm:$0xf]
      %v6309 = vld [vmem:[#allocation2 + $0x28] sm:$0xf]
      %v6310 = vld [vmem:[#allocation2 + $0x2c] sm:$0xf]
      %v6311 = vld [vmem:[#allocation2 + $0x30] sm:$0xf]
      %v6312 = vld [vmem:[#allocation2 + $0x34] sm:$0xf]
      %v6313 = vld [vmem:[#allocation2 + $0x38] sm:$0xf]
      %v6314 = vld [vmem:[#allocation2 + $0x3c] sm:$0xf]
      %v6315 = vld [vmem:[#allocation2 + $0x40] sm:$0xf]
      %v6316 = vld [vmem:[#allocation2 + $0x44] sm:$0xf]
      %v6317 = vld [vmem:[#allocation2 + $0x48] sm:$0xf]
      %v6318 = vld [vmem:[#allocation2 + $0x4c] sm:$0xf]
      %v6319 = vld [vmem:[#allocation2 + $0x50] sm:$0xf]
      %v6320 = vld [vmem:[#allocation2 + $0x54] sm:$0xf]
      %v6321 = vld [vmem:[#allocation2 + $0x58] sm:$0xf]
      %v6322 = vld [vmem:[#allocation2 + $0x5c] sm:$0xf]
      %v6323 = vld [vmem:[#allocation2 + $0x60] sm:$0xf]
      %v6324 = vld [vmem:[#allocation2 + $0x64] sm:$0xf]
      %v6325 = vld [vmem:[#allocation2 + $0x68] sm:$0xf]
      %v6326 = vld [vmem:[#allocation2 + $0x6c] sm:$0xf]
      %v6327 = vld [vmem:[#allocation2 + $0x70] sm:$0xf]
      %v6328 = vld [vmem:[#allocation2 + $0x74] sm:$0xf]
      %v6329 = vld [vmem:[#allocation2 + $0x78] sm:$0xf]
      %v6330 = vld [vmem:[#allocation2 + $0x7c] sm:$0xf]
      %v6331 = vld [vmem:[#allocation2 + $0x80] sm:$0xf]
      %v6332 = vld [vmem:[#allocation2 + $0x84] sm:$0xf]
      %v6333 = vld [vmem:[#allocation2 + $0x88] sm:$0xf]
      %v6334 = vld [vmem:[#allocation2 + $0x8c] sm:$0xf]
      %v6335 = vld [vmem:[#allocation2 + $0x90] sm:$0xf]
      %v6336 = vld [vmem:[#allocation2 + $0x94] sm:$0xf]
      %v6337 = vld [vmem:[#allocation2 + $0x98] sm:$0xf]
      %v6338 = vld [vmem:[#allocation2 + $0x9c] sm:$0xf]
      %s6339 = scalar_lea.vmem %s3, 48
      %v6340 = vld [vmem:[%s6339] sm:$0xf]
      %v6341 = vld [vmem:[%s6339 + $0x4] sm:$0xf]
      %v6342 = vld [vmem:[%s6339 + $0x8] sm:$0xf]
      %v6343 = vld [vmem:[%s6339 + $0xc] sm:$0xf]
      %v6381 = vunpack.c.l.b16 %v6302
      %v6382 = vunpack.c.l.b16 %v6303
      %v6383 = vunpack.c.l.b16 %v6304
      %v6384 = vunpack.c.l.b16 %v6305
      %v6385 = vunpack.c.l.b16 %v6306
      %v6386 = vunpack.c.l.b16 %v6307
      %v6387 = vunpack.c.l.b16 %v6308
      %v6388 = vunpack.c.l.b16 %v6309
      %v6389 = vunpack.c.l.b16 %v6310
      %v6390 = vunpack.c.l.b16 %v6311
      %v6391 = vunpack.c.l.b16 %v6312
      %v6392 = vunpack.c.l.b16 %v6313
      %v6393 = vunpack.c.l.b16 %v6314
      %v6394 = vunpack.c.l.b16 %v6315
      %v6395 = vunpack.c.l.b16 %v6316
      %v6396 = vunpack.c.l.b16 %v6317
      %v6397 = vunpack.c.l.b16 %v6318
      %v6398 = vunpack.c.l.b16 %v6319
      %v6399 = vunpack.c.l.b16 %v6320
      %v6400 = vunpack.c.l.b16 %v6321
      %v6401 = vunpack.c.l.b16 %v6322
      %v6402 = vunpack.c.l.b16 %v6323
      %v6403 = vunpack.c.l.b16 %v6324
      %v6404 = vunpack.c.l.b16 %v6325
      %v6405 = vunpack.c.l.b16 %v6326
      %v6406 = vunpack.c.l.b16 %v6327
      %v6407 = vunpack.c.l.b16 %v6328
      %v6408 = vunpack.c.l.b16 %v6329
      %v6409 = vunpack.c.l.b16 %v6330
      %v6410 = vunpack.c.l.b16 %v6331
      %v6411 = vunpack.c.l.b16 %v6332
      %v6412 = vunpack.c.l.b16 %v6333
      %v6413 = vunpack.c.l.b16 %v6334
      %v6414 = vunpack.c.l.b16 %v6335
      %v6415 = vunpack.c.l.b16 %v6336
      %v6416 = vunpack.c.l.b16 %v6337
      %v6417 = vunpack.c.l.b16 %v6338
      %v6418 = vpack.c.b16 %v6382, %v6381
      %v6419 = vpack.c.b16 %v6384, %v6383
      %v6420 = vpack.c.b16 %v6386, %v6385
      %v6421 = vpack.c.b16 %v6388, %v6387
      %v6422 = vpack.c.b16 %v6390, %v6389
      %v6423 = vpack.c.b16 %v6392, %v6391
      %v6424 = vpack.c.b16 %v6394, %v6393
      %v6425 = vpack.c.b16 %v6396, %v6395
      %v6426 = vpack.c.b16 %v6398, %v6397
      %v6427 = vpack.c.b16 %v6400, %v6399
      %v6428 = vpack.c.b16 %v6402, %v6401
      %v6429 = vpack.c.b16 %v6404, %v6403
      %v6430 = vpack.c.b16 %v6406, %v6405
      %v6431 = vpack.c.b16 %v6408, %v6407
      %v6432 = vpack.c.b16 %v6410, %v6409
      %v6433 = vpack.c.b16 %v6412, %v6411
      %v6434 = vpack.c.b16 %v6414, %v6413
      %v6435 = vpack.c.b16 %v6416, %v6415
      %v6436 = vpack.c.b16 %v6417, %v6417
      %v6438 = vshrl.u32 %v6418, 16
      %v6440 = vrot.slane %v6438, 3
      %v6441 = vshll.u32 %v6418, 16
      %v6443 = vrot.slane %v6441, 4
      %v6444 = vor.u32 %v6440, %v6443
      %v6446 = vshrl.u32 %v6419, 16
      %v6448 = vrot.slane %v6446, 3
      %v6449 = vshll.u32 %v6419, 16
      %v6451 = vrot.slane %v6449, 4
      %v6452 = vor.u32 %v6448, %v6451
      %v6453 = vsel %vm1476, %v6444, %v6452
      %v6455 = vshrl.u32 %v6420, 16
      %v6457 = vrot.slane %v6455, 3
      %v6458 = vshll.u32 %v6420, 16
      %v6460 = vrot.slane %v6458, 4
      %v6461 = vor.u32 %v6457, %v6460
      %v6462 = vsel %vm1476, %v6452, %v6461
      %v6464 = vshrl.u32 %v6421, 16
      %v6466 = vrot.slane %v6464, 3
      %v6467 = vshll.u32 %v6421, 16
      %v6469 = vrot.slane %v6467, 4
      %v6470 = vor.u32 %v6466, %v6469
      %v6471 = vsel %vm1476, %v6461, %v6470
      %v6473 = vshrl.u32 %v6422, 16
      %v6475 = vrot.slane %v6473, 3
      %v6476 = vshll.u32 %v6422, 16
      %v6478 = vrot.slane %v6476, 4
      %v6479 = vor.u32 %v6475, %v6478
      %v6480 = vsel %vm1476, %v6470, %v6479
      %v6482 = vshrl.u32 %v6423, 16
      %v6484 = vrot.slane %v6482, 3
      %v6485 = vshll.u32 %v6423, 16
      %v6487 = vrot.slane %v6485, 4
      %v6488 = vor.u32 %v6484, %v6487
      %v6489 = vsel %vm1476, %v6479, %v6488
      %v6491 = vshrl.u32 %v6424, 16
      %v6493 = vrot.slane %v6491, 3
      %v6494 = vshll.u32 %v6424, 16
      %v6496 = vrot.slane %v6494, 4
      %v6497 = vor.u32 %v6493, %v6496
      %v6498 = vsel %vm1476, %v6488, %v6497
      %v6500 = vshrl.u32 %v6425, 16
      %v6502 = vrot.slane %v6500, 3
      %v6503 = vshll.u32 %v6425, 16
      %v6505 = vrot.slane %v6503, 4
      %v6506 = vor.u32 %v6502, %v6505
      %v6507 = vsel %vm1476, %v6497, %v6506
      %v6509 = vshrl.u32 %v6426, 16
      %v6511 = vrot.slane %v6509, 3
      %v6512 = vshll.u32 %v6426, 16
      %v6514 = vrot.slane %v6512, 4
      %v6515 = vor.u32 %v6511, %v6514
      %v6516 = vsel %vm1476, %v6506, %v6515
      %v6518 = vshrl.u32 %v6427, 16
      %v6520 = vrot.slane %v6518, 3
      %v6521 = vshll.u32 %v6427, 16
      %v6523 = vrot.slane %v6521, 4
      %v6524 = vor.u32 %v6520, %v6523
      %v6525 = vsel %vm1476, %v6515, %v6524
      %v6527 = vshrl.u32 %v6428, 16
      %v6529 = vrot.slane %v6527, 3
      %v6530 = vshll.u32 %v6428, 16
      %v6532 = vrot.slane %v6530, 4
      %v6533 = vor.u32 %v6529, %v6532
      %v6534 = vsel %vm1476, %v6524, %v6533
      %v6536 = vshrl.u32 %v6429, 16
      %v6538 = vrot.slane %v6536, 3
      %v6539 = vshll.u32 %v6429, 16
      %v6541 = vrot.slane %v6539, 4
      %v6542 = vor.u32 %v6538, %v6541
      %v6543 = vsel %vm1476, %v6533, %v6542
      %v6545 = vshrl.u32 %v6430, 16
      %v6547 = vrot.slane %v6545, 3
      %v6548 = vshll.u32 %v6430, 16
      %v6550 = vrot.slane %v6548, 4
      %v6551 = vor.u32 %v6547, %v6550
      %v6552 = vsel %vm1476, %v6542, %v6551
      %v6554 = vshrl.u32 %v6431, 16
      %v6556 = vrot.slane %v6554, 3
      %v6557 = vshll.u32 %v6431, 16
      %v6559 = vrot.slane %v6557, 4
      %v6560 = vor.u32 %v6556, %v6559
      %v6561 = vsel %vm1476, %v6551, %v6560
      %v6563 = vshrl.u32 %v6432, 16
      %v6565 = vrot.slane %v6563, 3
      %v6566 = vshll.u32 %v6432, 16
      %v6568 = vrot.slane %v6566, 4
      %v6569 = vor.u32 %v6565, %v6568
      %v6570 = vsel %vm1476, %v6560, %v6569
      %v6572 = vshrl.u32 %v6433, 16
      %v6574 = vrot.slane %v6572, 3
      %v6575 = vshll.u32 %v6433, 16
      %v6577 = vrot.slane %v6575, 4
      %v6578 = vor.u32 %v6574, %v6577
      %v6579 = vsel %vm1476, %v6569, %v6578
      %v6581 = vshrl.u32 %v6434, 16
      %v6583 = vrot.slane %v6581, 3
      %v6584 = vshll.u32 %v6434, 16
      %v6586 = vrot.slane %v6584, 4
      %v6587 = vor.u32 %v6583, %v6586
      %v6588 = vsel %vm1476, %v6578, %v6587
      %v6590 = vshrl.u32 %v6435, 16
      %v6592 = vrot.slane %v6590, 3
      %v6593 = vshll.u32 %v6435, 16
      %v6595 = vrot.slane %v6593, 4
      %v6596 = vor.u32 %v6592, %v6595
      %v6597 = vsel %vm1476, %v6587, %v6596
      %v6599 = vshrl.u32 %v6436, 16
      %v6601 = vrot.slane %v6599, 3
      %v6602 = vshll.u32 %v6436, 16
      %v6604 = vrot.slane %v6602, 4
      %v6605 = vor.u32 %v6601, %v6604
      %v6606 = vsel %vm1476, %v6596, %v6605
      %v6611 = vunpack.c.l.b16 %v6340
      %v6612 = vunpack.c.l.b16 %v6341
      %v6613 = vunpack.c.l.b16 %v6342
      %v6614 = vunpack.c.l.b16 %v6343
      %v6615 = vpack.c.b16 %v6612, %v6611
      %v6616 = vpack.c.b16 %v6614, %v6613
      %v6620 = vsel %vm873, %v6453, 0
      %v6623 = vsel %vm873, %v6462, 0
      %v6626 = vsel %vm873, %v6471, 0
      %v6629 = vsel %vm873, %v6480, 0
      %v6632 = vsel %vm873, %v6489, 0
      %v6635 = vsel %vm873, %v6498, 0
      %v6638 = vsel %vm873, %v6507, 0
      %v6641 = vsel %vm873, %v6516, 0
      %v6644 = vsel %vm873, %v6525, 0
      %v6647 = vsel %vm873, %v6534, 0
      %v6650 = vsel %vm873, %v6543, 0
      %v6653 = vsel %vm873, %v6552, 0
      %v6656 = vsel %vm873, %v6561, 0
      %v6659 = vsel %vm873, %v6570, 0
      %v6662 = vsel %vm873, %v6579, 0
      %v6665 = vsel %vm873, %v6588, 0
      %v6668 = vsel %vm873, %v6597, 0
      %v6671 = vsel %vm873, %v6606, 0
      %6673 = vmatprep.subr.bf16.mxu0 0
      %6674 = vmatpush1.bf16.msra.mxu0 0
      %6675 = vmatprep.subr.bf16.mxu0 0
      %6676 = vmatpush1.bf16.msra.mxu0 0
      %6677 = vmatprep.subr.bf16.mxu0 0
      %6678 = vmatpush1.bf16.msra.mxu0 0
      %6679 = vmatprep.subr.bf16.mxu0 0
      %6680 = vmatpush1.bf16.msra.mxu0 0
      %6681 = vmatprep.subr.bf16.mxu0 0
      %6682 = vmatpush1.bf16.msra.mxu0 0
      %6683 = vmatprep.subr.bf16.mxu0 0
      %6684 = vmatpush1.bf16.msra.mxu0 0
      %6685 = vmatprep.subr.bf16.mxu0 0
      %6686 = vmatpush1.bf16.msra.mxu0 %v6616
      %6687 = vmatprep.subr.bf16.mxu0 0
      %6688 = vmatpush1.bf16.msra.mxu0 %v6615
      %6689 = vmatprep.subr.bf16.mxu0 0
      %6690 = vmatpush2.bf16.msra.mxu0 0
      %6691 = vmatprep.subr.bf16.mxu0 0
      %6692 = vmatpush2.bf16.msra.mxu0 0
      %6693 = vmatprep.subr.bf16.mxu0 0
      %6694 = vmatpush2.bf16.msra.mxu0 0
      %6695 = vmatprep.subr.bf16.mxu0 0
      %6696 = vmatpush2.bf16.msra.mxu0 0
      %6697 = vmatprep.subr.bf16.mxu0 0
      %6698 = vmatpush2.bf16.msra.mxu0 0
      %6699 = vmatprep.subr.bf16.mxu0 0
      %6700 = vmatpush2.bf16.msra.mxu0 0
      %6701 = vmatprep.subr.bf16.mxu0 0
      %6702 = vmatpush2.bf16.msra.mxu0 0
      %6703 = vmatprep.subr.bf16.mxu0 0
      %6704 = vmatpush2.bf16.msra.mxu0 0
      %6705 = vmatprep.mubr.bf16.mxu0 0
      %6706 = vmatmul.mubr.bf16.gmra.mxu0 %v6620
      %v6707 = vpop.f32.mrf.mxu0
      %v6708 = vadd.f32 0.0, %v6707
      %v6709 = vpop.f32.mrf.mxu0
      %v6710 = vpop.f32.mrf.mxu0
      %v6711 = vadd.f32 0.0, %v6710
      %v6712 = vpop.f32.mrf.mxu0
      %6713 = vmatprep.mubr.bf16.mxu0 0
      %6714 = vmatmul.mubr.bf16.gmra.mxu0 %v6623
      %v6715 = vpop.f32.mrf.mxu0
      %v6716 = vadd.f32 0.0, %v6715
      %v6717 = vpop.f32.mrf.mxu0
      %v6718 = vpop.f32.mrf.mxu0
      %v6719 = vadd.f32 0.0, %v6718
      %v6720 = vpop.f32.mrf.mxu0
      %6721 = vmatprep.mubr.bf16.mxu0 0
      %6722 = vmatmul.mubr.bf16.gmra.mxu0 %v6626
      %v6723 = vpop.f32.mrf.mxu0
      %v6724 = vadd.f32 0.0, %v6723
      %v6725 = vpop.f32.mrf.mxu0
      %v6726 = vpop.f32.mrf.mxu0
      %v6727 = vadd.f32 0.0, %v6726
      %v6728 = vpop.f32.mrf.mxu0
      %6729 = vmatprep.mubr.bf16.mxu0 0
      %6730 = vmatmul.mubr.bf16.gmra.mxu0 %v6629
      %v6731 = vpop.f32.mrf.mxu0
      %v6732 = vadd.f32 0.0, %v6731
      %v6733 = vpop.f32.mrf.mxu0
      %v6734 = vpop.f32.mrf.mxu0
      %v6735 = vadd.f32 0.0, %v6734
      %v6736 = vpop.f32.mrf.mxu0
      %6737 = vmatprep.mubr.bf16.mxu0 0
      %6738 = vmatmul.mubr.bf16.gmra.mxu0 %v6632
      %v6739 = vpop.f32.mrf.mxu0
      %v6740 = vadd.f32 0.0, %v6739
      %v6741 = vpop.f32.mrf.mxu0
      %v6742 = vpop.f32.mrf.mxu0
      %v6743 = vadd.f32 0.0, %v6742
      %v6744 = vpop.f32.mrf.mxu0
      %6745 = vmatprep.mubr.bf16.mxu0 0
      %6746 = vmatmul.mubr.bf16.gmra.mxu0 %v6635
      %v6747 = vpop.f32.mrf.mxu0
      %v6748 = vadd.f32 0.0, %v6747
      %v6749 = vpop.f32.mrf.mxu0
      %v6750 = vpop.f32.mrf.mxu0
      %v6751 = vadd.f32 0.0, %v6750
      %v6752 = vpop.f32.mrf.mxu0
      %6753 = vmatprep.mubr.bf16.mxu0 0
      %6754 = vmatmul.mubr.bf16.gmra.mxu0 %v6638
      %v6755 = vpop.f32.mrf.mxu0
      %v6756 = vadd.f32 0.0, %v6755
      %v6757 = vpop.f32.mrf.mxu0
      %v6758 = vpop.f32.mrf.mxu0
      %v6759 = vadd.f32 0.0, %v6758
      %v6760 = vpop.f32.mrf.mxu0
      %6761 = vmatprep.mubr.bf16.mxu0 0
      %6762 = vmatmul.mubr.bf16.gmra.mxu0 %v6641
      %v6763 = vpop.f32.mrf.mxu0
      %v6764 = vadd.f32 0.0, %v6763
      %v6765 = vpop.f32.mrf.mxu0
      %v6766 = vpop.f32.mrf.mxu0
      %v6767 = vadd.f32 0.0, %v6766
      %v6768 = vpop.f32.mrf.mxu0
      %6769 = vmatprep.mubr.bf16.mxu0 0
      %6770 = vmatmul.mubr.bf16.gmra.mxu0 %v6644
      %v6771 = vpop.f32.mrf.mxu0
      %v6772 = vadd.f32 0.0, %v6771
      %v6773 = vpop.f32.mrf.mxu0
      %v6774 = vpop.f32.mrf.mxu0
      %v6775 = vadd.f32 0.0, %v6774
      %v6776 = vpop.f32.mrf.mxu0
      %6777 = vmatprep.mubr.bf16.mxu0 0
      %6778 = vmatmul.mubr.bf16.gmra.mxu0 %v6647
      %v6779 = vpop.f32.mrf.mxu0
      %v6780 = vadd.f32 0.0, %v6779
      %v6781 = vpop.f32.mrf.mxu0
      %v6782 = vpop.f32.mrf.mxu0
      %v6783 = vadd.f32 0.0, %v6782
      %v6784 = vpop.f32.mrf.mxu0
      %6785 = vmatprep.mubr.bf16.mxu0 0
      %6786 = vmatmul.mubr.bf16.gmra.mxu0 %v6650
      %v6787 = vpop.f32.mrf.mxu0
      %v6788 = vadd.f32 0.0, %v6787
      %v6789 = vpop.f32.mrf.mxu0
      %v6790 = vpop.f32.mrf.mxu0
      %v6791 = vadd.f32 0.0, %v6790
      %v6792 = vpop.f32.mrf.mxu0
      %6793 = vmatprep.mubr.bf16.mxu0 0
      %6794 = vmatmul.mubr.bf16.gmra.mxu0 %v6653
      %v6795 = vpop.f32.mrf.mxu0
      %v6796 = vadd.f32 0.0, %v6795
      %v6797 = vpop.f32.mrf.mxu0
      %v6798 = vpop.f32.mrf.mxu0
      %v6799 = vadd.f32 0.0, %v6798
      %v6800 = vpop.f32.mrf.mxu0
      %6801 = vmatprep.mubr.bf16.mxu0 0
      %6802 = vmatmul.mubr.bf16.gmra.mxu0 %v6656
      %v6803 = vpop.f32.mrf.mxu0
      %v6804 = vadd.f32 0.0, %v6803
      %v6805 = vpop.f32.mrf.mxu0
      %v6806 = vpop.f32.mrf.mxu0
      %v6807 = vadd.f32 0.0, %v6806
      %v6808 = vpop.f32.mrf.mxu0
      %6809 = vmatprep.mubr.bf16.mxu0 0
      %6810 = vmatmul.mubr.bf16.gmra.mxu0 %v6659
      %v6811 = vpop.f32.mrf.mxu0
      %v6812 = vadd.f32 0.0, %v6811
      %v6813 = vpop.f32.mrf.mxu0
      %v6814 = vpop.f32.mrf.mxu0
      %v6815 = vadd.f32 0.0, %v6814
      %v6816 = vpop.f32.mrf.mxu0
      %6817 = vmatprep.mubr.bf16.mxu0 0
      %6818 = vmatmul.mubr.bf16.gmra.mxu0 %v6662
      %v6819 = vpop.f32.mrf.mxu0
      %v6820 = vadd.f32 0.0, %v6819
      %v6821 = vpop.f32.mrf.mxu0
      %v6822 = vpop.f32.mrf.mxu0
      %v6823 = vadd.f32 0.0, %v6822
      %v6824 = vpop.f32.mrf.mxu0
      %6825 = vmatprep.mubr.bf16.mxu0 0
      %6826 = vmatmul.mubr.bf16.gmra.mxu0 %v6665
      %v6827 = vpop.f32.mrf.mxu0
      %v6828 = vadd.f32 0.0, %v6827
      %v6829 = vpop.f32.mrf.mxu0
      %v6830 = vpop.f32.mrf.mxu0
      %v6831 = vadd.f32 0.0, %v6830
      %v6832 = vpop.f32.mrf.mxu0
      %6833 = vmatprep.mubr.bf16.mxu0 0
      %6834 = vmatmul.mubr.bf16.gmra.mxu0 %v6668
      %v6835 = vpop.f32.mrf.mxu0
      %v6836 = vadd.f32 0.0, %v6835
      %v6837 = vpop.f32.mrf.mxu0
      %v6838 = vpop.f32.mrf.mxu0
      %v6839 = vadd.f32 0.0, %v6838
      %v6840 = vpop.f32.mrf.mxu0
      %6841 = vmatprep.mubr.bf16.mxu0 0
      %6842 = vmatmul.mubr.bf16.gmra.mxu0 %v6671
      %v6843 = vpop.f32.mrf.mxu0
      %v6844 = vadd.f32 0.0, %v6843
      %v6845 = vpop.f32.mrf.mxu0
      %v6846 = vpop.f32.mrf.mxu0
      %v6847 = vadd.f32 0.0, %v6846
      %v6848 = vpop.f32.mrf.mxu0
      %6849 = vdwg.mxu0
      %v6850 = vadd.f32 %v6266, %v6708
      %v6851 = vadd.f32 %v6267, %v6711
      %v6852 = vadd.f32 %v6268, %v6716
      %v6853 = vadd.f32 %v6269, %v6719
      %v6854 = vadd.f32 %v6270, %v6724
      %v6855 = vadd.f32 %v6271, %v6727
      %v6856 = vadd.f32 %v6272, %v6732
      %v6857 = vadd.f32 %v6273, %v6735
      %v6858 = vadd.f32 %v6274, %v6740
      %v6859 = vadd.f32 %v6275, %v6743
      %v6860 = vadd.f32 %v6276, %v6748
      %v6861 = vadd.f32 %v6277, %v6751
      %v6862 = vadd.f32 %v6278, %v6756
      %v6863 = vadd.f32 %v6279, %v6759
      %v6864 = vadd.f32 %v6280, %v6764
      %v6865 = vadd.f32 %v6281, %v6767
      %v6866 = vadd.f32 %v6282, %v6772
      %v6867 = vadd.f32 %v6283, %v6775
      %v6868 = vadd.f32 %v6284, %v6780
      %v6869 = vadd.f32 %v6285, %v6783
      %v6870 = vadd.f32 %v6286, %v6788
      %v6871 = vadd.f32 %v6287, %v6791
      %v6872 = vadd.f32 %v6288, %v6796
      %v6873 = vadd.f32 %v6289, %v6799
      %v6874 = vadd.f32 %v6290, %v6804
      %v6875 = vadd.f32 %v6291, %v6807
      %v6876 = vadd.f32 %v6292, %v6812
      %v6877 = vadd.f32 %v6293, %v6815
      %v6878 = vadd.f32 %v6294, %v6820
      %v6879 = vadd.f32 %v6295, %v6823
      %v6880 = vadd.f32 %v6296, %v6828
      %v6881 = vadd.f32 %v6297, %v6831
      %v6882 = vadd.f32 %v6298, %v6836
      %v6883 = vadd.f32 %v6299, %v6839
      %v6884 = vadd.f32 %v6300, %v6844
      %v6885 = vadd.f32 %v6301, %v6847
      %s6886 = scalar_lea.vmem %s3, 64
      %v6887 = vld [vmem:[%s6886] sm:$0xf]
      %v6888 = vld [vmem:[%s6886 + $0x4] sm:$0xf]
      %v6889 = vld [vmem:[%s6886 + $0x8] sm:$0xf]
      %v6890 = vld [vmem:[%s6886 + $0xc] sm:$0xf]
      %v6891 = vpack.c.b16 %v6383, %v6382
      %v6892 = vpack.c.b16 %v6385, %v6384
      %v6893 = vpack.c.b16 %v6387, %v6386
      %v6894 = vpack.c.b16 %v6389, %v6388
      %v6895 = vpack.c.b16 %v6391, %v6390
      %v6896 = vpack.c.b16 %v6393, %v6392
      %v6897 = vpack.c.b16 %v6395, %v6394
      %v6898 = vpack.c.b16 %v6397, %v6396
      %v6899 = vpack.c.b16 %v6399, %v6398
      %v6900 = vpack.c.b16 %v6401, %v6400
      %v6901 = vpack.c.b16 %v6403, %v6402
      %v6902 = vpack.c.b16 %v6405, %v6404
      %v6903 = vpack.c.b16 %v6407, %v6406
      %v6904 = vpack.c.b16 %v6409, %v6408
      %v6905 = vpack.c.b16 %v6411, %v6410
      %v6906 = vpack.c.b16 %v6413, %v6412
      %v6907 = vpack.c.b16 %v6415, %v6414
      %v6908 = vpack.c.b16 %v6417, %v6416
      %v6913 = vunpack.c.l.b16 %v6887
      %v6914 = vunpack.c.l.b16 %v6888
      %v6915 = vunpack.c.l.b16 %v6889
      %v6916 = vunpack.c.l.b16 %v6890
      %v6917 = vpack.c.b16 %v6914, %v6913
      %v6918 = vpack.c.b16 %v6916, %v6915
      %v6922 = vsel %vm873, %v6891, 0
      %v6925 = vsel %vm873, %v6892, 0
      %v6928 = vsel %vm873, %v6893, 0
      %v6931 = vsel %vm873, %v6894, 0
      %v6934 = vsel %vm873, %v6895, 0
      %v6937 = vsel %vm873, %v6896, 0
      %v6940 = vsel %vm873, %v6897, 0
      %v6943 = vsel %vm873, %v6898, 0
      %v6946 = vsel %vm873, %v6899, 0
      %v6949 = vsel %vm873, %v6900, 0
      %v6952 = vsel %vm873, %v6901, 0
      %v6955 = vsel %vm873, %v6902, 0
      %v6958 = vsel %vm873, %v6903, 0
      %v6961 = vsel %vm873, %v6904, 0
      %v6964 = vsel %vm873, %v6905, 0
      %v6967 = vsel %vm873, %v6906, 0
      %v6970 = vsel %vm873, %v6907, 0
      %v6973 = vsel %vm873, %v6908, 0
      %6975 = vmatprep.subr.bf16.mxu0 0
      %6976 = vmatpush1.bf16.msra.mxu0 0
      %6977 = vmatprep.subr.bf16.mxu0 0
      %6978 = vmatpush1.bf16.msra.mxu0 0
      %6979 = vmatprep.subr.bf16.mxu0 0
      %6980 = vmatpush1.bf16.msra.mxu0 0
      %6981 = vmatprep.subr.bf16.mxu0 0
      %6982 = vmatpush1.bf16.msra.mxu0 0
      %6983 = vmatprep.subr.bf16.mxu0 0
      %6984 = vmatpush1.bf16.msra.mxu0 0
      %6985 = vmatprep.subr.bf16.mxu0 0
      %6986 = vmatpush1.bf16.msra.mxu0 0
      %6987 = vmatprep.subr.bf16.mxu0 0
      %6988 = vmatpush1.bf16.msra.mxu0 %v6918
      %6989 = vmatprep.subr.bf16.mxu0 0
      %6990 = vmatpush1.bf16.msra.mxu0 %v6917
      %6991 = vmatprep.subr.bf16.mxu0 0
      %6992 = vmatpush2.bf16.msra.mxu0 0
      %6993 = vmatprep.subr.bf16.mxu0 0
      %6994 = vmatpush2.bf16.msra.mxu0 0
      %6995 = vmatprep.subr.bf16.mxu0 0
      %6996 = vmatpush2.bf16.msra.mxu0 0
      %6997 = vmatprep.subr.bf16.mxu0 0
      %6998 = vmatpush2.bf16.msra.mxu0 0
      %6999 = vmatprep.subr.bf16.mxu0 0
      %7000 = vmatpush2.bf16.msra.mxu0 0
      %7001 = vmatprep.subr.bf16.mxu0 0
      %7002 = vmatpush2.bf16.msra.mxu0 0
      %7003 = vmatprep.subr.bf16.mxu0 0
      %7004 = vmatpush2.bf16.msra.mxu0 0
      %7005 = vmatprep.subr.bf16.mxu0 0
      %7006 = vmatpush2.bf16.msra.mxu0 0
      %7007 = vmatprep.mubr.bf16.mxu0 0
      %7008 = vmatmul.mubr.bf16.gmra.mxu0 %v6922
      %v7009 = vpop.f32.mrf.mxu0
      %v7010 = vadd.f32 0.0, %v7009
      %v7011 = vpop.f32.mrf.mxu0
      %v7012 = vpop.f32.mrf.mxu0
      %v7013 = vadd.f32 0.0, %v7012
      %v7014 = vpop.f32.mrf.mxu0
      %7015 = vmatprep.mubr.bf16.mxu0 0
      %7016 = vmatmul.mubr.bf16.gmra.mxu0 %v6925
      %v7017 = vpop.f32.mrf.mxu0
      %v7018 = vadd.f32 0.0, %v7017
      %v7019 = vpop.f32.mrf.mxu0
      %v7020 = vpop.f32.mrf.mxu0
      %v7021 = vadd.f32 0.0, %v7020
      %v7022 = vpop.f32.mrf.mxu0
      %7023 = vmatprep.mubr.bf16.mxu0 0
      %7024 = vmatmul.mubr.bf16.gmra.mxu0 %v6928
      %v7025 = vpop.f32.mrf.mxu0
      %v7026 = vadd.f32 0.0, %v7025
      %v7027 = vpop.f32.mrf.mxu0
      %v7028 = vpop.f32.mrf.mxu0
      %v7029 = vadd.f32 0.0, %v7028
      %v7030 = vpop.f32.mrf.mxu0
      %7031 = vmatprep.mubr.bf16.mxu0 0
      %7032 = vmatmul.mubr.bf16.gmra.mxu0 %v6931
      %v7033 = vpop.f32.mrf.mxu0
      %v7034 = vadd.f32 0.0, %v7033
      %v7035 = vpop.f32.mrf.mxu0
      %v7036 = vpop.f32.mrf.mxu0
      %v7037 = vadd.f32 0.0, %v7036
      %v7038 = vpop.f32.mrf.mxu0
      %7039 = vmatprep.mubr.bf16.mxu0 0
      %7040 = vmatmul.mubr.bf16.gmra.mxu0 %v6934
      %v7041 = vpop.f32.mrf.mxu0
      %v7042 = vadd.f32 0.0, %v7041
      %v7043 = vpop.f32.mrf.mxu0
      %v7044 = vpop.f32.mrf.mxu0
      %v7045 = vadd.f32 0.0, %v7044
      %v7046 = vpop.f32.mrf.mxu0
      %7047 = vmatprep.mubr.bf16.mxu0 0
      %7048 = vmatmul.mubr.bf16.gmra.mxu0 %v6937
      %v7049 = vpop.f32.mrf.mxu0
      %v7050 = vadd.f32 0.0, %v7049
      %v7051 = vpop.f32.mrf.mxu0
      %v7052 = vpop.f32.mrf.mxu0
      %v7053 = vadd.f32 0.0, %v7052
      %v7054 = vpop.f32.mrf.mxu0
      %7055 = vmatprep.mubr.bf16.mxu0 0
      %7056 = vmatmul.mubr.bf16.gmra.mxu0 %v6940
      %v7057 = vpop.f32.mrf.mxu0
      %v7058 = vadd.f32 0.0, %v7057
      %v7059 = vpop.f32.mrf.mxu0
      %v7060 = vpop.f32.mrf.mxu0
      %v7061 = vadd.f32 0.0, %v7060
      %v7062 = vpop.f32.mrf.mxu0
      %7063 = vmatprep.mubr.bf16.mxu0 0
      %7064 = vmatmul.mubr.bf16.gmra.mxu0 %v6943
      %v7065 = vpop.f32.mrf.mxu0
      %v7066 = vadd.f32 0.0, %v7065
      %v7067 = vpop.f32.mrf.mxu0
      %v7068 = vpop.f32.mrf.mxu0
      %v7069 = vadd.f32 0.0, %v7068
      %v7070 = vpop.f32.mrf.mxu0
      %7071 = vmatprep.mubr.bf16.mxu0 0
      %7072 = vmatmul.mubr.bf16.gmra.mxu0 %v6946
      %v7073 = vpop.f32.mrf.mxu0
      %v7074 = vadd.f32 0.0, %v7073
      %v7075 = vpop.f32.mrf.mxu0
      %v7076 = vpop.f32.mrf.mxu0
      %v7077 = vadd.f32 0.0, %v7076
      %v7078 = vpop.f32.mrf.mxu0
      %7079 = vmatprep.mubr.bf16.mxu0 0
      %7080 = vmatmul.mubr.bf16.gmra.mxu0 %v6949
      %v7081 = vpop.f32.mrf.mxu0
      %v7082 = vadd.f32 0.0, %v7081
      %v7083 = vpop.f32.mrf.mxu0
      %v7084 = vpop.f32.mrf.mxu0
      %v7085 = vadd.f32 0.0, %v7084
      %v7086 = vpop.f32.mrf.mxu0
      %7087 = vmatprep.mubr.bf16.mxu0 0
      %7088 = vmatmul.mubr.bf16.gmra.mxu0 %v6952
      %v7089 = vpop.f32.mrf.mxu0
      %v7090 = vadd.f32 0.0, %v7089
      %v7091 = vpop.f32.mrf.mxu0
      %v7092 = vpop.f32.mrf.mxu0
      %v7093 = vadd.f32 0.0, %v7092
      %v7094 = vpop.f32.mrf.mxu0
      %7095 = vmatprep.mubr.bf16.mxu0 0
      %7096 = vmatmul.mubr.bf16.gmra.mxu0 %v6955
      %v7097 = vpop.f32.mrf.mxu0
      %v7098 = vadd.f32 0.0, %v7097
      %v7099 = vpop.f32.mrf.mxu0
      %v7100 = vpop.f32.mrf.mxu0
      %v7101 = vadd.f32 0.0, %v7100
      %v7102 = vpop.f32.mrf.mxu0
      %7103 = vmatprep.mubr.bf16.mxu0 0
      %7104 = vmatmul.mubr.bf16.gmra.mxu0 %v6958
      %v7105 = vpop.f32.mrf.mxu0
      %v7106 = vadd.f32 0.0, %v7105
      %v7107 = vpop.f32.mrf.mxu0
      %v7108 = vpop.f32.mrf.mxu0
      %v7109 = vadd.f32 0.0, %v7108
      %v7110 = vpop.f32.mrf.mxu0
      %7111 = vmatprep.mubr.bf16.mxu0 0
      %7112 = vmatmul.mubr.bf16.gmra.mxu0 %v6961
      %v7113 = vpop.f32.mrf.mxu0
      %v7114 = vadd.f32 0.0, %v7113
      %v7115 = vpop.f32.mrf.mxu0
      %v7116 = vpop.f32.mrf.mxu0
      %v7117 = vadd.f32 0.0, %v7116
      %v7118 = vpop.f32.mrf.mxu0
      %7119 = vmatprep.mubr.bf16.mxu0 0
      %7120 = vmatmul.mubr.bf16.gmra.mxu0 %v6964
      %v7121 = vpop.f32.mrf.mxu0
      %v7122 = vadd.f32 0.0, %v7121
      %v7123 = vpop.f32.mrf.mxu0
      %v7124 = vpop.f32.mrf.mxu0
      %v7125 = vadd.f32 0.0, %v7124
      %v7126 = vpop.f32.mrf.mxu0
      %7127 = vmatprep.mubr.bf16.mxu0 0
      %7128 = vmatmul.mubr.bf16.gmra.mxu0 %v6967
      %v7129 = vpop.f32.mrf.mxu0
      %v7130 = vadd.f32 0.0, %v7129
      %v7131 = vpop.f32.mrf.mxu0
      %v7132 = vpop.f32.mrf.mxu0
      %v7133 = vadd.f32 0.0, %v7132
      %v7134 = vpop.f32.mrf.mxu0
      %7135 = vmatprep.mubr.bf16.mxu0 0
      %7136 = vmatmul.mubr.bf16.gmra.mxu0 %v6970
      %v7137 = vpop.f32.mrf.mxu0
      %v7138 = vadd.f32 0.0, %v7137
      %v7139 = vpop.f32.mrf.mxu0
      %v7140 = vpop.f32.mrf.mxu0
      %v7141 = vadd.f32 0.0, %v7140
      %v7142 = vpop.f32.mrf.mxu0
      %7143 = vmatprep.mubr.bf16.mxu0 0
      %7144 = vmatmul.mubr.bf16.gmra.mxu0 %v6973
      %v7145 = vpop.f32.mrf.mxu0
      %v7146 = vadd.f32 0.0, %v7145
      %v7147 = vpop.f32.mrf.mxu0
      %v7148 = vpop.f32.mrf.mxu0
      %v7149 = vadd.f32 0.0, %v7148
      %v7150 = vpop.f32.mrf.mxu0
      %7151 = vdwg.mxu0
      %v7152 = vadd.f32 %v6850, %v7010
      %v7153 = vadd.f32 %v6851, %v7013
      %v7154 = vadd.f32 %v6852, %v7018
      %v7155 = vadd.f32 %v6853, %v7021
      %v7156 = vadd.f32 %v6854, %v7026
      %v7157 = vadd.f32 %v6855, %v7029
      %v7158 = vadd.f32 %v6856, %v7034
      %v7159 = vadd.f32 %v6857, %v7037
      %v7160 = vadd.f32 %v6858, %v7042
      %v7161 = vadd.f32 %v6859, %v7045
      %v7162 = vadd.f32 %v6860, %v7050
      %v7163 = vadd.f32 %v6861, %v7053
      %v7164 = vadd.f32 %v6862, %v7058
      %v7165 = vadd.f32 %v6863, %v7061
      %v7166 = vadd.f32 %v6864, %v7066
      %v7167 = vadd.f32 %v6865, %v7069
      %v7168 = vadd.f32 %v6866, %v7074
      %v7169 = vadd.f32 %v6867, %v7077
      %v7170 = vadd.f32 %v6868, %v7082
      %v7171 = vadd.f32 %v6869, %v7085
      %v7172 = vadd.f32 %v6870, %v7090
      %v7173 = vadd.f32 %v6871, %v7093
      %v7174 = vadd.f32 %v6872, %v7098
      %v7175 = vadd.f32 %v6873, %v7101
      %v7176 = vadd.f32 %v6874, %v7106
      %v7177 = vadd.f32 %v6875, %v7109
      %v7178 = vadd.f32 %v6876, %v7114
      %v7179 = vadd.f32 %v6877, %v7117
      %v7180 = vadd.f32 %v6878, %v7122
      %v7181 = vadd.f32 %v6879, %v7125
      %v7182 = vadd.f32 %v6880, %v7130
      %v7183 = vadd.f32 %v6881, %v7133
      %v7184 = vadd.f32 %v6882, %v7138
      %v7185 = vadd.f32 %v6883, %v7141
      %v7186 = vadd.f32 %v6884, %v7146
      %v7187 = vadd.f32 %v6885, %v7149
      %v7188 = vld [vmem:[#allocation2 + $0x10] sm:$0xf]
      %v7189 = vld [vmem:[#allocation2 + $0x14] sm:$0xf]
      %v7190 = vld [vmem:[#allocation2 + $0x18] sm:$0xf]
      %v7191 = vld [vmem:[#allocation2 + $0x1c] sm:$0xf]
      %v7192 = vld [vmem:[#allocation2 + $0x20] sm:$0xf]
      %v7193 = vld [vmem:[#allocation2 + $0x24] sm:$0xf]
      %v7194 = vld [vmem:[#allocation2 + $0x28] sm:$0xf]
      %v7195 = vld [vmem:[#allocation2 + $0x2c] sm:$0xf]
      %v7196 = vld [vmem:[#allocation2 + $0x30] sm:$0xf]
      %v7197 = vld [vmem:[#allocation2 + $0x34] sm:$0xf]
      %v7198 = vld [vmem:[#allocation2 + $0x38] sm:$0xf]
      %v7199 = vld [vmem:[#allocation2 + $0x3c] sm:$0xf]
      %v7200 = vld [vmem:[#allocation2 + $0x40] sm:$0xf]
      %v7201 = vld [vmem:[#allocation2 + $0x44] sm:$0xf]
      %v7202 = vld [vmem:[#allocation2 + $0x48] sm:$0xf]
      %v7203 = vld [vmem:[#allocation2 + $0x4c] sm:$0xf]
      %v7204 = vld [vmem:[#allocation2 + $0x50] sm:$0xf]
      %v7205 = vld [vmem:[#allocation2 + $0x54] sm:$0xf]
      %v7206 = vld [vmem:[#allocation2 + $0x58] sm:$0xf]
      %v7207 = vld [vmem:[#allocation2 + $0x5c] sm:$0xf]
      %v7208 = vld [vmem:[#allocation2 + $0x60] sm:$0xf]
      %v7209 = vld [vmem:[#allocation2 + $0x64] sm:$0xf]
      %v7210 = vld [vmem:[#allocation2 + $0x68] sm:$0xf]
      %v7211 = vld [vmem:[#allocation2 + $0x6c] sm:$0xf]
      %v7212 = vld [vmem:[#allocation2 + $0x70] sm:$0xf]
      %v7213 = vld [vmem:[#allocation2 + $0x74] sm:$0xf]
      %v7214 = vld [vmem:[#allocation2 + $0x78] sm:$0xf]
      %v7215 = vld [vmem:[#allocation2 + $0x7c] sm:$0xf]
      %v7216 = vld [vmem:[#allocation2 + $0x80] sm:$0xf]
      %v7217 = vld [vmem:[#allocation2 + $0x84] sm:$0xf]
      %v7218 = vld [vmem:[#allocation2 + $0x88] sm:$0xf]
      %v7219 = vld [vmem:[#allocation2 + $0x8c] sm:$0xf]
      %v7220 = vld [vmem:[#allocation2 + $0x90] sm:$0xf]
      %v7221 = vld [vmem:[#allocation2 + $0x94] sm:$0xf]
      %v7222 = vld [vmem:[#allocation2 + $0x98] sm:$0xf]
      %v7223 = vld [vmem:[#allocation2 + $0x9c] sm:$0xf]
      %v7224 = vld [vmem:[#allocation2 + $0xa0] sm:$0x1]
      %s7225 = scalar_lea.vmem %s3, 80
      %v7226 = vld [vmem:[%s7225] sm:$0xf]
      %v7227 = vld [vmem:[%s7225 + $0x4] sm:$0xf]
      %v7228 = vld [vmem:[%s7225 + $0x8] sm:$0xf]
      %v7229 = vld [vmem:[%s7225 + $0xc] sm:$0xf]
      %v7267 = vunpack.c.l.b16 %v7188
      %v7268 = vunpack.c.l.b16 %v7189
      %v7269 = vunpack.c.l.b16 %v7190
      %v7270 = vunpack.c.l.b16 %v7191
      %v7271 = vunpack.c.l.b16 %v7192
      %v7272 = vunpack.c.l.b16 %v7193
      %v7273 = vunpack.c.l.b16 %v7194
      %v7274 = vunpack.c.l.b16 %v7195
      %v7275 = vunpack.c.l.b16 %v7196
      %v7276 = vunpack.c.l.b16 %v7197
      %v7277 = vunpack.c.l.b16 %v7198
      %v7278 = vunpack.c.l.b16 %v7199
      %v7279 = vunpack.c.l.b16 %v7200
      %v7280 = vunpack.c.l.b16 %v7201
      %v7281 = vunpack.c.l.b16 %v7202
      %v7282 = vunpack.c.l.b16 %v7203
      %v7283 = vunpack.c.l.b16 %v7204
      %v7284 = vunpack.c.l.b16 %v7205
      %v7285 = vunpack.c.l.b16 %v7206
      %v7286 = vunpack.c.l.b16 %v7207
      %v7287 = vunpack.c.l.b16 %v7208
      %v7288 = vunpack.c.l.b16 %v7209
      %v7289 = vunpack.c.l.b16 %v7210
      %v7290 = vunpack.c.l.b16 %v7211
      %v7291 = vunpack.c.l.b16 %v7212
      %v7292 = vunpack.c.l.b16 %v7213
      %v7293 = vunpack.c.l.b16 %v7214
      %v7294 = vunpack.c.l.b16 %v7215
      %v7295 = vunpack.c.l.b16 %v7216
      %v7296 = vunpack.c.l.b16 %v7217
      %v7297 = vunpack.c.l.b16 %v7218
      %v7298 = vunpack.c.l.b16 %v7219
      %v7299 = vunpack.c.l.b16 %v7220
      %v7300 = vunpack.c.l.b16 %v7221
      %v7301 = vunpack.c.l.b16 %v7222
      %v7302 = vunpack.c.l.b16 %v7223
      %v7303 = vunpack.c.l.b16 %v7224
      %v7304 = vpack.c.b16 %v7268, %v7267
      %v7305 = vpack.c.b16 %v7270, %v7269
      %v7306 = vpack.c.b16 %v7272, %v7271
      %v7307 = vpack.c.b16 %v7274, %v7273
      %v7308 = vpack.c.b16 %v7276, %v7275
      %v7309 = vpack.c.b16 %v7278, %v7277
      %v7310 = vpack.c.b16 %v7280, %v7279
      %v7311 = vpack.c.b16 %v7282, %v7281
      %v7312 = vpack.c.b16 %v7284, %v7283
      %v7313 = vpack.c.b16 %v7286, %v7285
      %v7314 = vpack.c.b16 %v7288, %v7287
      %v7315 = vpack.c.b16 %v7290, %v7289
      %v7316 = vpack.c.b16 %v7292, %v7291
      %v7317 = vpack.c.b16 %v7294, %v7293
      %v7318 = vpack.c.b16 %v7296, %v7295
      %v7319 = vpack.c.b16 %v7298, %v7297
      %v7320 = vpack.c.b16 %v7300, %v7299
      %v7321 = vpack.c.b16 %v7302, %v7301
      %v7322 = vpack.c.b16 %v7303, %v7303
      %v7324 = vshrl.u32 %v7304, 16
      %v7326 = vshll.u32 %v7304, 16
      %v7328 = vrot.slane %v7326, 1
      %v7329 = vor.u32 %v7324, %v7328
      %v7331 = vshll.u32 %v7305, 16
      %v7333 = vrot.slane %v7331, 1
      %v7334 = vsel %vm2862, %v7329, %v7333
      %v7335 = vshrl.u32 %v7305, 16
      %v7337 = vor.u32 %v7335, %v7333
      %v7339 = vshll.u32 %v7306, 16
      %v7341 = vrot.slane %v7339, 1
      %v7342 = vsel %vm2862, %v7337, %v7341
      %v7343 = vshrl.u32 %v7306, 16
      %v7345 = vor.u32 %v7343, %v7341
      %v7347 = vshll.u32 %v7307, 16
      %v7349 = vrot.slane %v7347, 1
      %v7350 = vsel %vm2862, %v7345, %v7349
      %v7351 = vshrl.u32 %v7307, 16
      %v7353 = vor.u32 %v7351, %v7349
      %v7355 = vshll.u32 %v7308, 16
      %v7357 = vrot.slane %v7355, 1
      %v7358 = vsel %vm2862, %v7353, %v7357
      %v7359 = vshrl.u32 %v7308, 16
      %v7361 = vor.u32 %v7359, %v7357
      %v7363 = vshll.u32 %v7309, 16
      %v7365 = vrot.slane %v7363, 1
      %v7366 = vsel %vm2862, %v7361, %v7365
      %v7367 = vshrl.u32 %v7309, 16
      %v7369 = vor.u32 %v7367, %v7365
      %v7371 = vshll.u32 %v7310, 16
      %v7373 = vrot.slane %v7371, 1
      %v7374 = vsel %vm2862, %v7369, %v7373
      %v7375 = vshrl.u32 %v7310, 16
      %v7377 = vor.u32 %v7375, %v7373
      %v7379 = vshll.u32 %v7311, 16
      %v7381 = vrot.slane %v7379, 1
      %v7382 = vsel %vm2862, %v7377, %v7381
      %v7383 = vshrl.u32 %v7311, 16
      %v7385 = vor.u32 %v7383, %v7381
      %v7387 = vshll.u32 %v7312, 16
      %v7389 = vrot.slane %v7387, 1
      %v7390 = vsel %vm2862, %v7385, %v7389
      %v7391 = vshrl.u32 %v7312, 16
      %v7393 = vor.u32 %v7391, %v7389
      %v7395 = vshll.u32 %v7313, 16
      %v7397 = vrot.slane %v7395, 1
      %v7398 = vsel %vm2862, %v7393, %v7397
      %v7399 = vshrl.u32 %v7313, 16
      %v7401 = vor.u32 %v7399, %v7397
      %v7403 = vshll.u32 %v7314, 16
      %v7405 = vrot.slane %v7403, 1
      %v7406 = vsel %vm2862, %v7401, %v7405
      %v7407 = vshrl.u32 %v7314, 16
      %v7409 = vor.u32 %v7407, %v7405
      %v7411 = vshll.u32 %v7315, 16
      %v7413 = vrot.slane %v7411, 1
      %v7414 = vsel %vm2862, %v7409, %v7413
      %v7415 = vshrl.u32 %v7315, 16
      %v7417 = vor.u32 %v7415, %v7413
      %v7419 = vshll.u32 %v7316, 16
      %v7421 = vrot.slane %v7419, 1
      %v7422 = vsel %vm2862, %v7417, %v7421
      %v7423 = vshrl.u32 %v7316, 16
      %v7425 = vor.u32 %v7423, %v7421
      %v7427 = vshll.u32 %v7317, 16
      %v7429 = vrot.slane %v7427, 1
      %v7430 = vsel %vm2862, %v7425, %v7429
      %v7431 = vshrl.u32 %v7317, 16
      %v7433 = vor.u32 %v7431, %v7429
      %v7435 = vshll.u32 %v7318, 16
      %v7437 = vrot.slane %v7435, 1
      %v7438 = vsel %vm2862, %v7433, %v7437
      %v7439 = vshrl.u32 %v7318, 16
      %v7441 = vor.u32 %v7439, %v7437
      %v7443 = vshll.u32 %v7319, 16
      %v7445 = vrot.slane %v7443, 1
      %v7446 = vsel %vm2862, %v7441, %v7445
      %v7447 = vshrl.u32 %v7319, 16
      %v7449 = vor.u32 %v7447, %v7445
      %v7451 = vshll.u32 %v7320, 16
      %v7453 = vrot.slane %v7451, 1
      %v7454 = vsel %vm2862, %v7449, %v7453
      %v7455 = vshrl.u32 %v7320, 16
      %v7457 = vor.u32 %v7455, %v7453
      %v7459 = vshll.u32 %v7321, 16
      %v7461 = vrot.slane %v7459, 1
      %v7462 = vsel %vm2862, %v7457, %v7461
      %v7463 = vshrl.u32 %v7321, 16
      %v7465 = vor.u32 %v7463, %v7461
      %v7467 = vshll.u32 %v7322, 16
      %v7469 = vrot.slane %v7467, 1
      %v7470 = vsel %vm2862, %v7465, %v7469
      %v7475 = vunpack.c.l.b16 %v7226
      %v7476 = vunpack.c.l.b16 %v7227
      %v7477 = vunpack.c.l.b16 %v7228
      %v7478 = vunpack.c.l.b16 %v7229
      %v7479 = vpack.c.b16 %v7476, %v7475
      %v7480 = vpack.c.b16 %v7478, %v7477
      %v7484 = vsel %vm873, %v7334, 0
      %v7487 = vsel %vm873, %v7342, 0
      %v7490 = vsel %vm873, %v7350, 0
      %v7493 = vsel %vm873, %v7358, 0
      %v7496 = vsel %vm873, %v7366, 0
      %v7499 = vsel %vm873, %v7374, 0
      %v7502 = vsel %vm873, %v7382, 0
      %v7505 = vsel %vm873, %v7390, 0
      %v7508 = vsel %vm873, %v7398, 0
      %v7511 = vsel %vm873, %v7406, 0
      %v7514 = vsel %vm873, %v7414, 0
      %v7517 = vsel %vm873, %v7422, 0
      %v7520 = vsel %vm873, %v7430, 0
      %v7523 = vsel %vm873, %v7438, 0
      %v7526 = vsel %vm873, %v7446, 0
      %v7529 = vsel %vm873, %v7454, 0
      %v7532 = vsel %vm873, %v7462, 0
      %v7535 = vsel %vm873, %v7470, 0
      %7537 = vmatprep.subr.bf16.mxu0 0
      %7538 = vmatpush1.bf16.msra.mxu0 0
      %7539 = vmatprep.subr.bf16.mxu0 0
      %7540 = vmatpush1.bf16.msra.mxu0 0
      %7541 = vmatprep.subr.bf16.mxu0 0
      %7542 = vmatpush1.bf16.msra.mxu0 0
      %7543 = vmatprep.subr.bf16.mxu0 0
      %7544 = vmatpush1.bf16.msra.mxu0 0
      %7545 = vmatprep.subr.bf16.mxu0 0
      %7546 = vmatpush1.bf16.msra.mxu0 0
      %7547 = vmatprep.subr.bf16.mxu0 0
      %7548 = vmatpush1.bf16.msra.mxu0 0
      %7549 = vmatprep.subr.bf16.mxu0 0
      %7550 = vmatpush1.bf16.msra.mxu0 %v7480
      %7551 = vmatprep.subr.bf16.mxu0 0
      %7552 = vmatpush1.bf16.msra.mxu0 %v7479
      %7553 = vmatprep.subr.bf16.mxu0 0
      %7554 = vmatpush2.bf16.msra.mxu0 0
      %7555 = vmatprep.subr.bf16.mxu0 0
      %7556 = vmatpush2.bf16.msra.mxu0 0
      %7557 = vmatprep.subr.bf16.mxu0 0
      %7558 = vmatpush2.bf16.msra.mxu0 0
      %7559 = vmatprep.subr.bf16.mxu0 0
      %7560 = vmatpush2.bf16.msra.mxu0 0
      %7561 = vmatprep.subr.bf16.mxu0 0
      %7562 = vmatpush2.bf16.msra.mxu0 0
      %7563 = vmatprep.subr.bf16.mxu0 0
      %7564 = vmatpush2.bf16.msra.mxu0 0
      %7565 = vmatprep.subr.bf16.mxu0 0
      %7566 = vmatpush2.bf16.msra.mxu0 0
      %7567 = vmatprep.subr.bf16.mxu0 0
      %7568 = vmatpush2.bf16.msra.mxu0 0
      %7569 = vmatprep.mubr.bf16.mxu0 0
      %7570 = vmatmul.mubr.bf16.gmra.mxu0 %v7484
      %v7571 = vpop.f32.mrf.mxu0
      %v7572 = vadd.f32 0.0, %v7571
      %v7573 = vpop.f32.mrf.mxu0
      %v7574 = vpop.f32.mrf.mxu0
      %v7575 = vadd.f32 0.0, %v7574
      %v7576 = vpop.f32.mrf.mxu0
      %7577 = vmatprep.mubr.bf16.mxu0 0
      %7578 = vmatmul.mubr.bf16.gmra.mxu0 %v7487
      %v7579 = vpop.f32.mrf.mxu0
      %v7580 = vadd.f32 0.0, %v7579
      %v7581 = vpop.f32.mrf.mxu0
      %v7582 = vpop.f32.mrf.mxu0
      %v7583 = vadd.f32 0.0, %v7582
      %v7584 = vpop.f32.mrf.mxu0
      %7585 = vmatprep.mubr.bf16.mxu0 0
      %7586 = vmatmul.mubr.bf16.gmra.mxu0 %v7490
      %v7587 = vpop.f32.mrf.mxu0
      %v7588 = vadd.f32 0.0, %v7587
      %v7589 = vpop.f32.mrf.mxu0
      %v7590 = vpop.f32.mrf.mxu0
      %v7591 = vadd.f32 0.0, %v7590
      %v7592 = vpop.f32.mrf.mxu0
      %7593 = vmatprep.mubr.bf16.mxu0 0
      %7594 = vmatmul.mubr.bf16.gmra.mxu0 %v7493
      %v7595 = vpop.f32.mrf.mxu0
      %v7596 = vadd.f32 0.0, %v7595
      %v7597 = vpop.f32.mrf.mxu0
      %v7598 = vpop.f32.mrf.mxu0
      %v7599 = vadd.f32 0.0, %v7598
      %v7600 = vpop.f32.mrf.mxu0
      %7601 = vmatprep.mubr.bf16.mxu0 0
      %7602 = vmatmul.mubr.bf16.gmra.mxu0 %v7496
      %v7603 = vpop.f32.mrf.mxu0
      %v7604 = vadd.f32 0.0, %v7603
      %v7605 = vpop.f32.mrf.mxu0
      %v7606 = vpop.f32.mrf.mxu0
      %v7607 = vadd.f32 0.0, %v7606
      %v7608 = vpop.f32.mrf.mxu0
      %7609 = vmatprep.mubr.bf16.mxu0 0
      %7610 = vmatmul.mubr.bf16.gmra.mxu0 %v7499
      %v7611 = vpop.f32.mrf.mxu0
      %v7612 = vadd.f32 0.0, %v7611
      %v7613 = vpop.f32.mrf.mxu0
      %v7614 = vpop.f32.mrf.mxu0
      %v7615 = vadd.f32 0.0, %v7614
      %v7616 = vpop.f32.mrf.mxu0
      %7617 = vmatprep.mubr.bf16.mxu0 0
      %7618 = vmatmul.mubr.bf16.gmra.mxu0 %v7502
      %v7619 = vpop.f32.mrf.mxu0
      %v7620 = vadd.f32 0.0, %v7619
      %v7621 = vpop.f32.mrf.mxu0
      %v7622 = vpop.f32.mrf.mxu0
      %v7623 = vadd.f32 0.0, %v7622
      %v7624 = vpop.f32.mrf.mxu0
      %7625 = vmatprep.mubr.bf16.mxu0 0
      %7626 = vmatmul.mubr.bf16.gmra.mxu0 %v7505
      %v7627 = vpop.f32.mrf.mxu0
      %v7628 = vadd.f32 0.0, %v7627
      %v7629 = vpop.f32.mrf.mxu0
      %v7630 = vpop.f32.mrf.mxu0
      %v7631 = vadd.f32 0.0, %v7630
      %v7632 = vpop.f32.mrf.mxu0
      %7633 = vmatprep.mubr.bf16.mxu0 0
      %7634 = vmatmul.mubr.bf16.gmra.mxu0 %v7508
      %v7635 = vpop.f32.mrf.mxu0
      %v7636 = vadd.f32 0.0, %v7635
      %v7637 = vpop.f32.mrf.mxu0
      %v7638 = vpop.f32.mrf.mxu0
      %v7639 = vadd.f32 0.0, %v7638
      %v7640 = vpop.f32.mrf.mxu0
      %7641 = vmatprep.mubr.bf16.mxu0 0
      %7642 = vmatmul.mubr.bf16.gmra.mxu0 %v7511
      %v7643 = vpop.f32.mrf.mxu0
      %v7644 = vadd.f32 0.0, %v7643
      %v7645 = vpop.f32.mrf.mxu0
      %v7646 = vpop.f32.mrf.mxu0
      %v7647 = vadd.f32 0.0, %v7646
      %v7648 = vpop.f32.mrf.mxu0
      %7649 = vmatprep.mubr.bf16.mxu0 0
      %7650 = vmatmul.mubr.bf16.gmra.mxu0 %v7514
      %v7651 = vpop.f32.mrf.mxu0
      %v7652 = vadd.f32 0.0, %v7651
      %v7653 = vpop.f32.mrf.mxu0
      %v7654 = vpop.f32.mrf.mxu0
      %v7655 = vadd.f32 0.0, %v7654
      %v7656 = vpop.f32.mrf.mxu0
      %7657 = vmatprep.mubr.bf16.mxu0 0
      %7658 = vmatmul.mubr.bf16.gmra.mxu0 %v7517
      %v7659 = vpop.f32.mrf.mxu0
      %v7660 = vadd.f32 0.0, %v7659
      %v7661 = vpop.f32.mrf.mxu0
      %v7662 = vpop.f32.mrf.mxu0
      %v7663 = vadd.f32 0.0, %v7662
      %v7664 = vpop.f32.mrf.mxu0
      %7665 = vmatprep.mubr.bf16.mxu0 0
      %7666 = vmatmul.mubr.bf16.gmra.mxu0 %v7520
      %v7667 = vpop.f32.mrf.mxu0
      %v7668 = vadd.f32 0.0, %v7667
      %v7669 = vpop.f32.mrf.mxu0
      %v7670 = vpop.f32.mrf.mxu0
      %v7671 = vadd.f32 0.0, %v7670
      %v7672 = vpop.f32.mrf.mxu0
      %7673 = vmatprep.mubr.bf16.mxu0 0
      %7674 = vmatmul.mubr.bf16.gmra.mxu0 %v7523
      %v7675 = vpop.f32.mrf.mxu0
      %v7676 = vadd.f32 0.0, %v7675
      %v7677 = vpop.f32.mrf.mxu0
      %v7678 = vpop.f32.mrf.mxu0
      %v7679 = vadd.f32 0.0, %v7678
      %v7680 = vpop.f32.mrf.mxu0
      %7681 = vmatprep.mubr.bf16.mxu0 0
      %7682 = vmatmul.mubr.bf16.gmra.mxu0 %v7526
      %v7683 = vpop.f32.mrf.mxu0
      %v7684 = vadd.f32 0.0, %v7683
      %v7685 = vpop.f32.mrf.mxu0
      %v7686 = vpop.f32.mrf.mxu0
      %v7687 = vadd.f32 0.0, %v7686
      %v7688 = vpop.f32.mrf.mxu0
      %7689 = vmatprep.mubr.bf16.mxu0 0
      %7690 = vmatmul.mubr.bf16.gmra.mxu0 %v7529
      %v7691 = vpop.f32.mrf.mxu0
      %v7692 = vadd.f32 0.0, %v7691
      %v7693 = vpop.f32.mrf.mxu0
      %v7694 = vpop.f32.mrf.mxu0
      %v7695 = vadd.f32 0.0, %v7694
      %v7696 = vpop.f32.mrf.mxu0
      %7697 = vmatprep.mubr.bf16.mxu0 0
      %7698 = vmatmul.mubr.bf16.gmra.mxu0 %v7532
      %v7699 = vpop.f32.mrf.mxu0
      %v7700 = vadd.f32 0.0, %v7699
      %v7701 = vpop.f32.mrf.mxu0
      %v7702 = vpop.f32.mrf.mxu0
      %v7703 = vadd.f32 0.0, %v7702
      %v7704 = vpop.f32.mrf.mxu0
      %7705 = vmatprep.mubr.bf16.mxu0 0
      %7706 = vmatmul.mubr.bf16.gmra.mxu0 %v7535
      %v7707 = vpop.f32.mrf.mxu0
      %v7708 = vadd.f32 0.0, %v7707
      %v7709 = vpop.f32.mrf.mxu0
      %v7710 = vpop.f32.mrf.mxu0
      %v7711 = vadd.f32 0.0, %v7710
      %v7712 = vpop.f32.mrf.mxu0
      %7713 = vdwg.mxu0
      %v7714 = vadd.f32 %v7152, %v7572
      %v7715 = vadd.f32 %v7153, %v7575
      %v7716 = vadd.f32 %v7154, %v7580
      %v7717 = vadd.f32 %v7155, %v7583
      %v7718 = vadd.f32 %v7156, %v7588
      %v7719 = vadd.f32 %v7157, %v7591
      %v7720 = vadd.f32 %v7158, %v7596
      %v7721 = vadd.f32 %v7159, %v7599
      %v7722 = vadd.f32 %v7160, %v7604
      %v7723 = vadd.f32 %v7161, %v7607
      %v7724 = vadd.f32 %v7162, %v7612
      %v7725 = vadd.f32 %v7163, %v7615
      %v7726 = vadd.f32 %v7164, %v7620
      %v7727 = vadd.f32 %v7165, %v7623
      %v7728 = vadd.f32 %v7166, %v7628
      %v7729 = vadd.f32 %v7167, %v7631
      %v7730 = vadd.f32 %v7168, %v7636
      %v7731 = vadd.f32 %v7169, %v7639
      %v7732 = vadd.f32 %v7170, %v7644
      %v7733 = vadd.f32 %v7171, %v7647
      %v7734 = vadd.f32 %v7172, %v7652
      %v7735 = vadd.f32 %v7173, %v7655
      %v7736 = vadd.f32 %v7174, %v7660
      %v7737 = vadd.f32 %v7175, %v7663
      %v7738 = vadd.f32 %v7176, %v7668
      %v7739 = vadd.f32 %v7177, %v7671
      %v7740 = vadd.f32 %v7178, %v7676
      %v7741 = vadd.f32 %v7179, %v7679
      %v7742 = vadd.f32 %v7180, %v7684
      %v7743 = vadd.f32 %v7181, %v7687
      %v7744 = vadd.f32 %v7182, %v7692
      %v7745 = vadd.f32 %v7183, %v7695
      %v7746 = vadd.f32 %v7184, %v7700
      %v7747 = vadd.f32 %v7185, %v7703
      %v7748 = vadd.f32 %v7186, %v7708
      %v7749 = vadd.f32 %v7187, %v7711
      %v7750 = vld [vmem:[#allocation2 + $0x18] sm:$0xf]
      %v7751 = vld [vmem:[#allocation2 + $0x1c] sm:$0xf]
      %v7752 = vld [vmem:[#allocation2 + $0x20] sm:$0xf]
      %v7753 = vld [vmem:[#allocation2 + $0x24] sm:$0xf]
      %v7754 = vld [vmem:[#allocation2 + $0x28] sm:$0xf]
      %v7755 = vld [vmem:[#allocation2 + $0x2c] sm:$0xf]
      %v7756 = vld [vmem:[#allocation2 + $0x30] sm:$0xf]
      %v7757 = vld [vmem:[#allocation2 + $0x34] sm:$0xf]
      %v7758 = vld [vmem:[#allocation2 + $0x38] sm:$0xf]
      %v7759 = vld [vmem:[#allocation2 + $0x3c] sm:$0xf]
      %v7760 = vld [vmem:[#allocation2 + $0x40] sm:$0xf]
      %v7761 = vld [vmem:[#allocation2 + $0x44] sm:$0xf]
      %v7762 = vld [vmem:[#allocation2 + $0x48] sm:$0xf]
      %v7763 = vld [vmem:[#allocation2 + $0x4c] sm:$0xf]
      %v7764 = vld [vmem:[#allocation2 + $0x50] sm:$0xf]
      %v7765 = vld [vmem:[#allocation2 + $0x54] sm:$0xf]
      %v7766 = vld [vmem:[#allocation2 + $0x58] sm:$0xf]
      %v7767 = vld [vmem:[#allocation2 + $0x5c] sm:$0xf]
      %v7768 = vld [vmem:[#allocation2 + $0x60] sm:$0xf]
      %v7769 = vld [vmem:[#allocation2 + $0x64] sm:$0xf]
      %v7770 = vld [vmem:[#allocation2 + $0x68] sm:$0xf]
      %v7771 = vld [vmem:[#allocation2 + $0x6c] sm:$0xf]
      %v7772 = vld [vmem:[#allocation2 + $0x70] sm:$0xf]
      %v7773 = vld [vmem:[#allocation2 + $0x74] sm:$0xf]
      %v7774 = vld [vmem:[#allocation2 + $0x78] sm:$0xf]
      %v7775 = vld [vmem:[#allocation2 + $0x7c] sm:$0xf]
      %v7776 = vld [vmem:[#allocation2 + $0x80] sm:$0xf]
      %v7777 = vld [vmem:[#allocation2 + $0x84] sm:$0xf]
      %v7778 = vld [vmem:[#allocation2 + $0x88] sm:$0xf]
      %v7779 = vld [vmem:[#allocation2 + $0x8c] sm:$0xf]
      %v7780 = vld [vmem:[#allocation2 + $0x90] sm:$0xf]
      %v7781 = vld [vmem:[#allocation2 + $0x94] sm:$0xf]
      %v7782 = vld [vmem:[#allocation2 + $0x98] sm:$0xf]
      %v7783 = vld [vmem:[#allocation2 + $0x9c] sm:$0xf]
      %v7784 = vld [vmem:[#allocation2 + $0xa0] sm:$0xf]
      %v7785 = vld [vmem:[#allocation2 + $0xa4] sm:$0xf]
      %v7786 = vld [vmem:[#allocation2 + $0xa8] sm:$0x1]
      %s7787 = scalar_lea.vmem %s3, 96
      %v7788 = vld [vmem:[%s7787] sm:$0xf]
      %v7789 = vld [vmem:[%s7787 + $0x4] sm:$0xf]
      %v7790 = vld [vmem:[%s7787 + $0x8] sm:$0xf]
      %v7791 = vld [vmem:[%s7787 + $0xc] sm:$0xf]
      %v7829 = vunpack.c.l.b16 %v7750
      %v7830 = vunpack.c.l.b16 %v7751
      %v7831 = vunpack.c.l.b16 %v7752
      %v7832 = vunpack.c.l.b16 %v7753
      %v7833 = vunpack.c.l.b16 %v7754
      %v7834 = vunpack.c.l.b16 %v7755
      %v7835 = vunpack.c.l.b16 %v7756
      %v7836 = vunpack.c.l.b16 %v7757
      %v7837 = vunpack.c.l.b16 %v7758
      %v7838 = vunpack.c.l.b16 %v7759
      %v7839 = vunpack.c.l.b16 %v7760
      %v7840 = vunpack.c.l.b16 %v7761
      %v7841 = vunpack.c.l.b16 %v7762
      %v7842 = vunpack.c.l.b16 %v7763
      %v7843 = vunpack.c.l.b16 %v7764
      %v7844 = vunpack.c.l.b16 %v7765
      %v7845 = vunpack.c.l.b16 %v7766
      %v7846 = vunpack.c.l.b16 %v7767
      %v7847 = vunpack.c.l.b16 %v7768
      %v7848 = vunpack.c.l.b16 %v7769
      %v7849 = vunpack.c.l.b16 %v7770
      %v7850 = vunpack.c.l.b16 %v7771
      %v7851 = vunpack.c.l.b16 %v7772
      %v7852 = vunpack.c.l.b16 %v7773
      %v7853 = vunpack.c.l.b16 %v7774
      %v7854 = vunpack.c.l.b16 %v7775
      %v7855 = vunpack.c.l.b16 %v7776
      %v7856 = vunpack.c.l.b16 %v7777
      %v7857 = vunpack.c.l.b16 %v7778
      %v7858 = vunpack.c.l.b16 %v7779
      %v7859 = vunpack.c.l.b16 %v7780
      %v7860 = vunpack.c.l.b16 %v7781
      %v7861 = vunpack.c.l.b16 %v7782
      %v7862 = vunpack.c.l.b16 %v7783
      %v7863 = vunpack.c.l.b16 %v7784
      %v7864 = vunpack.c.l.b16 %v7785
      %v7865 = vunpack.c.l.b16 %v7786
      %v7866 = vpack.c.b16 %v7830, %v7829
      %v7867 = vpack.c.b16 %v7832, %v7831
      %v7868 = vpack.c.b16 %v7834, %v7833
      %v7869 = vpack.c.b16 %v7836, %v7835
      %v7870 = vpack.c.b16 %v7838, %v7837
      %v7871 = vpack.c.b16 %v7840, %v7839
      %v7872 = vpack.c.b16 %v7842, %v7841
      %v7873 = vpack.c.b16 %v7844, %v7843
      %v7874 = vpack.c.b16 %v7846, %v7845
      %v7875 = vpack.c.b16 %v7848, %v7847
      %v7876 = vpack.c.b16 %v7850, %v7849
      %v7877 = vpack.c.b16 %v7852, %v7851
      %v7878 = vpack.c.b16 %v7854, %v7853
      %v7879 = vpack.c.b16 %v7856, %v7855
      %v7880 = vpack.c.b16 %v7858, %v7857
      %v7881 = vpack.c.b16 %v7860, %v7859
      %v7882 = vpack.c.b16 %v7862, %v7861
      %v7883 = vpack.c.b16 %v7864, %v7863
      %v7884 = vpack.c.b16 %v7865, %v7865
      %v7886 = vshrl.u32 %v7866, 16
      %v7888 = vshll.u32 %v7866, 16
      %v7890 = vrot.slane %v7888, 1
      %v7891 = vor.u32 %v7886, %v7890
      %v7893 = vshll.u32 %v7867, 16
      %v7895 = vrot.slane %v7893, 1
      %v7896 = vsel %vm2862, %v7891, %v7895
      %v7897 = vshrl.u32 %v7867, 16
      %v7899 = vor.u32 %v7897, %v7895
      %v7901 = vshll.u32 %v7868, 16
      %v7903 = vrot.slane %v7901, 1
      %v7904 = vsel %vm2862, %v7899, %v7903
      %v7905 = vshrl.u32 %v7868, 16
      %v7907 = vor.u32 %v7905, %v7903
      %v7909 = vshll.u32 %v7869, 16
      %v7911 = vrot.slane %v7909, 1
      %v7912 = vsel %vm2862, %v7907, %v7911
      %v7913 = vshrl.u32 %v7869, 16
      %v7915 = vor.u32 %v7913, %v7911
      %v7917 = vshll.u32 %v7870, 16
      %v7919 = vrot.slane %v7917, 1
      %v7920 = vsel %vm2862, %v7915, %v7919
      %v7921 = vshrl.u32 %v7870, 16
      %v7923 = vor.u32 %v7921, %v7919
      %v7925 = vshll.u32 %v7871, 16
      %v7927 = vrot.slane %v7925, 1
      %v7928 = vsel %vm2862, %v7923, %v7927
      %v7929 = vshrl.u32 %v7871, 16
      %v7931 = vor.u32 %v7929, %v7927
      %v7933 = vshll.u32 %v7872, 16
      %v7935 = vrot.slane %v7933, 1
      %v7936 = vsel %vm2862, %v7931, %v7935
      %v7937 = vshrl.u32 %v7872, 16
      %v7939 = vor.u32 %v7937, %v7935
      %v7941 = vshll.u32 %v7873, 16
      %v7943 = vrot.slane %v7941, 1
      %v7944 = vsel %vm2862, %v7939, %v7943
      %v7945 = vshrl.u32 %v7873, 16
      %v7947 = vor.u32 %v7945, %v7943
      %v7949 = vshll.u32 %v7874, 16
      %v7951 = vrot.slane %v7949, 1
      %v7952 = vsel %vm2862, %v7947, %v7951
      %v7953 = vshrl.u32 %v7874, 16
      %v7955 = vor.u32 %v7953, %v7951
      %v7957 = vshll.u32 %v7875, 16
      %v7959 = vrot.slane %v7957, 1
      %v7960 = vsel %vm2862, %v7955, %v7959
      %v7961 = vshrl.u32 %v7875, 16
      %v7963 = vor.u32 %v7961, %v7959
      %v7965 = vshll.u32 %v7876, 16
      %v7967 = vrot.slane %v7965, 1
      %v7968 = vsel %vm2862, %v7963, %v7967
      %v7969 = vshrl.u32 %v7876, 16
      %v7971 = vor.u32 %v7969, %v7967
      %v7973 = vshll.u32 %v7877, 16
      %v7975 = vrot.slane %v7973, 1
      %v7976 = vsel %vm2862, %v7971, %v7975
      %v7977 = vshrl.u32 %v7877, 16
      %v7979 = vor.u32 %v7977, %v7975
      %v7981 = vshll.u32 %v7878, 16
      %v7983 = vrot.slane %v7981, 1
      %v7984 = vsel %vm2862, %v7979, %v7983
      %v7985 = vshrl.u32 %v7878, 16
      %v7987 = vor.u32 %v7985, %v7983
      %v7989 = vshll.u32 %v7879, 16
      %v7991 = vrot.slane %v7989, 1
      %v7992 = vsel %vm2862, %v7987, %v7991
      %v7993 = vshrl.u32 %v7879, 16
      %v7995 = vor.u32 %v7993, %v7991
      %v7997 = vshll.u32 %v7880, 16
      %v7999 = vrot.slane %v7997, 1
      %v8000 = vsel %vm2862, %v7995, %v7999
      %v8001 = vshrl.u32 %v7880, 16
      %v8003 = vor.u32 %v8001, %v7999
      %v8005 = vshll.u32 %v7881, 16
      %v8007 = vrot.slane %v8005, 1
      %v8008 = vsel %vm2862, %v8003, %v8007
      %v8009 = vshrl.u32 %v7881, 16
      %v8011 = vor.u32 %v8009, %v8007
      %v8013 = vshll.u32 %v7882, 16
      %v8015 = vrot.slane %v8013, 1
      %v8016 = vsel %vm2862, %v8011, %v8015
      %v8017 = vshrl.u32 %v7882, 16
      %v8019 = vor.u32 %v8017, %v8015
      %v8021 = vshll.u32 %v7883, 16
      %v8023 = vrot.slane %v8021, 1
      %v8024 = vsel %vm2862, %v8019, %v8023
      %v8025 = vshrl.u32 %v7883, 16
      %v8027 = vor.u32 %v8025, %v8023
      %v8029 = vshll.u32 %v7884, 16
      %v8031 = vrot.slane %v8029, 1
      %v8032 = vsel %vm2862, %v8027, %v8031
      %v8037 = vunpack.c.l.b16 %v7788
      %v8038 = vunpack.c.l.b16 %v7789
      %v8039 = vunpack.c.l.b16 %v7790
      %v8040 = vunpack.c.l.b16 %v7791
      %v8041 = vpack.c.b16 %v8038, %v8037
      %v8042 = vpack.c.b16 %v8040, %v8039
      %v8046 = vsel %vm873, %v7896, 0
      %v8049 = vsel %vm873, %v7904, 0
      %v8052 = vsel %vm873, %v7912, 0
      %v8055 = vsel %vm873, %v7920, 0
      %v8058 = vsel %vm873, %v7928, 0
      %v8061 = vsel %vm873, %v7936, 0
      %v8064 = vsel %vm873, %v7944, 0
      %v8067 = vsel %vm873, %v7952, 0
      %v8070 = vsel %vm873, %v7960, 0
      %v8073 = vsel %vm873, %v7968, 0
      %v8076 = vsel %vm873, %v7976, 0
      %v8079 = vsel %vm873, %v7984, 0
      %v8082 = vsel %vm873, %v7992, 0
      %v8085 = vsel %vm873, %v8000, 0
      %v8088 = vsel %vm873, %v8008, 0
      %v8091 = vsel %vm873, %v8016, 0
      %v8094 = vsel %vm873, %v8024, 0
      %v8097 = vsel %vm873, %v8032, 0
      %8099 = vmatprep.subr.bf16.mxu0 0
      %8100 = vmatpush1.bf16.msra.mxu0 0
      %8101 = vmatprep.subr.bf16.mxu0 0
      %8102 = vmatpush1.bf16.msra.mxu0 0
      %8103 = vmatprep.subr.bf16.mxu0 0
      %8104 = vmatpush1.bf16.msra.mxu0 0
      %8105 = vmatprep.subr.bf16.mxu0 0
      %8106 = vmatpush1.bf16.msra.mxu0 0
      %8107 = vmatprep.subr.bf16.mxu0 0
      %8108 = vmatpush1.bf16.msra.mxu0 0
      %8109 = vmatprep.subr.bf16.mxu0 0
      %8110 = vmatpush1.bf16.msra.mxu0 0
      %8111 = vmatprep.subr.bf16.mxu0 0
      %8112 = vmatpush1.bf16.msra.mxu0 %v8042
      %8113 = vmatprep.subr.bf16.mxu0 0
      %8114 = vmatpush1.bf16.msra.mxu0 %v8041
      %8115 = vmatprep.subr.bf16.mxu0 0
      %8116 = vmatpush2.bf16.msra.mxu0 0
      %8117 = vmatprep.subr.bf16.mxu0 0
      %8118 = vmatpush2.bf16.msra.mxu0 0
      %8119 = vmatprep.subr.bf16.mxu0 0
      %8120 = vmatpush2.bf16.msra.mxu0 0
      %8121 = vmatprep.subr.bf16.mxu0 0
      %8122 = vmatpush2.bf16.msra.mxu0 0
      %8123 = vmatprep.subr.bf16.mxu0 0
      %8124 = vmatpush2.bf16.msra.mxu0 0
      %8125 = vmatprep.subr.bf16.mxu0 0
      %8126 = vmatpush2.bf16.msra.mxu0 0
      %8127 = vmatprep.subr.bf16.mxu0 0
      %8128 = vmatpush2.bf16.msra.mxu0 0
      %8129 = vmatprep.subr.bf16.mxu0 0
      %8130 = vmatpush2.bf16.msra.mxu0 0
      %8131 = vmatprep.mubr.bf16.mxu0 0
      %8132 = vmatmul.mubr.bf16.gmra.mxu0 %v8046
      %v8133 = vpop.f32.mrf.mxu0
      %v8134 = vadd.f32 0.0, %v8133
      %v8135 = vpop.f32.mrf.mxu0
      %v8136 = vpop.f32.mrf.mxu0
      %v8137 = vadd.f32 0.0, %v8136
      %v8138 = vpop.f32.mrf.mxu0
      %8139 = vmatprep.mubr.bf16.mxu0 0
      %8140 = vmatmul.mubr.bf16.gmra.mxu0 %v8049
      %v8141 = vpop.f32.mrf.mxu0
      %v8142 = vadd.f32 0.0, %v8141
      %v8143 = vpop.f32.mrf.mxu0
      %v8144 = vpop.f32.mrf.mxu0
      %v8145 = vadd.f32 0.0, %v8144
      %v8146 = vpop.f32.mrf.mxu0
      %8147 = vmatprep.mubr.bf16.mxu0 0
      %8148 = vmatmul.mubr.bf16.gmra.mxu0 %v8052
      %v8149 = vpop.f32.mrf.mxu0
      %v8150 = vadd.f32 0.0, %v8149
      %v8151 = vpop.f32.mrf.mxu0
      %v8152 = vpop.f32.mrf.mxu0
      %v8153 = vadd.f32 0.0, %v8152
      %v8154 = vpop.f32.mrf.mxu0
      %8155 = vmatprep.mubr.bf16.mxu0 0
      %8156 = vmatmul.mubr.bf16.gmra.mxu0 %v8055
      %v8157 = vpop.f32.mrf.mxu0
      %v8158 = vadd.f32 0.0, %v8157
      %v8159 = vpop.f32.mrf.mxu0
      %v8160 = vpop.f32.mrf.mxu0
      %v8161 = vadd.f32 0.0, %v8160
      %v8162 = vpop.f32.mrf.mxu0
      %8163 = vmatprep.mubr.bf16.mxu0 0
      %8164 = vmatmul.mubr.bf16.gmra.mxu0 %v8058
      %v8165 = vpop.f32.mrf.mxu0
      %v8166 = vadd.f32 0.0, %v8165
      %v8167 = vpop.f32.mrf.mxu0
      %v8168 = vpop.f32.mrf.mxu0
      %v8169 = vadd.f32 0.0, %v8168
      %v8170 = vpop.f32.mrf.mxu0
      %8171 = vmatprep.mubr.bf16.mxu0 0
      %8172 = vmatmul.mubr.bf16.gmra.mxu0 %v8061
      %v8173 = vpop.f32.mrf.mxu0
      %v8174 = vadd.f32 0.0, %v8173
      %v8175 = vpop.f32.mrf.mxu0
      %v8176 = vpop.f32.mrf.mxu0
      %v8177 = vadd.f32 0.0, %v8176
      %v8178 = vpop.f32.mrf.mxu0
      %8179 = vmatprep.mubr.bf16.mxu0 0
      %8180 = vmatmul.mubr.bf16.gmra.mxu0 %v8064
      %v8181 = vpop.f32.mrf.mxu0
      %v8182 = vadd.f32 0.0, %v8181
      %v8183 = vpop.f32.mrf.mxu0
      %v8184 = vpop.f32.mrf.mxu0
      %v8185 = vadd.f32 0.0, %v8184
      %v8186 = vpop.f32.mrf.mxu0
      %8187 = vmatprep.mubr.bf16.mxu0 0
      %8188 = vmatmul.mubr.bf16.gmra.mxu0 %v8067
      %v8189 = vpop.f32.mrf.mxu0
      %v8190 = vadd.f32 0.0, %v8189
      %v8191 = vpop.f32.mrf.mxu0
      %v8192 = vpop.f32.mrf.mxu0
      %v8193 = vadd.f32 0.0, %v8192
      %v8194 = vpop.f32.mrf.mxu0
      %8195 = vmatprep.mubr.bf16.mxu0 0
      %8196 = vmatmul.mubr.bf16.gmra.mxu0 %v8070
      %v8197 = vpop.f32.mrf.mxu0
      %v8198 = vadd.f32 0.0, %v8197
      %v8199 = vpop.f32.mrf.mxu0
      %v8200 = vpop.f32.mrf.mxu0
      %v8201 = vadd.f32 0.0, %v8200
      %v8202 = vpop.f32.mrf.mxu0
      %8203 = vmatprep.mubr.bf16.mxu0 0
      %8204 = vmatmul.mubr.bf16.gmra.mxu0 %v8073
      %v8205 = vpop.f32.mrf.mxu0
      %v8206 = vadd.f32 0.0, %v8205
      %v8207 = vpop.f32.mrf.mxu0
      %v8208 = vpop.f32.mrf.mxu0
      %v8209 = vadd.f32 0.0, %v8208
      %v8210 = vpop.f32.mrf.mxu0
      %8211 = vmatprep.mubr.bf16.mxu0 0
      %8212 = vmatmul.mubr.bf16.gmra.mxu0 %v8076
      %v8213 = vpop.f32.mrf.mxu0
      %v8214 = vadd.f32 0.0, %v8213
      %v8215 = vpop.f32.mrf.mxu0
      %v8216 = vpop.f32.mrf.mxu0
      %v8217 = vadd.f32 0.0, %v8216
      %v8218 = vpop.f32.mrf.mxu0
      %8219 = vmatprep.mubr.bf16.mxu0 0
      %8220 = vmatmul.mubr.bf16.gmra.mxu0 %v8079
      %v8221 = vpop.f32.mrf.mxu0
      %v8222 = vadd.f32 0.0, %v8221
      %v8223 = vpop.f32.mrf.mxu0
      %v8224 = vpop.f32.mrf.mxu0
      %v8225 = vadd.f32 0.0, %v8224
      %v8226 = vpop.f32.mrf.mxu0
      %8227 = vmatprep.mubr.bf16.mxu0 0
      %8228 = vmatmul.mubr.bf16.gmra.mxu0 %v8082
      %v8229 = vpop.f32.mrf.mxu0
      %v8230 = vadd.f32 0.0, %v8229
      %v8231 = vpop.f32.mrf.mxu0
      %v8232 = vpop.f32.mrf.mxu0
      %v8233 = vadd.f32 0.0, %v8232
      %v8234 = vpop.f32.mrf.mxu0
      %8235 = vmatprep.mubr.bf16.mxu0 0
      %8236 = vmatmul.mubr.bf16.gmra.mxu0 %v8085
      %v8237 = vpop.f32.mrf.mxu0
      %v8238 = vadd.f32 0.0, %v8237
      %v8239 = vpop.f32.mrf.mxu0
      %v8240 = vpop.f32.mrf.mxu0
      %v8241 = vadd.f32 0.0, %v8240
      %v8242 = vpop.f32.mrf.mxu0
      %8243 = vmatprep.mubr.bf16.mxu0 0
      %8244 = vmatmul.mubr.bf16.gmra.mxu0 %v8088
      %v8245 = vpop.f32.mrf.mxu0
      %v8246 = vadd.f32 0.0, %v8245
      %v8247 = vpop.f32.mrf.mxu0
      %v8248 = vpop.f32.mrf.mxu0
      %v8249 = vadd.f32 0.0, %v8248
      %v8250 = vpop.f32.mrf.mxu0
      %8251 = vmatprep.mubr.bf16.mxu0 0
      %8252 = vmatmul.mubr.bf16.gmra.mxu0 %v8091
      %v8253 = vpop.f32.mrf.mxu0
      %v8254 = vadd.f32 0.0, %v8253
      %v8255 = vpop.f32.mrf.mxu0
      %v8256 = vpop.f32.mrf.mxu0
      %v8257 = vadd.f32 0.0, %v8256
      %v8258 = vpop.f32.mrf.mxu0
      %8259 = vmatprep.mubr.bf16.mxu0 0
      %8260 = vmatmul.mubr.bf16.gmra.mxu0 %v8094
      %v8261 = vpop.f32.mrf.mxu0
      %v8262 = vadd.f32 0.0, %v8261
      %v8263 = vpop.f32.mrf.mxu0
      %v8264 = vpop.f32.mrf.mxu0
      %v8265 = vadd.f32 0.0, %v8264
      %v8266 = vpop.f32.mrf.mxu0
      %8267 = vmatprep.mubr.bf16.mxu0 0
      %8268 = vmatmul.mubr.bf16.gmra.mxu0 %v8097
      %v8269 = vpop.f32.mrf.mxu0
      %v8270 = vadd.f32 0.0, %v8269
      %v8271 = vpop.f32.mrf.mxu0
      %v8272 = vpop.f32.mrf.mxu0
      %v8273 = vadd.f32 0.0, %v8272
      %v8274 = vpop.f32.mrf.mxu0
      %8275 = vdwg.mxu0
      %v8276 = vadd.f32 %v7714, %v8134
      %v8277 = vadd.f32 %v7715, %v8137
      %v8278 = vadd.f32 %v7716, %v8142
      %v8279 = vadd.f32 %v7717, %v8145
      %v8280 = vadd.f32 %v7718, %v8150
      %v8281 = vadd.f32 %v7719, %v8153
      %v8282 = vadd.f32 %v7720, %v8158
      %v8283 = vadd.f32 %v7721, %v8161
      %v8284 = vadd.f32 %v7722, %v8166
      %v8285 = vadd.f32 %v7723, %v8169
      %v8286 = vadd.f32 %v7724, %v8174
      %v8287 = vadd.f32 %v7725, %v8177
      %v8288 = vadd.f32 %v7726, %v8182
      %v8289 = vadd.f32 %v7727, %v8185
      %v8290 = vadd.f32 %v7728, %v8190
      %v8291 = vadd.f32 %v7729, %v8193
      %v8292 = vadd.f32 %v7730, %v8198
      %v8293 = vadd.f32 %v7731, %v8201
      %v8294 = vadd.f32 %v7732, %v8206
      %v8295 = vadd.f32 %v7733, %v8209
      %v8296 = vadd.f32 %v7734, %v8214
      %v8297 = vadd.f32 %v7735, %v8217
      %v8298 = vadd.f32 %v7736, %v8222
      %v8299 = vadd.f32 %v7737, %v8225
      %v8300 = vadd.f32 %v7738, %v8230
      %v8301 = vadd.f32 %v7739, %v8233
      %v8302 = vadd.f32 %v7740, %v8238
      %v8303 = vadd.f32 %v7741, %v8241
      %v8304 = vadd.f32 %v7742, %v8246
      %v8305 = vadd.f32 %v7743, %v8249
      %v8306 = vadd.f32 %v7744, %v8254
      %v8307 = vadd.f32 %v7745, %v8257
      %v8308 = vadd.f32 %v7746, %v8262
      %v8309 = vadd.f32 %v7747, %v8265
      %v8310 = vadd.f32 %v7748, %v8270
      %v8311 = vadd.f32 %v7749, %v8273
      %v8312 = vld [vmem:[#allocation2 + $0x18] sm:$0xe]
      %s8313 = scalar_lea.vmem %s3, 112
      %v8314 = vld [vmem:[%s8313] sm:$0xf]
      %v8315 = vld [vmem:[%s8313 + $0x4] sm:$0xf]
      %v8316 = vld [vmem:[%s8313 + $0x8] sm:$0xf]
      %v8317 = vld [vmem:[%s8313 + $0xc] sm:$0xf]
      %v8319 = vunpack.c.l.b16 %v8312
      %v8320 = vpack.c.b16 %v7830, %v8319
      %v8321 = vrot.slane %v8320, 1
      %v8322 = vrot.slane %v7867, 1
      %v8323 = vsel %vm3861, %v8321, %v8322
      %v8324 = vrot.slane %v7868, 1
      %v8325 = vsel %vm3861, %v8322, %v8324
      %v8326 = vrot.slane %v7869, 1
      %v8327 = vsel %vm3861, %v8324, %v8326
      %v8328 = vrot.slane %v7870, 1
      %v8329 = vsel %vm3861, %v8326, %v8328
      %v8330 = vrot.slane %v7871, 1
      %v8331 = vsel %vm3861, %v8328, %v8330
      %v8332 = vrot.slane %v7872, 1
      %v8333 = vsel %vm3861, %v8330, %v8332
      %v8334 = vrot.slane %v7873, 1
      %v8335 = vsel %vm3861, %v8332, %v8334
      %v8336 = vrot.slane %v7874, 1
      %v8337 = vsel %vm3861, %v8334, %v8336
      %v8338 = vrot.slane %v7875, 1
      %v8339 = vsel %vm3861, %v8336, %v8338
      %v8340 = vrot.slane %v7876, 1
      %v8341 = vsel %vm3861, %v8338, %v8340
      %v8342 = vrot.slane %v7877, 1
      %v8343 = vsel %vm3861, %v8340, %v8342
      %v8344 = vrot.slane %v7878, 1
      %v8345 = vsel %vm3861, %v8342, %v8344
      %v8346 = vrot.slane %v7879, 1
      %v8347 = vsel %vm3861, %v8344, %v8346
      %v8348 = vrot.slane %v7880, 1
      %v8349 = vsel %vm3861, %v8346, %v8348
      %v8350 = vrot.slane %v7881, 1
      %v8351 = vsel %vm3861, %v8348, %v8350
      %v8352 = vrot.slane %v7882, 1
      %v8353 = vsel %vm3861, %v8350, %v8352
      %v8354 = vrot.slane %v7883, 1
      %v8355 = vsel %vm3861, %v8352, %v8354
      %v8356 = vrot.slane %v7884, 1
      %v8357 = vsel %vm3861, %v8354, %v8356
      %v8362 = vunpack.c.l.b16 %v8314
      %v8363 = vunpack.c.l.b16 %v8315
      %v8364 = vunpack.c.l.b16 %v8316
      %v8365 = vunpack.c.l.b16 %v8317
      %v8366 = vpack.c.b16 %v8363, %v8362
      %v8367 = vpack.c.b16 %v8365, %v8364
      %v8371 = vsel %vm873, %v8323, 0
      %v8374 = vsel %vm873, %v8325, 0
      %v8377 = vsel %vm873, %v8327, 0
      %v8380 = vsel %vm873, %v8329, 0
      %v8383 = vsel %vm873, %v8331, 0
      %v8386 = vsel %vm873, %v8333, 0
      %v8389 = vsel %vm873, %v8335, 0
      %v8392 = vsel %vm873, %v8337, 0
      %v8395 = vsel %vm873, %v8339, 0
      %v8398 = vsel %vm873, %v8341, 0
      %v8401 = vsel %vm873, %v8343, 0
      %v8404 = vsel %vm873, %v8345, 0
      %v8407 = vsel %vm873, %v8347, 0
      %v8410 = vsel %vm873, %v8349, 0
      %v8413 = vsel %vm873, %v8351, 0
      %v8416 = vsel %vm873, %v8353, 0
      %v8419 = vsel %vm873, %v8355, 0
      %v8422 = vsel %vm873, %v8357, 0
      %8424 = vmatprep.subr.bf16.mxu0 0
      %8425 = vmatpush1.bf16.msra.mxu0 0
      %8426 = vmatprep.subr.bf16.mxu0 0
      %8427 = vmatpush1.bf16.msra.mxu0 0
      %8428 = vmatprep.subr.bf16.mxu0 0
      %8429 = vmatpush1.bf16.msra.mxu0 0
      %8430 = vmatprep.subr.bf16.mxu0 0
      %8431 = vmatpush1.bf16.msra.mxu0 0
      %8432 = vmatprep.subr.bf16.mxu0 0
      %8433 = vmatpush1.bf16.msra.mxu0 0
      %8434 = vmatprep.subr.bf16.mxu0 0
      %8435 = vmatpush1.bf16.msra.mxu0 0
      %8436 = vmatprep.subr.bf16.mxu0 0
      %8437 = vmatpush1.bf16.msra.mxu0 %v8367
      %8438 = vmatprep.subr.bf16.mxu0 0
      %8439 = vmatpush1.bf16.msra.mxu0 %v8366
      %8440 = vmatprep.subr.bf16.mxu0 0
      %8441 = vmatpush2.bf16.msra.mxu0 0
      %8442 = vmatprep.subr.bf16.mxu0 0
      %8443 = vmatpush2.bf16.msra.mxu0 0
      %8444 = vmatprep.subr.bf16.mxu0 0
      %8445 = vmatpush2.bf16.msra.mxu0 0
      %8446 = vmatprep.subr.bf16.mxu0 0
      %8447 = vmatpush2.bf16.msra.mxu0 0
      %8448 = vmatprep.subr.bf16.mxu0 0
      %8449 = vmatpush2.bf16.msra.mxu0 0
      %8450 = vmatprep.subr.bf16.mxu0 0
      %8451 = vmatpush2.bf16.msra.mxu0 0
      %8452 = vmatprep.subr.bf16.mxu0 0
      %8453 = vmatpush2.bf16.msra.mxu0 0
      %8454 = vmatprep.subr.bf16.mxu0 0
      %8455 = vmatpush2.bf16.msra.mxu0 0
      %8456 = vmatprep.mubr.bf16.mxu0 0
      %8457 = vmatmul.mubr.bf16.gmra.mxu0 %v8371
      %v8458 = vpop.f32.mrf.mxu0
      %v8459 = vadd.f32 0.0, %v8458
      %v8460 = vpop.f32.mrf.mxu0
      %v8461 = vpop.f32.mrf.mxu0
      %v8462 = vadd.f32 0.0, %v8461
      %v8463 = vpop.f32.mrf.mxu0
      %8464 = vmatprep.mubr.bf16.mxu0 0
      %8465 = vmatmul.mubr.bf16.gmra.mxu0 %v8374
      %v8466 = vpop.f32.mrf.mxu0
      %v8467 = vadd.f32 0.0, %v8466
      %v8468 = vpop.f32.mrf.mxu0
      %v8469 = vpop.f32.mrf.mxu0
      %v8470 = vadd.f32 0.0, %v8469
      %v8471 = vpop.f32.mrf.mxu0
      %8472 = vmatprep.mubr.bf16.mxu0 0
      %8473 = vmatmul.mubr.bf16.gmra.mxu0 %v8377
      %v8474 = vpop.f32.mrf.mxu0
      %v8475 = vadd.f32 0.0, %v8474
      %v8476 = vpop.f32.mrf.mxu0
      %v8477 = vpop.f32.mrf.mxu0
      %v8478 = vadd.f32 0.0, %v8477
      %v8479 = vpop.f32.mrf.mxu0
      %8480 = vmatprep.mubr.bf16.mxu0 0
      %8481 = vmatmul.mubr.bf16.gmra.mxu0 %v8380
      %v8482 = vpop.f32.mrf.mxu0
      %v8483 = vadd.f32 0.0, %v8482
      %v8484 = vpop.f32.mrf.mxu0
      %v8485 = vpop.f32.mrf.mxu0
      %v8486 = vadd.f32 0.0, %v8485
      %v8487 = vpop.f32.mrf.mxu0
      %8488 = vmatprep.mubr.bf16.mxu0 0
      %8489 = vmatmul.mubr.bf16.gmra.mxu0 %v8383
      %v8490 = vpop.f32.mrf.mxu0
      %v8491 = vadd.f32 0.0, %v8490
      %v8492 = vpop.f32.mrf.mxu0
      %v8493 = vpop.f32.mrf.mxu0
      %v8494 = vadd.f32 0.0, %v8493
      %v8495 = vpop.f32.mrf.mxu0
      %8496 = vmatprep.mubr.bf16.mxu0 0
      %8497 = vmatmul.mubr.bf16.gmra.mxu0 %v8386
      %v8498 = vpop.f32.mrf.mxu0
      %v8499 = vadd.f32 0.0, %v8498
      %v8500 = vpop.f32.mrf.mxu0
      %v8501 = vpop.f32.mrf.mxu0
      %v8502 = vadd.f32 0.0, %v8501
      %v8503 = vpop.f32.mrf.mxu0
      %8504 = vmatprep.mubr.bf16.mxu0 0
      %8505 = vmatmul.mubr.bf16.gmra.mxu0 %v8389
      %v8506 = vpop.f32.mrf.mxu0
      %v8507 = vadd.f32 0.0, %v8506
      %v8508 = vpop.f32.mrf.mxu0
      %v8509 = vpop.f32.mrf.mxu0
      %v8510 = vadd.f32 0.0, %v8509
      %v8511 = vpop.f32.mrf.mxu0
      %8512 = vmatprep.mubr.bf16.mxu0 0
      %8513 = vmatmul.mubr.bf16.gmra.mxu0 %v8392
      %v8514 = vpop.f32.mrf.mxu0
      %v8515 = vadd.f32 0.0, %v8514
      %v8516 = vpop.f32.mrf.mxu0
      %v8517 = vpop.f32.mrf.mxu0
      %v8518 = vadd.f32 0.0, %v8517
      %v8519 = vpop.f32.mrf.mxu0
      %8520 = vmatprep.mubr.bf16.mxu0 0
      %8521 = vmatmul.mubr.bf16.gmra.mxu0 %v8395
      %v8522 = vpop.f32.mrf.mxu0
      %v8523 = vadd.f32 0.0, %v8522
      %v8524 = vpop.f32.mrf.mxu0
      %v8525 = vpop.f32.mrf.mxu0
      %v8526 = vadd.f32 0.0, %v8525
      %v8527 = vpop.f32.mrf.mxu0
      %8528 = vmatprep.mubr.bf16.mxu0 0
      %8529 = vmatmul.mubr.bf16.gmra.mxu0 %v8398
      %v8530 = vpop.f32.mrf.mxu0
      %v8531 = vadd.f32 0.0, %v8530
      %v8532 = vpop.f32.mrf.mxu0
      %v8533 = vpop.f32.mrf.mxu0
      %v8534 = vadd.f32 0.0, %v8533
      %v8535 = vpop.f32.mrf.mxu0
      %8536 = vmatprep.mubr.bf16.mxu0 0
      %8537 = vmatmul.mubr.bf16.gmra.mxu0 %v8401
      %v8538 = vpop.f32.mrf.mxu0
      %v8539 = vadd.f32 0.0, %v8538
      %v8540 = vpop.f32.mrf.mxu0
      %v8541 = vpop.f32.mrf.mxu0
      %v8542 = vadd.f32 0.0, %v8541
      %v8543 = vpop.f32.mrf.mxu0
      %8544 = vmatprep.mubr.bf16.mxu0 0
      %8545 = vmatmul.mubr.bf16.gmra.mxu0 %v8404
      %v8546 = vpop.f32.mrf.mxu0
      %v8547 = vadd.f32 0.0, %v8546
      %v8548 = vpop.f32.mrf.mxu0
      %v8549 = vpop.f32.mrf.mxu0
      %v8550 = vadd.f32 0.0, %v8549
      %v8551 = vpop.f32.mrf.mxu0
      %8552 = vmatprep.mubr.bf16.mxu0 0
      %8553 = vmatmul.mubr.bf16.gmra.mxu0 %v8407
      %v8554 = vpop.f32.mrf.mxu0
      %v8555 = vadd.f32 0.0, %v8554
      %v8556 = vpop.f32.mrf.mxu0
      %v8557 = vpop.f32.mrf.mxu0
      %v8558 = vadd.f32 0.0, %v8557
      %v8559 = vpop.f32.mrf.mxu0
      %8560 = vmatprep.mubr.bf16.mxu0 0
      %8561 = vmatmul.mubr.bf16.gmra.mxu0 %v8410
      %v8562 = vpop.f32.mrf.mxu0
      %v8563 = vadd.f32 0.0, %v8562
      %v8564 = vpop.f32.mrf.mxu0
      %v8565 = vpop.f32.mrf.mxu0
      %v8566 = vadd.f32 0.0, %v8565
      %v8567 = vpop.f32.mrf.mxu0
      %8568 = vmatprep.mubr.bf16.mxu0 0
      %8569 = vmatmul.mubr.bf16.gmra.mxu0 %v8413
      %v8570 = vpop.f32.mrf.mxu0
      %v8571 = vadd.f32 0.0, %v8570
      %v8572 = vpop.f32.mrf.mxu0
      %v8573 = vpop.f32.mrf.mxu0
      %v8574 = vadd.f32 0.0, %v8573
      %v8575 = vpop.f32.mrf.mxu0
      %8576 = vmatprep.mubr.bf16.mxu0 0
      %8577 = vmatmul.mubr.bf16.gmra.mxu0 %v8416
      %v8578 = vpop.f32.mrf.mxu0
      %v8579 = vadd.f32 0.0, %v8578
      %v8580 = vpop.f32.mrf.mxu0
      %v8581 = vpop.f32.mrf.mxu0
      %v8582 = vadd.f32 0.0, %v8581
      %v8583 = vpop.f32.mrf.mxu0
      %8584 = vmatprep.mubr.bf16.mxu0 0
      %8585 = vmatmul.mubr.bf16.gmra.mxu0 %v8419
      %v8586 = vpop.f32.mrf.mxu0
      %v8587 = vadd.f32 0.0, %v8586
      %v8588 = vpop.f32.mrf.mxu0
      %v8589 = vpop.f32.mrf.mxu0
      %v8590 = vadd.f32 0.0, %v8589
      %v8591 = vpop.f32.mrf.mxu0
      %8592 = vmatprep.mubr.bf16.mxu0 0
      %8593 = vmatmul.mubr.bf16.gmra.mxu0 %v8422
      %v8594 = vpop.f32.mrf.mxu0
      %v8595 = vadd.f32 0.0, %v8594
      %v8596 = vpop.f32.mrf.mxu0
      %v8597 = vpop.f32.mrf.mxu0
      %v8598 = vadd.f32 0.0, %v8597
      %v8599 = vpop.f32.mrf.mxu0
      %8600 = vdwg.mxu0
      %v8601 = vadd.f32 %v8276, %v8459
      %v8602 = vadd.f32 %v8277, %v8462
      %v8603 = vadd.f32 %v8278, %v8467
      %v8604 = vadd.f32 %v8279, %v8470
      %v8605 = vadd.f32 %v8280, %v8475
      %v8606 = vadd.f32 %v8281, %v8478
      %v8607 = vadd.f32 %v8282, %v8483
      %v8608 = vadd.f32 %v8283, %v8486
      %v8609 = vadd.f32 %v8284, %v8491
      %v8610 = vadd.f32 %v8285, %v8494
      %v8611 = vadd.f32 %v8286, %v8499
      %v8612 = vadd.f32 %v8287, %v8502
      %v8613 = vadd.f32 %v8288, %v8507
      %v8614 = vadd.f32 %v8289, %v8510
      %v8615 = vadd.f32 %v8290, %v8515
      %v8616 = vadd.f32 %v8291, %v8518
      %v8617 = vadd.f32 %v8292, %v8523
      %v8618 = vadd.f32 %v8293, %v8526
      %v8619 = vadd.f32 %v8294, %v8531
      %v8620 = vadd.f32 %v8295, %v8534
      %v8621 = vadd.f32 %v8296, %v8539
      %v8622 = vadd.f32 %v8297, %v8542
      %v8623 = vadd.f32 %v8298, %v8547
      %v8624 = vadd.f32 %v8299, %v8550
      %v8625 = vadd.f32 %v8300, %v8555
      %v8626 = vadd.f32 %v8301, %v8558
      %v8627 = vadd.f32 %v8302, %v8563
      %v8628 = vadd.f32 %v8303, %v8566
      %v8629 = vadd.f32 %v8304, %v8571
      %v8630 = vadd.f32 %v8305, %v8574
      %v8631 = vadd.f32 %v8306, %v8579
      %v8632 = vadd.f32 %v8307, %v8582
      %v8633 = vadd.f32 %v8308, %v8587
      %v8634 = vadd.f32 %v8309, %v8590
      %v8635 = vadd.f32 %v8310, %v8595
      %v8636 = vadd.f32 %v8311, %v8598
      %v8637 = vld [vmem:[#allocation2 + $0xa8] sm:$0x3]
      %s8638 = scalar_lea.vmem %s3, 128
      %v8639 = vld [vmem:[%s8638] sm:$0xf]
      %v8640 = vld [vmem:[%s8638 + $0x4] sm:$0xf]
      %v8641 = vld [vmem:[%s8638 + $0x8] sm:$0xf]
      %v8642 = vld [vmem:[%s8638 + $0xc] sm:$0xf]
      %v8644 = vunpack.c.l.b16 %v8637
      %v8645 = vpack.c.b16 %v8644, %v8644
      %v8647 = vshrl.u32 %v8320, 16
      %v8649 = vrot.slane %v8647, 1
      %v8650 = vshll.u32 %v8320, 16
      %v8652 = vrot.slane %v8650, 2
      %v8653 = vor.u32 %v8649, %v8652
      %v8654 = vrot.slane %v7897, 1
      %v8655 = vrot.slane %v7893, 2
      %v8656 = vor.u32 %v8654, %v8655
      %v8657 = vsel %vm4187, %v8653, %v8656
      %v8658 = vrot.slane %v7905, 1
      %v8659 = vrot.slane %v7901, 2
      %v8660 = vor.u32 %v8658, %v8659
      %v8661 = vsel %vm4187, %v8656, %v8660
      %v8662 = vrot.slane %v7913, 1
      %v8663 = vrot.slane %v7909, 2
      %v8664 = vor.u32 %v8662, %v8663
      %v8665 = vsel %vm4187, %v8660, %v8664
      %v8666 = vrot.slane %v7921, 1
      %v8667 = vrot.slane %v7917, 2
      %v8668 = vor.u32 %v8666, %v8667
      %v8669 = vsel %vm4187, %v8664, %v8668
      %v8670 = vrot.slane %v7929, 1
      %v8671 = vrot.slane %v7925, 2
      %v8672 = vor.u32 %v8670, %v8671
      %v8673 = vsel %vm4187, %v8668, %v8672
      %v8674 = vrot.slane %v7937, 1
      %v8675 = vrot.slane %v7933, 2
      %v8676 = vor.u32 %v8674, %v8675
      %v8677 = vsel %vm4187, %v8672, %v8676
      %v8678 = vrot.slane %v7945, 1
      %v8679 = vrot.slane %v7941, 2
      %v8680 = vor.u32 %v8678, %v8679
      %v8681 = vsel %vm4187, %v8676, %v8680
      %v8682 = vrot.slane %v7953, 1
      %v8683 = vrot.slane %v7949, 2
      %v8684 = vor.u32 %v8682, %v8683
      %v8685 = vsel %vm4187, %v8680, %v8684
      %v8686 = vrot.slane %v7961, 1
      %v8687 = vrot.slane %v7957, 2
      %v8688 = vor.u32 %v8686, %v8687
      %v8689 = vsel %vm4187, %v8684, %v8688
      %v8690 = vrot.slane %v7969, 1
      %v8691 = vrot.slane %v7965, 2
      %v8692 = vor.u32 %v8690, %v8691
      %v8693 = vsel %vm4187, %v8688, %v8692
      %v8694 = vrot.slane %v7977, 1
      %v8695 = vrot.slane %v7973, 2
      %v8696 = vor.u32 %v8694, %v8695
      %v8697 = vsel %vm4187, %v8692, %v8696
      %v8698 = vrot.slane %v7985, 1
      %v8699 = vrot.slane %v7981, 2
      %v8700 = vor.u32 %v8698, %v8699
      %v8701 = vsel %vm4187, %v8696, %v8700
      %v8702 = vrot.slane %v7993, 1
      %v8703 = vrot.slane %v7989, 2
      %v8704 = vor.u32 %v8702, %v8703
      %v8705 = vsel %vm4187, %v8700, %v8704
      %v8706 = vrot.slane %v8001, 1
      %v8707 = vrot.slane %v7997, 2
      %v8708 = vor.u32 %v8706, %v8707
      %v8709 = vsel %vm4187, %v8704, %v8708
      %v8710 = vrot.slane %v8009, 1
      %v8711 = vrot.slane %v8005, 2
      %v8712 = vor.u32 %v8710, %v8711
      %v8713 = vsel %vm4187, %v8708, %v8712
      %v8714 = vrot.slane %v8017, 1
      %v8715 = vrot.slane %v8013, 2
      %v8716 = vor.u32 %v8714, %v8715
      %v8717 = vsel %vm4187, %v8712, %v8716
      %v8718 = vrot.slane %v8025, 1
      %v8719 = vrot.slane %v8021, 2
      %v8720 = vor.u32 %v8718, %v8719
      %v8721 = vsel %vm4187, %v8716, %v8720
      %v8723 = vshrl.u32 %v8645, 16
      %v8725 = vrot.slane %v8723, 1
      %v8726 = vshll.u32 %v8645, 16
      %v8728 = vrot.slane %v8726, 2
      %v8729 = vor.u32 %v8725, %v8728
      %v8730 = vsel %vm4187, %v8720, %v8729
      %v8735 = vunpack.c.l.b16 %v8639
      %v8736 = vunpack.c.l.b16 %v8640
      %v8737 = vunpack.c.l.b16 %v8641
      %v8738 = vunpack.c.l.b16 %v8642
      %v8739 = vpack.c.b16 %v8736, %v8735
      %v8740 = vpack.c.b16 %v8738, %v8737
      %v8744 = vsel %vm873, %v8657, 0
      %v8747 = vsel %vm873, %v8661, 0
      %v8750 = vsel %vm873, %v8665, 0
      %v8753 = vsel %vm873, %v8669, 0
      %v8756 = vsel %vm873, %v8673, 0
      %v8759 = vsel %vm873, %v8677, 0
      %v8762 = vsel %vm873, %v8681, 0
      %v8765 = vsel %vm873, %v8685, 0
      %v8768 = vsel %vm873, %v8689, 0
      %v8771 = vsel %vm873, %v8693, 0
      %v8774 = vsel %vm873, %v8697, 0
      %v8777 = vsel %vm873, %v8701, 0
      %v8780 = vsel %vm873, %v8705, 0
      %v8783 = vsel %vm873, %v8709, 0
      %v8786 = vsel %vm873, %v8713, 0
      %v8789 = vsel %vm873, %v8717, 0
      %v8792 = vsel %vm873, %v8721, 0
      %v8795 = vsel %vm873, %v8730, 0
      %8797 = vmatprep.subr.bf16.mxu0 0
      %8798 = vmatpush1.bf16.msra.mxu0 0
      %8799 = vmatprep.subr.bf16.mxu0 0
      %8800 = vmatpush1.bf16.msra.mxu0 0
      %8801 = vmatprep.subr.bf16.mxu0 0
      %8802 = vmatpush1.bf16.msra.mxu0 0
      %8803 = vmatprep.subr.bf16.mxu0 0
      %8804 = vmatpush1.bf16.msra.mxu0 0
      %8805 = vmatprep.subr.bf16.mxu0 0
      %8806 = vmatpush1.bf16.msra.mxu0 0
      %8807 = vmatprep.subr.bf16.mxu0 0
      %8808 = vmatpush1.bf16.msra.mxu0 0
      %8809 = vmatprep.subr.bf16.mxu0 0
      %8810 = vmatpush1.bf16.msra.mxu0 %v8740
      %8811 = vmatprep.subr.bf16.mxu0 0
      %8812 = vmatpush1.bf16.msra.mxu0 %v8739
      %8813 = vmatprep.subr.bf16.mxu0 0
      %8814 = vmatpush2.bf16.msra.mxu0 0
      %8815 = vmatprep.subr.bf16.mxu0 0
      %8816 = vmatpush2.bf16.msra.mxu0 0
      %8817 = vmatprep.subr.bf16.mxu0 0
      %8818 = vmatpush2.bf16.msra.mxu0 0
      %8819 = vmatprep.subr.bf16.mxu0 0
      %8820 = vmatpush2.bf16.msra.mxu0 0
      %8821 = vmatprep.subr.bf16.mxu0 0
      %8822 = vmatpush2.bf16.msra.mxu0 0
      %8823 = vmatprep.subr.bf16.mxu0 0
      %8824 = vmatpush2.bf16.msra.mxu0 0
      %8825 = vmatprep.subr.bf16.mxu0 0
      %8826 = vmatpush2.bf16.msra.mxu0 0
      %8827 = vmatprep.subr.bf16.mxu0 0
      %8828 = vmatpush2.bf16.msra.mxu0 0
      %8829 = vmatprep.mubr.bf16.mxu0 0
      %8830 = vmatmul.mubr.bf16.gmra.mxu0 %v8744
      %v8831 = vpop.f32.mrf.mxu0
      %v8832 = vadd.f32 0.0, %v8831
      %v8833 = vpop.f32.mrf.mxu0
      %v8834 = vpop.f32.mrf.mxu0
      %v8835 = vadd.f32 0.0, %v8834
      %v8836 = vpop.f32.mrf.mxu0
      %8837 = vmatprep.mubr.bf16.mxu0 0
      %8838 = vmatmul.mubr.bf16.gmra.mxu0 %v8747
      %v8839 = vpop.f32.mrf.mxu0
      %v8840 = vadd.f32 0.0, %v8839
      %v8841 = vpop.f32.mrf.mxu0
      %v8842 = vpop.f32.mrf.mxu0
      %v8843 = vadd.f32 0.0, %v8842
      %v8844 = vpop.f32.mrf.mxu0
      %8845 = vmatprep.mubr.bf16.mxu0 0
      %8846 = vmatmul.mubr.bf16.gmra.mxu0 %v8750
      %v8847 = vpop.f32.mrf.mxu0
      %v8848 = vadd.f32 0.0, %v8847
      %v8849 = vpop.f32.mrf.mxu0
      %v8850 = vpop.f32.mrf.mxu0
      %v8851 = vadd.f32 0.0, %v8850
      %v8852 = vpop.f32.mrf.mxu0
      %8853 = vmatprep.mubr.bf16.mxu0 0
      %8854 = vmatmul.mubr.bf16.gmra.mxu0 %v8753
      %v8855 = vpop.f32.mrf.mxu0
      %v8856 = vadd.f32 0.0, %v8855
      %v8857 = vpop.f32.mrf.mxu0
      %v8858 = vpop.f32.mrf.mxu0
      %v8859 = vadd.f32 0.0, %v8858
      %v8860 = vpop.f32.mrf.mxu0
      %8861 = vmatprep.mubr.bf16.mxu0 0
      %8862 = vmatmul.mubr.bf16.gmra.mxu0 %v8756
      %v8863 = vpop.f32.mrf.mxu0
      %v8864 = vadd.f32 0.0, %v8863
      %v8865 = vpop.f32.mrf.mxu0
      %v8866 = vpop.f32.mrf.mxu0
      %v8867 = vadd.f32 0.0, %v8866
      %v8868 = vpop.f32.mrf.mxu0
      %8869 = vmatprep.mubr.bf16.mxu0 0
      %8870 = vmatmul.mubr.bf16.gmra.mxu0 %v8759
      %v8871 = vpop.f32.mrf.mxu0
      %v8872 = vadd.f32 0.0, %v8871
      %v8873 = vpop.f32.mrf.mxu0
      %v8874 = vpop.f32.mrf.mxu0
      %v8875 = vadd.f32 0.0, %v8874
      %v8876 = vpop.f32.mrf.mxu0
      %8877 = vmatprep.mubr.bf16.mxu0 0
      %8878 = vmatmul.mubr.bf16.gmra.mxu0 %v8762
      %v8879 = vpop.f32.mrf.mxu0
      %v8880 = vadd.f32 0.0, %v8879
      %v8881 = vpop.f32.mrf.mxu0
      %v8882 = vpop.f32.mrf.mxu0
      %v8883 = vadd.f32 0.0, %v8882
      %v8884 = vpop.f32.mrf.mxu0
      %8885 = vmatprep.mubr.bf16.mxu0 0
      %8886 = vmatmul.mubr.bf16.gmra.mxu0 %v8765
      %v8887 = vpop.f32.mrf.mxu0
      %v8888 = vadd.f32 0.0, %v8887
      %v8889 = vpop.f32.mrf.mxu0
      %v8890 = vpop.f32.mrf.mxu0
      %v8891 = vadd.f32 0.0, %v8890
      %v8892 = vpop.f32.mrf.mxu0
      %8893 = vmatprep.mubr.bf16.mxu0 0
      %8894 = vmatmul.mubr.bf16.gmra.mxu0 %v8768
      %v8895 = vpop.f32.mrf.mxu0
      %v8896 = vadd.f32 0.0, %v8895
      %v8897 = vpop.f32.mrf.mxu0
      %v8898 = vpop.f32.mrf.mxu0
      %v8899 = vadd.f32 0.0, %v8898
      %v8900 = vpop.f32.mrf.mxu0
      %8901 = vmatprep.mubr.bf16.mxu0 0
      %8902 = vmatmul.mubr.bf16.gmra.mxu0 %v8771
      %v8903 = vpop.f32.mrf.mxu0
      %v8904 = vadd.f32 0.0, %v8903
      %v8905 = vpop.f32.mrf.mxu0
      %v8906 = vpop.f32.mrf.mxu0
      %v8907 = vadd.f32 0.0, %v8906
      %v8908 = vpop.f32.mrf.mxu0
      %8909 = vmatprep.mubr.bf16.mxu0 0
      %8910 = vmatmul.mubr.bf16.gmra.mxu0 %v8774
      %v8911 = vpop.f32.mrf.mxu0
      %v8912 = vadd.f32 0.0, %v8911
      %v8913 = vpop.f32.mrf.mxu0
      %v8914 = vpop.f32.mrf.mxu0
      %v8915 = vadd.f32 0.0, %v8914
      %v8916 = vpop.f32.mrf.mxu0
      %8917 = vmatprep.mubr.bf16.mxu0 0
      %8918 = vmatmul.mubr.bf16.gmra.mxu0 %v8777
      %v8919 = vpop.f32.mrf.mxu0
      %v8920 = vadd.f32 0.0, %v8919
      %v8921 = vpop.f32.mrf.mxu0
      %v8922 = vpop.f32.mrf.mxu0
      %v8923 = vadd.f32 0.0, %v8922
      %v8924 = vpop.f32.mrf.mxu0
      %8925 = vmatprep.mubr.bf16.mxu0 0
      %8926 = vmatmul.mubr.bf16.gmra.mxu0 %v8780
      %v8927 = vpop.f32.mrf.mxu0
      %v8928 = vadd.f32 0.0, %v8927
      %v8929 = vpop.f32.mrf.mxu0
      %v8930 = vpop.f32.mrf.mxu0
      %v8931 = vadd.f32 0.0, %v8930
      %v8932 = vpop.f32.mrf.mxu0
      %8933 = vmatprep.mubr.bf16.mxu0 0
      %8934 = vmatmul.mubr.bf16.gmra.mxu0 %v8783
      %v8935 = vpop.f32.mrf.mxu0
      %v8936 = vadd.f32 0.0, %v8935
      %v8937 = vpop.f32.mrf.mxu0
      %v8938 = vpop.f32.mrf.mxu0
      %v8939 = vadd.f32 0.0, %v8938
      %v8940 = vpop.f32.mrf.mxu0
      %8941 = vmatprep.mubr.bf16.mxu0 0
      %8942 = vmatmul.mubr.bf16.gmra.mxu0 %v8786
      %v8943 = vpop.f32.mrf.mxu0
      %v8944 = vadd.f32 0.0, %v8943
      %v8945 = vpop.f32.mrf.mxu0
      %v8946 = vpop.f32.mrf.mxu0
      %v8947 = vadd.f32 0.0, %v8946
      %v8948 = vpop.f32.mrf.mxu0
      %8949 = vmatprep.mubr.bf16.mxu0 0
      %8950 = vmatmul.mubr.bf16.gmra.mxu0 %v8789
      %v8951 = vpop.f32.mrf.mxu0
      %v8952 = vadd.f32 0.0, %v8951
      %v8953 = vpop.f32.mrf.mxu0
      %v8954 = vpop.f32.mrf.mxu0
      %v8955 = vadd.f32 0.0, %v8954
      %v8956 = vpop.f32.mrf.mxu0
      %8957 = vmatprep.mubr.bf16.mxu0 0
      %8958 = vmatmul.mubr.bf16.gmra.mxu0 %v8792
      %v8959 = vpop.f32.mrf.mxu0
      %v8960 = vadd.f32 0.0, %v8959
      %v8961 = vpop.f32.mrf.mxu0
      %v8962 = vpop.f32.mrf.mxu0
      %v8963 = vadd.f32 0.0, %v8962
      %v8964 = vpop.f32.mrf.mxu0
      %8965 = vmatprep.mubr.bf16.mxu0 0
      %8966 = vmatmul.mubr.bf16.gmra.mxu0 %v8795
      %v8967 = vpop.f32.mrf.mxu0
      %v8968 = vadd.f32 0.0, %v8967
      %v8969 = vpop.f32.mrf.mxu0
      %v8970 = vpop.f32.mrf.mxu0
      %v8971 = vadd.f32 0.0, %v8970
      %v8972 = vpop.f32.mrf.mxu0
      %8973 = vdwg.mxu0
      %v8974 = vadd.f32 %v8601, %v8832
      %v8975 = vadd.f32 %v8602, %v8835
      %v8976 = vadd.f32 %v8603, %v8840
      %v8977 = vadd.f32 %v8604, %v8843
      %v8978 = vadd.f32 %v8605, %v8848
      %v8979 = vadd.f32 %v8606, %v8851
      %v8980 = vadd.f32 %v8607, %v8856
      %v8981 = vadd.f32 %v8608, %v8859
      %v8982 = vadd.f32 %v8609, %v8864
      %v8983 = vadd.f32 %v8610, %v8867
      %v8984 = vadd.f32 %v8611, %v8872
      %v8985 = vadd.f32 %v8612, %v8875
      %v8986 = vadd.f32 %v8613, %v8880
      %v8987 = vadd.f32 %v8614, %v8883
      %v8988 = vadd.f32 %v8615, %v8888
      %v8989 = vadd.f32 %v8616, %v8891
      %v8990 = vadd.f32 %v8617, %v8896
      %v8991 = vadd.f32 %v8618, %v8899
      %v8992 = vadd.f32 %v8619, %v8904
      %v8993 = vadd.f32 %v8620, %v8907
      %v8994 = vadd.f32 %v8621, %v8912
      %v8995 = vadd.f32 %v8622, %v8915
      %v8996 = vadd.f32 %v8623, %v8920
      %v8997 = vadd.f32 %v8624, %v8923
      %v8998 = vadd.f32 %v8625, %v8928
      %v8999 = vadd.f32 %v8626, %v8931
      %v9000 = vadd.f32 %v8627, %v8936
      %v9001 = vadd.f32 %v8628, %v8939
      %v9002 = vadd.f32 %v8629, %v8944
      %v9003 = vadd.f32 %v8630, %v8947
      %v9004 = vadd.f32 %v8631, %v8952
      %v9005 = vadd.f32 %v8632, %v8955
      %v9006 = vadd.f32 %v8633, %v8960
      %v9007 = vadd.f32 %v8634, %v8963
      %v9008 = vadd.f32 %v8635, %v8968
      %v9009 = vadd.f32 %v8636, %v8971
      %v9010 = vtanh.pop %v8974
      %v9011 = vtanh.pop %v8975
      %v9012 = vtanh.pop %v8976
      %v9013 = vtanh.pop %v8977
      %v9014 = vtanh.pop %v8978
      %v9015 = vtanh.pop %v8979
      %v9016 = vtanh.pop %v8980
      %v9017 = vtanh.pop %v8981
      %v9018 = vtanh.pop %v8982
      %v9019 = vtanh.pop %v8983
      %v9020 = vtanh.pop %v8984
      %v9021 = vtanh.pop %v8985
      %v9022 = vtanh.pop %v8986
      %v9023 = vtanh.pop %v8987
      %v9024 = vtanh.pop %v8988
      %v9025 = vtanh.pop %v8989
      %v9026 = vtanh.pop %v8990
      %v9027 = vtanh.pop %v8991
      %v9028 = vtanh.pop %v8992
      %v9029 = vtanh.pop %v8993
      %v9030 = vtanh.pop %v8994
      %v9031 = vtanh.pop %v8995
      %v9032 = vtanh.pop %v8996
      %v9033 = vtanh.pop %v8997
      %v9034 = vtanh.pop %v8998
      %v9035 = vtanh.pop %v8999
      %v9036 = vtanh.pop %v9000
      %v9037 = vtanh.pop %v9001
      %v9038 = vtanh.pop %v9002
      %v9039 = vtanh.pop %v9003
      %v9040 = vtanh.pop %v9004
      %v9041 = vtanh.pop %v9005
      %v9042 = vtanh.pop %v9006
      %v9043 = vtanh.pop %v9007
      %v9044 = vtanh.pop %v9008
      %v9045 = vtanh.pop %v9009
      %v9046 = vsub.f32 %v9010, %v484
      %v9047 = vsub.f32 %v9011, %v485
      %v9048 = vsub.f32 %v9012, %v486
      %v9049 = vsub.f32 %v9013, %v487
      %v9050 = vsub.f32 %v9014, %v488
      %v9051 = vsub.f32 %v9015, %v489
      %v9052 = vsub.f32 %v9016, %v490
      %v9053 = vsub.f32 %v9017, %v491
      %v9054 = vsub.f32 %v9018, %v492
      %v9055 = vsub.f32 %v9019, %v493
      %v9056 = vsub.f32 %v9020, %v494
      %v9057 = vsub.f32 %v9021, %v495
      %v9058 = vsub.f32 %v9022, %v496
      %v9059 = vsub.f32 %v9023, %v497
      %v9060 = vsub.f32 %v9024, %v498
      %v9061 = vsub.f32 %v9025, %v499
      %v9062 = vsub.f32 %v9026, %v500
      %v9063 = vsub.f32 %v9027, %v501
      %v9064 = vsub.f32 %v9028, %v502
      %v9065 = vsub.f32 %v9029, %v503
      %v9066 = vsub.f32 %v9030, %v504
      %v9067 = vsub.f32 %v9031, %v505
      %v9068 = vsub.f32 %v9032, %v506
      %v9069 = vsub.f32 %v9033, %v507
      %v9070 = vsub.f32 %v9034, %v508
      %v9071 = vsub.f32 %v9035, %v509
      %v9072 = vsub.f32 %v9036, %v510
      %v9073 = vsub.f32 %v9037, %v511
      %v9074 = vsub.f32 %v9038, %v512
      %v9075 = vsub.f32 %v9039, %v513
      %v9076 = vsub.f32 %v9040, %v514
      %v9077 = vsub.f32 %v9041, %v515
      %v9078 = vsub.f32 %v9042, %v516
      %v9079 = vsub.f32 %v9043, %v517
      %v9080 = vsub.f32 %v9044, %v518
      %v9081 = vsub.f32 %v9045, %v519
      %9118 = vrot.lane.b32.xlu0 %v9046, 32
      %v9119 = vpop.permute.xlu0 %9118
      %9120 = vrot.lane.b32.xlu0 %v9047, 32
      %v9121 = vpop.permute.xlu0 %9120
      %9122 = vrot.lane.b32.xlu0 %v9048, 32
      %v9123 = vpop.permute.xlu0 %9122
      %9124 = vrot.lane.b32.xlu0 %v9049, 32
      %v9125 = vpop.permute.xlu0 %9124
      %9126 = vrot.lane.b32.xlu0 %v9050, 32
      %v9127 = vpop.permute.xlu0 %9126
      %9128 = vrot.lane.b32.xlu0 %v9051, 32
      %v9129 = vpop.permute.xlu0 %9128
      %9130 = vrot.lane.b32.xlu0 %v9052, 32
      %v9131 = vpop.permute.xlu0 %9130
      %9132 = vrot.lane.b32.xlu0 %v9053, 32
      %v9133 = vpop.permute.xlu0 %9132
      %9134 = vrot.lane.b32.xlu0 %v9054, 32
      %v9135 = vpop.permute.xlu0 %9134
      %9136 = vrot.lane.b32.xlu0 %v9055, 32
      %v9137 = vpop.permute.xlu0 %9136
      %9138 = vrot.lane.b32.xlu0 %v9056, 32
      %v9139 = vpop.permute.xlu0 %9138
      %9140 = vrot.lane.b32.xlu0 %v9057, 32
      %v9141 = vpop.permute.xlu0 %9140
      %9142 = vrot.lane.b32.xlu0 %v9058, 32
      %v9143 = vpop.permute.xlu0 %9142
      %9144 = vrot.lane.b32.xlu0 %v9059, 32
      %v9145 = vpop.permute.xlu0 %9144
      %9146 = vrot.lane.b32.xlu0 %v9060, 32
      %v9147 = vpop.permute.xlu0 %9146
      %9148 = vrot.lane.b32.xlu0 %v9061, 32
      %v9149 = vpop.permute.xlu0 %9148
      %9150 = vrot.lane.b32.xlu0 %v9062, 32
      %v9151 = vpop.permute.xlu0 %9150
      %9152 = vrot.lane.b32.xlu0 %v9063, 32
      %v9153 = vpop.permute.xlu0 %9152
      %9154 = vrot.lane.b32.xlu0 %v9064, 32
      %v9155 = vpop.permute.xlu0 %9154
      %9156 = vrot.lane.b32.xlu0 %v9065, 32
      %v9157 = vpop.permute.xlu0 %9156
      %9158 = vrot.lane.b32.xlu0 %v9066, 32
      %v9159 = vpop.permute.xlu0 %9158
      %9160 = vrot.lane.b32.xlu0 %v9067, 32
      %v9161 = vpop.permute.xlu0 %9160
      %9162 = vrot.lane.b32.xlu0 %v9068, 32
      %v9163 = vpop.permute.xlu0 %9162
      %9164 = vrot.lane.b32.xlu0 %v9069, 32
      %v9165 = vpop.permute.xlu0 %9164
      %9166 = vrot.lane.b32.xlu0 %v9070, 32
      %v9167 = vpop.permute.xlu0 %9166
      %9168 = vrot.lane.b32.xlu0 %v9071, 32
      %v9169 = vpop.permute.xlu0 %9168
      %9170 = vrot.lane.b32.xlu0 %v9072, 32
      %v9171 = vpop.permute.xlu0 %9170
      %9172 = vrot.lane.b32.xlu0 %v9073, 32
      %v9173 = vpop.permute.xlu0 %9172
      %9174 = vrot.lane.b32.xlu0 %v9074, 32
      %v9175 = vpop.permute.xlu0 %9174
      %9176 = vrot.lane.b32.xlu0 %v9075, 32
      %v9177 = vpop.permute.xlu0 %9176
      %9178 = vrot.lane.b32.xlu0 %v9076, 32
      %v9179 = vpop.permute.xlu0 %9178
      %9180 = vrot.lane.b32.xlu0 %v9077, 32
      %v9181 = vpop.permute.xlu0 %9180
      %9182 = vrot.lane.b32.xlu0 %v9078, 32
      %v9183 = vpop.permute.xlu0 %9182
      %9184 = vrot.lane.b32.xlu0 %v9079, 32
      %v9185 = vpop.permute.xlu0 %9184
      %9186 = vrot.lane.b32.xlu0 %v9080, 32
      %v9187 = vpop.permute.xlu0 %9186
      %9188 = vrot.lane.b32.xlu0 %v9081, 32
      %v9189 = vpop.permute.xlu0 %9188
      %v9226 = vmul.f32 %v4697, %v9119
      %v9227 = vmul.f32 %v4699, %v9121
      %v9228 = vmul.f32 %v4701, %v9123
      %v9229 = vmul.f32 %v4703, %v9125
      %v9230 = vmul.f32 %v4705, %v9127
      %v9231 = vmul.f32 %v4707, %v9129
      %v9232 = vmul.f32 %v4709, %v9131
      %v9233 = vmul.f32 %v4711, %v9133
      %v9234 = vmul.f32 %v4713, %v9135
      %v9235 = vmul.f32 %v4715, %v9137
      %v9236 = vmul.f32 %v4717, %v9139
      %v9237 = vmul.f32 %v4719, %v9141
      %v9238 = vmul.f32 %v4721, %v9143
      %v9239 = vmul.f32 %v4723, %v9145
      %v9240 = vmul.f32 %v4725, %v9147
      %v9241 = vmul.f32 %v4727, %v9149
      %v9242 = vmul.f32 %v4729, %v9151
      %v9243 = vmul.f32 %v4731, %v9153
      %v9244 = vmul.f32 %v4733, %v9155
      %v9245 = vmul.f32 %v4735, %v9157
      %v9246 = vmul.f32 %v4737, %v9159
      %v9247 = vmul.f32 %v4739, %v9161
      %v9248 = vmul.f32 %v4741, %v9163
      %v9249 = vmul.f32 %v4743, %v9165
      %v9250 = vmul.f32 %v4745, %v9167
      %v9251 = vmul.f32 %v4747, %v9169
      %v9252 = vmul.f32 %v4749, %v9171
      %v9253 = vmul.f32 %v4751, %v9173
      %v9254 = vmul.f32 %v4753, %v9175
      %v9255 = vmul.f32 %v4755, %v9177
      %v9256 = vmul.f32 %v4757, %v9179
      %v9257 = vmul.f32 %v4759, %v9181
      %v9258 = vmul.f32 %v4761, %v9183
      %v9259 = vmul.f32 %v4763, %v9185
      %v9260 = vmul.f32 %v4765, %v9187
      %v9261 = vmul.f32 %v4767, %v9189
      %9298 = vrot.lane.b32.xlu0 %v9226, 96
      %v9299 = vpop.permute.xlu0 %9298
      %9300 = vrot.lane.b32.xlu0 %v9227, 96
      %v9301 = vpop.permute.xlu0 %9300
      %9302 = vrot.lane.b32.xlu0 %v9228, 96
      %v9303 = vpop.permute.xlu0 %9302
      %9304 = vrot.lane.b32.xlu0 %v9229, 96
      %v9305 = vpop.permute.xlu0 %9304
      %9306 = vrot.lane.b32.xlu0 %v9230, 96
      %v9307 = vpop.permute.xlu0 %9306
      %9308 = vrot.lane.b32.xlu0 %v9231, 96
      %v9309 = vpop.permute.xlu0 %9308
      %9310 = vrot.lane.b32.xlu0 %v9232, 96
      %v9311 = vpop.permute.xlu0 %9310
      %9312 = vrot.lane.b32.xlu0 %v9233, 96
      %v9313 = vpop.permute.xlu0 %9312
      %9314 = vrot.lane.b32.xlu0 %v9234, 96
      %v9315 = vpop.permute.xlu0 %9314
      %9316 = vrot.lane.b32.xlu0 %v9235, 96
      %v9317 = vpop.permute.xlu0 %9316
      %9318 = vrot.lane.b32.xlu0 %v9236, 96
      %v9319 = vpop.permute.xlu0 %9318
      %9320 = vrot.lane.b32.xlu0 %v9237, 96
      %v9321 = vpop.permute.xlu0 %9320
      %9322 = vrot.lane.b32.xlu0 %v9238, 96
      %v9323 = vpop.permute.xlu0 %9322
      %9324 = vrot.lane.b32.xlu0 %v9239, 96
      %v9325 = vpop.permute.xlu0 %9324
      %9326 = vrot.lane.b32.xlu0 %v9240, 96
      %v9327 = vpop.permute.xlu0 %9326
      %9328 = vrot.lane.b32.xlu0 %v9241, 96
      %v9329 = vpop.permute.xlu0 %9328
      %9330 = vrot.lane.b32.xlu0 %v9242, 96
      %v9331 = vpop.permute.xlu0 %9330
      %9332 = vrot.lane.b32.xlu0 %v9243, 96
      %v9333 = vpop.permute.xlu0 %9332
      %9334 = vrot.lane.b32.xlu0 %v9244, 96
      %v9335 = vpop.permute.xlu0 %9334
      %9336 = vrot.lane.b32.xlu0 %v9245, 96
      %v9337 = vpop.permute.xlu0 %9336
      %9338 = vrot.lane.b32.xlu0 %v9246, 96
      %v9339 = vpop.permute.xlu0 %9338
      %9340 = vrot.lane.b32.xlu0 %v9247, 96
      %v9341 = vpop.permute.xlu0 %9340
      %9342 = vrot.lane.b32.xlu0 %v9248, 96
      %v9343 = vpop.permute.xlu0 %9342
      %9344 = vrot.lane.b32.xlu0 %v9249, 96
      %v9345 = vpop.permute.xlu0 %9344
      %9346 = vrot.lane.b32.xlu0 %v9250, 96
      %v9347 = vpop.permute.xlu0 %9346
      %9348 = vrot.lane.b32.xlu0 %v9251, 96
      %v9349 = vpop.permute.xlu0 %9348
      %9350 = vrot.lane.b32.xlu0 %v9252, 96
      %v9351 = vpop.permute.xlu0 %9350
      %9352 = vrot.lane.b32.xlu0 %v9253, 96
      %v9353 = vpop.permute.xlu0 %9352
      %9354 = vrot.lane.b32.xlu0 %v9254, 96
      %v9355 = vpop.permute.xlu0 %9354
      %9356 = vrot.lane.b32.xlu0 %v9255, 96
      %v9357 = vpop.permute.xlu0 %9356
      %9358 = vrot.lane.b32.xlu0 %v9256, 96
      %v9359 = vpop.permute.xlu0 %9358
      %9360 = vrot.lane.b32.xlu0 %v9257, 96
      %v9361 = vpop.permute.xlu0 %9360
      %9362 = vrot.lane.b32.xlu0 %v9258, 96
      %v9363 = vpop.permute.xlu0 %9362
      %9364 = vrot.lane.b32.xlu0 %v9259, 96
      %v9365 = vpop.permute.xlu0 %9364
      %9366 = vrot.lane.b32.xlu0 %v9260, 96
      %v9367 = vpop.permute.xlu0 %9366
      %9368 = vrot.lane.b32.xlu0 %v9261, 96
      %v9369 = vpop.permute.xlu0 %9368
      %v9406 = vadd.f32 %v484, %v9299
      %v9407 = vadd.f32 %v485, %v9301
      %v9408 = vadd.f32 %v486, %v9303
      %v9409 = vadd.f32 %v487, %v9305
      %v9410 = vadd.f32 %v488, %v9307
      %v9411 = vadd.f32 %v489, %v9309
      %v9412 = vadd.f32 %v490, %v9311
      %v9413 = vadd.f32 %v491, %v9313
      %v9414 = vadd.f32 %v492, %v9315
      %v9415 = vadd.f32 %v493, %v9317
      %v9416 = vadd.f32 %v494, %v9319
      %v9417 = vadd.f32 %v495, %v9321
      %v9418 = vadd.f32 %v496, %v9323
      %v9419 = vadd.f32 %v497, %v9325
      %v9420 = vadd.f32 %v498, %v9327
      %v9421 = vadd.f32 %v499, %v9329
      %v9422 = vadd.f32 %v500, %v9331
      %v9423 = vadd.f32 %v501, %v9333
      %v9424 = vadd.f32 %v502, %v9335
      %v9425 = vadd.f32 %v503, %v9337
      %v9426 = vadd.f32 %v504, %v9339
      %v9427 = vadd.f32 %v505, %v9341
      %v9428 = vadd.f32 %v506, %v9343
      %v9429 = vadd.f32 %v507, %v9345
      %v9430 = vadd.f32 %v508, %v9347
      %v9431 = vadd.f32 %v509, %v9349
      %v9432 = vadd.f32 %v510, %v9351
      %v9433 = vadd.f32 %v511, %v9353
      %v9434 = vadd.f32 %v512, %v9355
      %v9435 = vadd.f32 %v513, %v9357
      %v9436 = vadd.f32 %v514, %v9359
      %v9437 = vadd.f32 %v515, %v9361
      %v9438 = vadd.f32 %v516, %v9363
      %v9439 = vadd.f32 %v517, %v9365
      %v9440 = vadd.f32 %v518, %v9367
      %v9441 = vadd.f32 %v519, %v9369
      %v9442 = vcombine.low %v427, %v434
      %v9443 = vcombine.low %v441, %v448
      %v9445 = vunpack.c.l.s4 1983009808
      %v9446 = vunpack.c.0.s8 %v9445
      %v9447 = vlaneseq
      %v9448 = vshrl.u32 %v9447, 7
      %v9449 = vsub.s32 %v9446, %v9448
      %v9450 = vrot.slane %v9442, %v9449
      %v9452 = vunpack.c.l.s4 1983009808
      %v9453 = vunpack.c.0.s8 %v9452
      %v9454 = vlaneseq
      %v9455 = vshrl.u32 %v9454, 7
      %v9456 = vsub.s32 %v9453, %v9455
      %v9457 = vrot.slane %v9443, %v9456
      %v9458 = vcombine.low %v9450, %v9457
      %v9459 = vcombine.low %v455, %v462
      %v9460 = vcombine.low %v469, %v476
      %v9462 = vunpack.c.l.s4 1983009808
      %v9463 = vunpack.c.0.s8 %v9462
      %v9464 = vlaneseq
      %v9465 = vshrl.u32 %v9464, 7
      %v9466 = vsub.s32 %v9463, %v9465
      %v9467 = vrot.slane %v9459, %v9466
      %v9469 = vunpack.c.l.s4 1983009808
      %v9470 = vunpack.c.0.s8 %v9469
      %v9471 = vlaneseq
      %v9472 = vshrl.u32 %v9471, 7
      %v9473 = vsub.s32 %v9470, %v9472
      %v9474 = vrot.slane %v9460, %v9473
      %v9475 = vcombine.low %v9467, %v9474
      %v9476 = vcombine.low %v483, %v427
      %v9477 = vcombine.low %v434, %v441
      %v9479 = vunpack.c.l.s4 1983009808
      %v9480 = vunpack.c.0.s8 %v9479
      %v9481 = vlaneseq
      %v9482 = vshrl.u32 %v9481, 7
      %v9483 = vsub.s32 %v9480, %v9482
      %v9484 = vrot.slane %v9476, %v9483
      %v9486 = vunpack.c.l.s4 1983009808
      %v9487 = vunpack.c.0.s8 %v9486
      %v9488 = vlaneseq
      %v9489 = vshrl.u32 %v9488, 7
      %v9490 = vsub.s32 %v9487, %v9489
      %v9491 = vrot.slane %v9477, %v9490
      %v9492 = vcombine.low %v9484, %v9491
      %v9493 = vcombine.low %v448, %v455
      %v9494 = vcombine.low %v462, %v469
      %v9496 = vunpack.c.l.s4 1983009808
      %v9497 = vunpack.c.0.s8 %v9496
      %v9498 = vlaneseq
      %v9499 = vshrl.u32 %v9498, 7
      %v9500 = vsub.s32 %v9497, %v9499
      %v9501 = vrot.slane %v9493, %v9500
      %v9503 = vunpack.c.l.s4 1983009808
      %v9504 = vunpack.c.0.s8 %v9503
      %v9505 = vlaneseq
      %v9506 = vshrl.u32 %v9505, 7
      %v9507 = vsub.s32 %v9504, %v9506
      %v9508 = vrot.slane %v9494, %v9507
      %v9509 = vcombine.low %v9501, %v9508
      %v9510 = vcombine.low %v476, %v483
      %v9512 = vunpack.c.l.s4 1983009808
      %v9513 = vunpack.c.0.s8 %v9512
      %v9514 = vlaneseq
      %v9515 = vshrl.u32 %v9514, 7
      %v9516 = vsub.s32 %v9513, %v9515
      %v9517 = vrot.slane %v9510, %v9516
      %v9518 = vcombine.low %v9517, %v9450
      %v9519 = vcombine.low %v9457, %v9467
      %v9520 = vcombine.low %v9474, %v9484
      %v9521 = vcombine.low %v9491, %v9501
      %v9522 = vcombine.low %v9508, %v9517
      %v9532 = vmul.f32 %v9406, %v9458
      %v9533 = vmul.f32 %v9407, %v9475
      %v9534 = vmul.f32 %v9408, %v9492
      %v9535 = vmul.f32 %v9409, %v9509
      %v9536 = vmul.f32 %v9410, %v9518
      %v9537 = vmul.f32 %v9411, %v9519
      %v9538 = vmul.f32 %v9412, %v9520
      %v9539 = vmul.f32 %v9413, %v9521
      %v9540 = vmul.f32 %v9414, %v9522
      %v9541 = vmul.f32 %v9415, %v9458
      %v9542 = vmul.f32 %v9416, %v9475
      %v9543 = vmul.f32 %v9417, %v9492
      %v9544 = vmul.f32 %v9418, %v9509
      %v9545 = vmul.f32 %v9419, %v9518
      %v9546 = vmul.f32 %v9420, %v9519
      %v9547 = vmul.f32 %v9421, %v9520
      %v9548 = vmul.f32 %v9422, %v9521
      %v9549 = vmul.f32 %v9423, %v9522
      %v9550 = vmul.f32 %v9424, %v9458
      %v9551 = vmul.f32 %v9425, %v9475
      %v9552 = vmul.f32 %v9426, %v9492
      %v9553 = vmul.f32 %v9427, %v9509
      %v9554 = vmul.f32 %v9428, %v9518
      %v9555 = vmul.f32 %v9429, %v9519
      %v9556 = vmul.f32 %v9430, %v9520
      %v9557 = vmul.f32 %v9431, %v9521
      %v9558 = vmul.f32 %v9432, %v9522
      %v9559 = vmul.f32 %v9433, %v9458
      %v9560 = vmul.f32 %v9434, %v9475
      %v9561 = vmul.f32 %v9435, %v9492
      %v9562 = vmul.f32 %v9436, %v9509
      %v9563 = vmul.f32 %v9437, %v9518
      %v9564 = vmul.f32 %v9438, %v9519
      %v9565 = vmul.f32 %v9439, %v9520
      %v9566 = vmul.f32 %v9440, %v9521
      %v9567 = vmul.f32 %v9441, %v9522
      %9568 = vst.msk [vmem:[#allocation3] sm:$0xff] %vm873, %v9532
      %9569 = vst.msk [vmem:[#allocation3 + $0x8] sm:$0xff] %vm873, %v9533
      %9570 = vst.msk [vmem:[#allocation3 + $0x10] sm:$0xff] %vm873, %v9534
      %9571 = vst.msk [vmem:[#allocation3 + $0x18] sm:$0xff] %vm873, %v9535
      %9572 = vst.msk [vmem:[#allocation3 + $0x20] sm:$0xff] %vm873, %v9536
      %9573 = vst.msk [vmem:[#allocation3 + $0x28] sm:$0xff] %vm873, %v9537
      %9574 = vst.msk [vmem:[#allocation3 + $0x30] sm:$0xff] %vm873, %v9538
      %9575 = vst.msk [vmem:[#allocation3 + $0x38] sm:$0xff] %vm873, %v9539
      %9576 = vst.msk [vmem:[#allocation3 + $0x40] sm:$0xff] %vm873, %v9540
      %9577 = vst.msk [vmem:[#allocation3 + $0x48] sm:$0xff] %vm873, %v9541
      %9578 = vst.msk [vmem:[#allocation3 + $0x50] sm:$0xff] %vm873, %v9542
      %9579 = vst.msk [vmem:[#allocation3 + $0x58] sm:$0xff] %vm873, %v9543
      %9580 = vst.msk [vmem:[#allocation3 + $0x60] sm:$0xff] %vm873, %v9544
      %9581 = vst.msk [vmem:[#allocation3 + $0x68] sm:$0xff] %vm873, %v9545
      %9582 = vst.msk [vmem:[#allocation3 + $0x70] sm:$0xff] %vm873, %v9546
      %9583 = vst.msk [vmem:[#allocation3 + $0x78] sm:$0xff] %vm873, %v9547
      %9584 = vst.msk [vmem:[#allocation3 + $0x80] sm:$0xff] %vm873, %v9548
      %9585 = vst.msk [vmem:[#allocation3 + $0x88] sm:$0xff] %vm873, %v9549
      %9586 = vst.msk [vmem:[#allocation3 + $0x90] sm:$0xff] %vm873, %v9550
      %9587 = vst.msk [vmem:[#allocation3 + $0x98] sm:$0xff] %vm873, %v9551
      %9588 = vst.msk [vmem:[#allocation3 + $0xa0] sm:$0xff] %vm873, %v9552
      %9589 = vst.msk [vmem:[#allocation3 + $0xa8] sm:$0xff] %vm873, %v9553
      %9590 = vst.msk [vmem:[#allocation3 + $0xb0] sm:$0xff] %vm873, %v9554
      %9591 = vst.msk [vmem:[#allocation3 + $0xb8] sm:$0xff] %vm873, %v9555
      %9592 = vst.msk [vmem:[#allocation3 + $0xc0] sm:$0xff] %vm873, %v9556
      %9593 = vst.msk [vmem:[#allocation3 + $0xc8] sm:$0xff] %vm873, %v9557
      %9594 = vst.msk [vmem:[#allocation3 + $0xd0] sm:$0xff] %vm873, %v9558
      %9595 = vst.msk [vmem:[#allocation3 + $0xd8] sm:$0xff] %vm873, %v9559
      %9596 = vst.msk [vmem:[#allocation3 + $0xe0] sm:$0xff] %vm873, %v9560
      %9597 = vst.msk [vmem:[#allocation3 + $0xe8] sm:$0xff] %vm873, %v9561
      %9598 = vst.msk [vmem:[#allocation3 + $0xf0] sm:$0xff] %vm873, %v9562
      %9599 = vst.msk [vmem:[#allocation3 + $0xf8] sm:$0xff] %vm873, %v9563
      %9600 = vst.msk [vmem:[#allocation3 + $0x100] sm:$0xff] %vm873, %v9564
      %9601 = vst.msk [vmem:[#allocation3 + $0x108] sm:$0xff] %vm873, %v9565
      %9602 = vst.msk [vmem:[#allocation3 + $0x110] sm:$0xff] %vm873, %v9566
      %9603 = vst.msk [vmem:[#allocation3 + $0x118] sm:$0xff] %vm873, %v9567
      %v9604 = vpack.c.bf16 %v9533, %v9532
      %v9605 = vpack.c.bf16 %v9535, %v9534
      %v9606 = vpack.c.bf16 %v9537, %v9536
      %v9607 = vpack.c.bf16 %v9539, %v9538
      %v9608 = vpack.c.bf16 %v9541, %v9540
      %v9609 = vpack.c.bf16 %v9543, %v9542
      %v9610 = vpack.c.bf16 %v9545, %v9544
      %v9611 = vpack.c.bf16 %v9547, %v9546
      %v9612 = vpack.c.bf16 %v9549, %v9548
      %v9613 = vpack.c.bf16 %v9551, %v9550
      %v9614 = vpack.c.bf16 %v9553, %v9552
      %v9615 = vpack.c.bf16 %v9555, %v9554
      %v9616 = vpack.c.bf16 %v9557, %v9556
      %v9617 = vpack.c.bf16 %v9559, %v9558
      %v9618 = vpack.c.bf16 %v9561, %v9560
      %v9619 = vpack.c.bf16 %v9563, %v9562
      %v9620 = vpack.c.bf16 %v9565, %v9564
      %v9621 = vpack.c.bf16 %v9567, %v9566
      %v9640 = vunpack.c.l.b16 %v9604
      %v9641 = vunpack.c.h.b16 %v9604
      %v9642 = vunpack.c.l.b16 %v9605
      %v9643 = vunpack.c.h.b16 %v9605
      %v9644 = vunpack.c.l.b16 %v9606
      %v9645 = vunpack.c.h.b16 %v9606
      %v9646 = vunpack.c.l.b16 %v9607
      %v9647 = vunpack.c.h.b16 %v9607
      %v9648 = vunpack.c.l.b16 %v9608
      %v9649 = vunpack.c.h.b16 %v9608
      %v9650 = vunpack.c.l.b16 %v9609
      %v9651 = vunpack.c.h.b16 %v9609
      %v9652 = vunpack.c.l.b16 %v9610
      %v9653 = vunpack.c.h.b16 %v9610
      %v9654 = vunpack.c.l.b16 %v9611
      %v9655 = vunpack.c.h.b16 %v9611
      %v9656 = vunpack.c.l.b16 %v9612
      %v9657 = vunpack.c.h.b16 %v9612
      %v9658 = vunpack.c.l.b16 %v9613
      %v9659 = vunpack.c.h.b16 %v9613
      %v9660 = vunpack.c.l.b16 %v9614
      %v9661 = vunpack.c.h.b16 %v9614
      %v9662 = vunpack.c.l.b16 %v9615
      %v9663 = vunpack.c.h.b16 %v9615
      %v9664 = vunpack.c.l.b16 %v9616
      %v9665 = vunpack.c.h.b16 %v9616
      %v9666 = vunpack.c.l.b16 %v9617
      %v9667 = vunpack.c.h.b16 %v9617
      %v9668 = vunpack.c.l.b16 %v9618
      %v9669 = vunpack.c.h.b16 %v9618
      %v9670 = vunpack.c.l.b16 %v9619
      %v9671 = vunpack.c.h.b16 %v9619
      %v9672 = vunpack.c.l.b16 %v9620
      %v9673 = vunpack.c.h.b16 %v9620
      %v9674 = vunpack.c.l.b16 %v9621
      %v9675 = vunpack.c.h.b16 %v9621
      %v9676 = vpack.c.b16 %v9640, %v9640
      %v9677 = vpack.c.b16 %v9641, %v9641
      %v9678 = vpack.c.b16 %v9642, %v9642
      %v9679 = vpack.c.b16 %v9643, %v9643
      %v9680 = vpack.c.b16 %v9644, %v9644
      %v9681 = vpack.c.b16 %v9645, %v9645
      %v9682 = vpack.c.b16 %v9646, %v9646
      %v9683 = vpack.c.b16 %v9647, %v9647
      %v9684 = vpack.c.b16 %v9648, %v9648
      %v9685 = vpack.c.b16 %v9649, %v9649
      %v9686 = vpack.c.b16 %v9650, %v9650
      %v9687 = vpack.c.b16 %v9651, %v9651
      %v9688 = vpack.c.b16 %v9652, %v9652
      %v9689 = vpack.c.b16 %v9653, %v9653
      %v9690 = vpack.c.b16 %v9654, %v9654
      %v9691 = vpack.c.b16 %v9655, %v9655
      %v9692 = vpack.c.b16 %v9656, %v9656
      %v9693 = vpack.c.b16 %v9657, %v9657
      %v9694 = vpack.c.b16 %v9658, %v9658
      %v9695 = vpack.c.b16 %v9659, %v9659
      %v9696 = vpack.c.b16 %v9660, %v9660
      %v9697 = vpack.c.b16 %v9661, %v9661
      %v9698 = vpack.c.b16 %v9662, %v9662
      %v9699 = vpack.c.b16 %v9663, %v9663
      %v9700 = vpack.c.b16 %v9664, %v9664
      %v9701 = vpack.c.b16 %v9665, %v9665
      %v9702 = vpack.c.b16 %v9666, %v9666
      %v9703 = vpack.c.b16 %v9667, %v9667
      %v9704 = vpack.c.b16 %v9668, %v9668
      %v9705 = vpack.c.b16 %v9669, %v9669
      %v9706 = vpack.c.b16 %v9670, %v9670
      %v9707 = vpack.c.b16 %v9671, %v9671
      %v9708 = vpack.c.b16 %v9672, %v9672
      %v9709 = vpack.c.b16 %v9673, %v9673
      %v9710 = vpack.c.b16 %v9674, %v9674
      %v9711 = vpack.c.b16 %v9675, %v9675
      %9748 = vst.msk [vmem:[#allocation2 + $0x10] sm:$0xf] %vm4948, %v9676
      %9749 = vst.msk [vmem:[#allocation2 + $0x14] sm:$0xf] %vm4948, %v9677
      %9750 = vst.msk [vmem:[#allocation2 + $0x18] sm:$0xf] %vm4948, %v9678
      %9751 = vst.msk [vmem:[#allocation2 + $0x1c] sm:$0xf] %vm4948, %v9679
      %9752 = vst.msk [vmem:[#allocation2 + $0x20] sm:$0xf] %vm4948, %v9680
      %9753 = vst.msk [vmem:[#allocation2 + $0x24] sm:$0xf] %vm4948, %v9681
      %9754 = vst.msk [vmem:[#allocation2 + $0x28] sm:$0xf] %vm4948, %v9682
      %9755 = vst.msk [vmem:[#allocation2 + $0x2c] sm:$0xf] %vm4948, %v9683
      %9756 = vst.msk [vmem:[#allocation2 + $0x30] sm:$0xf] %vm4948, %v9684
      %9757 = vst.msk [vmem:[#allocation2 + $0x34] sm:$0xf] %vm4948, %v9685
      %9758 = vst.msk [vmem:[#allocation2 + $0x38] sm:$0xf] %vm4948, %v9686
      %9759 = vst.msk [vmem:[#allocation2 + $0x3c] sm:$0xf] %vm4948, %v9687
      %9760 = vst.msk [vmem:[#allocation2 + $0x40] sm:$0xf] %vm4948, %v9688
      %9761 = vst.msk [vmem:[#allocation2 + $0x44] sm:$0xf] %vm4948, %v9689
      %9762 = vst.msk [vmem:[#allocation2 + $0x48] sm:$0xf] %vm4948, %v9690
      %9763 = vst.msk [vmem:[#allocation2 + $0x4c] sm:$0xf] %vm4948, %v9691
      %9764 = vst.msk [vmem:[#allocation2 + $0x50] sm:$0xf] %vm4948, %v9692
      %9765 = vst.msk [vmem:[#allocation2 + $0x54] sm:$0xf] %vm4948, %v9693
      %9766 = vst.msk [vmem:[#allocation2 + $0x58] sm:$0xf] %vm4948, %v9694
      %9767 = vst.msk [vmem:[#allocation2 + $0x5c] sm:$0xf] %vm4948, %v9695
      %9768 = vst.msk [vmem:[#allocation2 + $0x60] sm:$0xf] %vm4948, %v9696
      %9769 = vst.msk [vmem:[#allocation2 + $0x64] sm:$0xf] %vm4948, %v9697
      %9770 = vst.msk [vmem:[#allocation2 + $0x68] sm:$0xf] %vm4948, %v9698
      %9771 = vst.msk [vmem:[#allocation2 + $0x6c] sm:$0xf] %vm4948, %v9699
      %9772 = vst.msk [vmem:[#allocation2 + $0x70] sm:$0xf] %vm4948, %v9700
      %9773 = vst.msk [vmem:[#allocation2 + $0x74] sm:$0xf] %vm4948, %v9701
      %9774 = vst.msk [vmem:[#allocation2 + $0x78] sm:$0xf] %vm4948, %v9702
      %9775 = vst.msk [vmem:[#allocation2 + $0x7c] sm:$0xf] %vm4948, %v9703
      %9776 = vst.msk [vmem:[#allocation2 + $0x80] sm:$0xf] %vm4948, %v9704
      %9777 = vst.msk [vmem:[#allocation2 + $0x84] sm:$0xf] %vm4948, %v9705
      %9778 = vst.msk [vmem:[#allocation2 + $0x88] sm:$0xf] %vm4948, %v9706
      %9779 = vst.msk [vmem:[#allocation2 + $0x8c] sm:$0xf] %vm4948, %v9707
      %9780 = vst.msk [vmem:[#allocation2 + $0x90] sm:$0xf] %vm4948, %v9708
      %9781 = vst.msk [vmem:[#allocation2 + $0x94] sm:$0xf] %vm4948, %v9709
      %9782 = vst.msk [vmem:[#allocation2 + $0x98] sm:$0xf] %vm4948, %v9710
      %9783 = vst.msk [vmem:[#allocation2 + $0x9c] sm:$0xf] %vm4948, %v9711
      %9784 = vst.msk [vmem:[%s302] sm:$0xff] %vm873, %v9532
      %9785 = vst.msk [vmem:[%s302 + $0x8] sm:$0xff] %vm873, %v9533
      %9786 = vst.msk [vmem:[%s302 + $0x10] sm:$0xff] %vm873, %v9534
      %9787 = vst.msk [vmem:[%s302 + $0x18] sm:$0xff] %vm873, %v9535
      %9788 = vst.msk [vmem:[%s302 + $0x20] sm:$0xff] %vm873, %v9536
      %9789 = vst.msk [vmem:[%s302 + $0x28] sm:$0xff] %vm873, %v9537
      %9790 = vst.msk [vmem:[%s302 + $0x30] sm:$0xff] %vm873, %v9538
      %9791 = vst.msk [vmem:[%s302 + $0x38] sm:$0xff] %vm873, %v9539
      %9792 = vst.msk [vmem:[%s302 + $0x40] sm:$0xff] %vm873, %v9540
      %9793 = vst.msk [vmem:[%s302 + $0x48] sm:$0xff] %vm873, %v9541
      %9794 = vst.msk [vmem:[%s302 + $0x50] sm:$0xff] %vm873, %v9542
      %9795 = vst.msk [vmem:[%s302 + $0x58] sm:$0xff] %vm873, %v9543
      %9796 = vst.msk [vmem:[%s302 + $0x60] sm:$0xff] %vm873, %v9544
      %9797 = vst.msk [vmem:[%s302 + $0x68] sm:$0xff] %vm873, %v9545
      %9798 = vst.msk [vmem:[%s302 + $0x70] sm:$0xff] %vm873, %v9546
      %9799 = vst.msk [vmem:[%s302 + $0x78] sm:$0xff] %vm873, %v9547
      %9800 = vst.msk [vmem:[%s302 + $0x80] sm:$0xff] %vm873, %v9548
      %9801 = vst.msk [vmem:[%s302 + $0x88] sm:$0xff] %vm873, %v9549
      %9802 = vst.msk [vmem:[%s302 + $0x90] sm:$0xff] %vm873, %v9550
      %9803 = vst.msk [vmem:[%s302 + $0x98] sm:$0xff] %vm873, %v9551
      %9804 = vst.msk [vmem:[%s302 + $0xa0] sm:$0xff] %vm873, %v9552
      %9805 = vst.msk [vmem:[%s302 + $0xa8] sm:$0xff] %vm873, %v9553
      %9806 = vst.msk [vmem:[%s302 + $0xb0] sm:$0xff] %vm873, %v9554
      %9807 = vst.msk [vmem:[%s302 + $0xb8] sm:$0xff] %vm873, %v9555
      %9808 = vst.msk [vmem:[%s302 + $0xc0] sm:$0xff] %vm873, %v9556
      %9809 = vst.msk [vmem:[%s302 + $0xc8] sm:$0xff] %vm873, %v9557
      %9810 = vst.msk [vmem:[%s302 + $0xd0] sm:$0xff] %vm873, %v9558
      %9811 = vst.msk [vmem:[%s302 + $0xd8] sm:$0xff] %vm873, %v9559
      %9812 = vst.msk [vmem:[%s302 + $0xe0] sm:$0xff] %vm873, %v9560
      %9813 = vst.msk [vmem:[%s302 + $0xe8] sm:$0xff] %vm873, %v9561
      %9814 = vst.msk [vmem:[%s302 + $0xf0] sm:$0xff] %vm873, %v9562
      %9815 = vst.msk [vmem:[%s302 + $0xf8] sm:$0xff] %vm873, %v9563
      %9816 = vst.msk [vmem:[%s302 + $0x100] sm:$0xff] %vm873, %v9564
      %9817 = vst.msk [vmem:[%s302 + $0x108] sm:$0xff] %vm873, %v9565
      %9818 = vst.msk [vmem:[%s302 + $0x110] sm:$0xff] %vm873, %v9566
      %9819 = vst.msk [vmem:[%s302 + $0x118] sm:$0xff] %vm873, %v9567
      %p9820 = scmp.eq.s32.totalorder %s22, 7
      // Predicated region
      $region41: #{tpu_custom_call.1} parent=35 // pred_check
        %p9821 = pneg %p9820
      $region42: #{tpu_custom_call.1} parent=35 // pred_check_branch
        %9823 = sbr.rel (%p9821) target = $region44
      $region43: #{tpu_custom_call.1} parent=35 // pred_region
        %9824 = vst.msk [vmem:[%s307] sm:$0xff] %vm873, %v9532
        %9825 = vst.msk [vmem:[%s307 + $0x8] sm:$0xff] %vm873, %v9533
        %9826 = vst.msk [vmem:[%s307 + $0x10] sm:$0xff] %vm873, %v9534
        %9827 = vst.msk [vmem:[%s307 + $0x18] sm:$0xff] %vm873, %v9535
        %9828 = vst.msk [vmem:[%s307 + $0x20] sm:$0xff] %vm873, %v9536
        %9829 = vst.msk [vmem:[%s307 + $0x28] sm:$0xff] %vm873, %v9537
        %9830 = vst.msk [vmem:[%s307 + $0x30] sm:$0xff] %vm873, %v9538
        %9831 = vst.msk [vmem:[%s307 + $0x38] sm:$0xff] %vm873, %v9539
        %9832 = vst.msk [vmem:[%s307 + $0x40] sm:$0xff] %vm873, %v9540
        %9833 = vst.msk [vmem:[%s307 + $0x48] sm:$0xff] %vm873, %v9541
        %9834 = vst.msk [vmem:[%s307 + $0x50] sm:$0xff] %vm873, %v9542
        %9835 = vst.msk [vmem:[%s307 + $0x58] sm:$0xff] %vm873, %v9543
        %9836 = vst.msk [vmem:[%s307 + $0x60] sm:$0xff] %vm873, %v9544
        %9837 = vst.msk [vmem:[%s307 + $0x68] sm:$0xff] %vm873, %v9545
        %9838 = vst.msk [vmem:[%s307 + $0x70] sm:$0xff] %vm873, %v9546
        %9839 = vst.msk [vmem:[%s307 + $0x78] sm:$0xff] %vm873, %v9547
        %9840 = vst.msk [vmem:[%s307 + $0x80] sm:$0xff] %vm873, %v9548
        %9841 = vst.msk [vmem:[%s307 + $0x88] sm:$0xff] %vm873, %v9549
        %9842 = vst.msk [vmem:[%s307 + $0x90] sm:$0xff] %vm873, %v9550
        %9843 = vst.msk [vmem:[%s307 + $0x98] sm:$0xff] %vm873, %v9551
        %9844 = vst.msk [vmem:[%s307 + $0xa0] sm:$0xff] %vm873, %v9552
        %9845 = vst.msk [vmem:[%s307 + $0xa8] sm:$0xff] %vm873, %v9553
        %9846 = vst.msk [vmem:[%s307 + $0xb0] sm:$0xff] %vm873, %v9554
        %9847 = vst.msk [vmem:[%s307 + $0xb8] sm:$0xff] %vm873, %v9555
        %9848 = vst.msk [vmem:[%s307 + $0xc0] sm:$0xff] %vm873, %v9556
        %9849 = vst.msk [vmem:[%s307 + $0xc8] sm:$0xff] %vm873, %v9557
        %9850 = vst.msk [vmem:[%s307 + $0xd0] sm:$0xff] %vm873, %v9558
        %9851 = vst.msk [vmem:[%s307 + $0xd8] sm:$0xff] %vm873, %v9559
        %9852 = vst.msk [vmem:[%s307 + $0xe0] sm:$0xff] %vm873, %v9560
        %9853 = vst.msk [vmem:[%s307 + $0xe8] sm:$0xff] %vm873, %v9561
        %9854 = vst.msk [vmem:[%s307 + $0xf0] sm:$0xff] %vm873, %v9562
        %9855 = vst.msk [vmem:[%s307 + $0xf8] sm:$0xff] %vm873, %v9563
        %9856 = vst.msk [vmem:[%s307 + $0x100] sm:$0xff] %vm873, %v9564
        %9857 = vst.msk [vmem:[%s307 + $0x108] sm:$0xff] %vm873, %v9565
        %9858 = vst.msk [vmem:[%s307 + $0x110] sm:$0xff] %vm873, %v9566
        %9859 = vst.msk [vmem:[%s307 + $0x118] sm:$0xff] %vm873, %v9567
      $region44: #{tpu_custom_call.1} parent=35 // pred_fallthru
        _
      %p9860 = scmp.lt.s32.totalorder %s21, 1
      %s9861 = scalar_select %p9860, %s21, 1
      %p9862 = scmp.lt.s32.totalorder %s22, 7
      %s9863 = scalar_select %p9862, %s22, 7
      %s9864 = smul.addr %s9863, 36
      %s9865 = smul.addr %s9861, 288
      %s9866 = sadd.s32 %s9864, %s9865
      %s9867 = smul.addr %s9866, 8
      %s9868 = scalar_lea.vmem %s4, %s9867
      %p9869 = scmp.lt.s32.totalorder %s21, 1
      %s9870 = scalar_select %p9869, %s21, 1
      %s9871 = smul.addr %s9870, 36
      %s9872 = smul.addr %s9871, 8
      %s9873 = scalar_lea.vmem %s5, %s9872
      // Predicated region
      $region45: #{tpu_custom_call.1} parent=35 // pred_check
        %p9874 = pneg %p147
      $region46: #{tpu_custom_call.1} parent=35 // pred_check_branch
        %9876 = sbr.rel (%p9874) target = $region48
      $region47: #{tpu_custom_call.1} parent=35 // pred_region
        _
      $region48: #{tpu_custom_call.1} parent=35 // pred_fallthru
        _
      // Predicated region
      $region49: #{tpu_custom_call.1} parent=35 // pred_check
        %p9877 = pneg %p173
      $region50: #{tpu_custom_call.1} parent=35 // pred_check_branch
        %9879 = sbr.rel (%p9877) target = $region52
      $region51: #{tpu_custom_call.1} parent=35 // pred_region
        _
      $region52: #{tpu_custom_call.1} parent=35 // pred_fallthru
        _
    $region36: #{tpu_custom_call.1} parent=5 // pred_fallthru
      _
    %p9880 = scmp.le.s32.totalorder 2, %s12
    // Predicated region
    $region53: #{tpu_custom_call.1} parent=5 // pred_check
      %p9881 = pneg %p9880
    $region54: #{tpu_custom_call.1} parent=5 // pred_check_branch
      %9883 = sbr.rel (%p9881) target = $region56
    $region55: #{tpu_custom_call.1} parent=5 // pred_region
      %s9884 = ssub.s32 %s12, 2
      // Predicated region
      $region57: #{tpu_custom_call.1} parent=55 // pred_check
        %p9885 = pneg %p153
      $region58: #{tpu_custom_call.1} parent=55 // pred_check_branch
        %9887 = sbr.rel (%p9885) target = $region60
      $region59: #{tpu_custom_call.1} parent=55 // pred_region
        %p9888 = scmp.lt.s32.totalorder %s23, 1
        %s9889 = scalar_select %p9888, %s23, 1
        %p9890 = scmp.lt.s32.totalorder %s24, 7
        %s9891 = scalar_select %p9890, %s24, 7
        %s9892 = smul.addr %s9891, 36
        %s9893 = smul.addr %s9889, 288
        %s9894 = sadd.s32 %s9892, %s9893
        %s9895 = smul.addr %s9894, 8
        %s9896 = scalar_lea.vmem %s4, %s9895
      $region60: #{tpu_custom_call.1} parent=55 // pred_fallthru
        _
      // Predicated region
      $region61: #{tpu_custom_call.1} parent=55 // pred_check
        %p9897 = pneg %p179
      $region62: #{tpu_custom_call.1} parent=55 // pred_check_branch
        %9899 = sbr.rel (%p9897) target = $region64
      $region63: #{tpu_custom_call.1} parent=55 // pred_region
        %p9900 = scmp.lt.s32.totalorder %s23, 1
        %s9901 = scalar_select %p9900, %s23, 1
        %s9902 = smul.addr %s9901, 36
        %s9903 = smul.addr %s9902, 8
        %s9904 = scalar_lea.vmem %s5, %s9903
      $region64: #{tpu_custom_call.1} parent=55 // pred_fallthru
        _
    $region56: #{tpu_custom_call.1} parent=5 // pred_fallthru
      _
  $region6: #{tpu_custom_call.1} parent=0 // loop_footer
    %s16 = sadd.s32 1, %s12
  $region7: #{tpu_custom_call.1} parent=0 // loop_footer_branch
    %11 = sbr.rel target = $region3
  $region8: #{tpu_custom_call.1} parent=0 // loop_exit
    _

</llo_original>
